<compile_context>
chip_gen: v7x
topology: tpu7x:2x2x1
jax: 0.10.0
libtpu: 0.0.40
codegen_flags: <defaults>
</compile_context>

<pallas_src>
import math
from functools import partial

import jax
import jax.numpy as jnp
from jax.experimental import pallas as pl
from jax.experimental.pallas import tpu as pltpu  # noqa: F401


# ----------------------------------------------------------------------------- config
CONFIG = dict(
    in_channel=4,
    down_sample_list=[8],
    patch_size=[2, 2],
    hidden_size=32,
    num_layers=2,
    num_heads=4,
    mlp_dim=64,
    head_channels=16,
    decoder_list=[16, 8],
    label_size=[14, 14],
    data_dim=[16, 16],
)

# BatchNorm (eval mode, default running stats mean=0/var=1, gamma=1/beta=0) folds into
# the preceding conv weight as a scalar scale.
# TODO(synk): for trained params with nonzero bias / running stats, fold bias too.
_BN_SCALE = 1.0 / math.sqrt(1.0 + 1e-5)


# ----------------------------------------------------------------------------- Pallas kernels
def _mm_bias_act_kernel(a_ref, w_ref, b_ref, o_ref, *, activation):
    """(M,K)@(K,N) + bias with fused activation; bf16 MXU inputs, f32 accumulation."""
    a = a_ref[...].astype(jnp.bfloat16)
    acc = jnp.dot(a, w_ref[...], preferred_element_type=jnp.float32)
    acc = acc + b_ref[...]
    if activation == "relu":
        acc = jnp.maximum(acc, 0.0)
    o_ref[...] = acc.astype(o_ref.dtype)


def matmul_bias_act(a, w_bf16, bias_1n, activation="none"):
    M, K = a.shape
    K2, N = w_bf16.shape
    assert K == K2
    return pl.pallas_call(
        partial(_mm_bias_act_kernel, activation=activation),
        out_shape=jax.ShapeDtypeStruct((M, N), jnp.float32),
        grid=(1,),
        in_specs=[
            pl.BlockSpec((M, K), lambda i: (0, 0)),
            pl.BlockSpec((K, N), lambda i: (0, 0)),
            pl.BlockSpec((1, N), lambda i: (0, 0)),
        ],
        out_specs=pl.BlockSpec((M, N), lambda i: (0, 0)),
    )(a, w_bf16, bias_1n)


def _conv1x1_out_kernel(a_ref, w_ref, b_ref, o_ref):
    """1x1 output conv to a single channel: VPU multiply + lane reduce (avoids N=1 matmul)."""
    a = a_ref[...]                                   # (M, K) f32
    w = w_ref[...]                                   # (1, K) f32
    o_ref[...] = jnp.sum(a * w, axis=-1, keepdims=True) + b_ref[...]


def conv1x1_out(a, w_1k, b_11):
    M, K = a.shape
    return pl.pallas_call(
        _conv1x1_out_kernel,
        out_shape=jax.ShapeDtypeStruct((M, 1), jnp.float32),
        grid=(1,),
        in_specs=[
            pl.BlockSpec((M, K), lambda i: (0, 0)),
            pl.BlockSpec((1, K), lambda i: (0, 0)),
            pl.BlockSpec((1, 1), lambda i: (0, 0)),
        ],
        out_specs=pl.BlockSpec((M, 1), lambda i: (0, 0)),
    )(a, w_1k, b_11)


def _maxpool_kernel(x_ref, o_ref, *, W, C):
    """2x2/stride-2 max pool on NHWC rows packed as (B*H/2, 2*W*C) -> (B*H/2, W/2*C)."""
    x = x_ref[...]
    top = x[:, : W * C]
    bot = x[:, W * C:]
    m = jnp.maximum(top, bot)                        # (R, W*C)  max over row pairs
    cols = []
    for w in range(0, W, 2):                         # max over column pairs (lane slices)
        a = m[:, w * C:(w + 1) * C]
        b = m[:, (w + 1) * C:(w + 2) * C]
        cols.append(jnp.maximum(a, b))
    o_ref[...] = jnp.concatenate(cols, axis=1)       # (R, (W/2)*C)


def maxpool2_nhwc(x):
    B, H, W, C = x.shape
    xr = x.reshape(B * (H // 2), 2 * W * C)          # pure reshape, no transpose
    out = pl.pallas_call(
        partial(_maxpool_kernel, W=W, C=C),
        out_shape=jax.ShapeDtypeStruct((B * (H // 2), (W // 2) * C), jnp.float32),
        grid=(1,),
        in_specs=[pl.BlockSpec(xr.shape, lambda i: (0, 0))],
        out_specs=pl.BlockSpec((B * (H // 2), (W // 2) * C), lambda i: (0, 0)),
    )(xr)
    return out.reshape(B, H // 2, W // 2, C)


def _encoder_layer_kernel(x_ref, ln1g_ref, ln1b_ref, wqkv_ref, bqkv_ref,
                          wo_ref, bo_ref, ln2g_ref, ln2b_ref,
                          wfc1_ref, bfc1_ref, wfc2_ref, bfc2_ref,
                          lnfg_ref, lnfb_ref, o_ref,
                          *, B, S, D, heads, apply_final_ln, eps=1e-6):
    """Whole pre-norm ViT encoder layer in one kernel (everything VMEM-resident)."""

    def ln(v, g, b):
        mu = jnp.mean(v, axis=-1, keepdims=True)
        var = jnp.mean((v - mu) ** 2, axis=-1, keepdims=True)
        return (v - mu) * jax.lax.rsqrt(var + eps) * g + b

    Dh = D // heads
    scale = 1.0 / math.sqrt(Dh)

    x = x_ref[...]                                                   # (B*S, D) f32
    xn = ln(x, ln1g_ref[...], ln1b_ref[...])
    qkv = jnp.dot(xn.astype(jnp.bfloat16), wqkv_ref[...],
                  preferred_element_type=jnp.float32) + bqkv_ref[...]  # (B*S, 3D)
    q = qkv[:, 0:D]
    k = qkv[:, D:2 * D]
    v = qkv[:, 2 * D:3 * D]

    batch_outs = []
    for b in range(B):                                               # static unroll
        r0 = b * S
        head_outs = []
        for h in range(heads):
            c0 = h * Dh
            qb = q[r0:r0 + S, c0:c0 + Dh]
            kb = k[r0:r0 + S, c0:c0 + Dh]
            vb = v[r0:r0 + S, c0:c0 + Dh]
            s = jax.lax.dot_general(qb, kb, (((1,), (1,)), ((), ())),
                                    preferred_element_type=jnp.float32) * scale
            s = s - jnp.max(s, axis=-1, keepdims=True)
            p = jnp.exp(s)
            p = p / jnp.sum(p, axis=-1, keepdims=True)
            head_outs.append(jnp.dot(p, vb, preferred_element_type=jnp.float32))
        batch_outs.append(jnp.concatenate(head_outs, axis=1))
    attn = jnp.concatenate(batch_outs, axis=0)                       # (B*S, D)

    attn = jnp.dot(attn.astype(jnp.bfloat16), wo_ref[...],
                   preferred_element_type=jnp.float32) + bo_ref[...]
    x = x + attn                                                     # residual 1

    xn2 = ln(x, ln2g_ref[...], ln2b_ref[...])
    h1 = jnp.dot(xn2.astype(jnp.bfloat16), wfc1_ref[...],
                 preferred_element_type=jnp.float32) + bfc1_ref[...]
    # TODO(synk): PyTorch nn.GELU default is exact erf; tanh approximation used here.
    h1 = jax.nn.gelu(h1, approximate=True)
    h2 = jnp.dot(h1.astype(jnp.bfloat16), wfc2_ref[...],
                 preferred_element_type=jnp.float32) + bfc2_ref[...]
    out = x + h2                                                     # residual 2

    if apply_final_ln:                                               # fused final encoder LN
        out = ln(out, lnfg_ref[...], lnfb_ref[...])
    o_ref[...] = out


def encoder_layer(x2d, lp, lnf_g, lnf_b, *, B, S, D, heads, apply_final_ln):
    args = [x2d, lp["ln1_g"], lp["ln1_b"], lp["wqkv"], lp["bqkv"],
            lp["wo"], lp["bo"], lp["ln2_g"], lp["ln2_b"],
            lp["w_fc1"], lp["b_fc1"], lp["w_fc2"], lp["b_fc2"], lnf_g, lnf_b]
    return pl.pallas_call(
        partial(_encoder_layer_kernel, B=B, S=S, D=D, heads=heads,
                apply_final_ln=apply_final_ln),
        out_shape=jax.ShapeDtypeStruct((B * S, D), jnp.float32),
        grid=(1,),
        in_specs=[pl.BlockSpec(a.shape, lambda i: (0, 0)) for a in args],
        out_specs=pl.BlockSpec((B * S, D), lambda i: (0, 0)),
    )(*args)


# ----------------------------------------------------------------------------- conv / pool / upsample glue (NHWC)
def conv2d_nhwc(x, w_mat, b_vec, kh, kw, stride=1, padding=0, activation="none"):
    """PyTorch-semantics Conv2d on NHWC activations.
    w_mat is pre-reshaped to (kh*kw*Cin, Cout) [bf16], b_vec to (1, Cout) [f32]."""
    B, H, W, C = x.shape
    if padding > 0:
        x = jnp.pad(x, ((0, 0), (padding, padding), (padding, padding), (0, 0)))
    Hp, Wp = x.shape[1], x.shape[2]
    Ho = (Hp - kh) // stride + 1
    Wo = (Wp - kw) // stride + 1
    if kh == 1 and kw == 1 and stride == 1:
        p = x.reshape(B * Ho * Wo, C)
    else:
        slices = []
        for ki in range(kh):
            for kj in range(kw):
                slices.append(x[:, ki:ki + stride * Ho:stride, kj:kj + stride * Wo:stride, :])
        p = jnp.concatenate(slices, axis=-1).reshape(B * Ho * Wo, kh * kw * C)
    out = matmul_bias_act(p, w_mat, b_vec, activation=activation)
    return out.reshape(B, Ho, Wo, w_mat.shape[1])


def upsample2_nhwc(x):
    # TODO(synk): reference DecoderCup uses bilinear upsampling; nearest-neighbor used here.
    return jnp.repeat(jnp.repeat(x, 2, axis=1), 2, axis=2)


# ----------------------------------------------------------------------------- parameters
def init_params(key):
    """Raw parameters in PyTorch layout."""
    keys = iter(jax.random.split(key, 128))
    nrm = lambda shape, s=0.05: jax.random.normal(next(keys), shape, jnp.float32) * s
    zeros = lambda shape: jnp.zeros(shape, jnp.float32)
    ones = lambda shape: jnp.ones(shape, jnp.float32)

    H = CONFIG["hidden_size"]
    params = {}
    c0 = CONFIG["down_sample_list"][0]
    params["down0"] = dict(
        w1=nrm((c0, CONFIG["in_channel"], 3, 3)) * _BN_SCALE, b1=zeros((c0,)),
        w2=nrm((c0, c0, 3, 3)) * _BN_SCALE, b2=zeros((c0,)),
    )
    ph, pw = CONFIG["patch_size"]
    params["patch_w"] = nrm((H, c0, ph, pw))
    params["patch_b"] = zeros((H,))
    params["pos_emb"] = nrm((1, 16, H), 0.02)   # n_patch = 4x4 -> 16 tokens

    layers = []
    for _ in range(CONFIG["num_layers"]):
        layers.append(dict(
            ln1_g=ones((H,)), ln1_b=zeros((H,)),
            wq=nrm((H, H)), bq=zeros((H,)),
            wk=nrm((H, H)), bk=zeros((H,)),
            wv=nrm((H, H)), bv=zeros((H,)),
            wo=nrm((H, H)), bo=zeros((H,)),
            ln2_g=ones((H,)), ln2_b=zeros((H,)),
            w_fc1=nrm((H, CONFIG["mlp_dim"])), b_fc1=zeros((CONFIG["mlp_dim"],)),
            w_fc2=nrm((CONFIG["mlp_dim"], H)), b_fc2=zeros((H,)),
        ))
    params["encoder_layers"] = layers
    params["enc_norm_g"] = ones((H,))
    params["enc_norm_b"] = zeros((H,))

    hc = CONFIG["head_channels"]
    params["conv_more"] = dict(w=nrm((hc, H, 3, 3)) * _BN_SCALE, b=zeros((hc,)))
    d0, d1 = CONFIG["decoder_list"]
    params["decoder_blocks"] = [
        dict(w=nrm((d0, hc, 3, 3)) * _BN_SCALE, b=zeros((d0,))),
        dict(w=nrm((d1, d0 + c0, 3, 3)) * _BN_SCALE, b=zeros((d1,))),
    ]
    params["out_w"] = nrm((1, d1, 1, 1))
    params["out_b"] = zeros((1,))
    return params


def prepare_params(raw):
    """One-time conversion to kernel-ready layout (pre-transposed, pre-reshaped, bf16 weights)."""
    def conv_w(w):   # (Cout, Cin, kh, kw) -> (kh*kw*Cin, Cout), bf16
        Cout, Cin, kh, kw = w.shape
        return jnp.transpose(w, (2, 3, 1, 0)).reshape(kh * kw * Cin, Cout).astype(jnp.bfloat16)

    def bias(b):
        return b.reshape(1, -1).astype(jnp.float32)

    p = {}
    p["down0"] = dict(
        w1=conv_w(raw["down0"]["w1"]), b1=bias(raw["down0"]["b1"]),
        w2=conv_w(raw["down0"]["w2"]), b2=bias(raw["down0"]["b2"]),
    )
    p["patch_w"] = conv_w(raw["patch_w"])
    p["patch_b"] = bias(raw["patch_b"])
    p["pos_emb"] = raw["pos_emb"][0]                                  # (S, D) f32

    layers = []
    for lp in raw["encoder_layers"]:
        layers.append(dict(
            ln1_g=lp["ln1_g"].reshape(1, -1), ln1_b=lp["ln1_b"].reshape(1, -1),
            wqkv=jnp.concatenate([lp["wq"], lp["wk"], lp["wv"]], axis=1).astype(jnp.bfloat16),
            bqkv=jnp.concatenate([lp["bq"], lp["bk"], lp["bv"]]).reshape(1, -1),
            wo=lp["wo"].astype(jnp.bfloat16), bo=bias(lp["bo"]),
            ln2_g=lp["ln2_g"].reshape(1, -1), ln2_b=lp["ln2_b"].reshape(1, -1),
            w_fc1=lp["w_fc1"].astype(jnp.bfloat16), b_fc1=bias(lp["b_fc1"]),
            w_fc2=lp["w_fc2"].astype(jnp.bfloat16), b_fc2=bias(lp["b_fc2"]),
        ))
    p["encoder_layers"] = layers
    p["enc_norm_g"] = raw["enc_norm_g"].reshape(1, -1)
    p["enc_norm_b"] = raw["enc_norm_b"].reshape(1, -1)

    p["conv_more"] = dict(w=conv_w(raw["conv_more"]["w"]), b=bias(raw["conv_more"]["b"]))
    p["decoder_blocks"] = [dict(w=conv_w(b["w"]), b=bias(b["b"])) for b in raw["decoder_blocks"]]
    p["out_w"] = raw["out_w"].reshape(1, -1).astype(jnp.float32)      # (1, d1)
    p["out_b"] = raw["out_b"].reshape(1, 1).astype(jnp.float32)
    return p


# ----------------------------------------------------------------------------- forward
def vision_transformer_forward(x_nchw, params):
    cfg = CONFIG
    x = jnp.transpose(x_nchw, (0, 2, 3, 1))                           # NCHW -> NHWC (once)

    # ---- UNet_Down (single down stage) --------------------------------------
    d = params["down0"]
    x = conv2d_nhwc(x, d["w1"], d["b1"], 3, 3, padding=1, activation="relu")
    x = conv2d_nhwc(x, d["w2"], d["b2"], 3, 3, padding=1, activation="relu")
    features = [x]
    x = maxpool2_nhwc(x)

    # ---- Transformer_seg ------------------------------------------------------
    ph, pw = cfg["patch_size"]
    emb = conv2d_nhwc(x, params["patch_w"], params["patch_b"], ph, pw, stride=ph)
    B, hh, ww, D = emb.shape
    S = hh * ww
    seq2d = (emb.reshape(B, S, D) + params["pos_emb"][None]).reshape(B * S, D)
    n_layers = len(params["encoder_layers"])
    for li, lp in enumerate(params["encoder_layers"]):
        seq2d = encoder_layer(seq2d, lp, params["enc_norm_g"], params["enc_norm_b"],
                              B=B, S=S, D=D, heads=cfg["num_heads"],
                              apply_final_ln=(li == n_layers - 1))

    # ---- DecoderCup (UNet_Up) -------------------------------------------------
    x = seq2d.reshape(B, hh, ww, D)
    pm = params["conv_more"]
    x = conv2d_nhwc(x, pm["w"], pm["b"], 3, 3, padding=1, activation="relu")
    for blk in params["decoder_blocks"]:
        x = upsample2_nhwc(x)
        skip = None
        for f in features:
            if f.shape[1] == x.shape[1] and f.shape[2] == x.shape[2]:
                skip = f
        if skip is not None:
            x = jnp.concatenate([x, skip], axis=-1)                   # channel (lane) concat
        x = conv2d_nhwc(x, blk["w"], blk["b"], 3, 3, padding=1, activation="relu")

    # ---- crop + 1x1 output conv (exactly as in the PyTorch forward) -----------
    off1 = int((x.shape[1] - cfg["label_size"][0]) / 2)
    off1 = off1 - 1 if off1 > 0 else off1
    off2 = int((x.shape[2] - cfg["label_size"][1]) / 2)
    off2 = off2 - 1 if off2 > 0 else off2
    x = x[:, off1:off1 + cfg["label_size"][0], off2:off2 + cfg["label_size"][1], :]
    Bx, Hx, Wx, Cx = x.shape
    out = conv1x1_out(x.reshape(Bx * Hx * Wx, Cx), params["out_w"], params["out_b"])
    out = out.reshape(Bx, Hx, Wx, 1)
    return jnp.transpose(out, (0, 3, 1, 2))                           # back to NCHW


# ----------------------------------------------------------------------------- main
if __name__ == "__main__":
    key = jax.random.PRNGKey(0)
    pkey, xkey = jax.random.split(key)
    raw_params = init_params(pkey)
    params = prepare_params(raw_params)     # one-time weight repacking (outside forward)

    B = 2
    x = jax.random.normal(
        xkey, (B, CONFIG["in_channel"], CONFIG["data_dim"][0], CONFIG["data_dim"][1]), jnp.float32
    )

    fwd = jax.jit(vision_transformer_forward)
    out = fwd(x, params)
    out = jax.block_until_ready(out)
    assert out.shape == (B, 1, CONFIG["label_size"][0], CONFIG["label_size"][1]), out.shape
    assert bool(jnp.all(jnp.isfinite(out)))
    print("KERNEL_OK")
</pallas_src>

<mosaic_0001>
module attributes {stable_mosaic.version = 11 : i64} {
  func.func @_mm_bias_act_kernel(%arg0: i32, %arg1: memref<512x36xf32, #tpu.memory_space<vmem>>, %arg2: memref<36x8xbf16, #tpu.memory_space<vmem>>, %arg3: memref<1x8xf32, #tpu.memory_space<vmem>>, %arg4: memref<512x8xf32, #tpu.memory_space<vmem>>) attributes {dimension_semantics = [#tpu.dimension_semantics<arbitrary>], iteration_bounds = array<i64: 1>, scalar_prefetch = 0 : i64, scratch_operands = 0 : i64, tpu.core_type = #tpu.core_type<tc>, window_params = [{pipeline_mode = #tpu.pipeline_mode<synchronous>, transform_indices = @transform_0, window_bounds = array<i64: 512, 36>}, {pipeline_mode = #tpu.pipeline_mode<synchronous>, transform_indices = @transform_1, window_bounds = array<i64: 36, 8>}, {pipeline_mode = #tpu.pipeline_mode<synchronous>, transform_indices = @transform_2, window_bounds = array<i64: 1, 8>}, {pipeline_mode = #tpu.pipeline_mode<synchronous>, transform_indices = @transform_3, window_bounds = array<i64: 512, 8>}]} {
    %c0 = arith.constant 0 : index
    %c0_0 = arith.constant 0 : index
    %0 = vector.load %arg1[%c0, %c0_0] : memref<512x36xf32, #tpu.memory_space<vmem>>, vector<512x36xf32>
    %1 = arith.truncf %0 : vector<512x36xf32> to vector<512x36xbf16>
    %c0_1 = arith.constant 0 : index
    %c0_2 = arith.constant 0 : index
    %2 = vector.load %arg2[%c0_1, %c0_2] : memref<36x8xbf16, #tpu.memory_space<vmem>>, vector<36x8xbf16>
    %cst = arith.constant dense<0.000000e+00> : vector<512x8xf32>
    %3 = tpu.matmul %1, %2, %cst {dimension_numbers = #tpu.dot_dimension_numbers<[1], [0], [0], [1], [0, 0, 1, 1], [], []>} : vector<512x36xbf16>, vector<36x8xbf16>, vector<512x8xf32> -> vector<512x8xf32>
    %c0_3 = arith.constant 0 : index
    %c0_4 = arith.constant 0 : index
    %4 = vector.load %arg3[%c0_3, %c0_4] : memref<1x8xf32, #tpu.memory_space<vmem>>, vector<1x8xf32>
    %5 = vector.broadcast %4 : vector<1x8xf32> to vector<512x8xf32>
    %6 = arith.addf %3, %5 : vector<512x8xf32>
    %cst_5 = arith.constant 0.000000e+00 : f32
    %7 = vector.broadcast %cst_5 : f32 to vector<512x8xf32>
    %8 = arith.maximumf %6, %7 : vector<512x8xf32>
    %c0_6 = arith.constant 0 : index
    %c0_7 = arith.constant 0 : index
    %9 = vector.load %arg4[%c0_6, %c0_7] : memref<512x8xf32, #tpu.memory_space<vmem>>, vector<512x8xf32>
    tpu.vector_store %arg4[%c0_6, %c0_7], %8 {strides = array<i32>} : memref<512x8xf32, #tpu.memory_space<vmem>>, vector<512x8xf32>,
    return
  }
  func.func @transform_0(%arg0: i32) -> (i32, i32) {
    %c0_i32 = arith.constant 0 : i32
    %c0_i32_0 = arith.constant 0 : i32
    %c0_i32_1 = arith.constant 0 : i32
    return %c0_i32, %c0_i32_0 : i32, i32
  }
  func.func @transform_1(%arg0: i32) -> (i32, i32) {
    %c0_i32 = arith.constant 0 : i32
    %c0_i32_0 = arith.constant 0 : i32
    %c0_i32_1 = arith.constant 0 : i32
    return %c0_i32, %c0_i32_0 : i32, i32
  }
  func.func @transform_2(%arg0: i32) -> (i32, i32) {
    %c0_i32 = arith.constant 0 : i32
    %c0_i32_0 = arith.constant 0 : i32
    %c0_i32_1 = arith.constant 0 : i32
    return %c0_i32, %c0_i32_0 : i32, i32
  }
  func.func @transform_3(%arg0: i32) -> (i32, i32) {
    %c0_i32 = arith.constant 0 : i32
    %c0_i32_0 = arith.constant 0 : i32
    %c0_i32_1 = arith.constant 0 : i32
    return %c0_i32, %c0_i32_0 : i32, i32
  }
}

module attributes {stable_mosaic.version = 11 : i64} {
  func.func @_mm_bias_act_kernel(%arg0: i32, %arg1: memref<512x72xf32, #tpu.memory_space<vmem>>, %arg2: memref<72x8xbf16, #tpu.memory_space<vmem>>, %arg3: memref<1x8xf32, #tpu.memory_space<vmem>>, %arg4: memref<512x8xf32, #tpu.memory_space<vmem>>) attributes {dimension_semantics = [#tpu.dimension_semantics<arbitrary>], iteration_bounds = array<i64: 1>, scalar_prefetch = 0 : i64, scratch_operands = 0 : i64, tpu.core_type = #tpu.core_type<tc>, window_params = [{pipeline_mode = #tpu.pipeline_mode<synchronous>, transform_indices = @transform_0, window_bounds = array<i64: 512, 72>}, {pipeline_mode = #tpu.pipeline_mode<synchronous>, transform_indices = @transform_1, window_bounds = array<i64: 72, 8>}, {pipeline_mode = #tpu.pipeline_mode<synchronous>, transform_indices = @transform_2, window_bounds = array<i64: 1, 8>}, {pipeline_mode = #tpu.pipeline_mode<synchronous>, transform_indices = @transform_3, window_bounds = array<i64: 512, 8>}]} {
    %c0 = arith.constant 0 : index
    %c0_0 = arith.constant 0 : index
    %0 = vector.load %arg1[%c0, %c0_0] : memref<512x72xf32, #tpu.memory_space<vmem>>, vector<512x72xf32>
    %1 = arith.truncf %0 : vector<512x72xf32> to vector<512x72xbf16>
    %c0_1 = arith.constant 0 : index
    %c0_2 = arith.constant 0 : index
    %2 = vector.load %arg2[%c0_1, %c0_2] : memref<72x8xbf16, #tpu.memory_space<vmem>>, vector<72x8xbf16>
    %cst = arith.constant dense<0.000000e+00> : vector<512x8xf32>
    %3 = tpu.matmul %1, %2, %cst {dimension_numbers = #tpu.dot_dimension_numbers<[1], [0], [0], [1], [0, 0, 1, 1], [], []>} : vector<512x72xbf16>, vector<72x8xbf16>, vector<512x8xf32> -> vector<512x8xf32>
    %c0_3 = arith.constant 0 : index
    %c0_4 = arith.constant 0 : index
    %4 = vector.load %arg3[%c0_3, %c0_4] : memref<1x8xf32, #tpu.memory_space<vmem>>, vector<1x8xf32>
    %5 = vector.broadcast %4 : vector<1x8xf32> to vector<512x8xf32>
    %6 = arith.addf %3, %5 : vector<512x8xf32>
    %cst_5 = arith.constant 0.000000e+00 : f32
    %7 = vector.broadcast %cst_5 : f32 to vector<512x8xf32>
    %8 = arith.maximumf %6, %7 : vector<512x8xf32>
    %c0_6 = arith.constant 0 : index
    %c0_7 = arith.constant 0 : index
    %9 = vector.load %arg4[%c0_6, %c0_7] : memref<512x8xf32, #tpu.memory_space<vmem>>, vector<512x8xf32>
    tpu.vector_store %arg4[%c0_6, %c0_7], %8 {strides = array<i32>} : memref<512x8xf32, #tpu.memory_space<vmem>>, vector<512x8xf32>,
    return
  }
  func.func @transform_0(%arg0: i32) -> (i32, i32) {
    %c0_i32 = arith.constant 0 : i32
    %c0_i32_0 = arith.constant 0 : i32
    %c0_i32_1 = arith.constant 0 : i32
    return %c0_i32, %c0_i32_0 : i32, i32
  }
  func.func @transform_1(%arg0: i32) -> (i32, i32) {
    %c0_i32 = arith.constant 0 : i32
    %c0_i32_0 = arith.constant 0 : i32
    %c0_i32_1 = arith.constant 0 : i32
    return %c0_i32, %c0_i32_0 : i32, i32
  }
  func.func @transform_2(%arg0: i32) -> (i32, i32) {
    %c0_i32 = arith.constant 0 : i32
    %c0_i32_0 = arith.constant 0 : i32
    %c0_i32_1 = arith.constant 0 : i32
    return %c0_i32, %c0_i32_0 : i32, i32
  }
  func.func @transform_3(%arg0: i32) -> (i32, i32) {
    %c0_i32 = arith.constant 0 : i32
    %c0_i32_0 = arith.constant 0 : i32
    %c0_i32_1 = arith.constant 0 : i32
    return %c0_i32, %c0_i32_0 : i32, i32
  }
}

module attributes {stable_mosaic.version = 11 : i64} {
  func.func @_maxpool_kernel(%arg0: i32, %arg1: memref<16x256xf32, #tpu.memory_space<vmem>>, %arg2: memref<16x64xf32, #tpu.memory_space<vmem>>) attributes {dimension_semantics = [#tpu.dimension_semantics<arbitrary>], iteration_bounds = array<i64: 1>, scalar_prefetch = 0 : i64, scratch_operands = 0 : i64, tpu.core_type = #tpu.core_type<tc>, window_params = [{pipeline_mode = #tpu.pipeline_mode<synchronous>, transform_indices = @transform_0, window_bounds = array<i64: 16, 256>}, {pipeline_mode = #tpu.pipeline_mode<synchronous>, transform_indices = @transform_1, window_bounds = array<i64: 16, 64>}]} {
    %c0 = arith.constant 0 : index
    %c0_0 = arith.constant 0 : index
    %0 = vector.load %arg1[%c0, %c0_0] : memref<16x256xf32, #tpu.memory_space<vmem>>, vector<16x256xf32>
    %1 = vector.extract_strided_slice %0 {offsets = [0, 0], sizes = [16, 128], strides = [1, 1]} : vector<16x256xf32> to vector<16x128xf32>
    %2 = vector.extract_strided_slice %0 {offsets = [0, 128], sizes = [16, 128], strides = [1, 1]} : vector<16x256xf32> to vector<16x128xf32>
    %3 = arith.maximumf %1, %2 : vector<16x128xf32>
    %4 = vector.extract_strided_slice %3 {offsets = [0, 0], sizes = [16, 8], strides = [1, 1]} : vector<16x128xf32> to vector<16x8xf32>
    %5 = vector.extract_strided_slice %3 {offsets = [0, 8], sizes = [16, 8], strides = [1, 1]} : vector<16x128xf32> to vector<16x8xf32>
    %6 = arith.maximumf %4, %5 : vector<16x8xf32>
    %7 = vector.extract_strided_slice %3 {offsets = [0, 16], sizes = [16, 8], strides = [1, 1]} : vector<16x128xf32> to vector<16x8xf32>
    %8 = vector.extract_strided_slice %3 {offsets = [0, 24], sizes = [16, 8], strides = [1, 1]} : vector<16x128xf32> to vector<16x8xf32>
    %9 = arith.maximumf %7, %8 : vector<16x8xf32>
    %10 = vector.extract_strided_slice %3 {offsets = [0, 32], sizes = [16, 8], strides = [1, 1]} : vector<16x128xf32> to vector<16x8xf32>
    %11 = vector.extract_strided_slice %3 {offsets = [0, 40], sizes = [16, 8], strides = [1, 1]} : vector<16x128xf32> to vector<16x8xf32>
    %12 = arith.maximumf %10, %11 : vector<16x8xf32>
    %13 = vector.extract_strided_slice %3 {offsets = [0, 48], sizes = [16, 8], strides = [1, 1]} : vector<16x128xf32> to vector<16x8xf32>
    %14 = vector.extract_strided_slice %3 {offsets = [0, 56], sizes = [16, 8], strides = [1, 1]} : vector<16x128xf32> to vector<16x8xf32>
    %15 = arith.maximumf %13, %14 : vector<16x8xf32>
    %16 = vector.extract_strided_slice %3 {offsets = [0, 64], sizes = [16, 8], strides = [1, 1]} : vector<16x128xf32> to vector<16x8xf32>
    %17 = vector.extract_strided_slice %3 {offsets = [0, 72], sizes = [16, 8], strides = [1, 1]} : vector<16x128xf32> to vector<16x8xf32>
    %18 = arith.maximumf %16, %17 : vector<16x8xf32>
    %19 = vector.extract_strided_slice %3 {offsets = [0, 80], sizes = [16, 8], strides = [1, 1]} : vector<16x128xf32> to vector<16x8xf32>
    %20 = vector.extract_strided_slice %3 {offsets = [0, 88], sizes = [16, 8], strides = [1, 1]} : vector<16x128xf32> to vector<16x8xf32>
    %21 = arith.maximumf %19, %20 : vector<16x8xf32>
    %22 = vector.extract_strided_slice %3 {offsets = [0, 96], sizes = [16, 8], strides = [1, 1]} : vector<16x128xf32> to vector<16x8xf32>
    %23 = vector.extract_strided_slice %3 {offsets = [0, 104], sizes = [16, 8], strides = [1, 1]} : vector<16x128xf32> to vector<16x8xf32>
    %24 = arith.maximumf %22, %23 : vector<16x8xf32>
    %25 = vector.extract_strided_slice %3 {offsets = [0, 112], sizes = [16, 8], strides = [1, 1]} : vector<16x128xf32> to vector<16x8xf32>
    %26 = vector.extract_strided_slice %3 {offsets = [0, 120], sizes = [16, 8], strides = [1, 1]} : vector<16x128xf32> to vector<16x8xf32>
    %27 = arith.maximumf %25, %26 : vector<16x8xf32>
    %28 = tpu.concatenate %6, %9, %12, %15, %18, %21, %24, %27 in 1 : vector<16x8xf32>, vector<16x8xf32>, vector<16x8xf32>, vector<16x8xf32>, vector<16x8xf32>, vector<16x8xf32>, vector<16x8xf32>, vector<16x8xf32> -> vector<16x64xf32>
    %c0_1 = arith.constant 0 : index
    %c0_2 = arith.constant 0 : index
    %29 = vector.load %arg2[%c0_1, %c0_2] : memref<16x64xf32, #tpu.memory_space<vmem>>, vector<16x64xf32>
    tpu.vector_store %arg2[%c0_1, %c0_2], %28 {strides = array<i32>} : memref<16x64xf32, #tpu.memory_space<vmem>>, vector<16x64xf32>,
    return
  }
  func.func @transform_0(%arg0: i32) -> (i32, i32) {
    %c0_i32 = arith.constant 0 : i32
    %c0_i32_0 = arith.constant 0 : i32
    %c0_i32_1 = arith.constant 0 : i32
    return %c0_i32, %c0_i32_0 : i32, i32
  }
  func.func @transform_1(%arg0: i32) -> (i32, i32) {
    %c0_i32 = arith.constant 0 : i32
    %c0_i32_0 = arith.constant 0 : i32
    %c0_i32_1 = arith.constant 0 : i32
    return %c0_i32, %c0_i32_0 : i32, i32
  }
}

module attributes {stable_mosaic.version = 11 : i64} {
  func.func @_mm_bias_act_kernel(%arg0: i32, %arg1: memref<32x32xf32, #tpu.memory_space<vmem>>, %arg2: memref<32x32xbf16, #tpu.memory_space<vmem>>, %arg3: memref<1x32xf32, #tpu.memory_space<vmem>>, %arg4: memref<32x32xf32, #tpu.memory_space<vmem>>) attributes {dimension_semantics = [#tpu.dimension_semantics<arbitrary>], iteration_bounds = array<i64: 1>, scalar_prefetch = 0 : i64, scratch_operands = 0 : i64, tpu.core_type = #tpu.core_type<tc>, window_params = [{pipeline_mode = #tpu.pipeline_mode<synchronous>, transform_indices = @transform_0, window_bounds = array<i64: 32, 32>}, {pipeline_mode = #tpu.pipeline_mode<synchronous>, transform_indices = @transform_1, window_bounds = array<i64: 32, 32>}, {pipeline_mode = #tpu.pipeline_mode<synchronous>, transform_indices = @transform_2, window_bounds = array<i64: 1, 32>}, {pipeline_mode = #tpu.pipeline_mode<synchronous>, transform_indices = @transform_3, window_bounds = array<i64: 32, 32>}]} {
    %c0 = arith.constant 0 : index
    %c0_0 = arith.constant 0 : index
    %0 = vector.load %arg1[%c0, %c0_0] : memref<32x32xf32, #tpu.memory_space<vmem>>, vector<32x32xf32>
    %1 = arith.truncf %0 : vector<32x32xf32> to vector<32x32xbf16>
    %c0_1 = arith.constant 0 : index
    %c0_2 = arith.constant 0 : index
    %2 = vector.load %arg2[%c0_1, %c0_2] : memref<32x32xbf16, #tpu.memory_space<vmem>>, vector<32x32xbf16>
    %cst = arith.constant dense<0.000000e+00> : vector<32x32xf32>
    %3 = tpu.matmul %1, %2, %cst {dimension_numbers = #tpu.dot_dimension_numbers<[1], [0], [0], [1], [0, 0, 1, 1], [], []>} : vector<32x32xbf16>, vector<32x32xbf16>, vector<32x32xf32> -> vector<32x32xf32>
    %c0_3 = arith.constant 0 : index
    %c0_4 = arith.constant 0 : index
    %4 = vector.load %arg3[%c0_3, %c0_4] : memref<1x32xf32, #tpu.memory_space<vmem>>, vector<1x32xf32>
    %5 = vector.broadcast %4 : vector<1x32xf32> to vector<32x32xf32>
    %6 = arith.addf %3, %5 : vector<32x32xf32>
    %c0_5 = arith.constant 0 : index
    %c0_6 = arith.constant 0 : index
    %7 = vector.load %arg4[%c0_5, %c0_6] : memref<32x32xf32, #tpu.memory_space<vmem>>, vector<32x32xf32>
    tpu.vector_store %arg4[%c0_5, %c0_6], %6 {strides = array<i32>} : memref<32x32xf32, #tpu.memory_space<vmem>>, vector<32x32xf32>,
    return
  }
  func.func @transform_0(%arg0: i32) -> (i32, i32) {
    %c0_i32 = arith.constant 0 : i32
    %c0_i32_0 = arith.constant 0 : i32
    %c0_i32_1 = arith.constant 0 : i32
    return %c0_i32, %c0_i32_0 : i32, i32
  }
  func.func @transform_1(%arg0: i32) -> (i32, i32) {
    %c0_i32 = arith.constant 0 : i32
    %c0_i32_0 = arith.constant 0 : i32
    %c0_i32_1 = arith.constant 0 : i32
    return %c0_i32, %c0_i32_0 : i32, i32
  }
  func.func @transform_2(%arg0: i32) -> (i32, i32) {
    %c0_i32 = arith.constant 0 : i32
    %c0_i32_0 = arith.constant 0 : i32
    %c0_i32_1 = arith.constant 0 : i32
    return %c0_i32, %c0_i32_0 : i32, i32
  }
  func.func @transform_3(%arg0: i32) -> (i32, i32) {
    %c0_i32 = arith.constant 0 : i32
    %c0_i32_0 = arith.constant 0 : i32
    %c0_i32_1 = arith.constant 0 : i32
    return %c0_i32, %c0_i32_0 : i32, i32
  }
}

module attributes {stable_mosaic.version = 11 : i64} {
  func.func @_encoder_layer_kernel(%arg0: i32, %arg1: memref<32x32xf32, #tpu.memory_space<vmem>>, %arg2: memref<1x32xf32, #tpu.memory_space<vmem>>, %arg3: memref<1x32xf32, #tpu.memory_space<vmem>>, %arg4: memref<32x96xbf16, #tpu.memory_space<vmem>>, %arg5: memref<1x96xf32, #tpu.memory_space<vmem>>, %arg6: memref<32x32xbf16, #tpu.memory_space<vmem>>, %arg7: memref<1x32xf32, #tpu.memory_space<vmem>>, %arg8: memref<1x32xf32, #tpu.memory_space<vmem>>, %arg9: memref<1x32xf32, #tpu.memory_space<vmem>>, %arg10: memref<32x64xbf16, #tpu.memory_space<vmem>>, %arg11: memref<1x64xf32, #tpu.memory_space<vmem>>, %arg12: memref<64x32xbf16, #tpu.memory_space<vmem>>, %arg13: memref<1x32xf32, #tpu.memory_space<vmem>>, %arg14: memref<1x32xf32, #tpu.memory_space<vmem>>, %arg15: memref<1x32xf32, #tpu.memory_space<vmem>>, %arg16: memref<32x32xf32, #tpu.memory_space<vmem>>) attributes {dimension_semantics = [#tpu.dimension_semantics<arbitrary>], iteration_bounds = array<i64: 1>, scalar_prefetch = 0 : i64, scratch_operands = 0 : i64, tpu.core_type = #tpu.core_type<tc>, window_params = [{pipeline_mode = #tpu.pipeline_mode<synchronous>, transform_indices = @transform_0, window_bounds = array<i64: 32, 32>}, {pipeline_mode = #tpu.pipeline_mode<synchronous>, transform_indices = @transform_1, window_bounds = array<i64: 1, 32>}, {pipeline_mode = #tpu.pipeline_mode<synchronous>, transform_indices = @transform_2, window_bounds = array<i64: 1, 32>}, {pipeline_mode = #tpu.pipeline_mode<synchronous>, transform_indices = @transform_3, window_bounds = array<i64: 32, 96>}, {pipeline_mode = #tpu.pipeline_mode<synchronous>, transform_indices = @transform_4, window_bounds = array<i64: 1, 96>}, {pipeline_mode = #tpu.pipeline_mode<synchronous>, transform_indices = @transform_5, window_bounds = array<i64: 32, 32>}, {pipeline_mode = #tpu.pipeline_mode<synchronous>, transform_indices = @transform_6, window_bounds = array<i64: 1, 32>}, {pipeline_mode = #tpu.pipeline_mode<synchronous>, transform_indices = @transform_7, window_bounds = array<i64: 1, 32>}, {pipeline_mode = #tpu.pipeline_mode<synchronous>, transform_indices = @transform_8, window_bounds = array<i64: 1, 32>}, {pipeline_mode = #tpu.pipeline_mode<synchronous>, transform_indices = @transform_9, window_bounds = array<i64: 32, 64>}, {pipeline_mode = #tpu.pipeline_mode<synchronous>, transform_indices = @transform_10, window_bounds = array<i64: 1, 64>}, {pipeline_mode = #tpu.pipeline_mode<synchronous>, transform_indices = @transform_11, window_bounds = array<i64: 64, 32>}, {pipeline_mode = #tpu.pipeline_mode<synchronous>, transform_indices = @transform_12, window_bounds = array<i64: 1, 32>}, {pipeline_mode = #tpu.pipeline_mode<synchronous>, transform_indices = @transform_13, window_bounds = array<i64: 1, 32>}, {pipeline_mode = #tpu.pipeline_mode<synchronous>, transform_indices = @transform_14, window_bounds = array<i64: 1, 32>}, {pipeline_mode = #tpu.pipeline_mode<synchronous>, transform_indices = @transform_15, window_bounds = array<i64: 32, 32>}]} {
    %c0 = arith.constant 0 : index
    %c0_0 = arith.constant 0 : index
    %0 = vector.load %arg1[%c0, %c0_0] : memref<32x32xf32, #tpu.memory_space<vmem>>, vector<32x32xf32>
    %c0_1 = arith.constant 0 : index
    %c0_2 = arith.constant 0 : index
    %1 = vector.load %arg2[%c0_1, %c0_2] : memref<1x32xf32, #tpu.memory_space<vmem>>, vector<1x32xf32>
    %c0_3 = arith.constant 0 : index
    %c0_4 = arith.constant 0 : index
    %2 = vector.load %arg3[%c0_3, %c0_4] : memref<1x32xf32, #tpu.memory_space<vmem>>, vector<1x32xf32>
    %cst = arith.constant dense<0.000000e+00> : vector<32xf32>
    %3 = vector.multi_reduction <add>, %0, %cst [1] : vector<32x32xf32> to vector<32xf32>
    %4 = vector.shape_cast %3 : vector<32xf32> to vector<32x1xf32>
    %cst_5 = arith.constant 3.200000e+01 : f32
    %5 = vector.broadcast %cst_5 : f32 to vector<32x1xf32>
    %6 = arith.divf %4, %5 : vector<32x1xf32>
    %7 = vector.broadcast %6 : vector<32x1xf32> to vector<32x32xf32>
    %8 = arith.subf %0, %7 : vector<32x32xf32>
    %9 = arith.mulf %8, %8 : vector<32x32xf32>
    %cst_6 = arith.constant dense<0.000000e+00> : vector<32xf32>
    %10 = vector.multi_reduction <add>, %9, %cst_6 [1] : vector<32x32xf32> to vector<32xf32>
    %11 = vector.shape_cast %10 : vector<32xf32> to vector<32x1xf32>
    %cst_7 = arith.constant 3.200000e+01 : f32
    %12 = vector.broadcast %cst_7 : f32 to vector<32x1xf32>
    %13 = arith.divf %11, %12 : vector<32x1xf32>
    %14 = vector.broadcast %6 : vector<32x1xf32> to vector<32x32xf32>
    %15 = arith.subf %0, %14 : vector<32x32xf32>
    %cst_8 = arith.constant 9.99999997E-7 : f32
    %16 = vector.broadcast %cst_8 : f32 to vector<32x1xf32>
    %17 = arith.addf %13, %16 : vector<32x1xf32>
    %18 = math.rsqrt %17 : vector<32x1xf32>
    %19 = vector.broadcast %18 : vector<32x1xf32> to vector<32x32xf32>
    %20 = arith.mulf %15, %19 : vector<32x32xf32>
    %21 = vector.broadcast %1 : vector<1x32xf32> to vector<32x32xf32>
    %22 = arith.mulf %20, %21 : vector<32x32xf32>
    %23 = vector.broadcast %2 : vector<1x32xf32> to vector<32x32xf32>
    %24 = arith.addf %22, %23 : vector<32x32xf32>
    %25 = arith.truncf %24 : vector<32x32xf32> to vector<32x32xbf16>
    %c0_9 = arith.constant 0 : index
    %c0_10 = arith.constant 0 : index
    %26 = vector.load %arg4[%c0_9, %c0_10] : memref<32x96xbf16, #tpu.memory_space<vmem>>, vector<32x96xbf16>
    %cst_11 = arith.constant dense<0.000000e+00> : vector<32x96xf32>
    %27 = tpu.matmul %25, %26, %cst_11 {dimension_numbers = #tpu.dot_dimension_numbers<[1], [0], [0], [1], [0, 0, 1, 1], [], []>} : vector<32x32xbf16>, vector<32x96xbf16>, vector<32x96xf32> -> vector<32x96xf32>
    %c0_12 = arith.constant 0 : index
    %c0_13 = arith.constant 0 : index
    %28 = vector.load %arg5[%c0_12, %c0_13] : memref<1x96xf32, #tpu.memory_space<vmem>>, vector<1x96xf32>
    %29 = vector.broadcast %28 : vector<1x96xf32> to vector<32x96xf32>
    %30 = arith.addf %27, %29 : vector<32x96xf32>
    %31 = vector.extract_strided_slice %30 {offsets = [0, 0], sizes = [32, 32], strides = [1, 1]} : vector<32x96xf32> to vector<32x32xf32>
    %32 = vector.extract_strided_slice %30 {offsets = [0, 32], sizes = [32, 32], strides = [1, 1]} : vector<32x96xf32> to vector<32x32xf32>
    %33 = vector.extract_strided_slice %30 {offsets = [0, 64], sizes = [32, 32], strides = [1, 1]} : vector<32x96xf32> to vector<32x32xf32>
    %34 = vector.extract_strided_slice %31 {offsets = [0, 0], sizes = [16, 8], strides = [1, 1]} : vector<32x32xf32> to vector<16x8xf32>
    %35 = vector.extract_strided_slice %32 {offsets = [0, 0], sizes = [16, 8], strides = [1, 1]} : vector<32x32xf32> to vector<16x8xf32>
    %36 = vector.extract_strided_slice %33 {offsets = [0, 0], sizes = [16, 8], strides = [1, 1]} : vector<32x32xf32> to vector<16x8xf32>
    %cst_14 = arith.constant dense<0.000000e+00> : vector<16x16xf32>
    %37 = tpu.matmul %34, %35, %cst_14 {dimension_numbers = #tpu.dot_dimension_numbers<[1], [1], [0], [0], [0, 0, 1, 0], [], []>} : vector<16x8xf32>, vector<16x8xf32>, vector<16x16xf32> -> vector<16x16xf32>
    %cst_15 = arith.constant 0.353553385 : f32
    %38 = vector.broadcast %cst_15 : f32 to vector<16x16xf32>
    %39 = arith.mulf %37, %38 : vector<16x16xf32>
    %cst_16 = arith.constant dense<0xFF800000> : vector<16xf32>
    %40 = vector.multi_reduction <maximumf>, %39, %cst_16 [1] : vector<16x16xf32> to vector<16xf32>
    %41 = vector.shape_cast %40 : vector<16xf32> to vector<16x1xf32>
    %42 = vector.broadcast %41 : vector<16x1xf32> to vector<16x16xf32>
    %43 = arith.subf %39, %42 : vector<16x16xf32>
    %44 = math.exp %43 : vector<16x16xf32>
    %cst_17 = arith.constant dense<0.000000e+00> : vector<16xf32>
    %45 = vector.multi_reduction <add>, %44, %cst_17 [1] : vector<16x16xf32> to vector<16xf32>
    %46 = vector.shape_cast %45 : vector<16xf32> to vector<16x1xf32>
    %47 = vector.broadcast %46 : vector<16x1xf32> to vector<16x16xf32>
    %48 = arith.divf %44, %47 : vector<16x16xf32>
    %cst_18 = arith.constant dense<0.000000e+00> : vector<16x8xf32>
    %49 = tpu.matmul %48, %36, %cst_18 {dimension_numbers = #tpu.dot_dimension_numbers<[1], [0], [0], [1], [0, 0, 1, 1], [], []>} : vector<16x16xf32>, vector<16x8xf32>, vector<16x8xf32> -> vector<16x8xf32>
    %50 = vector.extract_strided_slice %31 {offsets = [0, 8], sizes = [16, 8], strides = [1, 1]} : vector<32x32xf32> to vector<16x8xf32>
    %51 = vector.extract_strided_slice %32 {offsets = [0, 8], sizes = [16, 8], strides = [1, 1]} : vector<32x32xf32> to vector<16x8xf32>
    %52 = vector.extract_strided_slice %33 {offsets = [0, 8], sizes = [16, 8], strides = [1, 1]} : vector<32x32xf32> to vector<16x8xf32>
    %cst_19 = arith.constant dense<0.000000e+00> : vector<16x16xf32>
    %53 = tpu.matmul %50, %51, %cst_19 {dimension_numbers = #tpu.dot_dimension_numbers<[1], [1], [0], [0], [0, 0, 1, 0], [], []>} : vector<16x8xf32>, vector<16x8xf32>, vector<16x16xf32> -> vector<16x16xf32>
    %cst_20 = arith.constant 0.353553385 : f32
    %54 = vector.broadcast %cst_20 : f32 to vector<16x16xf32>
    %55 = arith.mulf %53, %54 : vector<16x16xf32>
    %cst_21 = arith.constant dense<0xFF800000> : vector<16xf32>
    %56 = vector.multi_reduction <maximumf>, %55, %cst_21 [1] : vector<16x16xf32> to vector<16xf32>
    %57 = vector.shape_cast %56 : vector<16xf32> to vector<16x1xf32>
    %58 = vector.broadcast %57 : vector<16x1xf32> to vector<16x16xf32>
    %59 = arith.subf %55, %58 : vector<16x16xf32>
    %60 = math.exp %59 : vector<16x16xf32>
    %cst_22 = arith.constant dense<0.000000e+00> : vector<16xf32>
    %61 = vector.multi_reduction <add>, %60, %cst_22 [1] : vector<16x16xf32> to vector<16xf32>
    %62 = vector.shape_cast %61 : vector<16xf32> to vector<16x1xf32>
    %63 = vector.broadcast %62 : vector<16x1xf32> to vector<16x16xf32>
    %64 = arith.divf %60, %63 : vector<16x16xf32>
    %cst_23 = arith.constant dense<0.000000e+00> : vector<16x8xf32>
    %65 = tpu.matmul %64, %52, %cst_23 {dimension_numbers = #tpu.dot_dimension_numbers<[1], [0], [0], [1], [0, 0, 1, 1], [], []>} : vector<16x16xf32>, vector<16x8xf32>, vector<16x8xf32> -> vector<16x8xf32>
    %66 = vector.extract_strided_slice %31 {offsets = [0, 16], sizes = [16, 8], strides = [1, 1]} : vector<32x32xf32> to vector<16x8xf32>
    %67 = vector.extract_strided_slice %32 {offsets = [0, 16], sizes = [16, 8], strides = [1, 1]} : vector<32x32xf32> to vector<16x8xf32>
    %68 = vector.extract_strided_slice %33 {offsets = [0, 16], sizes = [16, 8], strides = [1, 1]} : vector<32x32xf32> to vector<16x8xf32>
    %cst_24 = arith.constant dense<0.000000e+00> : vector<16x16xf32>
    %69 = tpu.matmul %66, %67, %cst_24 {dimension_numbers = #tpu.dot_dimension_numbers<[1], [1], [0], [0], [0, 0, 1, 0], [], []>} : vector<16x8xf32>, vector<16x8xf32>, vector<16x16xf32> -> vector<16x16xf32>
    %cst_25 = arith.constant 0.353553385 : f32
    %70 = vector.broadcast %cst_25 : f32 to vector<16x16xf32>
    %71 = arith.mulf %69, %70 : vector<16x16xf32>
    %cst_26 = arith.constant dense<0xFF800000> : vector<16xf32>
    %72 = vector.multi_reduction <maximumf>, %71, %cst_26 [1] : vector<16x16xf32> to vector<16xf32>
    %73 = vector.shape_cast %72 : vector<16xf32> to vector<16x1xf32>
    %74 = vector.broadcast %73 : vector<16x1xf32> to vector<16x16xf32>
    %75 = arith.subf %71, %74 : vector<16x16xf32>
    %76 = math.exp %75 : vector<16x16xf32>
    %cst_27 = arith.constant dense<0.000000e+00> : vector<16xf32>
    %77 = vector.multi_reduction <add>, %76, %cst_27 [1] : vector<16x16xf32> to vector<16xf32>
    %78 = vector.shape_cast %77 : vector<16xf32> to vector<16x1xf32>
    %79 = vector.broadcast %78 : vector<16x1xf32> to vector<16x16xf32>
    %80 = arith.divf %76, %79 : vector<16x16xf32>
    %cst_28 = arith.constant dense<0.000000e+00> : vector<16x8xf32>
    %81 = tpu.matmul %80, %68, %cst_28 {dimension_numbers = #tpu.dot_dimension_numbers<[1], [0], [0], [1], [0, 0, 1, 1], [], []>} : vector<16x16xf32>, vector<16x8xf32>, vector<16x8xf32> -> vector<16x8xf32>
    %82 = vector.extract_strided_slice %31 {offsets = [0, 24], sizes = [16, 8], strides = [1, 1]} : vector<32x32xf32> to vector<16x8xf32>
    %83 = vector.extract_strided_slice %32 {offsets = [0, 24], sizes = [16, 8], strides = [1, 1]} : vector<32x32xf32> to vector<16x8xf32>
    %84 = vector.extract_strided_slice %33 {offsets = [0, 24], sizes = [16, 8], strides = [1, 1]} : vector<32x32xf32> to vector<16x8xf32>
    %cst_29 = arith.constant dense<0.000000e+00> : vector<16x16xf32>
    %85 = tpu.matmul %82, %83, %cst_29 {dimension_numbers = #tpu.dot_dimension_numbers<[1], [1], [0], [0], [0, 0, 1, 0], [], []>} : vector<16x8xf32>, vector<16x8xf32>, vector<16x16xf32> -> vector<16x16xf32>
    %cst_30 = arith.constant 0.353553385 : f32
    %86 = vector.broadcast %cst_30 : f32 to vector<16x16xf32>
    %87 = arith.mulf %85, %86 : vector<16x16xf32>
    %cst_31 = arith.constant dense<0xFF800000> : vector<16xf32>
    %88 = vector.multi_reduction <maximumf>, %87, %cst_31 [1] : vector<16x16xf32> to vector<16xf32>
    %89 = vector.shape_cast %88 : vector<16xf32> to vector<16x1xf32>
    %90 = vector.broadcast %89 : vector<16x1xf32> to vector<16x16xf32>
    %91 = arith.subf %87, %90 : vector<16x16xf32>
    %92 = math.exp %91 : vector<16x16xf32>
    %cst_32 = arith.constant dense<0.000000e+00> : vector<16xf32>
    %93 = vector.multi_reduction <add>, %92, %cst_32 [1] : vector<16x16xf32> to vector<16xf32>
    %94 = vector.shape_cast %93 : vector<16xf32> to vector<16x1xf32>
    %95 = vector.broadcast %94 : vector<16x1xf32> to vector<16x16xf32>
    %96 = arith.divf %92, %95 : vector<16x16xf32>
    %cst_33 = arith.constant dense<0.000000e+00> : vector<16x8xf32>
    %97 = tpu.matmul %96, %84, %cst_33 {dimension_numbers = #tpu.dot_dimension_numbers<[1], [0], [0], [1], [0, 0, 1, 1], [], []>} : vector<16x16xf32>, vector<16x8xf32>, vector<16x8xf32> -> vector<16x8xf32>
    %98 = tpu.concatenate %49, %65, %81, %97 in 1 : vector<16x8xf32>, vector<16x8xf32>, vector<16x8xf32>, vector<16x8xf32> -> vector<16x32xf32>
    %99 = vector.extract_strided_slice %31 {offsets = [16, 0], sizes = [16, 8], strides = [1, 1]} : vector<32x32xf32> to vector<16x8xf32>
    %100 = vector.extract_strided_slice %32 {offsets = [16, 0], sizes = [16, 8], strides = [1, 1]} : vector<32x32xf32> to vector<16x8xf32>
    %101 = vector.extract_strided_slice %33 {offsets = [16, 0], sizes = [16, 8], strides = [1, 1]} : vector<32x32xf32> to vector<16x8xf32>
    %cst_34 = arith.constant dense<0.000000e+00> : vector<16x16xf32>
    %102 = tpu.matmul %99, %100, %cst_34 {dimension_numbers = #tpu.dot_dimension_numbers<[1], [1], [0], [0], [0, 0, 1, 0], [], []>} : vector<16x8xf32>, vector<16x8xf32>, vector<16x16xf32> -> vector<16x16xf32>
    %cst_35 = arith.constant 0.353553385 : f32
    %103 = vector.broadcast %cst_35 : f32 to vector<16x16xf32>
    %104 = arith.mulf %102, %103 : vector<16x16xf32>
    %cst_36 = arith.constant dense<0xFF800000> : vector<16xf32>
    %105 = vector.multi_reduction <maximumf>, %104, %cst_36 [1] : vector<16x16xf32> to vector<16xf32>
    %106 = vector.shape_cast %105 : vector<16xf32> to vector<16x1xf32>
    %107 = vector.broadcast %106 : vector<16x1xf32> to vector<16x16xf32>
    %108 = arith.subf %104, %107 : vector<16x16xf32>
    %109 = math.exp %108 : vector<16x16xf32>
    %cst_37 = arith.constant dense<0.000000e+00> : vector<16xf32>
    %110 = vector.multi_reduction <add>, %109, %cst_37 [1] : vector<16x16xf32> to vector<16xf32>
    %111 = vector.shape_cast %110 : vector<16xf32> to vector<16x1xf32>
    %112 = vector.broadcast %111 : vector<16x1xf32> to vector<16x16xf32>
    %113 = arith.divf %109, %112 : vector<16x16xf32>
    %cst_38 = arith.constant dense<0.000000e+00> : vector<16x8xf32>
    %114 = tpu.matmul %113, %101, %cst_38 {dimension_numbers = #tpu.dot_dimension_numbers<[1], [0], [0], [1], [0, 0, 1, 1], [], []>} : vector<16x16xf32>, vector<16x8xf32>, vector<16x8xf32> -> vector<16x8xf32>
    %115 = vector.extract_strided_slice %31 {offsets = [16, 8], sizes = [16, 8], strides = [1, 1]} : vector<32x32xf32> to vector<16x8xf32>
    %116 = vector.extract_strided_slice %32 {offsets = [16, 8], sizes = [16, 8], strides = [1, 1]} : vector<32x32xf32> to vector<16x8xf32>
    %117 = vector.extract_strided_slice %33 {offsets = [16, 8], sizes = [16, 8], strides = [1, 1]} : vector<32x32xf32> to vector<16x8xf32>
    %cst_39 = arith.constant dense<0.000000e+00> : vector<16x16xf32>
    %118 = tpu.matmul %115, %116, %cst_39 {dimension_numbers = #tpu.dot_dimension_numbers<[1], [1], [0], [0], [0, 0, 1, 0], [], []>} : vector<16x8xf32>, vector<16x8xf32>, vector<16x16xf32> -> vector<16x16xf32>
    %cst_40 = arith.constant 0.353553385 : f32
    %119 = vector.broadcast %cst_40 : f32 to vector<16x16xf32>
    %120 = arith.mulf %118, %119 : vector<16x16xf32>
    %cst_41 = arith.constant dense<0xFF800000> : vector<16xf32>
    %121 = vector.multi_reduction <maximumf>, %120, %cst_41 [1] : vector<16x16xf32> to vector<16xf32>
    %122 = vector.shape_cast %121 : vector<16xf32> to vector<16x1xf32>
    %123 = vector.broadcast %122 : vector<16x1xf32> to vector<16x16xf32>
    %124 = arith.subf %120, %123 : vector<16x16xf32>
    %125 = math.exp %124 : vector<16x16xf32>
    %cst_42 = arith.constant dense<0.000000e+00> : vector<16xf32>
    %126 = vector.multi_reduction <add>, %125, %cst_42 [1] : vector<16x16xf32> to vector<16xf32>
    %127 = vector.shape_cast %126 : vector<16xf32> to vector<16x1xf32>
    %128 = vector.broadcast %127 : vector<16x1xf32> to vector<16x16xf32>
    %129 = arith.divf %125, %128 : vector<16x16xf32>
    %cst_43 = arith.constant dense<0.000000e+00> : vector<16x8xf32>
    %130 = tpu.matmul %129, %117, %cst_43 {dimension_numbers = #tpu.dot_dimension_numbers<[1], [0], [0], [1], [0, 0, 1, 1], [], []>} : vector<16x16xf32>, vector<16x8xf32>, vector<16x8xf32> -> vector<16x8xf32>
    %131 = vector.extract_strided_slice %31 {offsets = [16, 16], sizes = [16, 8], strides = [1, 1]} : vector<32x32xf32> to vector<16x8xf32>
    %132 = vector.extract_strided_slice %32 {offsets = [16, 16], sizes = [16, 8], strides = [1, 1]} : vector<32x32xf32> to vector<16x8xf32>
    %133 = vector.extract_strided_slice %33 {offsets = [16, 16], sizes = [16, 8], strides = [1, 1]} : vector<32x32xf32> to vector<16x8xf32>
    %cst_44 = arith.constant dense<0.000000e+00> : vector<16x16xf32>
    %134 = tpu.matmul %131, %132, %cst_44 {dimension_numbers = #tpu.dot_dimension_numbers<[1], [1], [0], [0], [0, 0, 1, 0], [], []>} : vector<16x8xf32>, vector<16x8xf32>, vector<16x16xf32> -> vector<16x16xf32>
    %cst_45 = arith.constant 0.353553385 : f32
    %135 = vector.broadcast %cst_45 : f32 to vector<16x16xf32>
    %136 = arith.mulf %134, %135 : vector<16x16xf32>
    %cst_46 = arith.constant dense<0xFF800000> : vector<16xf32>
    %137 = vector.multi_reduction <maximumf>, %136, %cst_46 [1] : vector<16x16xf32> to vector<16xf32>
    %138 = vector.shape_cast %137 : vector<16xf32> to vector<16x1xf32>
    %139 = vector.broadcast %138 : vector<16x1xf32> to vector<16x16xf32>
    %140 = arith.subf %136, %139 : vector<16x16xf32>
    %141 = math.exp %140 : vector<16x16xf32>
    %cst_47 = arith.constant dense<0.000000e+00> : vector<16xf32>
    %142 = vector.multi_reduction <add>, %141, %cst_47 [1] : vector<16x16xf32> to vector<16xf32>
    %143 = vector.shape_cast %142 : vector<16xf32> to vector<16x1xf32>
    %144 = vector.broadcast %143 : vector<16x1xf32> to vector<16x16xf32>
    %145 = arith.divf %141, %144 : vector<16x16xf32>
    %cst_48 = arith.constant dense<0.000000e+00> : vector<16x8xf32>
    %146 = tpu.matmul %145, %133, %cst_48 {dimension_numbers = #tpu.dot_dimension_numbers<[1], [0], [0], [1], [0, 0, 1, 1], [], []>} : vector<16x16xf32>, vector<16x8xf32>, vector<16x8xf32> -> vector<16x8xf32>
    %147 = vector.extract_strided_slice %31 {offsets = [16, 24], sizes = [16, 8], strides = [1, 1]} : vector<32x32xf32> to vector<16x8xf32>
    %148 = vector.extract_strided_slice %32 {offsets = [16, 24], sizes = [16, 8], strides = [1, 1]} : vector<32x32xf32> to vector<16x8xf32>
    %149 = vector.extract_strided_slice %33 {offsets = [16, 24], sizes = [16, 8], strides = [1, 1]} : vector<32x32xf32> to vector<16x8xf32>
    %cst_49 = arith.constant dense<0.000000e+00> : vector<16x16xf32>
    %150 = tpu.matmul %147, %148, %cst_49 {dimension_numbers = #tpu.dot_dimension_numbers<[1], [1], [0], [0], [0, 0, 1, 0], [], []>} : vector<16x8xf32>, vector<16x8xf32>, vector<16x16xf32> -> vector<16x16xf32>
    %cst_50 = arith.constant 0.353553385 : f32
    %151 = vector.broadcast %cst_50 : f32 to vector<16x16xf32>
    %152 = arith.mulf %150, %151 : vector<16x16xf32>
    %cst_51 = arith.constant dense<0xFF800000> : vector<16xf32>
    %153 = vector.multi_reduction <maximumf>, %152, %cst_51 [1] : vector<16x16xf32> to vector<16xf32>
    %154 = vector.shape_cast %153 : vector<16xf32> to vector<16x1xf32>
    %155 = vector.broadcast %154 : vector<16x1xf32> to vector<16x16xf32>
    %156 = arith.subf %152, %155 : vector<16x16xf32>
    %157 = math.exp %156 : vector<16x16xf32>
    %cst_52 = arith.constant dense<0.000000e+00> : vector<16xf32>
    %158 = vector.multi_reduction <add>, %157, %cst_52 [1] : vector<16x16xf32> to vector<16xf32>
    %159 = vector.shape_cast %158 : vector<16xf32> to vector<16x1xf32>
    %160 = vector.broadcast %159 : vector<16x1xf32> to vector<16x16xf32>
    %161 = arith.divf %157, %160 : vector<16x16xf32>
    %cst_53 = arith.constant dense<0.000000e+00> : vector<16x8xf32>
    %162 = tpu.matmul %161, %149, %cst_53 {dimension_numbers = #tpu.dot_dimension_numbers<[1], [0], [0], [1], [0, 0, 1, 1], [], []>} : vector<16x16xf32>, vector<16x8xf32>, vector<16x8xf32> -> vector<16x8xf32>
    %163 = tpu.concatenate %114, %130, %146, %162 in 1 : vector<16x8xf32>, vector<16x8xf32>, vector<16x8xf32>, vector<16x8xf32> -> vector<16x32xf32>
    %164 = tpu.concatenate %98, %163 in 0 : vector<16x32xf32>, vector<16x32xf32> -> vector<32x32xf32>
    %165 = arith.truncf %164 : vector<32x32xf32> to vector<32x32xbf16>
    %c0_54 = arith.constant 0 : index
    %c0_55 = arith.constant 0 : index
    %166 = vector.load %arg6[%c0_54, %c0_55] : memref<32x32xbf16, #tpu.memory_space<vmem>>, vector<32x32xbf16>
    %cst_56 = arith.constant dense<0.000000e+00> : vector<32x32xf32>
    %167 = tpu.matmul %165, %166, %cst_56 {dimension_numbers = #tpu.dot_dimension_numbers<[1], [0], [0], [1], [0, 0, 1, 1], [], []>} : vector<32x32xbf16>, vector<32x32xbf16>, vector<32x32xf32> -> vector<32x32xf32>
    %c0_57 = arith.constant 0 : index
    %c0_58 = arith.constant 0 : index
    %168 = vector.load %arg7[%c0_57, %c0_58] : memref<1x32xf32, #tpu.memory_space<vmem>>, vector<1x32xf32>
    %169 = vector.broadcast %168 : vector<1x32xf32> to vector<32x32xf32>
    %170 = arith.addf %167, %169 : vector<32x32xf32>
    %171 = arith.addf %0, %170 : vector<32x32xf32>
    %c0_59 = arith.constant 0 : index
    %c0_60 = arith.constant 0 : index
    %172 = vector.load %arg8[%c0_59, %c0_60] : memref<1x32xf32, #tpu.memory_space<vmem>>, vector<1x32xf32>
    %c0_61 = arith.constant 0 : index
    %c0_62 = arith.constant 0 : index
    %173 = vector.load %arg9[%c0_61, %c0_62] : memref<1x32xf32, #tpu.memory_space<vmem>>, vector<1x32xf32>
    %cst_63 = arith.constant dense<0.000000e+00> : vector<32xf32>
    %174 = vector.multi_reduction <add>, %171, %cst_63 [1] : vector<32x32xf32> to vector<32xf32>
    %175 = vector.shape_cast %174 : vector<32xf32> to vector<32x1xf32>
    %cst_64 = arith.constant 3.200000e+01 : f32
    %176 = vector.broadcast %cst_64 : f32 to vector<32x1xf32>
    %177 = arith.divf %175, %176 : vector<32x1xf32>
    %178 = vector.broadcast %177 : vector<32x1xf32> to vector<32x32xf32>
    %179 = arith.subf %171, %178 : vector<32x32xf32>
    %180 = arith.mulf %179, %179 : vector<32x32xf32>
    %cst_65 = arith.constant dense<0.000000e+00> : vector<32xf32>
    %181 = vector.multi_reduction <add>, %180, %cst_65 [1] : vector<32x32xf32> to vector<32xf32>
    %182 = vector.shape_cast %181 : vector<32xf32> to vector<32x1xf32>
    %cst_66 = arith.constant 3.200000e+01 : f32
    %183 = vector.broadcast %cst_66 : f32 to vector<32x1xf32>
    %184 = arith.divf %182, %183 : vector<32x1xf32>
    %185 = vector.broadcast %177 : vector<32x1xf32> to vector<32x32xf32>
    %186 = arith.subf %171, %185 : vector<32x32xf32>
    %cst_67 = arith.constant 9.99999997E-7 : f32
    %187 = vector.broadcast %cst_67 : f32 to vector<32x1xf32>
    %188 = arith.addf %184, %187 : vector<32x1xf32>
    %189 = math.rsqrt %188 : vector<32x1xf32>
    %190 = vector.broadcast %189 : vector<32x1xf32> to vector<32x32xf32>
    %191 = arith.mulf %186, %190 : vector<32x32xf32>
    %192 = vector.broadcast %172 : vector<1x32xf32> to vector<32x32xf32>
    %193 = arith.mulf %191, %192 : vector<32x32xf32>
    %194 = vector.broadcast %173 : vector<1x32xf32> to vector<32x32xf32>
    %195 = arith.addf %193, %194 : vector<32x32xf32>
    %196 = arith.truncf %195 : vector<32x32xf32> to vector<32x32xbf16>
    %c0_68 = arith.constant 0 : index
    %c0_69 = arith.constant 0 : index
    %197 = vector.load %arg10[%c0_68, %c0_69] : memref<32x64xbf16, #tpu.memory_space<vmem>>, vector<32x64xbf16>
    %cst_70 = arith.constant dense<0.000000e+00> : vector<32x64xf32>
    %198 = tpu.matmul %196, %197, %cst_70 {dimension_numbers = #tpu.dot_dimension_numbers<[1], [0], [0], [1], [0, 0, 1, 1], [], []>} : vector<32x32xbf16>, vector<32x64xbf16>, vector<32x64xf32> -> vector<32x64xf32>
    %c0_71 = arith.constant 0 : index
    %c0_72 = arith.constant 0 : index
    %199 = vector.load %arg11[%c0_71, %c0_72] : memref<1x64xf32, #tpu.memory_space<vmem>>, vector<1x64xf32>
    %200 = vector.broadcast %199 : vector<1x64xf32> to vector<32x64xf32>
    %201 = arith.addf %198, %200 : vector<32x64xf32>
    %202 = arith.mulf %201, %201 : vector<32x64xf32>
    %203 = arith.mulf %201, %202 : vector<32x64xf32>
    %cst_73 = arith.constant 4.471500e-02 : f32
    %204 = vector.broadcast %cst_73 : f32 to vector<32x64xf32>
    %205 = arith.mulf %204, %203 : vector<32x64xf32>
    %206 = arith.addf %201, %205 : vector<32x64xf32>
    %cst_74 = arith.constant 0.797884583 : f32
    %207 = vector.broadcast %cst_74 : f32 to vector<32x64xf32>
    %208 = arith.mulf %207, %206 : vector<32x64xf32>
    %209 = math.tanh %208 : vector<32x64xf32>
    %cst_75 = arith.constant 1.000000e+00 : f32
    %210 = vector.broadcast %cst_75 : f32 to vector<32x64xf32>
    %211 = arith.addf %210, %209 : vector<32x64xf32>
    %cst_76 = arith.constant 5.000000e-01 : f32
    %212 = vector.broadcast %cst_76 : f32 to vector<32x64xf32>
    %213 = arith.mulf %212, %211 : vector<32x64xf32>
    %214 = arith.mulf %201, %213 : vector<32x64xf32>
    %215 = arith.truncf %214 : vector<32x64xf32> to vector<32x64xbf16>
    %c0_77 = arith.constant 0 : index
    %c0_78 = arith.constant 0 : index
    %216 = vector.load %arg12[%c0_77, %c0_78] : memref<64x32xbf16, #tpu.memory_space<vmem>>, vector<64x32xbf16>
    %cst_79 = arith.constant dense<0.000000e+00> : vector<32x32xf32>
    %217 = tpu.matmul %215, %216, %cst_79 {dimension_numbers = #tpu.dot_dimension_numbers<[1], [0], [0], [1], [0, 0, 1, 1], [], []>} : vector<32x64xbf16>, vector<64x32xbf16>, vector<32x32xf32> -> vector<32x32xf32>
    %c0_80 = arith.constant 0 : index
    %c0_81 = arith.constant 0 : index
    %218 = vector.load %arg13[%c0_80, %c0_81] : memref<1x32xf32, #tpu.memory_space<vmem>>, vector<1x32xf32>
    %219 = vector.broadcast %218 : vector<1x32xf32> to vector<32x32xf32>
    %220 = arith.addf %217, %219 : vector<32x32xf32>
    %221 = arith.addf %171, %220 : vector<32x32xf32>
    %c0_82 = arith.constant 0 : index
    %c0_83 = arith.constant 0 : index
    %222 = vector.load %arg16[%c0_82, %c0_83] : memref<32x32xf32, #tpu.memory_space<vmem>>, vector<32x32xf32>
    tpu.vector_store %arg16[%c0_82, %c0_83], %221 {strides = array<i32>} : memref<32x32xf32, #tpu.memory_space<vmem>>, vector<32x32xf32>,
    return
  }
  func.func @transform_0(%arg0: i32) -> (i32, i32) {
    %c0_i32 = arith.constant 0 : i32
    %c0_i32_0 = arith.constant 0 : i32
    %c0_i32_1 = arith.constant 0 : i32
    return %c0_i32, %c0_i32_0 : i32, i32
  }
  func.func @transform_1(%arg0: i32) -> (i32, i32) {
    %c0_i32 = arith.constant 0 : i32
    %c0_i32_0 = arith.constant 0 : i32
    %c0_i32_1 = arith.constant 0 : i32
    return %c0_i32, %c0_i32_0 : i32, i32
  }
  func.func @transform_2(%arg0: i32) -> (i32, i32) {
    %c0_i32 = arith.constant 0 : i32
    %c0_i32_0 = arith.constant 0 : i32
    %c0_i32_1 = arith.constant 0 : i32
    return %c0_i32, %c0_i32_0 : i32, i32
  }
  func.func @transform_3(%arg0: i32) -> (i32, i32) {
    %c0_i32 = arith.constant 0 : i32
    %c0_i32_0 = arith.constant 0 : i32
    %c0_i32_1 = arith.constant 0 : i32
    return %c0_i32, %c0_i32_0 : i32, i32
  }
  func.func @transform_4(%arg0: i32) -> (i32, i32) {
    %c0_i32 = arith.constant 0 : i32
    %c0_i32_0 = arith.constant 0 : i32
    %c0_i32_1 = arith.constant 0 : i32
    return %c0_i32, %c0_i32_0 : i32, i32
  }
  func.func @transform_5(%arg0: i32) -> (i32, i32) {
    %c0_i32 = arith.constant 0 : i32
    %c0_i32_0 = arith.constant 0 : i32
    %c0_i32_1 = arith.constant 0 : i32
    return %c0_i32, %c0_i32_0 : i32, i32
  }
  func.func @transform_6(%arg0: i32) -> (i32, i32) {
    %c0_i32 = arith.constant 0 : i32
    %c0_i32_0 = arith.constant 0 : i32
    %c0_i32_1 = arith.constant 0 : i32
    return %c0_i32, %c0_i32_0 : i32, i32
  }
  func.func @transform_7(%arg0: i32) -> (i32, i32) {
    %c0_i32 = arith.constant 0 : i32
    %c0_i32_0 = arith.constant 0 : i32
    %c0_i32_1 = arith.constant 0 : i32
    return %c0_i32, %c0_i32_0 : i32, i32
  }
  func.func @transform_8(%arg0: i32) -> (i32, i32) {
    %c0_i32 = arith.constant 0 : i32
    %c0_i32_0 = arith.constant 0 : i32
    %c0_i32_1 = arith.constant 0 : i32
    return %c0_i32, %c0_i32_0 : i32, i32
  }
  func.func @transform_9(%arg0: i32) -> (i32, i32) {
    %c0_i32 = arith.constant 0 : i32
    %c0_i32_0 = arith.constant 0 : i32
    %c0_i32_1 = arith.constant 0 : i32
    return %c0_i32, %c0_i32_0 : i32, i32
  }
  func.func @transform_10(%arg0: i32) -> (i32, i32) {
    %c0_i32 = arith.constant 0 : i32
    %c0_i32_0 = arith.constant 0 : i32
    %c0_i32_1 = arith.constant 0 : i32
    return %c0_i32, %c0_i32_0 : i32, i32
  }
  func.func @transform_11(%arg0: i32) -> (i32, i32) {
    %c0_i32 = arith.constant 0 : i32
    %c0_i32_0 = arith.constant 0 : i32
    %c0_i32_1 = arith.constant 0 : i32
    return %c0_i32, %c0_i32_0 : i32, i32
  }
  func.func @transform_12(%arg0: i32) -> (i32, i32) {
    %c0_i32 = arith.constant 0 : i32
    %c0_i32_0 = arith.constant 0 : i32
    %c0_i32_1 = arith.constant 0 : i32
    return %c0_i32, %c0_i32_0 : i32, i32
  }
  func.func @transform_13(%arg0: i32) -> (i32, i32) {
    %c0_i32 = arith.constant 0 : i32
    %c0_i32_0 = arith.constant 0 : i32
    %c0_i32_1 = arith.constant 0 : i32
    return %c0_i32, %c0_i32_0 : i32, i32
  }
  func.func @transform_14(%arg0: i32) -> (i32, i32) {
    %c0_i32 = arith.constant 0 : i32
    %c0_i32_0 = arith.constant 0 : i32
    %c0_i32_1 = arith.constant 0 : i32
    return %c0_i32, %c0_i32_0 : i32, i32
  }
  func.func @transform_15(%arg0: i32) -> (i32, i32) {
    %c0_i32 = arith.constant 0 : i32
    %c0_i32_0 = arith.constant 0 : i32
    %c0_i32_1 = arith.constant 0 : i32
    return %c0_i32, %c0_i32_0 : i32, i32
  }
}

module attributes {stable_mosaic.version = 11 : i64} {
  func.func @_encoder_layer_kernel(%arg0: i32, %arg1: memref<32x32xf32, #tpu.memory_space<vmem>>, %arg2: memref<1x32xf32, #tpu.memory_space<vmem>>, %arg3: memref<1x32xf32, #tpu.memory_space<vmem>>, %arg4: memref<32x96xbf16, #tpu.memory_space<vmem>>, %arg5: memref<1x96xf32, #tpu.memory_space<vmem>>, %arg6: memref<32x32xbf16, #tpu.memory_space<vmem>>, %arg7: memref<1x32xf32, #tpu.memory_space<vmem>>, %arg8: memref<1x32xf32, #tpu.memory_space<vmem>>, %arg9: memref<1x32xf32, #tpu.memory_space<vmem>>, %arg10: memref<32x64xbf16, #tpu.memory_space<vmem>>, %arg11: memref<1x64xf32, #tpu.memory_space<vmem>>, %arg12: memref<64x32xbf16, #tpu.memory_space<vmem>>, %arg13: memref<1x32xf32, #tpu.memory_space<vmem>>, %arg14: memref<1x32xf32, #tpu.memory_space<vmem>>, %arg15: memref<1x32xf32, #tpu.memory_space<vmem>>, %arg16: memref<32x32xf32, #tpu.memory_space<vmem>>) attributes {dimension_semantics = [#tpu.dimension_semantics<arbitrary>], iteration_bounds = array<i64: 1>, scalar_prefetch = 0 : i64, scratch_operands = 0 : i64, tpu.core_type = #tpu.core_type<tc>, window_params = [{pipeline_mode = #tpu.pipeline_mode<synchronous>, transform_indices = @transform_0, window_bounds = array<i64: 32, 32>}, {pipeline_mode = #tpu.pipeline_mode<synchronous>, transform_indices = @transform_1, window_bounds = array<i64: 1, 32>}, {pipeline_mode = #tpu.pipeline_mode<synchronous>, transform_indices = @transform_2, window_bounds = array<i64: 1, 32>}, {pipeline_mode = #tpu.pipeline_mode<synchronous>, transform_indices = @transform_3, window_bounds = array<i64: 32, 96>}, {pipeline_mode = #tpu.pipeline_mode<synchronous>, transform_indices = @transform_4, window_bounds = array<i64: 1, 96>}, {pipeline_mode = #tpu.pipeline_mode<synchronous>, transform_indices = @transform_5, window_bounds = array<i64: 32, 32>}, {pipeline_mode = #tpu.pipeline_mode<synchronous>, transform_indices = @transform_6, window_bounds = array<i64: 1, 32>}, {pipeline_mode = #tpu.pipeline_mode<synchronous>, transform_indices = @transform_7, window_bounds = array<i64: 1, 32>}, {pipeline_mode = #tpu.pipeline_mode<synchronous>, transform_indices = @transform_8, window_bounds = array<i64: 1, 32>}, {pipeline_mode = #tpu.pipeline_mode<synchronous>, transform_indices = @transform_9, window_bounds = array<i64: 32, 64>}, {pipeline_mode = #tpu.pipeline_mode<synchronous>, transform_indices = @transform_10, window_bounds = array<i64: 1, 64>}, {pipeline_mode = #tpu.pipeline_mode<synchronous>, transform_indices = @transform_11, window_bounds = array<i64: 64, 32>}, {pipeline_mode = #tpu.pipeline_mode<synchronous>, transform_indices = @transform_12, window_bounds = array<i64: 1, 32>}, {pipeline_mode = #tpu.pipeline_mode<synchronous>, transform_indices = @transform_13, window_bounds = array<i64: 1, 32>}, {pipeline_mode = #tpu.pipeline_mode<synchronous>, transform_indices = @transform_14, window_bounds = array<i64: 1, 32>}, {pipeline_mode = #tpu.pipeline_mode<synchronous>, transform_indices = @transform_15, window_bounds = array<i64: 32, 32>}]} {
    %c0 = arith.constant 0 : index
    %c0_0 = arith.constant 0 : index
    %0 = vector.load %arg1[%c0, %c0_0] : memref<32x32xf32, #tpu.memory_space<vmem>>, vector<32x32xf32>
    %c0_1 = arith.constant 0 : index
    %c0_2 = arith.constant 0 : index
    %1 = vector.load %arg2[%c0_1, %c0_2] : memref<1x32xf32, #tpu.memory_space<vmem>>, vector<1x32xf32>
    %c0_3 = arith.constant 0 : index
    %c0_4 = arith.constant 0 : index
    %2 = vector.load %arg3[%c0_3, %c0_4] : memref<1x32xf32, #tpu.memory_space<vmem>>, vector<1x32xf32>
    %cst = arith.constant dense<0.000000e+00> : vector<32xf32>
    %3 = vector.multi_reduction <add>, %0, %cst [1] : vector<32x32xf32> to vector<32xf32>
    %4 = vector.shape_cast %3 : vector<32xf32> to vector<32x1xf32>
    %cst_5 = arith.constant 3.200000e+01 : f32
    %5 = vector.broadcast %cst_5 : f32 to vector<32x1xf32>
    %6 = arith.divf %4, %5 : vector<32x1xf32>
    %7 = vector.broadcast %6 : vector<32x1xf32> to vector<32x32xf32>
    %8 = arith.subf %0, %7 : vector<32x32xf32>
    %9 = arith.mulf %8, %8 : vector<32x32xf32>
    %cst_6 = arith.constant dense<0.000000e+00> : vector<32xf32>
    %10 = vector.multi_reduction <add>, %9, %cst_6 [1] : vector<32x32xf32> to vector<32xf32>
    %11 = vector.shape_cast %10 : vector<32xf32> to vector<32x1xf32>
    %cst_7 = arith.constant 3.200000e+01 : f32
    %12 = vector.broadcast %cst_7 : f32 to vector<32x1xf32>
    %13 = arith.divf %11, %12 : vector<32x1xf32>
    %14 = vector.broadcast %6 : vector<32x1xf32> to vector<32x32xf32>
    %15 = arith.subf %0, %14 : vector<32x32xf32>
    %cst_8 = arith.constant 9.99999997E-7 : f32
    %16 = vector.broadcast %cst_8 : f32 to vector<32x1xf32>
    %17 = arith.addf %13, %16 : vector<32x1xf32>
    %18 = math.rsqrt %17 : vector<32x1xf32>
    %19 = vector.broadcast %18 : vector<32x1xf32> to vector<32x32xf32>
    %20 = arith.mulf %15, %19 : vector<32x32xf32>
    %21 = vector.broadcast %1 : vector<1x32xf32> to vector<32x32xf32>
    %22 = arith.mulf %20, %21 : vector<32x32xf32>
    %23 = vector.broadcast %2 : vector<1x32xf32> to vector<32x32xf32>
    %24 = arith.addf %22, %23 : vector<32x32xf32>
    %25 = arith.truncf %24 : vector<32x32xf32> to vector<32x32xbf16>
    %c0_9 = arith.constant 0 : index
    %c0_10 = arith.constant 0 : index
    %26 = vector.load %arg4[%c0_9, %c0_10] : memref<32x96xbf16, #tpu.memory_space<vmem>>, vector<32x96xbf16>
    %cst_11 = arith.constant dense<0.000000e+00> : vector<32x96xf32>
    %27 = tpu.matmul %25, %26, %cst_11 {dimension_numbers = #tpu.dot_dimension_numbers<[1], [0], [0], [1], [0, 0, 1, 1], [], []>} : vector<32x32xbf16>, vector<32x96xbf16>, vector<32x96xf32> -> vector<32x96xf32>
    %c0_12 = arith.constant 0 : index
    %c0_13 = arith.constant 0 : index
    %28 = vector.load %arg5[%c0_12, %c0_13] : memref<1x96xf32, #tpu.memory_space<vmem>>, vector<1x96xf32>
    %29 = vector.broadcast %28 : vector<1x96xf32> to vector<32x96xf32>
    %30 = arith.addf %27, %29 : vector<32x96xf32>
    %31 = vector.extract_strided_slice %30 {offsets = [0, 0], sizes = [32, 32], strides = [1, 1]} : vector<32x96xf32> to vector<32x32xf32>
    %32 = vector.extract_strided_slice %30 {offsets = [0, 32], sizes = [32, 32], strides = [1, 1]} : vector<32x96xf32> to vector<32x32xf32>
    %33 = vector.extract_strided_slice %30 {offsets = [0, 64], sizes = [32, 32], strides = [1, 1]} : vector<32x96xf32> to vector<32x32xf32>
    %34 = vector.extract_strided_slice %31 {offsets = [0, 0], sizes = [16, 8], strides = [1, 1]} : vector<32x32xf32> to vector<16x8xf32>
    %35 = vector.extract_strided_slice %32 {offsets = [0, 0], sizes = [16, 8], strides = [1, 1]} : vector<32x32xf32> to vector<16x8xf32>
    %36 = vector.extract_strided_slice %33 {offsets = [0, 0], sizes = [16, 8], strides = [1, 1]} : vector<32x32xf32> to vector<16x8xf32>
    %cst_14 = arith.constant dense<0.000000e+00> : vector<16x16xf32>
    %37 = tpu.matmul %34, %35, %cst_14 {dimension_numbers = #tpu.dot_dimension_numbers<[1], [1], [0], [0], [0, 0, 1, 0], [], []>} : vector<16x8xf32>, vector<16x8xf32>, vector<16x16xf32> -> vector<16x16xf32>
    %cst_15 = arith.constant 0.353553385 : f32
    %38 = vector.broadcast %cst_15 : f32 to vector<16x16xf32>
    %39 = arith.mulf %37, %38 : vector<16x16xf32>
    %cst_16 = arith.constant dense<0xFF800000> : vector<16xf32>
    %40 = vector.multi_reduction <maximumf>, %39, %cst_16 [1] : vector<16x16xf32> to vector<16xf32>
    %41 = vector.shape_cast %40 : vector<16xf32> to vector<16x1xf32>
    %42 = vector.broadcast %41 : vector<16x1xf32> to vector<16x16xf32>
    %43 = arith.subf %39, %42 : vector<16x16xf32>
    %44 = math.exp %43 : vector<16x16xf32>
    %cst_17 = arith.constant dense<0.000000e+00> : vector<16xf32>
    %45 = vector.multi_reduction <add>, %44, %cst_17 [1] : vector<16x16xf32> to vector<16xf32>
    %46 = vector.shape_cast %45 : vector<16xf32> to vector<16x1xf32>
    %47 = vector.broadcast %46 : vector<16x1xf32> to vector<16x16xf32>
    %48 = arith.divf %44, %47 : vector<16x16xf32>
    %cst_18 = arith.constant dense<0.000000e+00> : vector<16x8xf32>
    %49 = tpu.matmul %48, %36, %cst_18 {dimension_numbers = #tpu.dot_dimension_numbers<[1], [0], [0], [1], [0, 0, 1, 1], [], []>} : vector<16x16xf32>, vector<16x8xf32>, vector<16x8xf32> -> vector<16x8xf32>
    %50 = vector.extract_strided_slice %31 {offsets = [0, 8], sizes = [16, 8], strides = [1, 1]} : vector<32x32xf32> to vector<16x8xf32>
    %51 = vector.extract_strided_slice %32 {offsets = [0, 8], sizes = [16, 8], strides = [1, 1]} : vector<32x32xf32> to vector<16x8xf32>
    %52 = vector.extract_strided_slice %33 {offsets = [0, 8], sizes = [16, 8], strides = [1, 1]} : vector<32x32xf32> to vector<16x8xf32>
    %cst_19 = arith.constant dense<0.000000e+00> : vector<16x16xf32>
    %53 = tpu.matmul %50, %51, %cst_19 {dimension_numbers = #tpu.dot_dimension_numbers<[1], [1], [0], [0], [0, 0, 1, 0], [], []>} : vector<16x8xf32>, vector<16x8xf32>, vector<16x16xf32> -> vector<16x16xf32>
    %cst_20 = arith.constant 0.353553385 : f32
    %54 = vector.broadcast %cst_20 : f32 to vector<16x16xf32>
    %55 = arith.mulf %53, %54 : vector<16x16xf32>
    %cst_21 = arith.constant dense<0xFF800000> : vector<16xf32>
    %56 = vector.multi_reduction <maximumf>, %55, %cst_21 [1] : vector<16x16xf32> to vector<16xf32>
    %57 = vector.shape_cast %56 : vector<16xf32> to vector<16x1xf32>
    %58 = vector.broadcast %57 : vector<16x1xf32> to vector<16x16xf32>
    %59 = arith.subf %55, %58 : vector<16x16xf32>
    %60 = math.exp %59 : vector<16x16xf32>
    %cst_22 = arith.constant dense<0.000000e+00> : vector<16xf32>
    %61 = vector.multi_reduction <add>, %60, %cst_22 [1] : vector<16x16xf32> to vector<16xf32>
    %62 = vector.shape_cast %61 : vector<16xf32> to vector<16x1xf32>
    %63 = vector.broadcast %62 : vector<16x1xf32> to vector<16x16xf32>
    %64 = arith.divf %60, %63 : vector<16x16xf32>
    %cst_23 = arith.constant dense<0.000000e+00> : vector<16x8xf32>
    %65 = tpu.matmul %64, %52, %cst_23 {dimension_numbers = #tpu.dot_dimension_numbers<[1], [0], [0], [1], [0, 0, 1, 1], [], []>} : vector<16x16xf32>, vector<16x8xf32>, vector<16x8xf32> -> vector<16x8xf32>
    %66 = vector.extract_strided_slice %31 {offsets = [0, 16], sizes = [16, 8], strides = [1, 1]} : vector<32x32xf32> to vector<16x8xf32>
    %67 = vector.extract_strided_slice %32 {offsets = [0, 16], sizes = [16, 8], strides = [1, 1]} : vector<32x32xf32> to vector<16x8xf32>
    %68 = vector.extract_strided_slice %33 {offsets = [0, 16], sizes = [16, 8], strides = [1, 1]} : vector<32x32xf32> to vector<16x8xf32>
    %cst_24 = arith.constant dense<0.000000e+00> : vector<16x16xf32>
    %69 = tpu.matmul %66, %67, %cst_24 {dimension_numbers = #tpu.dot_dimension_numbers<[1], [1], [0], [0], [0, 0, 1, 0], [], []>} : vector<16x8xf32>, vector<16x8xf32>, vector<16x16xf32> -> vector<16x16xf32>
    %cst_25 = arith.constant 0.353553385 : f32
    %70 = vector.broadcast %cst_25 : f32 to vector<16x16xf32>
    %71 = arith.mulf %69, %70 : vector<16x16xf32>
    %cst_26 = arith.constant dense<0xFF800000> : vector<16xf32>
    %72 = vector.multi_reduction <maximumf>, %71, %cst_26 [1] : vector<16x16xf32> to vector<16xf32>
    %73 = vector.shape_cast %72 : vector<16xf32> to vector<16x1xf32>
    %74 = vector.broadcast %73 : vector<16x1xf32> to vector<16x16xf32>
    %75 = arith.subf %71, %74 : vector<16x16xf32>
    %76 = math.exp %75 : vector<16x16xf32>
    %cst_27 = arith.constant dense<0.000000e+00> : vector<16xf32>
    %77 = vector.multi_reduction <add>, %76, %cst_27 [1] : vector<16x16xf32> to vector<16xf32>
    %78 = vector.shape_cast %77 : vector<16xf32> to vector<16x1xf32>
    %79 = vector.broadcast %78 : vector<16x1xf32> to vector<16x16xf32>
    %80 = arith.divf %76, %79 : vector<16x16xf32>
    %cst_28 = arith.constant dense<0.000000e+00> : vector<16x8xf32>
    %81 = tpu.matmul %80, %68, %cst_28 {dimension_numbers = #tpu.dot_dimension_numbers<[1], [0], [0], [1], [0, 0, 1, 1], [], []>} : vector<16x16xf32>, vector<16x8xf32>, vector<16x8xf32> -> vector<16x8xf32>
    %82 = vector.extract_strided_slice %31 {offsets = [0, 24], sizes = [16, 8], strides = [1, 1]} : vector<32x32xf32> to vector<16x8xf32>
    %83 = vector.extract_strided_slice %32 {offsets = [0, 24], sizes = [16, 8], strides = [1, 1]} : vector<32x32xf32> to vector<16x8xf32>
    %84 = vector.extract_strided_slice %33 {offsets = [0, 24], sizes = [16, 8], strides = [1, 1]} : vector<32x32xf32> to vector<16x8xf32>
    %cst_29 = arith.constant dense<0.000000e+00> : vector<16x16xf32>
    %85 = tpu.matmul %82, %83, %cst_29 {dimension_numbers = #tpu.dot_dimension_numbers<[1], [1], [0], [0], [0, 0, 1, 0], [], []>} : vector<16x8xf32>, vector<16x8xf32>, vector<16x16xf32> -> vector<16x16xf32>
    %cst_30 = arith.constant 0.353553385 : f32
    %86 = vector.broadcast %cst_30 : f32 to vector<16x16xf32>
    %87 = arith.mulf %85, %86 : vector<16x16xf32>
    %cst_31 = arith.constant dense<0xFF800000> : vector<16xf32>
    %88 = vector.multi_reduction <maximumf>, %87, %cst_31 [1] : vector<16x16xf32> to vector<16xf32>
    %89 = vector.shape_cast %88 : vector<16xf32> to vector<16x1xf32>
    %90 = vector.broadcast %89 : vector<16x1xf32> to vector<16x16xf32>
    %91 = arith.subf %87, %90 : vector<16x16xf32>
    %92 = math.exp %91 : vector<16x16xf32>
    %cst_32 = arith.constant dense<0.000000e+00> : vector<16xf32>
    %93 = vector.multi_reduction <add>, %92, %cst_32 [1] : vector<16x16xf32> to vector<16xf32>
    %94 = vector.shape_cast %93 : vector<16xf32> to vector<16x1xf32>
    %95 = vector.broadcast %94 : vector<16x1xf32> to vector<16x16xf32>
    %96 = arith.divf %92, %95 : vector<16x16xf32>
    %cst_33 = arith.constant dense<0.000000e+00> : vector<16x8xf32>
    %97 = tpu.matmul %96, %84, %cst_33 {dimension_numbers = #tpu.dot_dimension_numbers<[1], [0], [0], [1], [0, 0, 1, 1], [], []>} : vector<16x16xf32>, vector<16x8xf32>, vector<16x8xf32> -> vector<16x8xf32>
    %98 = tpu.concatenate %49, %65, %81, %97 in 1 : vector<16x8xf32>, vector<16x8xf32>, vector<16x8xf32>, vector<16x8xf32> -> vector<16x32xf32>
    %99 = vector.extract_strided_slice %31 {offsets = [16, 0], sizes = [16, 8], strides = [1, 1]} : vector<32x32xf32> to vector<16x8xf32>
    %100 = vector.extract_strided_slice %32 {offsets = [16, 0], sizes = [16, 8], strides = [1, 1]} : vector<32x32xf32> to vector<16x8xf32>
    %101 = vector.extract_strided_slice %33 {offsets = [16, 0], sizes = [16, 8], strides = [1, 1]} : vector<32x32xf32> to vector<16x8xf32>
    %cst_34 = arith.constant dense<0.000000e+00> : vector<16x16xf32>
    %102 = tpu.matmul %99, %100, %cst_34 {dimension_numbers = #tpu.dot_dimension_numbers<[1], [1], [0], [0], [0, 0, 1, 0], [], []>} : vector<16x8xf32>, vector<16x8xf32>, vector<16x16xf32> -> vector<16x16xf32>
    %cst_35 = arith.constant 0.353553385 : f32
    %103 = vector.broadcast %cst_35 : f32 to vector<16x16xf32>
    %104 = arith.mulf %102, %103 : vector<16x16xf32>
    %cst_36 = arith.constant dense<0xFF800000> : vector<16xf32>
    %105 = vector.multi_reduction <maximumf>, %104, %cst_36 [1] : vector<16x16xf32> to vector<16xf32>
    %106 = vector.shape_cast %105 : vector<16xf32> to vector<16x1xf32>
    %107 = vector.broadcast %106 : vector<16x1xf32> to vector<16x16xf32>
    %108 = arith.subf %104, %107 : vector<16x16xf32>
    %109 = math.exp %108 : vector<16x16xf32>
    %cst_37 = arith.constant dense<0.000000e+00> : vector<16xf32>
    %110 = vector.multi_reduction <add>, %109, %cst_37 [1] : vector<16x16xf32> to vector<16xf32>
    %111 = vector.shape_cast %110 : vector<16xf32> to vector<16x1xf32>
    %112 = vector.broadcast %111 : vector<16x1xf32> to vector<16x16xf32>
    %113 = arith.divf %109, %112 : vector<16x16xf32>
    %cst_38 = arith.constant dense<0.000000e+00> : vector<16x8xf32>
    %114 = tpu.matmul %113, %101, %cst_38 {dimension_numbers = #tpu.dot_dimension_numbers<[1], [0], [0], [1], [0, 0, 1, 1], [], []>} : vector<16x16xf32>, vector<16x8xf32>, vector<16x8xf32> -> vector<16x8xf32>
    %115 = vector.extract_strided_slice %31 {offsets = [16, 8], sizes = [16, 8], strides = [1, 1]} : vector<32x32xf32> to vector<16x8xf32>
    %116 = vector.extract_strided_slice %32 {offsets = [16, 8], sizes = [16, 8], strides = [1, 1]} : vector<32x32xf32> to vector<16x8xf32>
    %117 = vector.extract_strided_slice %33 {offsets = [16, 8], sizes = [16, 8], strides = [1, 1]} : vector<32x32xf32> to vector<16x8xf32>
    %cst_39 = arith.constant dense<0.000000e+00> : vector<16x16xf32>
    %118 = tpu.matmul %115, %116, %cst_39 {dimension_numbers = #tpu.dot_dimension_numbers<[1], [1], [0], [0], [0, 0, 1, 0], [], []>} : vector<16x8xf32>, vector<16x8xf32>, vector<16x16xf32> -> vector<16x16xf32>
    %cst_40 = arith.constant 0.353553385 : f32
    %119 = vector.broadcast %cst_40 : f32 to vector<16x16xf32>
    %120 = arith.mulf %118, %119 : vector<16x16xf32>
    %cst_41 = arith.constant dense<0xFF800000> : vector<16xf32>
    %121 = vector.multi_reduction <maximumf>, %120, %cst_41 [1] : vector<16x16xf32> to vector<16xf32>
    %122 = vector.shape_cast %121 : vector<16xf32> to vector<16x1xf32>
    %123 = vector.broadcast %122 : vector<16x1xf32> to vector<16x16xf32>
    %124 = arith.subf %120, %123 : vector<16x16xf32>
    %125 = math.exp %124 : vector<16x16xf32>
    %cst_42 = arith.constant dense<0.000000e+00> : vector<16xf32>
    %126 = vector.multi_reduction <add>, %125, %cst_42 [1] : vector<16x16xf32> to vector<16xf32>
    %127 = vector.shape_cast %126 : vector<16xf32> to vector<16x1xf32>
    %128 = vector.broadcast %127 : vector<16x1xf32> to vector<16x16xf32>
    %129 = arith.divf %125, %128 : vector<16x16xf32>
    %cst_43 = arith.constant dense<0.000000e+00> : vector<16x8xf32>
    %130 = tpu.matmul %129, %117, %cst_43 {dimension_numbers = #tpu.dot_dimension_numbers<[1], [0], [0], [1], [0, 0, 1, 1], [], []>} : vector<16x16xf32>, vector<16x8xf32>, vector<16x8xf32> -> vector<16x8xf32>
    %131 = vector.extract_strided_slice %31 {offsets = [16, 16], sizes = [16, 8], strides = [1, 1]} : vector<32x32xf32> to vector<16x8xf32>
    %132 = vector.extract_strided_slice %32 {offsets = [16, 16], sizes = [16, 8], strides = [1, 1]} : vector<32x32xf32> to vector<16x8xf32>
    %133 = vector.extract_strided_slice %33 {offsets = [16, 16], sizes = [16, 8], strides = [1, 1]} : vector<32x32xf32> to vector<16x8xf32>
    %cst_44 = arith.constant dense<0.000000e+00> : vector<16x16xf32>
    %134 = tpu.matmul %131, %132, %cst_44 {dimension_numbers = #tpu.dot_dimension_numbers<[1], [1], [0], [0], [0, 0, 1, 0], [], []>} : vector<16x8xf32>, vector<16x8xf32>, vector<16x16xf32> -> vector<16x16xf32>
    %cst_45 = arith.constant 0.353553385 : f32
    %135 = vector.broadcast %cst_45 : f32 to vector<16x16xf32>
    %136 = arith.mulf %134, %135 : vector<16x16xf32>
    %cst_46 = arith.constant dense<0xFF800000> : vector<16xf32>
    %137 = vector.multi_reduction <maximumf>, %136, %cst_46 [1] : vector<16x16xf32> to vector<16xf32>
    %138 = vector.shape_cast %137 : vector<16xf32> to vector<16x1xf32>
    %139 = vector.broadcast %138 : vector<16x1xf32> to vector<16x16xf32>
    %140 = arith.subf %136, %139 : vector<16x16xf32>
    %141 = math.exp %140 : vector<16x16xf32>
    %cst_47 = arith.constant dense<0.000000e+00> : vector<16xf32>
    %142 = vector.multi_reduction <add>, %141, %cst_47 [1] : vector<16x16xf32> to vector<16xf32>
    %143 = vector.shape_cast %142 : vector<16xf32> to vector<16x1xf32>
    %144 = vector.broadcast %143 : vector<16x1xf32> to vector<16x16xf32>
    %145 = arith.divf %141, %144 : vector<16x16xf32>
    %cst_48 = arith.constant dense<0.000000e+00> : vector<16x8xf32>
    %146 = tpu.matmul %145, %133, %cst_48 {dimension_numbers = #tpu.dot_dimension_numbers<[1], [0], [0], [1], [0, 0, 1, 1], [], []>} : vector<16x16xf32>, vector<16x8xf32>, vector<16x8xf32> -> vector<16x8xf32>
    %147 = vector.extract_strided_slice %31 {offsets = [16, 24], sizes = [16, 8], strides = [1, 1]} : vector<32x32xf32> to vector<16x8xf32>
    %148 = vector.extract_strided_slice %32 {offsets = [16, 24], sizes = [16, 8], strides = [1, 1]} : vector<32x32xf32> to vector<16x8xf32>
    %149 = vector.extract_strided_slice %33 {offsets = [16, 24], sizes = [16, 8], strides = [1, 1]} : vector<32x32xf32> to vector<16x8xf32>
    %cst_49 = arith.constant dense<0.000000e+00> : vector<16x16xf32>
    %150 = tpu.matmul %147, %148, %cst_49 {dimension_numbers = #tpu.dot_dimension_numbers<[1], [1], [0], [0], [0, 0, 1, 0], [], []>} : vector<16x8xf32>, vector<16x8xf32>, vector<16x16xf32> -> vector<16x16xf32>
    %cst_50 = arith.constant 0.353553385 : f32
    %151 = vector.broadcast %cst_50 : f32 to vector<16x16xf32>
    %152 = arith.mulf %150, %151 : vector<16x16xf32>
    %cst_51 = arith.constant dense<0xFF800000> : vector<16xf32>
    %153 = vector.multi_reduction <maximumf>, %152, %cst_51 [1] : vector<16x16xf32> to vector<16xf32>
    %154 = vector.shape_cast %153 : vector<16xf32> to vector<16x1xf32>
    %155 = vector.broadcast %154 : vector<16x1xf32> to vector<16x16xf32>
    %156 = arith.subf %152, %155 : vector<16x16xf32>
    %157 = math.exp %156 : vector<16x16xf32>
    %cst_52 = arith.constant dense<0.000000e+00> : vector<16xf32>
    %158 = vector.multi_reduction <add>, %157, %cst_52 [1] : vector<16x16xf32> to vector<16xf32>
    %159 = vector.shape_cast %158 : vector<16xf32> to vector<16x1xf32>
    %160 = vector.broadcast %159 : vector<16x1xf32> to vector<16x16xf32>
    %161 = arith.divf %157, %160 : vector<16x16xf32>
    %cst_53 = arith.constant dense<0.000000e+00> : vector<16x8xf32>
    %162 = tpu.matmul %161, %149, %cst_53 {dimension_numbers = #tpu.dot_dimension_numbers<[1], [0], [0], [1], [0, 0, 1, 1], [], []>} : vector<16x16xf32>, vector<16x8xf32>, vector<16x8xf32> -> vector<16x8xf32>
    %163 = tpu.concatenate %114, %130, %146, %162 in 1 : vector<16x8xf32>, vector<16x8xf32>, vector<16x8xf32>, vector<16x8xf32> -> vector<16x32xf32>
    %164 = tpu.concatenate %98, %163 in 0 : vector<16x32xf32>, vector<16x32xf32> -> vector<32x32xf32>
    %165 = arith.truncf %164 : vector<32x32xf32> to vector<32x32xbf16>
    %c0_54 = arith.constant 0 : index
    %c0_55 = arith.constant 0 : index
    %166 = vector.load %arg6[%c0_54, %c0_55] : memref<32x32xbf16, #tpu.memory_space<vmem>>, vector<32x32xbf16>
    %cst_56 = arith.constant dense<0.000000e+00> : vector<32x32xf32>
    %167 = tpu.matmul %165, %166, %cst_56 {dimension_numbers = #tpu.dot_dimension_numbers<[1], [0], [0], [1], [0, 0, 1, 1], [], []>} : vector<32x32xbf16>, vector<32x32xbf16>, vector<32x32xf32> -> vector<32x32xf32>
    %c0_57 = arith.constant 0 : index
    %c0_58 = arith.constant 0 : index
    %168 = vector.load %arg7[%c0_57, %c0_58] : memref<1x32xf32, #tpu.memory_space<vmem>>, vector<1x32xf32>
    %169 = vector.broadcast %168 : vector<1x32xf32> to vector<32x32xf32>
    %170 = arith.addf %167, %169 : vector<32x32xf32>
    %171 = arith.addf %0, %170 : vector<32x32xf32>
    %c0_59 = arith.constant 0 : index
    %c0_60 = arith.constant 0 : index
    %172 = vector.load %arg8[%c0_59, %c0_60] : memref<1x32xf32, #tpu.memory_space<vmem>>, vector<1x32xf32>
    %c0_61 = arith.constant 0 : index
    %c0_62 = arith.constant 0 : index
    %173 = vector.load %arg9[%c0_61, %c0_62] : memref<1x32xf32, #tpu.memory_space<vmem>>, vector<1x32xf32>
    %cst_63 = arith.constant dense<0.000000e+00> : vector<32xf32>
    %174 = vector.multi_reduction <add>, %171, %cst_63 [1] : vector<32x32xf32> to vector<32xf32>
    %175 = vector.shape_cast %174 : vector<32xf32> to vector<32x1xf32>
    %cst_64 = arith.constant 3.200000e+01 : f32
    %176 = vector.broadcast %cst_64 : f32 to vector<32x1xf32>
    %177 = arith.divf %175, %176 : vector<32x1xf32>
    %178 = vector.broadcast %177 : vector<32x1xf32> to vector<32x32xf32>
    %179 = arith.subf %171, %178 : vector<32x32xf32>
    %180 = arith.mulf %179, %179 : vector<32x32xf32>
    %cst_65 = arith.constant dense<0.000000e+00> : vector<32xf32>
    %181 = vector.multi_reduction <add>, %180, %cst_65 [1] : vector<32x32xf32> to vector<32xf32>
    %182 = vector.shape_cast %181 : vector<32xf32> to vector<32x1xf32>
    %cst_66 = arith.constant 3.200000e+01 : f32
    %183 = vector.broadcast %cst_66 : f32 to vector<32x1xf32>
    %184 = arith.divf %182, %183 : vector<32x1xf32>
    %185 = vector.broadcast %177 : vector<32x1xf32> to vector<32x32xf32>
    %186 = arith.subf %171, %185 : vector<32x32xf32>
    %cst_67 = arith.constant 9.99999997E-7 : f32
    %187 = vector.broadcast %cst_67 : f32 to vector<32x1xf32>
    %188 = arith.addf %184, %187 : vector<32x1xf32>
    %189 = math.rsqrt %188 : vector<32x1xf32>
    %190 = vector.broadcast %189 : vector<32x1xf32> to vector<32x32xf32>
    %191 = arith.mulf %186, %190 : vector<32x32xf32>
    %192 = vector.broadcast %172 : vector<1x32xf32> to vector<32x32xf32>
    %193 = arith.mulf %191, %192 : vector<32x32xf32>
    %194 = vector.broadcast %173 : vector<1x32xf32> to vector<32x32xf32>
    %195 = arith.addf %193, %194 : vector<32x32xf32>
    %196 = arith.truncf %195 : vector<32x32xf32> to vector<32x32xbf16>
    %c0_68 = arith.constant 0 : index
    %c0_69 = arith.constant 0 : index
    %197 = vector.load %arg10[%c0_68, %c0_69] : memref<32x64xbf16, #tpu.memory_space<vmem>>, vector<32x64xbf16>
    %cst_70 = arith.constant dense<0.000000e+00> : vector<32x64xf32>
    %198 = tpu.matmul %196, %197, %cst_70 {dimension_numbers = #tpu.dot_dimension_numbers<[1], [0], [0], [1], [0, 0, 1, 1], [], []>} : vector<32x32xbf16>, vector<32x64xbf16>, vector<32x64xf32> -> vector<32x64xf32>
    %c0_71 = arith.constant 0 : index
    %c0_72 = arith.constant 0 : index
    %199 = vector.load %arg11[%c0_71, %c0_72] : memref<1x64xf32, #tpu.memory_space<vmem>>, vector<1x64xf32>
    %200 = vector.broadcast %199 : vector<1x64xf32> to vector<32x64xf32>
    %201 = arith.addf %198, %200 : vector<32x64xf32>
    %202 = arith.mulf %201, %201 : vector<32x64xf32>
    %203 = arith.mulf %201, %202 : vector<32x64xf32>
    %cst_73 = arith.constant 4.471500e-02 : f32
    %204 = vector.broadcast %cst_73 : f32 to vector<32x64xf32>
    %205 = arith.mulf %204, %203 : vector<32x64xf32>
    %206 = arith.addf %201, %205 : vector<32x64xf32>
    %cst_74 = arith.constant 0.797884583 : f32
    %207 = vector.broadcast %cst_74 : f32 to vector<32x64xf32>
    %208 = arith.mulf %207, %206 : vector<32x64xf32>
    %209 = math.tanh %208 : vector<32x64xf32>
    %cst_75 = arith.constant 1.000000e+00 : f32
    %210 = vector.broadcast %cst_75 : f32 to vector<32x64xf32>
    %211 = arith.addf %210, %209 : vector<32x64xf32>
    %cst_76 = arith.constant 5.000000e-01 : f32
    %212 = vector.broadcast %cst_76 : f32 to vector<32x64xf32>
    %213 = arith.mulf %212, %211 : vector<32x64xf32>
    %214 = arith.mulf %201, %213 : vector<32x64xf32>
    %215 = arith.truncf %214 : vector<32x64xf32> to vector<32x64xbf16>
    %c0_77 = arith.constant 0 : index
    %c0_78 = arith.constant 0 : index
    %216 = vector.load %arg12[%c0_77, %c0_78] : memref<64x32xbf16, #tpu.memory_space<vmem>>, vector<64x32xbf16>
    %cst_79 = arith.constant dense<0.000000e+00> : vector<32x32xf32>
    %217 = tpu.matmul %215, %216, %cst_79 {dimension_numbers = #tpu.dot_dimension_numbers<[1], [0], [0], [1], [0, 0, 1, 1], [], []>} : vector<32x64xbf16>, vector<64x32xbf16>, vector<32x32xf32> -> vector<32x32xf32>
    %c0_80 = arith.constant 0 : index
    %c0_81 = arith.constant 0 : index
    %218 = vector.load %arg13[%c0_80, %c0_81] : memref<1x32xf32, #tpu.memory_space<vmem>>, vector<1x32xf32>
    %219 = vector.broadcast %218 : vector<1x32xf32> to vector<32x32xf32>
    %220 = arith.addf %217, %219 : vector<32x32xf32>
    %221 = arith.addf %171, %220 : vector<32x32xf32>
    %c0_82 = arith.constant 0 : index
    %c0_83 = arith.constant 0 : index
    %222 = vector.load %arg14[%c0_82, %c0_83] : memref<1x32xf32, #tpu.memory_space<vmem>>, vector<1x32xf32>
    %c0_84 = arith.constant 0 : index
    %c0_85 = arith.constant 0 : index
    %223 = vector.load %arg15[%c0_84, %c0_85] : memref<1x32xf32, #tpu.memory_space<vmem>>, vector<1x32xf32>
    %cst_86 = arith.constant dense<0.000000e+00> : vector<32xf32>
    %224 = vector.multi_reduction <add>, %221, %cst_86 [1] : vector<32x32xf32> to vector<32xf32>
    %225 = vector.shape_cast %224 : vector<32xf32> to vector<32x1xf32>
    %cst_87 = arith.constant 3.200000e+01 : f32
    %226 = vector.broadcast %cst_87 : f32 to vector<32x1xf32>
    %227 = arith.divf %225, %226 : vector<32x1xf32>
    %228 = vector.broadcast %227 : vector<32x1xf32> to vector<32x32xf32>
    %229 = arith.subf %221, %228 : vector<32x32xf32>
    %230 = arith.mulf %229, %229 : vector<32x32xf32>
    %cst_88 = arith.constant dense<0.000000e+00> : vector<32xf32>
    %231 = vector.multi_reduction <add>, %230, %cst_88 [1] : vector<32x32xf32> to vector<32xf32>
    %232 = vector.shape_cast %231 : vector<32xf32> to vector<32x1xf32>
    %cst_89 = arith.constant 3.200000e+01 : f32
    %233 = vector.broadcast %cst_89 : f32 to vector<32x1xf32>
    %234 = arith.divf %232, %233 : vector<32x1xf32>
    %235 = vector.broadcast %227 : vector<32x1xf32> to vector<32x32xf32>
    %236 = arith.subf %221, %235 : vector<32x32xf32>
    %cst_90 = arith.constant 9.99999997E-7 : f32
    %237 = vector.broadcast %cst_90 : f32 to vector<32x1xf32>
    %238 = arith.addf %234, %237 : vector<32x1xf32>
    %239 = math.rsqrt %238 : vector<32x1xf32>
    %240 = vector.broadcast %239 : vector<32x1xf32> to vector<32x32xf32>
    %241 = arith.mulf %236, %240 : vector<32x32xf32>
    %242 = vector.broadcast %222 : vector<1x32xf32> to vector<32x32xf32>
    %243 = arith.mulf %241, %242 : vector<32x32xf32>
    %244 = vector.broadcast %223 : vector<1x32xf32> to vector<32x32xf32>
    %245 = arith.addf %243, %244 : vector<32x32xf32>
    %c0_91 = arith.constant 0 : index
    %c0_92 = arith.constant 0 : index
    %246 = vector.load %arg16[%c0_91, %c0_92] : memref<32x32xf32, #tpu.memory_space<vmem>>, vector<32x32xf32>
    tpu.vector_store %arg16[%c0_91, %c0_92], %245 {strides = array<i32>} : memref<32x32xf32, #tpu.memory_space<vmem>>, vector<32x32xf32>,
    return
  }
  func.func @transform_0(%arg0: i32) -> (i32, i32) {
    %c0_i32 = arith.constant 0 : i32
    %c0_i32_0 = arith.constant 0 : i32
    %c0_i32_1 = arith.constant 0 : i32
    return %c0_i32, %c0_i32_0 : i32, i32
  }
  func.func @transform_1(%arg0: i32) -> (i32, i32) {
    %c0_i32 = arith.constant 0 : i32
    %c0_i32_0 = arith.constant 0 : i32
    %c0_i32_1 = arith.constant 0 : i32
    return %c0_i32, %c0_i32_0 : i32, i32
  }
  func.func @transform_2(%arg0: i32) -> (i32, i32) {
    %c0_i32 = arith.constant 0 : i32
    %c0_i32_0 = arith.constant 0 : i32
    %c0_i32_1 = arith.constant 0 : i32
    return %c0_i32, %c0_i32_0 : i32, i32
  }
  func.func @transform_3(%arg0: i32) -> (i32, i32) {
    %c0_i32 = arith.constant 0 : i32
    %c0_i32_0 = arith.constant 0 : i32
    %c0_i32_1 = arith.constant 0 : i32
    return %c0_i32, %c0_i32_0 : i32, i32
  }
  func.func @transform_4(%arg0: i32) -> (i32, i32) {
    %c0_i32 = arith.constant 0 : i32
    %c0_i32_0 = arith.constant 0 : i32
    %c0_i32_1 = arith.constant 0 : i32
    return %c0_i32, %c0_i32_0 : i32, i32
  }
  func.func @transform_5(%arg0: i32) -> (i32, i32) {
    %c0_i32 = arith.constant 0 : i32
    %c0_i32_0 = arith.constant 0 : i32
    %c0_i32_1 = arith.constant 0 : i32
    return %c0_i32, %c0_i32_0 : i32, i32
  }
  func.func @transform_6(%arg0: i32) -> (i32, i32) {
    %c0_i32 = arith.constant 0 : i32
    %c0_i32_0 = arith.constant 0 : i32
    %c0_i32_1 = arith.constant 0 : i32
    return %c0_i32, %c0_i32_0 : i32, i32
  }
  func.func @transform_7(%arg0: i32) -> (i32, i32) {
    %c0_i32 = arith.constant 0 : i32
    %c0_i32_0 = arith.constant 0 : i32
    %c0_i32_1 = arith.constant 0 : i32
    return %c0_i32, %c0_i32_0 : i32, i32
  }
  func.func @transform_8(%arg0: i32) -> (i32, i32) {
    %c0_i32 = arith.constant 0 : i32
    %c0_i32_0 = arith.constant 0 : i32
    %c0_i32_1 = arith.constant 0 : i32
    return %c0_i32, %c0_i32_0 : i32, i32
  }
  func.func @transform_9(%arg0: i32) -> (i32, i32) {
    %c0_i32 = arith.constant 0 : i32
    %c0_i32_0 = arith.constant 0 : i32
    %c0_i32_1 = arith.constant 0 : i32
    return %c0_i32, %c0_i32_0 : i32, i32
  }
  func.func @transform_10(%arg0: i32) -> (i32, i32) {
    %c0_i32 = arith.constant 0 : i32
    %c0_i32_0 = arith.constant 0 : i32
    %c0_i32_1 = arith.constant 0 : i32
    return %c0_i32, %c0_i32_0 : i32, i32
  }
  func.func @transform_11(%arg0: i32) -> (i32, i32) {
    %c0_i32 = arith.constant 0 : i32
    %c0_i32_0 = arith.constant 0 : i32
    %c0_i32_1 = arith.constant 0 : i32
    return %c0_i32, %c0_i32_0 : i32, i32
  }
  func.func @transform_12(%arg0: i32) -> (i32, i32) {
    %c0_i32 = arith.constant 0 : i32
    %c0_i32_0 = arith.constant 0 : i32
    %c0_i32_1 = arith.constant 0 : i32
    return %c0_i32, %c0_i32_0 : i32, i32
  }
  func.func @transform_13(%arg0: i32) -> (i32, i32) {
    %c0_i32 = arith.constant 0 : i32
    %c0_i32_0 = arith.constant 0 : i32
    %c0_i32_1 = arith.constant 0 : i32
    return %c0_i32, %c0_i32_0 : i32, i32
  }
  func.func @transform_14(%arg0: i32) -> (i32, i32) {
    %c0_i32 = arith.constant 0 : i32
    %c0_i32_0 = arith.constant 0 : i32
    %c0_i32_1 = arith.constant 0 : i32
    return %c0_i32, %c0_i32_0 : i32, i32
  }
  func.func @transform_15(%arg0: i32) -> (i32, i32) {
    %c0_i32 = arith.constant 0 : i32
    %c0_i32_0 = arith.constant 0 : i32
    %c0_i32_1 = arith.constant 0 : i32
    return %c0_i32, %c0_i32_0 : i32, i32
  }
}

module attributes {stable_mosaic.version = 11 : i64} {
  func.func @_mm_bias_act_kernel(%arg0: i32, %arg1: memref<32x288xf32, #tpu.memory_space<vmem>>, %arg2: memref<288x16xbf16, #tpu.memory_space<vmem>>, %arg3: memref<1x16xf32, #tpu.memory_space<vmem>>, %arg4: memref<32x16xf32, #tpu.memory_space<vmem>>) attributes {dimension_semantics = [#tpu.dimension_semantics<arbitrary>], iteration_bounds = array<i64: 1>, scalar_prefetch = 0 : i64, scratch_operands = 0 : i64, tpu.core_type = #tpu.core_type<tc>, window_params = [{pipeline_mode = #tpu.pipeline_mode<synchronous>, transform_indices = @transform_0, window_bounds = array<i64: 32, 288>}, {pipeline_mode = #tpu.pipeline_mode<synchronous>, transform_indices = @transform_1, window_bounds = array<i64: 288, 16>}, {pipeline_mode = #tpu.pipeline_mode<synchronous>, transform_indices = @transform_2, window_bounds = array<i64: 1, 16>}, {pipeline_mode = #tpu.pipeline_mode<synchronous>, transform_indices = @transform_3, window_bounds = array<i64: 32, 16>}]} {
    %c0 = arith.constant 0 : index
    %c0_0 = arith.constant 0 : index
    %0 = vector.load %arg1[%c0, %c0_0] : memref<32x288xf32, #tpu.memory_space<vmem>>, vector<32x288xf32>
    %1 = arith.truncf %0 : vector<32x288xf32> to vector<32x288xbf16>
    %c0_1 = arith.constant 0 : index
    %c0_2 = arith.constant 0 : index
    %2 = vector.load %arg2[%c0_1, %c0_2] : memref<288x16xbf16, #tpu.memory_space<vmem>>, vector<288x16xbf16>
    %cst = arith.constant dense<0.000000e+00> : vector<32x16xf32>
    %3 = tpu.matmul %1, %2, %cst {dimension_numbers = #tpu.dot_dimension_numbers<[1], [0], [0], [1], [0, 0, 1, 1], [], []>} : vector<32x288xbf16>, vector<288x16xbf16>, vector<32x16xf32> -> vector<32x16xf32>
    %c0_3 = arith.constant 0 : index
    %c0_4 = arith.constant 0 : index
    %4 = vector.load %arg3[%c0_3, %c0_4] : memref<1x16xf32, #tpu.memory_space<vmem>>, vector<1x16xf32>
    %5 = vector.broadcast %4 : vector<1x16xf32> to vector<32x16xf32>
    %6 = arith.addf %3, %5 : vector<32x16xf32>
    %cst_5 = arith.constant 0.000000e+00 : f32
    %7 = vector.broadcast %cst_5 : f32 to vector<32x16xf32>
    %8 = arith.maximumf %6, %7 : vector<32x16xf32>
    %c0_6 = arith.constant 0 : index
    %c0_7 = arith.constant 0 : index
    %9 = vector.load %arg4[%c0_6, %c0_7] : memref<32x16xf32, #tpu.memory_space<vmem>>, vector<32x16xf32>
    tpu.vector_store %arg4[%c0_6, %c0_7], %8 {strides = array<i32>} : memref<32x16xf32, #tpu.memory_space<vmem>>, vector<32x16xf32>,
    return
  }
  func.func @transform_0(%arg0: i32) -> (i32, i32) {
    %c0_i32 = arith.constant 0 : i32
    %c0_i32_0 = arith.constant 0 : i32
    %c0_i32_1 = arith.constant 0 : i32
    return %c0_i32, %c0_i32_0 : i32, i32
  }
  func.func @transform_1(%arg0: i32) -> (i32, i32) {
    %c0_i32 = arith.constant 0 : i32
    %c0_i32_0 = arith.constant 0 : i32
    %c0_i32_1 = arith.constant 0 : i32
    return %c0_i32, %c0_i32_0 : i32, i32
  }
  func.func @transform_2(%arg0: i32) -> (i32, i32) {
    %c0_i32 = arith.constant 0 : i32
    %c0_i32_0 = arith.constant 0 : i32
    %c0_i32_1 = arith.constant 0 : i32
    return %c0_i32, %c0_i32_0 : i32, i32
  }
  func.func @transform_3(%arg0: i32) -> (i32, i32) {
    %c0_i32 = arith.constant 0 : i32
    %c0_i32_0 = arith.constant 0 : i32
    %c0_i32_1 = arith.constant 0 : i32
    return %c0_i32, %c0_i32_0 : i32, i32
  }
}

module attributes {stable_mosaic.version = 11 : i64} {
  func.func @_mm_bias_act_kernel(%arg0: i32, %arg1: memref<128x144xf32, #tpu.memory_space<vmem>>, %arg2: memref<144x16xbf16, #tpu.memory_space<vmem>>, %arg3: memref<1x16xf32, #tpu.memory_space<vmem>>, %arg4: memref<128x16xf32, #tpu.memory_space<vmem>>) attributes {dimension_semantics = [#tpu.dimension_semantics<arbitrary>], iteration_bounds = array<i64: 1>, scalar_prefetch = 0 : i64, scratch_operands = 0 : i64, tpu.core_type = #tpu.core_type<tc>, window_params = [{pipeline_mode = #tpu.pipeline_mode<synchronous>, transform_indices = @transform_0, window_bounds = array<i64: 128, 144>}, {pipeline_mode = #tpu.pipeline_mode<synchronous>, transform_indices = @transform_1, window_bounds = array<i64: 144, 16>}, {pipeline_mode = #tpu.pipeline_mode<synchronous>, transform_indices = @transform_2, window_bounds = array<i64: 1, 16>}, {pipeline_mode = #tpu.pipeline_mode<synchronous>, transform_indices = @transform_3, window_bounds = array<i64: 128, 16>}]} {
    %c0 = arith.constant 0 : index
    %c0_0 = arith.constant 0 : index
    %0 = vector.load %arg1[%c0, %c0_0] : memref<128x144xf32, #tpu.memory_space<vmem>>, vector<128x144xf32>
    %1 = arith.truncf %0 : vector<128x144xf32> to vector<128x144xbf16>
    %c0_1 = arith.constant 0 : index
    %c0_2 = arith.constant 0 : index
    %2 = vector.load %arg2[%c0_1, %c0_2] : memref<144x16xbf16, #tpu.memory_space<vmem>>, vector<144x16xbf16>
    %cst = arith.constant dense<0.000000e+00> : vector<128x16xf32>
    %3 = tpu.matmul %1, %2, %cst {dimension_numbers = #tpu.dot_dimension_numbers<[1], [0], [0], [1], [0, 0, 1, 1], [], []>} : vector<128x144xbf16>, vector<144x16xbf16>, vector<128x16xf32> -> vector<128x16xf32>
    %c0_3 = arith.constant 0 : index
    %c0_4 = arith.constant 0 : index
    %4 = vector.load %arg3[%c0_3, %c0_4] : memref<1x16xf32, #tpu.memory_space<vmem>>, vector<1x16xf32>
    %5 = vector.broadcast %4 : vector<1x16xf32> to vector<128x16xf32>
    %6 = arith.addf %3, %5 : vector<128x16xf32>
    %cst_5 = arith.constant 0.000000e+00 : f32
    %7 = vector.broadcast %cst_5 : f32 to vector<128x16xf32>
    %8 = arith.maximumf %6, %7 : vector<128x16xf32>
    %c0_6 = arith.constant 0 : index
    %c0_7 = arith.constant 0 : index
    %9 = vector.load %arg4[%c0_6, %c0_7] : memref<128x16xf32, #tpu.memory_space<vmem>>, vector<128x16xf32>
    tpu.vector_store %arg4[%c0_6, %c0_7], %8 {strides = array<i32>} : memref<128x16xf32, #tpu.memory_space<vmem>>, vector<128x16xf32>,
    return
  }
  func.func @transform_0(%arg0: i32) -> (i32, i32) {
    %c0_i32 = arith.constant 0 : i32
    %c0_i32_0 = arith.constant 0 : i32
    %c0_i32_1 = arith.constant 0 : i32
    return %c0_i32, %c0_i32_0 : i32, i32
  }
  func.func @transform_1(%arg0: i32) -> (i32, i32) {
    %c0_i32 = arith.constant 0 : i32
    %c0_i32_0 = arith.constant 0 : i32
    %c0_i32_1 = arith.constant 0 : i32
    return %c0_i32, %c0_i32_0 : i32, i32
  }
  func.func @transform_2(%arg0: i32) -> (i32, i32) {
    %c0_i32 = arith.constant 0 : i32
    %c0_i32_0 = arith.constant 0 : i32
    %c0_i32_1 = arith.constant 0 : i32
    return %c0_i32, %c0_i32_0 : i32, i32
  }
  func.func @transform_3(%arg0: i32) -> (i32, i32) {
    %c0_i32 = arith.constant 0 : i32
    %c0_i32_0 = arith.constant 0 : i32
    %c0_i32_1 = arith.constant 0 : i32
    return %c0_i32, %c0_i32_0 : i32, i32
  }
}

module attributes {stable_mosaic.version = 11 : i64} {
  func.func @_mm_bias_act_kernel(%arg0: i32, %arg1: memref<512x216xf32, #tpu.memory_space<vmem>>, %arg2: memref<216x8xbf16, #tpu.memory_space<vmem>>, %arg3: memref<1x8xf32, #tpu.memory_space<vmem>>, %arg4: memref<512x8xf32, #tpu.memory_space<vmem>>) attributes {dimension_semantics = [#tpu.dimension_semantics<arbitrary>], iteration_bounds = array<i64: 1>, scalar_prefetch = 0 : i64, scratch_operands = 0 : i64, tpu.core_type = #tpu.core_type<tc>, window_params = [{pipeline_mode = #tpu.pipeline_mode<synchronous>, transform_indices = @transform_0, window_bounds = array<i64: 512, 216>}, {pipeline_mode = #tpu.pipeline_mode<synchronous>, transform_indices = @transform_1, window_bounds = array<i64: 216, 8>}, {pipeline_mode = #tpu.pipeline_mode<synchronous>, transform_indices = @transform_2, window_bounds = array<i64: 1, 8>}, {pipeline_mode = #tpu.pipeline_mode<synchronous>, transform_indices = @transform_3, window_bounds = array<i64: 512, 8>}]} {
    %c0 = arith.constant 0 : index
    %c0_0 = arith.constant 0 : index
    %0 = vector.load %arg1[%c0, %c0_0] : memref<512x216xf32, #tpu.memory_space<vmem>>, vector<512x216xf32>
    %1 = arith.truncf %0 : vector<512x216xf32> to vector<512x216xbf16>
    %c0_1 = arith.constant 0 : index
    %c0_2 = arith.constant 0 : index
    %2 = vector.load %arg2[%c0_1, %c0_2] : memref<216x8xbf16, #tpu.memory_space<vmem>>, vector<216x8xbf16>
    %cst = arith.constant dense<0.000000e+00> : vector<512x8xf32>
    %3 = tpu.matmul %1, %2, %cst {dimension_numbers = #tpu.dot_dimension_numbers<[1], [0], [0], [1], [0, 0, 1, 1], [], []>} : vector<512x216xbf16>, vector<216x8xbf16>, vector<512x8xf32> -> vector<512x8xf32>
    %c0_3 = arith.constant 0 : index
    %c0_4 = arith.constant 0 : index
    %4 = vector.load %arg3[%c0_3, %c0_4] : memref<1x8xf32, #tpu.memory_space<vmem>>, vector<1x8xf32>
    %5 = vector.broadcast %4 : vector<1x8xf32> to vector<512x8xf32>
    %6 = arith.addf %3, %5 : vector<512x8xf32>
    %cst_5 = arith.constant 0.000000e+00 : f32
    %7 = vector.broadcast %cst_5 : f32 to vector<512x8xf32>
    %8 = arith.maximumf %6, %7 : vector<512x8xf32>
    %c0_6 = arith.constant 0 : index
    %c0_7 = arith.constant 0 : index
    %9 = vector.load %arg4[%c0_6, %c0_7] : memref<512x8xf32, #tpu.memory_space<vmem>>, vector<512x8xf32>
    tpu.vector_store %arg4[%c0_6, %c0_7], %8 {strides = array<i32>} : memref<512x8xf32, #tpu.memory_space<vmem>>, vector<512x8xf32>,
    return
  }
  func.func @transform_0(%arg0: i32) -> (i32, i32) {
    %c0_i32 = arith.constant 0 : i32
    %c0_i32_0 = arith.constant 0 : i32
    %c0_i32_1 = arith.constant 0 : i32
    return %c0_i32, %c0_i32_0 : i32, i32
  }
  func.func @transform_1(%arg0: i32) -> (i32, i32) {
    %c0_i32 = arith.constant 0 : i32
    %c0_i32_0 = arith.constant 0 : i32
    %c0_i32_1 = arith.constant 0 : i32
    return %c0_i32, %c0_i32_0 : i32, i32
  }
  func.func @transform_2(%arg0: i32) -> (i32, i32) {
    %c0_i32 = arith.constant 0 : i32
    %c0_i32_0 = arith.constant 0 : i32
    %c0_i32_1 = arith.constant 0 : i32
    return %c0_i32, %c0_i32_0 : i32, i32
  }
  func.func @transform_3(%arg0: i32) -> (i32, i32) {
    %c0_i32 = arith.constant 0 : i32
    %c0_i32_0 = arith.constant 0 : i32
    %c0_i32_1 = arith.constant 0 : i32
    return %c0_i32, %c0_i32_0 : i32, i32
  }
}

module attributes {stable_mosaic.version = 11 : i64} {
  func.func @_conv1x1_out_kernel(%arg0: i32, %arg1: memref<392x8xf32, #tpu.memory_space<vmem>>, %arg2: memref<1x8xf32, #tpu.memory_space<vmem>>, %arg3: memref<1x1xf32, #tpu.memory_space<vmem>>, %arg4: memref<392x1xf32, #tpu.memory_space<vmem>>) attributes {dimension_semantics = [#tpu.dimension_semantics<arbitrary>], iteration_bounds = array<i64: 1>, scalar_prefetch = 0 : i64, scratch_operands = 0 : i64, tpu.core_type = #tpu.core_type<tc>, window_params = [{pipeline_mode = #tpu.pipeline_mode<synchronous>, transform_indices = @transform_0, window_bounds = array<i64: 392, 8>}, {pipeline_mode = #tpu.pipeline_mode<synchronous>, transform_indices = @transform_1, window_bounds = array<i64: 1, 8>}, {pipeline_mode = #tpu.pipeline_mode<synchronous>, transform_indices = @transform_2, window_bounds = array<i64: 1, 1>}, {pipeline_mode = #tpu.pipeline_mode<synchronous>, transform_indices = @transform_3, window_bounds = array<i64: 392, 1>}]} {
    %c0 = arith.constant 0 : index
    %c0_0 = arith.constant 0 : index
    %0 = vector.load %arg1[%c0, %c0_0] : memref<392x8xf32, #tpu.memory_space<vmem>>, vector<392x8xf32>
    %c0_1 = arith.constant 0 : index
    %c0_2 = arith.constant 0 : index
    %1 = vector.load %arg2[%c0_1, %c0_2] : memref<1x8xf32, #tpu.memory_space<vmem>>, vector<1x8xf32>
    %2 = vector.broadcast %1 : vector<1x8xf32> to vector<392x8xf32>
    %3 = arith.mulf %0, %2 : vector<392x8xf32>
    %cst = arith.constant dense<0.000000e+00> : vector<392xf32>
    %4 = vector.multi_reduction <add>, %3, %cst [1] : vector<392x8xf32> to vector<392xf32>
    %5 = vector.shape_cast %4 : vector<392xf32> to vector<392x1xf32>
    %c0_3 = arith.constant 0 : index
    %c0_4 = arith.constant 0 : index
    %6 = vector.load %arg3[%c0_3, %c0_4] : memref<1x1xf32, #tpu.memory_space<vmem>>, vector<1x1xf32>
    %7 = vector.broadcast %6 : vector<1x1xf32> to vector<392x1xf32>
    %8 = arith.addf %5, %7 : vector<392x1xf32>
    %c0_5 = arith.constant 0 : index
    %c0_6 = arith.constant 0 : index
    %9 = vector.load %arg4[%c0_5, %c0_6] : memref<392x1xf32, #tpu.memory_space<vmem>>, vector<392x1xf32>
    tpu.vector_store %arg4[%c0_5, %c0_6], %8 {strides = array<i32>} : memref<392x1xf32, #tpu.memory_space<vmem>>, vector<392x1xf32>,
    return
  }
  func.func @transform_0(%arg0: i32) -> (i32, i32) {
    %c0_i32 = arith.constant 0 : i32
    %c0_i32_0 = arith.constant 0 : i32
    %c0_i32_1 = arith.constant 0 : i32
    return %c0_i32, %c0_i32_0 : i32, i32
  }
  func.func @transform_1(%arg0: i32) -> (i32, i32) {
    %c0_i32 = arith.constant 0 : i32
    %c0_i32_0 = arith.constant 0 : i32
    %c0_i32_1 = arith.constant 0 : i32
    return %c0_i32, %c0_i32_0 : i32, i32
  }
  func.func @transform_2(%arg0: i32) -> (i32, i32) {
    %c0_i32 = arith.constant 0 : i32
    %c0_i32_0 = arith.constant 0 : i32
    %c0_i32_1 = arith.constant 0 : i32
    return %c0_i32, %c0_i32_0 : i32, i32
  }
  func.func @transform_3(%arg0: i32) -> (i32, i32) {
    %c0_i32 = arith.constant 0 : i32
    %c0_i32_0 = arith.constant 0 : i32
    %c0_i32_1 = arith.constant 0 : i32
    return %c0_i32, %c0_i32_0 : i32, i32
  }
}

</mosaic_0001>

<llo_original>
// kernel: vision_transformer_forward.10
$region0: #{vision_transformer_forward.10}
  #allocation0 [shape = 'u32[]', space=smem, size = 0x4, offset = 0x4, fixed_abs, tag = 'smem constant byte address 0x4 - core index']
  #allocation1 [shape = 'u32[144,128]{1,0:T(1,128)}', space=vmem, size = 0x12000, scoped, tag = 'internal scratch']
  %s0 = inlined_call_operand.vmem [shape: f32[512,36], index: 0, kind: input, shape index: {}]
  %s1 = inlined_call_operand.vmem [shape: bf16[36,8], index: 1, kind: input, shape index: {}]
  %s2 = inlined_call_operand.vmem [shape: f32[1,8], index: 2, kind: input, shape index: {}]
  %s3 = inlined_call_operand.vmem [shape: f32[512,8], index: 3, kind: output, shape index: {}]
  %s4 = sld [smem:[#allocation0]]
  $region22: #{vision_transformer_forward.10} parent=0
    _
  %s6 = ssub.s32 1, %s4
  %s7 = scalar_select 0, %s6, %s4
  // Predicated region
  $region2: #{vision_transformer_forward.10} parent=0 // pred_check
    _
  $region3: #{vision_transformer_forward.10} parent=0 // pred_check_branch
    %9 = sbr.rel (0) target = $region5
  $region4: #{vision_transformer_forward.10} parent=0 // pred_region
    _
  $region5: #{vision_transformer_forward.10} parent=0 // pred_fallthru
    _
  // Predicated region
  $region6: #{vision_transformer_forward.10} parent=0 // pred_check
    _
  $region7: #{vision_transformer_forward.10} parent=0 // pred_check_branch
    %11 = sbr.rel (0) target = $region9
  $region8: #{vision_transformer_forward.10} parent=0 // pred_region
    _
  $region9: #{vision_transformer_forward.10} parent=0 // pred_fallthru
    _
  // Predicated region
  $region10: #{vision_transformer_forward.10} parent=0 // pred_check
    _
  $region11: #{vision_transformer_forward.10} parent=0 // pred_check_branch
    %13 = sbr.rel (0) target = $region13
  $region12: #{vision_transformer_forward.10} parent=0 // pred_region
    _
  $region13: #{vision_transformer_forward.10} parent=0 // pred_fallthru
    _
  %v15 = vld [vmem:[%s0] sm:$0xff]
  %v16 = vld [vmem:[%s0 + $0x8] sm:$0xff]
  %v17 = vld [vmem:[%s0 + $0x10] sm:$0xff]
  %v18 = vld [vmem:[%s0 + $0x18] sm:$0xff]
  %v19 = vld [vmem:[%s0 + $0x20] sm:$0xff]
  %v20 = vld [vmem:[%s0 + $0x28] sm:$0xff]
  %v21 = vld [vmem:[%s0 + $0x30] sm:$0xff]
  %v22 = vld [vmem:[%s0 + $0x38] sm:$0xff]
  %v23 = vld [vmem:[%s0 + $0x40] sm:$0xff]
  %v24 = vld [vmem:[%s0 + $0x48] sm:$0xff]
  %v25 = vld [vmem:[%s0 + $0x50] sm:$0xff]
  %v26 = vld [vmem:[%s0 + $0x58] sm:$0xff]
  %v27 = vld [vmem:[%s0 + $0x60] sm:$0xff]
  %v28 = vld [vmem:[%s0 + $0x68] sm:$0xff]
  %v29 = vld [vmem:[%s0 + $0x70] sm:$0xff]
  %v30 = vld [vmem:[%s0 + $0x78] sm:$0xff]
  %v31 = vld [vmem:[%s0 + $0x80] sm:$0xff]
  %v32 = vld [vmem:[%s0 + $0x88] sm:$0xff]
  %v33 = vld [vmem:[%s0 + $0x90] sm:$0xff]
  %v34 = vld [vmem:[%s0 + $0x98] sm:$0xff]
  %v35 = vld [vmem:[%s0 + $0xa0] sm:$0xff]
  %v36 = vld [vmem:[%s0 + $0xa8] sm:$0xff]
  %v37 = vld [vmem:[%s0 + $0xb0] sm:$0xff]
  %v38 = vld [vmem:[%s0 + $0xb8] sm:$0xff]
  %v39 = vld [vmem:[%s0 + $0xc0] sm:$0xff]
  %v40 = vld [vmem:[%s0 + $0xc8] sm:$0xff]
  %v41 = vld [vmem:[%s0 + $0xd0] sm:$0xff]
  %v42 = vld [vmem:[%s0 + $0xd8] sm:$0xff]
  %v43 = vld [vmem:[%s0 + $0xe0] sm:$0xff]
  %v44 = vld [vmem:[%s0 + $0xe8] sm:$0xff]
  %v45 = vld [vmem:[%s0 + $0xf0] sm:$0xff]
  %v46 = vld [vmem:[%s0 + $0xf8] sm:$0xff]
  %v47 = vld [vmem:[%s0 + $0x100] sm:$0xff]
  %v48 = vld [vmem:[%s0 + $0x108] sm:$0xff]
  %v49 = vld [vmem:[%s0 + $0x110] sm:$0xff]
  %v50 = vld [vmem:[%s0 + $0x118] sm:$0xff]
  %v51 = vld [vmem:[%s0 + $0x120] sm:$0xff]
  %v52 = vld [vmem:[%s0 + $0x128] sm:$0xff]
  %v53 = vld [vmem:[%s0 + $0x130] sm:$0xff]
  %v54 = vld [vmem:[%s0 + $0x138] sm:$0xff]
  %v55 = vld [vmem:[%s0 + $0x140] sm:$0xff]
  %v56 = vld [vmem:[%s0 + $0x148] sm:$0xff]
  %v57 = vld [vmem:[%s0 + $0x150] sm:$0xff]
  %v58 = vld [vmem:[%s0 + $0x158] sm:$0xff]
  %v59 = vld [vmem:[%s0 + $0x160] sm:$0xff]
  %v60 = vld [vmem:[%s0 + $0x168] sm:$0xff]
  %v61 = vld [vmem:[%s0 + $0x170] sm:$0xff]
  %v62 = vld [vmem:[%s0 + $0x178] sm:$0xff]
  %v63 = vld [vmem:[%s0 + $0x180] sm:$0xff]
  %v64 = vld [vmem:[%s0 + $0x188] sm:$0xff]
  %v65 = vld [vmem:[%s0 + $0x190] sm:$0xff]
  %v66 = vld [vmem:[%s0 + $0x198] sm:$0xff]
  %v67 = vld [vmem:[%s0 + $0x1a0] sm:$0xff]
  %v68 = vld [vmem:[%s0 + $0x1a8] sm:$0xff]
  %v69 = vld [vmem:[%s0 + $0x1b0] sm:$0xff]
  %v70 = vld [vmem:[%s0 + $0x1b8] sm:$0xff]
  %v71 = vld [vmem:[%s0 + $0x1c0] sm:$0xff]
  %v72 = vld [vmem:[%s0 + $0x1c8] sm:$0xff]
  %v73 = vld [vmem:[%s0 + $0x1d0] sm:$0xff]
  %v74 = vld [vmem:[%s0 + $0x1d8] sm:$0xff]
  %v75 = vld [vmem:[%s0 + $0x1e0] sm:$0xff]
  %v76 = vld [vmem:[%s0 + $0x1e8] sm:$0xff]
  %v77 = vld [vmem:[%s0 + $0x1f0] sm:$0xff]
  %v78 = vld [vmem:[%s0 + $0x1f8] sm:$0xff]
  %v79 = vpack.c.bf16 %v16, %v15
  %v80 = vpack.c.bf16 %v18, %v17
  %v81 = vpack.c.bf16 %v20, %v19
  %v82 = vpack.c.bf16 %v22, %v21
  %v83 = vpack.c.bf16 %v24, %v23
  %v84 = vpack.c.bf16 %v26, %v25
  %v85 = vpack.c.bf16 %v28, %v27
  %v86 = vpack.c.bf16 %v30, %v29
  %v87 = vpack.c.bf16 %v32, %v31
  %v88 = vpack.c.bf16 %v34, %v33
  %v89 = vpack.c.bf16 %v36, %v35
  %v90 = vpack.c.bf16 %v38, %v37
  %v91 = vpack.c.bf16 %v40, %v39
  %v92 = vpack.c.bf16 %v42, %v41
  %v93 = vpack.c.bf16 %v44, %v43
  %v94 = vpack.c.bf16 %v46, %v45
  %v95 = vpack.c.bf16 %v48, %v47
  %v96 = vpack.c.bf16 %v50, %v49
  %v97 = vpack.c.bf16 %v52, %v51
  %v98 = vpack.c.bf16 %v54, %v53
  %v99 = vpack.c.bf16 %v56, %v55
  %v100 = vpack.c.bf16 %v58, %v57
  %v101 = vpack.c.bf16 %v60, %v59
  %v102 = vpack.c.bf16 %v62, %v61
  %v103 = vpack.c.bf16 %v64, %v63
  %v104 = vpack.c.bf16 %v66, %v65
  %v105 = vpack.c.bf16 %v68, %v67
  %v106 = vpack.c.bf16 %v70, %v69
  %v107 = vpack.c.bf16 %v72, %v71
  %v108 = vpack.c.bf16 %v74, %v73
  %v109 = vpack.c.bf16 %v76, %v75
  %v110 = vpack.c.bf16 %v78, %v77
  %v111 = vld [vmem:[%s1] sm:$0xf]
  %v112 = vld [vmem:[%s1 + $0x4] sm:$0xf]
  %v113 = vld [vmem:[%s1 + $0x8] sm:$0xf]
  %v114 = vld [vmem:[%s1 + $0xc] sm:$0xf]
  %v115 = vld [vmem:[%s1 + $0x10] sm:$0x3]
  %v116 = vld [vmem:[%s2] sm:$0x1]
  %v118 = vlaneseq
  %v119 = vshrl.u32 %v118, 7
  %v120 = vsub.s32 0, %v119
  %v121 = vrot.slane %v116, %v120
  %v128 = vunpack.c.l.b16 %v111
  %v129 = vunpack.c.l.b16 %v112
  %v130 = vunpack.c.l.b16 %v113
  %v131 = vunpack.c.l.b16 %v114
  %v132 = vunpack.c.l.b16 %v115
  %v133 = vpack.c.b16 %v129, %v128
  %v134 = vpack.c.b16 %v131, %v130
  %v135 = vpack.c.b16 %v132, %v132
  %vm138 = vcmask 293888
  %v140 = vsel %vm138, %v79, 0
  %v143 = vsel %vm138, %v80, 0
  %v146 = vsel %vm138, %v81, 0
  %v149 = vsel %vm138, %v82, 0
  %v152 = vsel %vm138, %v83, 0
  %v155 = vsel %vm138, %v84, 0
  %v158 = vsel %vm138, %v85, 0
  %v161 = vsel %vm138, %v86, 0
  %v164 = vsel %vm138, %v87, 0
  %v167 = vsel %vm138, %v88, 0
  %v170 = vsel %vm138, %v89, 0
  %v173 = vsel %vm138, %v90, 0
  %v176 = vsel %vm138, %v91, 0
  %v179 = vsel %vm138, %v92, 0
  %v182 = vsel %vm138, %v93, 0
  %v185 = vsel %vm138, %v94, 0
  %v188 = vsel %vm138, %v95, 0
  %v191 = vsel %vm138, %v96, 0
  %v194 = vsel %vm138, %v97, 0
  %v197 = vsel %vm138, %v98, 0
  %v200 = vsel %vm138, %v99, 0
  %v203 = vsel %vm138, %v100, 0
  %v206 = vsel %vm138, %v101, 0
  %v209 = vsel %vm138, %v102, 0
  %v212 = vsel %vm138, %v103, 0
  %v215 = vsel %vm138, %v104, 0
  %v218 = vsel %vm138, %v105, 0
  %v221 = vsel %vm138, %v106, 0
  %v224 = vsel %vm138, %v107, 0
  %v227 = vsel %vm138, %v108, 0
  %v230 = vsel %vm138, %v109, 0
  %v233 = vsel %vm138, %v110, 0
  %vm235 = vcmask 1041408
  %v237 = vsel %vm235, %v135, 0
  %239 = vmatprep.subr.bf16.mxu0 0
  %240 = vmatpush1.bf16.msra.mxu0 %v133
  %241 = vmatprep.subr.bf16.mxu0 0
  %242 = vmatpush1.bf16.msra.mxu0 %v134
  %243 = vmatprep.subr.bf16.mxu0 0
  %244 = vmatpush1.bf16.msra.mxu0 %v237
  %245 = vmatprep.subr.bf16.mxu0 0
  %246 = vmatpush1.bf16.msra.mxu0 0
  %247 = vmatprep.subr.bf16.mxu0 0
  %248 = vmatpush1.bf16.msra.mxu0 0
  %249 = vmatprep.subr.bf16.mxu0 0
  %250 = vmatpush1.bf16.msra.mxu0 0
  %251 = vmatprep.subr.bf16.mxu0 0
  %252 = vmatpush1.bf16.msra.mxu0 0
  %253 = vmatprep.subr.bf16.mxu0 0
  %254 = vmatpush1.bf16.msra.mxu0 0
  %255 = vmatprep.subr.bf16.mxu0 0
  %256 = vmatpush1.bf16.msra.mxu0 0
  %257 = vmatprep.subr.bf16.mxu0 0
  %258 = vmatpush1.bf16.msra.mxu0 0
  %259 = vmatprep.subr.bf16.mxu0 0
  %260 = vmatpush1.bf16.msra.mxu0 0
  %261 = vmatprep.subr.bf16.mxu0 0
  %262 = vmatpush1.bf16.msra.mxu0 0
  %263 = vmatprep.subr.bf16.mxu0 0
  %264 = vmatpush1.bf16.msra.mxu0 0
  %265 = vmatprep.subr.bf16.mxu0 0
  %266 = vmatpush1.bf16.msra.mxu0 0
  %267 = vmatprep.subr.bf16.mxu0 0
  %268 = vmatpush1.bf16.msra.mxu0 0
  %269 = vmatprep.subr.bf16.mxu0 0
  %270 = vmatpush1.bf16.msra.mxu0 0
  %271 = vmatprep.mubr.bf16.mxu0 0
  %272 = vmatmul.mubr.bf16.gmra.mrb[0].mxu0 %v140
  %v273 = vpop.f32.mrb[0].mxu0
  %v274 = vadd.f32 %v121, %v273
  %v275 = vpop.f32.mrb[0].mxu0
  %v276 = vpop.f32.mrb[0].mxu0
  %v277 = vadd.f32 %v121, %v276
  %v278 = vpop.f32.mrb[0].mxu0
  %279 = vmatprep.mubr.bf16.mxu0 0
  %280 = vmatmul.mubr.bf16.gmra.mrb[0].mxu0 %v143
  %v281 = vpop.f32.mrb[0].mxu0
  %v282 = vadd.f32 %v121, %v281
  %v283 = vpop.f32.mrb[0].mxu0
  %v284 = vpop.f32.mrb[0].mxu0
  %v285 = vadd.f32 %v121, %v284
  %v286 = vpop.f32.mrb[0].mxu0
  %287 = vmatprep.mubr.bf16.mxu0 0
  %288 = vmatmul.mubr.bf16.gmra.mrb[0].mxu0 %v146
  %v289 = vpop.f32.mrb[0].mxu0
  %v290 = vadd.f32 %v121, %v289
  %v291 = vpop.f32.mrb[0].mxu0
  %v292 = vpop.f32.mrb[0].mxu0
  %v293 = vadd.f32 %v121, %v292
  %v294 = vpop.f32.mrb[0].mxu0
  %295 = vmatprep.mubr.bf16.mxu0 0
  %296 = vmatmul.mubr.bf16.gmra.mrb[0].mxu0 %v149
  %v297 = vpop.f32.mrb[0].mxu0
  %v298 = vadd.f32 %v121, %v297
  %v299 = vpop.f32.mrb[0].mxu0
  %v300 = vpop.f32.mrb[0].mxu0
  %v301 = vadd.f32 %v121, %v300
  %v302 = vpop.f32.mrb[0].mxu0
  %303 = vmatprep.mubr.bf16.mxu0 0
  %304 = vmatmul.mubr.bf16.gmra.mrb[0].mxu0 %v152
  %v305 = vpop.f32.mrb[0].mxu0
  %v306 = vadd.f32 %v121, %v305
  %v307 = vpop.f32.mrb[0].mxu0
  %v308 = vpop.f32.mrb[0].mxu0
  %v309 = vadd.f32 %v121, %v308
  %v310 = vpop.f32.mrb[0].mxu0
  %311 = vmatprep.mubr.bf16.mxu0 0
  %312 = vmatmul.mubr.bf16.gmra.mrb[0].mxu0 %v155
  %v313 = vpop.f32.mrb[0].mxu0
  %v314 = vadd.f32 %v121, %v313
  %v315 = vpop.f32.mrb[0].mxu0
  %v316 = vpop.f32.mrb[0].mxu0
  %v317 = vadd.f32 %v121, %v316
  %v318 = vpop.f32.mrb[0].mxu0
  %319 = vmatprep.mubr.bf16.mxu0 0
  %320 = vmatmul.mubr.bf16.gmra.mrb[0].mxu0 %v158
  %v321 = vpop.f32.mrb[0].mxu0
  %v322 = vadd.f32 %v121, %v321
  %v323 = vpop.f32.mrb[0].mxu0
  %v324 = vpop.f32.mrb[0].mxu0
  %v325 = vadd.f32 %v121, %v324
  %v326 = vpop.f32.mrb[0].mxu0
  %327 = vmatprep.mubr.bf16.mxu0 0
  %328 = vmatmul.mubr.bf16.gmra.mrb[0].mxu0 %v161
  %v329 = vpop.f32.mrb[0].mxu0
  %v330 = vadd.f32 %v121, %v329
  %v331 = vpop.f32.mrb[0].mxu0
  %v332 = vpop.f32.mrb[0].mxu0
  %v333 = vadd.f32 %v121, %v332
  %v334 = vpop.f32.mrb[0].mxu0
  %335 = vmatprep.mubr.bf16.mxu0 0
  %336 = vmatmul.mubr.bf16.gmra.mrb[0].mxu0 %v164
  %v337 = vpop.f32.mrb[0].mxu0
  %v338 = vadd.f32 %v121, %v337
  %v339 = vpop.f32.mrb[0].mxu0
  %v340 = vpop.f32.mrb[0].mxu0
  %v341 = vadd.f32 %v121, %v340
  %v342 = vpop.f32.mrb[0].mxu0
  %343 = vmatprep.mubr.bf16.mxu0 0
  %344 = vmatmul.mubr.bf16.gmra.mrb[0].mxu0 %v167
  %v345 = vpop.f32.mrb[0].mxu0
  %v346 = vadd.f32 %v121, %v345
  %v347 = vpop.f32.mrb[0].mxu0
  %v348 = vpop.f32.mrb[0].mxu0
  %v349 = vadd.f32 %v121, %v348
  %v350 = vpop.f32.mrb[0].mxu0
  %351 = vmatprep.mubr.bf16.mxu0 0
  %352 = vmatmul.mubr.bf16.gmra.mrb[0].mxu0 %v170
  %v353 = vpop.f32.mrb[0].mxu0
  %v354 = vadd.f32 %v121, %v353
  %v355 = vpop.f32.mrb[0].mxu0
  %v356 = vpop.f32.mrb[0].mxu0
  %v357 = vadd.f32 %v121, %v356
  %v358 = vpop.f32.mrb[0].mxu0
  %359 = vmatprep.mubr.bf16.mxu0 0
  %360 = vmatmul.mubr.bf16.gmra.mrb[0].mxu0 %v173
  %v361 = vpop.f32.mrb[0].mxu0
  %v362 = vadd.f32 %v121, %v361
  %v363 = vpop.f32.mrb[0].mxu0
  %v364 = vpop.f32.mrb[0].mxu0
  %v365 = vadd.f32 %v121, %v364
  %v366 = vpop.f32.mrb[0].mxu0
  %367 = vmatprep.mubr.bf16.mxu0 0
  %368 = vmatmul.mubr.bf16.gmra.mrb[0].mxu0 %v176
  %v369 = vpop.f32.mrb[0].mxu0
  %v370 = vadd.f32 %v121, %v369
  %v371 = vpop.f32.mrb[0].mxu0
  %v372 = vpop.f32.mrb[0].mxu0
  %v373 = vadd.f32 %v121, %v372
  %v374 = vpop.f32.mrb[0].mxu0
  %375 = vmatprep.mubr.bf16.mxu0 0
  %376 = vmatmul.mubr.bf16.gmra.mrb[0].mxu0 %v179
  %v377 = vpop.f32.mrb[0].mxu0
  %v378 = vadd.f32 %v121, %v377
  %v379 = vpop.f32.mrb[0].mxu0
  %v380 = vpop.f32.mrb[0].mxu0
  %v381 = vadd.f32 %v121, %v380
  %v382 = vpop.f32.mrb[0].mxu0
  %383 = vmatprep.mubr.bf16.mxu0 0
  %384 = vmatmul.mubr.bf16.gmra.mrb[0].mxu0 %v182
  %v385 = vpop.f32.mrb[0].mxu0
  %v386 = vadd.f32 %v121, %v385
  %v387 = vpop.f32.mrb[0].mxu0
  %v388 = vpop.f32.mrb[0].mxu0
  %v389 = vadd.f32 %v121, %v388
  %v390 = vpop.f32.mrb[0].mxu0
  %391 = vmatprep.mubr.bf16.mxu0 0
  %392 = vmatmul.mubr.bf16.gmra.mrb[0].mxu0 %v185
  %v393 = vpop.f32.mrb[0].mxu0
  %v394 = vadd.f32 %v121, %v393
  %v395 = vpop.f32.mrb[0].mxu0
  %v396 = vpop.f32.mrb[0].mxu0
  %v397 = vadd.f32 %v121, %v396
  %v398 = vpop.f32.mrb[0].mxu0
  %399 = vmatprep.mubr.bf16.mxu0 0
  %400 = vmatmul.mubr.bf16.gmra.mrb[0].mxu0 %v188
  %v401 = vpop.f32.mrb[0].mxu0
  %v402 = vadd.f32 %v121, %v401
  %v403 = vpop.f32.mrb[0].mxu0
  %v404 = vpop.f32.mrb[0].mxu0
  %v405 = vadd.f32 %v121, %v404
  %v406 = vpop.f32.mrb[0].mxu0
  %407 = vmatprep.mubr.bf16.mxu0 0
  %408 = vmatmul.mubr.bf16.gmra.mrb[0].mxu0 %v191
  %v409 = vpop.f32.mrb[0].mxu0
  %v410 = vadd.f32 %v121, %v409
  %v411 = vpop.f32.mrb[0].mxu0
  %v412 = vpop.f32.mrb[0].mxu0
  %v413 = vadd.f32 %v121, %v412
  %v414 = vpop.f32.mrb[0].mxu0
  %415 = vmatprep.mubr.bf16.mxu0 0
  %416 = vmatmul.mubr.bf16.gmra.mrb[0].mxu0 %v194
  %v417 = vpop.f32.mrb[0].mxu0
  %v418 = vadd.f32 %v121, %v417
  %v419 = vpop.f32.mrb[0].mxu0
  %v420 = vpop.f32.mrb[0].mxu0
  %v421 = vadd.f32 %v121, %v420
  %v422 = vpop.f32.mrb[0].mxu0
  %423 = vmatprep.mubr.bf16.mxu0 0
  %424 = vmatmul.mubr.bf16.gmra.mrb[0].mxu0 %v197
  %v425 = vpop.f32.mrb[0].mxu0
  %v426 = vadd.f32 %v121, %v425
  %v427 = vpop.f32.mrb[0].mxu0
  %v428 = vpop.f32.mrb[0].mxu0
  %v429 = vadd.f32 %v121, %v428
  %v430 = vpop.f32.mrb[0].mxu0
  %431 = vmatprep.mubr.bf16.mxu0 0
  %432 = vmatmul.mubr.bf16.gmra.mrb[0].mxu0 %v200
  %v433 = vpop.f32.mrb[0].mxu0
  %v434 = vadd.f32 %v121, %v433
  %v435 = vpop.f32.mrb[0].mxu0
  %v436 = vpop.f32.mrb[0].mxu0
  %v437 = vadd.f32 %v121, %v436
  %v438 = vpop.f32.mrb[0].mxu0
  %439 = vmatprep.mubr.bf16.mxu0 0
  %440 = vmatmul.mubr.bf16.gmra.mrb[0].mxu0 %v203
  %v441 = vpop.f32.mrb[0].mxu0
  %v442 = vadd.f32 %v121, %v441
  %v443 = vpop.f32.mrb[0].mxu0
  %v444 = vpop.f32.mrb[0].mxu0
  %v445 = vadd.f32 %v121, %v444
  %v446 = vpop.f32.mrb[0].mxu0
  %447 = vmatprep.mubr.bf16.mxu0 0
  %448 = vmatmul.mubr.bf16.gmra.mrb[0].mxu0 %v206
  %v449 = vpop.f32.mrb[0].mxu0
  %v450 = vadd.f32 %v121, %v449
  %v451 = vpop.f32.mrb[0].mxu0
  %v452 = vpop.f32.mrb[0].mxu0
  %v453 = vadd.f32 %v121, %v452
  %v454 = vpop.f32.mrb[0].mxu0
  %455 = vmatprep.mubr.bf16.mxu0 0
  %456 = vmatmul.mubr.bf16.gmra.mrb[0].mxu0 %v209
  %v457 = vpop.f32.mrb[0].mxu0
  %v458 = vadd.f32 %v121, %v457
  %v459 = vpop.f32.mrb[0].mxu0
  %v460 = vpop.f32.mrb[0].mxu0
  %v461 = vadd.f32 %v121, %v460
  %v462 = vpop.f32.mrb[0].mxu0
  %463 = vmatprep.mubr.bf16.mxu0 0
  %464 = vmatmul.mubr.bf16.gmra.mrb[0].mxu0 %v212
  %v465 = vpop.f32.mrb[0].mxu0
  %v466 = vadd.f32 %v121, %v465
  %v467 = vpop.f32.mrb[0].mxu0
  %v468 = vpop.f32.mrb[0].mxu0
  %v469 = vadd.f32 %v121, %v468
  %v470 = vpop.f32.mrb[0].mxu0
  %471 = vmatprep.mubr.bf16.mxu0 0
  %472 = vmatmul.mubr.bf16.gmra.mrb[0].mxu0 %v215
  %v473 = vpop.f32.mrb[0].mxu0
  %v474 = vadd.f32 %v121, %v473
  %v475 = vpop.f32.mrb[0].mxu0
  %v476 = vpop.f32.mrb[0].mxu0
  %v477 = vadd.f32 %v121, %v476
  %v478 = vpop.f32.mrb[0].mxu0
  %479 = vmatprep.mubr.bf16.mxu0 0
  %480 = vmatmul.mubr.bf16.gmra.mrb[0].mxu0 %v218
  %v481 = vpop.f32.mrb[0].mxu0
  %v482 = vadd.f32 %v121, %v481
  %v483 = vpop.f32.mrb[0].mxu0
  %v484 = vpop.f32.mrb[0].mxu0
  %v485 = vadd.f32 %v121, %v484
  %v486 = vpop.f32.mrb[0].mxu0
  %487 = vmatprep.mubr.bf16.mxu0 0
  %488 = vmatmul.mubr.bf16.gmra.mrb[0].mxu0 %v221
  %v489 = vpop.f32.mrb[0].mxu0
  %v490 = vadd.f32 %v121, %v489
  %v491 = vpop.f32.mrb[0].mxu0
  %v492 = vpop.f32.mrb[0].mxu0
  %v493 = vadd.f32 %v121, %v492
  %v494 = vpop.f32.mrb[0].mxu0
  %495 = vmatprep.mubr.bf16.mxu0 0
  %496 = vmatmul.mubr.bf16.gmra.mrb[0].mxu0 %v224
  %v497 = vpop.f32.mrb[0].mxu0
  %v498 = vadd.f32 %v121, %v497
  %v499 = vpop.f32.mrb[0].mxu0
  %v500 = vpop.f32.mrb[0].mxu0
  %v501 = vadd.f32 %v121, %v500
  %v502 = vpop.f32.mrb[0].mxu0
  %503 = vmatprep.mubr.bf16.mxu0 0
  %504 = vmatmul.mubr.bf16.gmra.mrb[0].mxu0 %v227
  %v505 = vpop.f32.mrb[0].mxu0
  %v506 = vadd.f32 %v121, %v505
  %v507 = vpop.f32.mrb[0].mxu0
  %v508 = vpop.f32.mrb[0].mxu0
  %v509 = vadd.f32 %v121, %v508
  %v510 = vpop.f32.mrb[0].mxu0
  %511 = vmatprep.mubr.bf16.mxu0 0
  %512 = vmatmul.mubr.bf16.gmra.mrb[0].mxu0 %v230
  %v513 = vpop.f32.mrb[0].mxu0
  %v514 = vadd.f32 %v121, %v513
  %v515 = vpop.f32.mrb[0].mxu0
  %v516 = vpop.f32.mrb[0].mxu0
  %v517 = vadd.f32 %v121, %v516
  %v518 = vpop.f32.mrb[0].mxu0
  %519 = vmatprep.mubr.bf16.mxu0 0
  %520 = vmatmul.mubr.bf16.gmra.mrb[0].mxu0 %v233
  %v521 = vpop.f32.mrb[0].mxu0
  %v522 = vadd.f32 %v121, %v521
  %v523 = vpop.f32.mrb[0].mxu0
  %v524 = vpop.f32.mrb[0].mxu0
  %v525 = vadd.f32 %v121, %v524
  %v526 = vpop.f32.mrb[0].mxu0
  %527 = vdwg.mxu0
  %v528 = vmax.f32 %v274, 0.0
  %v529 = vmax.f32 %v277, 0.0
  %v530 = vmax.f32 %v282, 0.0
  %v531 = vmax.f32 %v285, 0.0
  %v532 = vmax.f32 %v290, 0.0
  %v533 = vmax.f32 %v293, 0.0
  %v534 = vmax.f32 %v298, 0.0
  %v535 = vmax.f32 %v301, 0.0
  %v536 = vmax.f32 %v306, 0.0
  %v537 = vmax.f32 %v309, 0.0
  %v538 = vmax.f32 %v314, 0.0
  %v539 = vmax.f32 %v317, 0.0
  %v540 = vmax.f32 %v322, 0.0
  %v541 = vmax.f32 %v325, 0.0
  %v542 = vmax.f32 %v330, 0.0
  %v543 = vmax.f32 %v333, 0.0
  %v544 = vmax.f32 %v338, 0.0
  %v545 = vmax.f32 %v341, 0.0
  %v546 = vmax.f32 %v346, 0.0
  %v547 = vmax.f32 %v349, 0.0
  %v548 = vmax.f32 %v354, 0.0
  %v549 = vmax.f32 %v357, 0.0
  %v550 = vmax.f32 %v362, 0.0
  %v551 = vmax.f32 %v365, 0.0
  %v552 = vmax.f32 %v370, 0.0
  %v553 = vmax.f32 %v373, 0.0
  %v554 = vmax.f32 %v378, 0.0
  %v555 = vmax.f32 %v381, 0.0
  %v556 = vmax.f32 %v386, 0.0
  %v557 = vmax.f32 %v389, 0.0
  %v558 = vmax.f32 %v394, 0.0
  %v559 = vmax.f32 %v397, 0.0
  %v560 = vmax.f32 %v402, 0.0
  %v561 = vmax.f32 %v405, 0.0
  %v562 = vmax.f32 %v410, 0.0
  %v563 = vmax.f32 %v413, 0.0
  %v564 = vmax.f32 %v418, 0.0
  %v565 = vmax.f32 %v421, 0.0
  %v566 = vmax.f32 %v426, 0.0
  %v567 = vmax.f32 %v429, 0.0
  %v568 = vmax.f32 %v434, 0.0
  %v569 = vmax.f32 %v437, 0.0
  %v570 = vmax.f32 %v442, 0.0
  %v571 = vmax.f32 %v445, 0.0
  %v572 = vmax.f32 %v450, 0.0
  %v573 = vmax.f32 %v453, 0.0
  %v574 = vmax.f32 %v458, 0.0
  %v575 = vmax.f32 %v461, 0.0
  %v576 = vmax.f32 %v466, 0.0
  %v577 = vmax.f32 %v469, 0.0
  %v578 = vmax.f32 %v474, 0.0
  %v579 = vmax.f32 %v477, 0.0
  %v580 = vmax.f32 %v482, 0.0
  %v581 = vmax.f32 %v485, 0.0
  %v582 = vmax.f32 %v490, 0.0
  %v583 = vmax.f32 %v493, 0.0
  %v584 = vmax.f32 %v498, 0.0
  %v585 = vmax.f32 %v501, 0.0
  %v586 = vmax.f32 %v506, 0.0
  %v587 = vmax.f32 %v509, 0.0
  %v588 = vmax.f32 %v514, 0.0
  %v589 = vmax.f32 %v517, 0.0
  %v590 = vmax.f32 %v522, 0.0
  %v591 = vmax.f32 %v525, 0.0
  %vm592 = vcmask 64512
  %593 = vst.msk [vmem:[%s3] sm:$0xff] %vm592, %v528
  %594 = vst.msk [vmem:[%s3 + $0x8] sm:$0xff] %vm592, %v529
  %595 = vst.msk [vmem:[%s3 + $0x10] sm:$0xff] %vm592, %v530
  %596 = vst.msk [vmem:[%s3 + $0x18] sm:$0xff] %vm592, %v531
  %597 = vst.msk [vmem:[%s3 + $0x20] sm:$0xff] %vm592, %v532
  %598 = vst.msk [vmem:[%s3 + $0x28] sm:$0xff] %vm592, %v533
  %599 = vst.msk [vmem:[%s3 + $0x30] sm:$0xff] %vm592, %v534
  %600 = vst.msk [vmem:[%s3 + $0x38] sm:$0xff] %vm592, %v535
  %601 = vst.msk [vmem:[%s3 + $0x40] sm:$0xff] %vm592, %v536
  %602 = vst.msk [vmem:[%s3 + $0x48] sm:$0xff] %vm592, %v537
  %603 = vst.msk [vmem:[%s3 + $0x50] sm:$0xff] %vm592, %v538
  %604 = vst.msk [vmem:[%s3 + $0x58] sm:$0xff] %vm592, %v539
  %605 = vst.msk [vmem:[%s3 + $0x60] sm:$0xff] %vm592, %v540
  %606 = vst.msk [vmem:[%s3 + $0x68] sm:$0xff] %vm592, %v541
  %607 = vst.msk [vmem:[%s3 + $0x70] sm:$0xff] %vm592, %v542
  %608 = vst.msk [vmem:[%s3 + $0x78] sm:$0xff] %vm592, %v543
  %609 = vst.msk [vmem:[%s3 + $0x80] sm:$0xff] %vm592, %v544
  %610 = vst.msk [vmem:[%s3 + $0x88] sm:$0xff] %vm592, %v545
  %611 = vst.msk [vmem:[%s3 + $0x90] sm:$0xff] %vm592, %v546
  %612 = vst.msk [vmem:[%s3 + $0x98] sm:$0xff] %vm592, %v547
  %613 = vst.msk [vmem:[%s3 + $0xa0] sm:$0xff] %vm592, %v548
  %614 = vst.msk [vmem:[%s3 + $0xa8] sm:$0xff] %vm592, %v549
  %615 = vst.msk [vmem:[%s3 + $0xb0] sm:$0xff] %vm592, %v550
  %616 = vst.msk [vmem:[%s3 + $0xb8] sm:$0xff] %vm592, %v551
  %617 = vst.msk [vmem:[%s3 + $0xc0] sm:$0xff] %vm592, %v552
  %618 = vst.msk [vmem:[%s3 + $0xc8] sm:$0xff] %vm592, %v553
  %619 = vst.msk [vmem:[%s3 + $0xd0] sm:$0xff] %vm592, %v554
  %620 = vst.msk [vmem:[%s3 + $0xd8] sm:$0xff] %vm592, %v555
  %621 = vst.msk [vmem:[%s3 + $0xe0] sm:$0xff] %vm592, %v556
  %622 = vst.msk [vmem:[%s3 + $0xe8] sm:$0xff] %vm592, %v557
  %623 = vst.msk [vmem:[%s3 + $0xf0] sm:$0xff] %vm592, %v558
  %624 = vst.msk [vmem:[%s3 + $0xf8] sm:$0xff] %vm592, %v559
  %625 = vst.msk [vmem:[%s3 + $0x100] sm:$0xff] %vm592, %v560
  %626 = vst.msk [vmem:[%s3 + $0x108] sm:$0xff] %vm592, %v561
  %627 = vst.msk [vmem:[%s3 + $0x110] sm:$0xff] %vm592, %v562
  %628 = vst.msk [vmem:[%s3 + $0x118] sm:$0xff] %vm592, %v563
  %629 = vst.msk [vmem:[%s3 + $0x120] sm:$0xff] %vm592, %v564
  %630 = vst.msk [vmem:[%s3 + $0x128] sm:$0xff] %vm592, %v565
  %631 = vst.msk [vmem:[%s3 + $0x130] sm:$0xff] %vm592, %v566
  %632 = vst.msk [vmem:[%s3 + $0x138] sm:$0xff] %vm592, %v567
  %633 = vst.msk [vmem:[%s3 + $0x140] sm:$0xff] %vm592, %v568
  %634 = vst.msk [vmem:[%s3 + $0x148] sm:$0xff] %vm592, %v569
  %635 = vst.msk [vmem:[%s3 + $0x150] sm:$0xff] %vm592, %v570
  %636 = vst.msk [vmem:[%s3 + $0x158] sm:$0xff] %vm592, %v571
  %637 = vst.msk [vmem:[%s3 + $0x160] sm:$0xff] %vm592, %v572
  %638 = vst.msk [vmem:[%s3 + $0x168] sm:$0xff] %vm592, %v573
  %639 = vst.msk [vmem:[%s3 + $0x170] sm:$0xff] %vm592, %v574
  %640 = vst.msk [vmem:[%s3 + $0x178] sm:$0xff] %vm592, %v575
  %641 = vst.msk [vmem:[%s3 + $0x180] sm:$0xff] %vm592, %v576
  %642 = vst.msk [vmem:[%s3 + $0x188] sm:$0xff] %vm592, %v577
  %643 = vst.msk [vmem:[%s3 + $0x190] sm:$0xff] %vm592, %v578
  %644 = vst.msk [vmem:[%s3 + $0x198] sm:$0xff] %vm592, %v579
  %645 = vst.msk [vmem:[%s3 + $0x1a0] sm:$0xff] %vm592, %v580
  %646 = vst.msk [vmem:[%s3 + $0x1a8] sm:$0xff] %vm592, %v581
  %647 = vst.msk [vmem:[%s3 + $0x1b0] sm:$0xff] %vm592, %v582
  %648 = vst.msk [vmem:[%s3 + $0x1b8] sm:$0xff] %vm592, %v583
  %649 = vst.msk [vmem:[%s3 + $0x1c0] sm:$0xff] %vm592, %v584
  %650 = vst.msk [vmem:[%s3 + $0x1c8] sm:$0xff] %vm592, %v585
  %651 = vst.msk [vmem:[%s3 + $0x1d0] sm:$0xff] %vm592, %v586
  %652 = vst.msk [vmem:[%s3 + $0x1d8] sm:$0xff] %vm592, %v587
  %653 = vst.msk [vmem:[%s3 + $0x1e0] sm:$0xff] %vm592, %v588
  %654 = vst.msk [vmem:[%s3 + $0x1e8] sm:$0xff] %vm592, %v589
  %655 = vst.msk [vmem:[%s3 + $0x1f0] sm:$0xff] %vm592, %v590
  %656 = vst.msk [vmem:[%s3 + $0x1f8] sm:$0xff] %vm592, %v591
  // Predicated region
  $region14: #{vision_transformer_forward.10} parent=0 // pred_check
    _
  $region15: #{vision_transformer_forward.10} parent=0 // pred_check_branch
    %658 = sbr.rel (0) target = $region17
  $region16: #{vision_transformer_forward.10} parent=0 // pred_region
    _
  $region17: #{vision_transformer_forward.10} parent=0 // pred_fallthru
    _
  // Predicated region
  $region18: #{vision_transformer_forward.10} parent=0 // pred_check
    _
  $region19: #{vision_transformer_forward.10} parent=0 // pred_check_branch
    %660 = sbr.rel (0) target = $region21
  $region20: #{vision_transformer_forward.10} parent=0 // pred_region
    _
  $region21: #{vision_transformer_forward.10} parent=0 // pred_fallthru
    _

// kernel: vision_transformer_forward.11
$region0: #{vision_transformer_forward.11}
  #allocation0 [shape = 'u32[]', space=smem, size = 0x4, offset = 0x4, fixed_abs, tag = 'smem constant byte address 0x4 - core index']
  #allocation1 [shape = 'u32[144,128]{1,0:T(1,128)}', space=vmem, size = 0x12000, scoped, tag = 'internal scratch']
  %s0 = inlined_call_operand.vmem [shape: f32[512,72], index: 0, kind: input, shape index: {}]
  %s1 = inlined_call_operand.vmem [shape: bf16[72,8], index: 1, kind: input, shape index: {}]
  %s2 = inlined_call_operand.vmem [shape: f32[1,8], index: 2, kind: input, shape index: {}]
  %s3 = inlined_call_operand.vmem [shape: f32[512,8], index: 3, kind: output, shape index: {}]
  %s4 = sld [smem:[#allocation0]]
  $region22: #{vision_transformer_forward.11} parent=0
    _
  %s6 = ssub.s32 1, %s4
  %s7 = scalar_select 0, %s6, %s4
  // Predicated region
  $region2: #{vision_transformer_forward.11} parent=0 // pred_check
    _
  $region3: #{vision_transformer_forward.11} parent=0 // pred_check_branch
    %9 = sbr.rel (0) target = $region5
  $region4: #{vision_transformer_forward.11} parent=0 // pred_region
    _
  $region5: #{vision_transformer_forward.11} parent=0 // pred_fallthru
    _
  // Predicated region
  $region6: #{vision_transformer_forward.11} parent=0 // pred_check
    _
  $region7: #{vision_transformer_forward.11} parent=0 // pred_check_branch
    %11 = sbr.rel (0) target = $region9
  $region8: #{vision_transformer_forward.11} parent=0 // pred_region
    _
  $region9: #{vision_transformer_forward.11} parent=0 // pred_fallthru
    _
  // Predicated region
  $region10: #{vision_transformer_forward.11} parent=0 // pred_check
    _
  $region11: #{vision_transformer_forward.11} parent=0 // pred_check_branch
    %13 = sbr.rel (0) target = $region13
  $region12: #{vision_transformer_forward.11} parent=0 // pred_region
    _
  $region13: #{vision_transformer_forward.11} parent=0 // pred_fallthru
    _
  %v15 = vld [vmem:[%s0] sm:$0xff]
  %v16 = vld [vmem:[%s0 + $0x8] sm:$0xff]
  %v17 = vld [vmem:[%s0 + $0x10] sm:$0xff]
  %v18 = vld [vmem:[%s0 + $0x18] sm:$0xff]
  %v19 = vld [vmem:[%s0 + $0x20] sm:$0xff]
  %v20 = vld [vmem:[%s0 + $0x28] sm:$0xff]
  %v21 = vld [vmem:[%s0 + $0x30] sm:$0xff]
  %v22 = vld [vmem:[%s0 + $0x38] sm:$0xff]
  %v23 = vld [vmem:[%s0 + $0x40] sm:$0xff]
  %v24 = vld [vmem:[%s0 + $0x48] sm:$0xff]
  %v25 = vld [vmem:[%s0 + $0x50] sm:$0xff]
  %v26 = vld [vmem:[%s0 + $0x58] sm:$0xff]
  %v27 = vld [vmem:[%s0 + $0x60] sm:$0xff]
  %v28 = vld [vmem:[%s0 + $0x68] sm:$0xff]
  %v29 = vld [vmem:[%s0 + $0x70] sm:$0xff]
  %v30 = vld [vmem:[%s0 + $0x78] sm:$0xff]
  %v31 = vld [vmem:[%s0 + $0x80] sm:$0xff]
  %v32 = vld [vmem:[%s0 + $0x88] sm:$0xff]
  %v33 = vld [vmem:[%s0 + $0x90] sm:$0xff]
  %v34 = vld [vmem:[%s0 + $0x98] sm:$0xff]
  %v35 = vld [vmem:[%s0 + $0xa0] sm:$0xff]
  %v36 = vld [vmem:[%s0 + $0xa8] sm:$0xff]
  %v37 = vld [vmem:[%s0 + $0xb0] sm:$0xff]
  %v38 = vld [vmem:[%s0 + $0xb8] sm:$0xff]
  %v39 = vld [vmem:[%s0 + $0xc0] sm:$0xff]
  %v40 = vld [vmem:[%s0 + $0xc8] sm:$0xff]
  %v41 = vld [vmem:[%s0 + $0xd0] sm:$0xff]
  %v42 = vld [vmem:[%s0 + $0xd8] sm:$0xff]
  %v43 = vld [vmem:[%s0 + $0xe0] sm:$0xff]
  %v44 = vld [vmem:[%s0 + $0xe8] sm:$0xff]
  %v45 = vld [vmem:[%s0 + $0xf0] sm:$0xff]
  %v46 = vld [vmem:[%s0 + $0xf8] sm:$0xff]
  %v47 = vld [vmem:[%s0 + $0x100] sm:$0xff]
  %v48 = vld [vmem:[%s0 + $0x108] sm:$0xff]
  %v49 = vld [vmem:[%s0 + $0x110] sm:$0xff]
  %v50 = vld [vmem:[%s0 + $0x118] sm:$0xff]
  %v51 = vld [vmem:[%s0 + $0x120] sm:$0xff]
  %v52 = vld [vmem:[%s0 + $0x128] sm:$0xff]
  %v53 = vld [vmem:[%s0 + $0x130] sm:$0xff]
  %v54 = vld [vmem:[%s0 + $0x138] sm:$0xff]
  %v55 = vld [vmem:[%s0 + $0x140] sm:$0xff]
  %v56 = vld [vmem:[%s0 + $0x148] sm:$0xff]
  %v57 = vld [vmem:[%s0 + $0x150] sm:$0xff]
  %v58 = vld [vmem:[%s0 + $0x158] sm:$0xff]
  %v59 = vld [vmem:[%s0 + $0x160] sm:$0xff]
  %v60 = vld [vmem:[%s0 + $0x168] sm:$0xff]
  %v61 = vld [vmem:[%s0 + $0x170] sm:$0xff]
  %v62 = vld [vmem:[%s0 + $0x178] sm:$0xff]
  %v63 = vld [vmem:[%s0 + $0x180] sm:$0xff]
  %v64 = vld [vmem:[%s0 + $0x188] sm:$0xff]
  %v65 = vld [vmem:[%s0 + $0x190] sm:$0xff]
  %v66 = vld [vmem:[%s0 + $0x198] sm:$0xff]
  %v67 = vld [vmem:[%s0 + $0x1a0] sm:$0xff]
  %v68 = vld [vmem:[%s0 + $0x1a8] sm:$0xff]
  %v69 = vld [vmem:[%s0 + $0x1b0] sm:$0xff]
  %v70 = vld [vmem:[%s0 + $0x1b8] sm:$0xff]
  %v71 = vld [vmem:[%s0 + $0x1c0] sm:$0xff]
  %v72 = vld [vmem:[%s0 + $0x1c8] sm:$0xff]
  %v73 = vld [vmem:[%s0 + $0x1d0] sm:$0xff]
  %v74 = vld [vmem:[%s0 + $0x1d8] sm:$0xff]
  %v75 = vld [vmem:[%s0 + $0x1e0] sm:$0xff]
  %v76 = vld [vmem:[%s0 + $0x1e8] sm:$0xff]
  %v77 = vld [vmem:[%s0 + $0x1f0] sm:$0xff]
  %v78 = vld [vmem:[%s0 + $0x1f8] sm:$0xff]
  %v79 = vpack.c.bf16 %v16, %v15
  %v80 = vpack.c.bf16 %v18, %v17
  %v81 = vpack.c.bf16 %v20, %v19
  %v82 = vpack.c.bf16 %v22, %v21
  %v83 = vpack.c.bf16 %v24, %v23
  %v84 = vpack.c.bf16 %v26, %v25
  %v85 = vpack.c.bf16 %v28, %v27
  %v86 = vpack.c.bf16 %v30, %v29
  %v87 = vpack.c.bf16 %v32, %v31
  %v88 = vpack.c.bf16 %v34, %v33
  %v89 = vpack.c.bf16 %v36, %v35
  %v90 = vpack.c.bf16 %v38, %v37
  %v91 = vpack.c.bf16 %v40, %v39
  %v92 = vpack.c.bf16 %v42, %v41
  %v93 = vpack.c.bf16 %v44, %v43
  %v94 = vpack.c.bf16 %v46, %v45
  %v95 = vpack.c.bf16 %v48, %v47
  %v96 = vpack.c.bf16 %v50, %v49
  %v97 = vpack.c.bf16 %v52, %v51
  %v98 = vpack.c.bf16 %v54, %v53
  %v99 = vpack.c.bf16 %v56, %v55
  %v100 = vpack.c.bf16 %v58, %v57
  %v101 = vpack.c.bf16 %v60, %v59
  %v102 = vpack.c.bf16 %v62, %v61
  %v103 = vpack.c.bf16 %v64, %v63
  %v104 = vpack.c.bf16 %v66, %v65
  %v105 = vpack.c.bf16 %v68, %v67
  %v106 = vpack.c.bf16 %v70, %v69
  %v107 = vpack.c.bf16 %v72, %v71
  %v108 = vpack.c.bf16 %v74, %v73
  %v109 = vpack.c.bf16 %v76, %v75
  %v110 = vpack.c.bf16 %v78, %v77
  %v111 = vld [vmem:[%s1] sm:$0xf]
  %v112 = vld [vmem:[%s1 + $0x4] sm:$0xf]
  %v113 = vld [vmem:[%s1 + $0x8] sm:$0xf]
  %v114 = vld [vmem:[%s1 + $0xc] sm:$0xf]
  %v115 = vld [vmem:[%s1 + $0x10] sm:$0xf]
  %v116 = vld [vmem:[%s1 + $0x14] sm:$0xf]
  %v117 = vld [vmem:[%s1 + $0x18] sm:$0xf]
  %v118 = vld [vmem:[%s1 + $0x1c] sm:$0xf]
  %v119 = vld [vmem:[%s1 + $0x20] sm:$0xf]
  %v120 = vld [vmem:[%s2] sm:$0x1]
  %v122 = vlaneseq
  %v123 = vshrl.u32 %v122, 7
  %v124 = vsub.s32 0, %v123
  %v125 = vrot.slane %v120, %v124
  %v136 = vunpack.c.l.b16 %v111
  %v137 = vunpack.c.l.b16 %v112
  %v138 = vunpack.c.l.b16 %v113
  %v139 = vunpack.c.l.b16 %v114
  %v140 = vunpack.c.l.b16 %v115
  %v141 = vunpack.c.l.b16 %v116
  %v142 = vunpack.c.l.b16 %v117
  %v143 = vunpack.c.l.b16 %v118
  %v144 = vunpack.c.l.b16 %v119
  %v145 = vpack.c.b16 %v137, %v136
  %v146 = vpack.c.b16 %v139, %v138
  %v147 = vpack.c.b16 %v141, %v140
  %v148 = vpack.c.b16 %v143, %v142
  %v149 = vpack.c.b16 %v144, %v144
  %vm154 = vcmask 588800
  %v156 = vsel %vm154, %v79, 0
  %v159 = vsel %vm154, %v80, 0
  %v162 = vsel %vm154, %v81, 0
  %v165 = vsel %vm154, %v82, 0
  %v168 = vsel %vm154, %v83, 0
  %v171 = vsel %vm154, %v84, 0
  %v174 = vsel %vm154, %v85, 0
  %v177 = vsel %vm154, %v86, 0
  %v180 = vsel %vm154, %v87, 0
  %v183 = vsel %vm154, %v88, 0
  %v186 = vsel %vm154, %v89, 0
  %v189 = vsel %vm154, %v90, 0
  %v192 = vsel %vm154, %v91, 0
  %v195 = vsel %vm154, %v92, 0
  %v198 = vsel %vm154, %v93, 0
  %v201 = vsel %vm154, %v94, 0
  %v204 = vsel %vm154, %v95, 0
  %v207 = vsel %vm154, %v96, 0
  %v210 = vsel %vm154, %v97, 0
  %v213 = vsel %vm154, %v98, 0
  %v216 = vsel %vm154, %v99, 0
  %v219 = vsel %vm154, %v100, 0
  %v222 = vsel %vm154, %v101, 0
  %v225 = vsel %vm154, %v102, 0
  %v228 = vsel %vm154, %v103, 0
  %v231 = vsel %vm154, %v104, 0
  %v234 = vsel %vm154, %v105, 0
  %v237 = vsel %vm154, %v106, 0
  %v240 = vsel %vm154, %v107, 0
  %v243 = vsel %vm154, %v108, 0
  %v246 = vsel %vm154, %v109, 0
  %v249 = vsel %vm154, %v110, 0
  %vm251 = vcmask 1043456
  %v253 = vsel %vm251, %v149, 0
  %255 = vmatprep.subr.bf16.mxu0 0
  %256 = vmatpush1.bf16.msra.mxu0 %v145
  %257 = vmatprep.subr.bf16.mxu0 0
  %258 = vmatpush1.bf16.msra.mxu0 %v146
  %259 = vmatprep.subr.bf16.mxu0 0
  %260 = vmatpush1.bf16.msra.mxu0 %v147
  %261 = vmatprep.subr.bf16.mxu0 0
  %262 = vmatpush1.bf16.msra.mxu0 %v148
  %263 = vmatprep.subr.bf16.mxu0 0
  %264 = vmatpush1.bf16.msra.mxu0 %v253
  %265 = vmatprep.subr.bf16.mxu0 0
  %266 = vmatpush1.bf16.msra.mxu0 0
  %267 = vmatprep.subr.bf16.mxu0 0
  %268 = vmatpush1.bf16.msra.mxu0 0
  %269 = vmatprep.subr.bf16.mxu0 0
  %270 = vmatpush1.bf16.msra.mxu0 0
  %271 = vmatprep.subr.bf16.mxu0 0
  %272 = vmatpush1.bf16.msra.mxu0 0
  %273 = vmatprep.subr.bf16.mxu0 0
  %274 = vmatpush1.bf16.msra.mxu0 0
  %275 = vmatprep.subr.bf16.mxu0 0
  %276 = vmatpush1.bf16.msra.mxu0 0
  %277 = vmatprep.subr.bf16.mxu0 0
  %278 = vmatpush1.bf16.msra.mxu0 0
  %279 = vmatprep.subr.bf16.mxu0 0
  %280 = vmatpush1.bf16.msra.mxu0 0
  %281 = vmatprep.subr.bf16.mxu0 0
  %282 = vmatpush1.bf16.msra.mxu0 0
  %283 = vmatprep.subr.bf16.mxu0 0
  %284 = vmatpush1.bf16.msra.mxu0 0
  %285 = vmatprep.subr.bf16.mxu0 0
  %286 = vmatpush1.bf16.msra.mxu0 0
  %287 = vmatprep.mubr.bf16.mxu0 0
  %288 = vmatmul.mubr.bf16.gmra.mrb[0].mxu0 %v156
  %v289 = vpop.f32.mrb[0].mxu0
  %v290 = vadd.f32 %v125, %v289
  %v291 = vpop.f32.mrb[0].mxu0
  %v292 = vpop.f32.mrb[0].mxu0
  %v293 = vadd.f32 %v125, %v292
  %v294 = vpop.f32.mrb[0].mxu0
  %295 = vmatprep.mubr.bf16.mxu0 0
  %296 = vmatmul.mubr.bf16.gmra.mrb[0].mxu0 %v159
  %v297 = vpop.f32.mrb[0].mxu0
  %v298 = vadd.f32 %v125, %v297
  %v299 = vpop.f32.mrb[0].mxu0
  %v300 = vpop.f32.mrb[0].mxu0
  %v301 = vadd.f32 %v125, %v300
  %v302 = vpop.f32.mrb[0].mxu0
  %303 = vmatprep.mubr.bf16.mxu0 0
  %304 = vmatmul.mubr.bf16.gmra.mrb[0].mxu0 %v162
  %v305 = vpop.f32.mrb[0].mxu0
  %v306 = vadd.f32 %v125, %v305
  %v307 = vpop.f32.mrb[0].mxu0
  %v308 = vpop.f32.mrb[0].mxu0
  %v309 = vadd.f32 %v125, %v308
  %v310 = vpop.f32.mrb[0].mxu0
  %311 = vmatprep.mubr.bf16.mxu0 0
  %312 = vmatmul.mubr.bf16.gmra.mrb[0].mxu0 %v165
  %v313 = vpop.f32.mrb[0].mxu0
  %v314 = vadd.f32 %v125, %v313
  %v315 = vpop.f32.mrb[0].mxu0
  %v316 = vpop.f32.mrb[0].mxu0
  %v317 = vadd.f32 %v125, %v316
  %v318 = vpop.f32.mrb[0].mxu0
  %319 = vmatprep.mubr.bf16.mxu0 0
  %320 = vmatmul.mubr.bf16.gmra.mrb[0].mxu0 %v168
  %v321 = vpop.f32.mrb[0].mxu0
  %v322 = vadd.f32 %v125, %v321
  %v323 = vpop.f32.mrb[0].mxu0
  %v324 = vpop.f32.mrb[0].mxu0
  %v325 = vadd.f32 %v125, %v324
  %v326 = vpop.f32.mrb[0].mxu0
  %327 = vmatprep.mubr.bf16.mxu0 0
  %328 = vmatmul.mubr.bf16.gmra.mrb[0].mxu0 %v171
  %v329 = vpop.f32.mrb[0].mxu0
  %v330 = vadd.f32 %v125, %v329
  %v331 = vpop.f32.mrb[0].mxu0
  %v332 = vpop.f32.mrb[0].mxu0
  %v333 = vadd.f32 %v125, %v332
  %v334 = vpop.f32.mrb[0].mxu0
  %335 = vmatprep.mubr.bf16.mxu0 0
  %336 = vmatmul.mubr.bf16.gmra.mrb[0].mxu0 %v174
  %v337 = vpop.f32.mrb[0].mxu0
  %v338 = vadd.f32 %v125, %v337
  %v339 = vpop.f32.mrb[0].mxu0
  %v340 = vpop.f32.mrb[0].mxu0
  %v341 = vadd.f32 %v125, %v340
  %v342 = vpop.f32.mrb[0].mxu0
  %343 = vmatprep.mubr.bf16.mxu0 0
  %344 = vmatmul.mubr.bf16.gmra.mrb[0].mxu0 %v177
  %v345 = vpop.f32.mrb[0].mxu0
  %v346 = vadd.f32 %v125, %v345
  %v347 = vpop.f32.mrb[0].mxu0
  %v348 = vpop.f32.mrb[0].mxu0
  %v349 = vadd.f32 %v125, %v348
  %v350 = vpop.f32.mrb[0].mxu0
  %351 = vmatprep.mubr.bf16.mxu0 0
  %352 = vmatmul.mubr.bf16.gmra.mrb[0].mxu0 %v180
  %v353 = vpop.f32.mrb[0].mxu0
  %v354 = vadd.f32 %v125, %v353
  %v355 = vpop.f32.mrb[0].mxu0
  %v356 = vpop.f32.mrb[0].mxu0
  %v357 = vadd.f32 %v125, %v356
  %v358 = vpop.f32.mrb[0].mxu0
  %359 = vmatprep.mubr.bf16.mxu0 0
  %360 = vmatmul.mubr.bf16.gmra.mrb[0].mxu0 %v183
  %v361 = vpop.f32.mrb[0].mxu0
  %v362 = vadd.f32 %v125, %v361
  %v363 = vpop.f32.mrb[0].mxu0
  %v364 = vpop.f32.mrb[0].mxu0
  %v365 = vadd.f32 %v125, %v364
  %v366 = vpop.f32.mrb[0].mxu0
  %367 = vmatprep.mubr.bf16.mxu0 0
  %368 = vmatmul.mubr.bf16.gmra.mrb[0].mxu0 %v186
  %v369 = vpop.f32.mrb[0].mxu0
  %v370 = vadd.f32 %v125, %v369
  %v371 = vpop.f32.mrb[0].mxu0
  %v372 = vpop.f32.mrb[0].mxu0
  %v373 = vadd.f32 %v125, %v372
  %v374 = vpop.f32.mrb[0].mxu0
  %375 = vmatprep.mubr.bf16.mxu0 0
  %376 = vmatmul.mubr.bf16.gmra.mrb[0].mxu0 %v189
  %v377 = vpop.f32.mrb[0].mxu0
  %v378 = vadd.f32 %v125, %v377
  %v379 = vpop.f32.mrb[0].mxu0
  %v380 = vpop.f32.mrb[0].mxu0
  %v381 = vadd.f32 %v125, %v380
  %v382 = vpop.f32.mrb[0].mxu0
  %383 = vmatprep.mubr.bf16.mxu0 0
  %384 = vmatmul.mubr.bf16.gmra.mrb[0].mxu0 %v192
  %v385 = vpop.f32.mrb[0].mxu0
  %v386 = vadd.f32 %v125, %v385
  %v387 = vpop.f32.mrb[0].mxu0
  %v388 = vpop.f32.mrb[0].mxu0
  %v389 = vadd.f32 %v125, %v388
  %v390 = vpop.f32.mrb[0].mxu0
  %391 = vmatprep.mubr.bf16.mxu0 0
  %392 = vmatmul.mubr.bf16.gmra.mrb[0].mxu0 %v195
  %v393 = vpop.f32.mrb[0].mxu0
  %v394 = vadd.f32 %v125, %v393
  %v395 = vpop.f32.mrb[0].mxu0
  %v396 = vpop.f32.mrb[0].mxu0
  %v397 = vadd.f32 %v125, %v396
  %v398 = vpop.f32.mrb[0].mxu0
  %399 = vmatprep.mubr.bf16.mxu0 0
  %400 = vmatmul.mubr.bf16.gmra.mrb[0].mxu0 %v198
  %v401 = vpop.f32.mrb[0].mxu0
  %v402 = vadd.f32 %v125, %v401
  %v403 = vpop.f32.mrb[0].mxu0
  %v404 = vpop.f32.mrb[0].mxu0
  %v405 = vadd.f32 %v125, %v404
  %v406 = vpop.f32.mrb[0].mxu0
  %407 = vmatprep.mubr.bf16.mxu0 0
  %408 = vmatmul.mubr.bf16.gmra.mrb[0].mxu0 %v201
  %v409 = vpop.f32.mrb[0].mxu0
  %v410 = vadd.f32 %v125, %v409
  %v411 = vpop.f32.mrb[0].mxu0
  %v412 = vpop.f32.mrb[0].mxu0
  %v413 = vadd.f32 %v125, %v412
  %v414 = vpop.f32.mrb[0].mxu0
  %415 = vmatprep.mubr.bf16.mxu0 0
  %416 = vmatmul.mubr.bf16.gmra.mrb[0].mxu0 %v204
  %v417 = vpop.f32.mrb[0].mxu0
  %v418 = vadd.f32 %v125, %v417
  %v419 = vpop.f32.mrb[0].mxu0
  %v420 = vpop.f32.mrb[0].mxu0
  %v421 = vadd.f32 %v125, %v420
  %v422 = vpop.f32.mrb[0].mxu0
  %423 = vmatprep.mubr.bf16.mxu0 0
  %424 = vmatmul.mubr.bf16.gmra.mrb[0].mxu0 %v207
  %v425 = vpop.f32.mrb[0].mxu0
  %v426 = vadd.f32 %v125, %v425
  %v427 = vpop.f32.mrb[0].mxu0
  %v428 = vpop.f32.mrb[0].mxu0
  %v429 = vadd.f32 %v125, %v428
  %v430 = vpop.f32.mrb[0].mxu0
  %431 = vmatprep.mubr.bf16.mxu0 0
  %432 = vmatmul.mubr.bf16.gmra.mrb[0].mxu0 %v210
  %v433 = vpop.f32.mrb[0].mxu0
  %v434 = vadd.f32 %v125, %v433
  %v435 = vpop.f32.mrb[0].mxu0
  %v436 = vpop.f32.mrb[0].mxu0
  %v437 = vadd.f32 %v125, %v436
  %v438 = vpop.f32.mrb[0].mxu0
  %439 = vmatprep.mubr.bf16.mxu0 0
  %440 = vmatmul.mubr.bf16.gmra.mrb[0].mxu0 %v213
  %v441 = vpop.f32.mrb[0].mxu0
  %v442 = vadd.f32 %v125, %v441
  %v443 = vpop.f32.mrb[0].mxu0
  %v444 = vpop.f32.mrb[0].mxu0
  %v445 = vadd.f32 %v125, %v444
  %v446 = vpop.f32.mrb[0].mxu0
  %447 = vmatprep.mubr.bf16.mxu0 0
  %448 = vmatmul.mubr.bf16.gmra.mrb[0].mxu0 %v216
  %v449 = vpop.f32.mrb[0].mxu0
  %v450 = vadd.f32 %v125, %v449
  %v451 = vpop.f32.mrb[0].mxu0
  %v452 = vpop.f32.mrb[0].mxu0
  %v453 = vadd.f32 %v125, %v452
  %v454 = vpop.f32.mrb[0].mxu0
  %455 = vmatprep.mubr.bf16.mxu0 0
  %456 = vmatmul.mubr.bf16.gmra.mrb[0].mxu0 %v219
  %v457 = vpop.f32.mrb[0].mxu0
  %v458 = vadd.f32 %v125, %v457
  %v459 = vpop.f32.mrb[0].mxu0
  %v460 = vpop.f32.mrb[0].mxu0
  %v461 = vadd.f32 %v125, %v460
  %v462 = vpop.f32.mrb[0].mxu0
  %463 = vmatprep.mubr.bf16.mxu0 0
  %464 = vmatmul.mubr.bf16.gmra.mrb[0].mxu0 %v222
  %v465 = vpop.f32.mrb[0].mxu0
  %v466 = vadd.f32 %v125, %v465
  %v467 = vpop.f32.mrb[0].mxu0
  %v468 = vpop.f32.mrb[0].mxu0
  %v469 = vadd.f32 %v125, %v468
  %v470 = vpop.f32.mrb[0].mxu0
  %471 = vmatprep.mubr.bf16.mxu0 0
  %472 = vmatmul.mubr.bf16.gmra.mrb[0].mxu0 %v225
  %v473 = vpop.f32.mrb[0].mxu0
  %v474 = vadd.f32 %v125, %v473
  %v475 = vpop.f32.mrb[0].mxu0
  %v476 = vpop.f32.mrb[0].mxu0
  %v477 = vadd.f32 %v125, %v476
  %v478 = vpop.f32.mrb[0].mxu0
  %479 = vmatprep.mubr.bf16.mxu0 0
  %480 = vmatmul.mubr.bf16.gmra.mrb[0].mxu0 %v228
  %v481 = vpop.f32.mrb[0].mxu0
  %v482 = vadd.f32 %v125, %v481
  %v483 = vpop.f32.mrb[0].mxu0
  %v484 = vpop.f32.mrb[0].mxu0
  %v485 = vadd.f32 %v125, %v484
  %v486 = vpop.f32.mrb[0].mxu0
  %487 = vmatprep.mubr.bf16.mxu0 0
  %488 = vmatmul.mubr.bf16.gmra.mrb[0].mxu0 %v231
  %v489 = vpop.f32.mrb[0].mxu0
  %v490 = vadd.f32 %v125, %v489
  %v491 = vpop.f32.mrb[0].mxu0
  %v492 = vpop.f32.mrb[0].mxu0
  %v493 = vadd.f32 %v125, %v492
  %v494 = vpop.f32.mrb[0].mxu0
  %495 = vmatprep.mubr.bf16.mxu0 0
  %496 = vmatmul.mubr.bf16.gmra.mrb[0].mxu0 %v234
  %v497 = vpop.f32.mrb[0].mxu0
  %v498 = vadd.f32 %v125, %v497
  %v499 = vpop.f32.mrb[0].mxu0
  %v500 = vpop.f32.mrb[0].mxu0
  %v501 = vadd.f32 %v125, %v500
  %v502 = vpop.f32.mrb[0].mxu0
  %503 = vmatprep.mubr.bf16.mxu0 0
  %504 = vmatmul.mubr.bf16.gmra.mrb[0].mxu0 %v237
  %v505 = vpop.f32.mrb[0].mxu0
  %v506 = vadd.f32 %v125, %v505
  %v507 = vpop.f32.mrb[0].mxu0
  %v508 = vpop.f32.mrb[0].mxu0
  %v509 = vadd.f32 %v125, %v508
  %v510 = vpop.f32.mrb[0].mxu0
  %511 = vmatprep.mubr.bf16.mxu0 0
  %512 = vmatmul.mubr.bf16.gmra.mrb[0].mxu0 %v240
  %v513 = vpop.f32.mrb[0].mxu0
  %v514 = vadd.f32 %v125, %v513
  %v515 = vpop.f32.mrb[0].mxu0
  %v516 = vpop.f32.mrb[0].mxu0
  %v517 = vadd.f32 %v125, %v516
  %v518 = vpop.f32.mrb[0].mxu0
  %519 = vmatprep.mubr.bf16.mxu0 0
  %520 = vmatmul.mubr.bf16.gmra.mrb[0].mxu0 %v243
  %v521 = vpop.f32.mrb[0].mxu0
  %v522 = vadd.f32 %v125, %v521
  %v523 = vpop.f32.mrb[0].mxu0
  %v524 = vpop.f32.mrb[0].mxu0
  %v525 = vadd.f32 %v125, %v524
  %v526 = vpop.f32.mrb[0].mxu0
  %527 = vmatprep.mubr.bf16.mxu0 0
  %528 = vmatmul.mubr.bf16.gmra.mrb[0].mxu0 %v246
  %v529 = vpop.f32.mrb[0].mxu0
  %v530 = vadd.f32 %v125, %v529
  %v531 = vpop.f32.mrb[0].mxu0
  %v532 = vpop.f32.mrb[0].mxu0
  %v533 = vadd.f32 %v125, %v532
  %v534 = vpop.f32.mrb[0].mxu0
  %535 = vmatprep.mubr.bf16.mxu0 0
  %536 = vmatmul.mubr.bf16.gmra.mrb[0].mxu0 %v249
  %v537 = vpop.f32.mrb[0].mxu0
  %v538 = vadd.f32 %v125, %v537
  %v539 = vpop.f32.mrb[0].mxu0
  %v540 = vpop.f32.mrb[0].mxu0
  %v541 = vadd.f32 %v125, %v540
  %v542 = vpop.f32.mrb[0].mxu0
  %543 = vdwg.mxu0
  %v544 = vmax.f32 %v290, 0.0
  %v545 = vmax.f32 %v293, 0.0
  %v546 = vmax.f32 %v298, 0.0
  %v547 = vmax.f32 %v301, 0.0
  %v548 = vmax.f32 %v306, 0.0
  %v549 = vmax.f32 %v309, 0.0
  %v550 = vmax.f32 %v314, 0.0
  %v551 = vmax.f32 %v317, 0.0
  %v552 = vmax.f32 %v322, 0.0
  %v553 = vmax.f32 %v325, 0.0
  %v554 = vmax.f32 %v330, 0.0
  %v555 = vmax.f32 %v333, 0.0
  %v556 = vmax.f32 %v338, 0.0
  %v557 = vmax.f32 %v341, 0.0
  %v558 = vmax.f32 %v346, 0.0
  %v559 = vmax.f32 %v349, 0.0
  %v560 = vmax.f32 %v354, 0.0
  %v561 = vmax.f32 %v357, 0.0
  %v562 = vmax.f32 %v362, 0.0
  %v563 = vmax.f32 %v365, 0.0
  %v564 = vmax.f32 %v370, 0.0
  %v565 = vmax.f32 %v373, 0.0
  %v566 = vmax.f32 %v378, 0.0
  %v567 = vmax.f32 %v381, 0.0
  %v568 = vmax.f32 %v386, 0.0
  %v569 = vmax.f32 %v389, 0.0
  %v570 = vmax.f32 %v394, 0.0
  %v571 = vmax.f32 %v397, 0.0
  %v572 = vmax.f32 %v402, 0.0
  %v573 = vmax.f32 %v405, 0.0
  %v574 = vmax.f32 %v410, 0.0
  %v575 = vmax.f32 %v413, 0.0
  %v576 = vmax.f32 %v418, 0.0
  %v577 = vmax.f32 %v421, 0.0
  %v578 = vmax.f32 %v426, 0.0
  %v579 = vmax.f32 %v429, 0.0
  %v580 = vmax.f32 %v434, 0.0
  %v581 = vmax.f32 %v437, 0.0
  %v582 = vmax.f32 %v442, 0.0
  %v583 = vmax.f32 %v445, 0.0
  %v584 = vmax.f32 %v450, 0.0
  %v585 = vmax.f32 %v453, 0.0
  %v586 = vmax.f32 %v458, 0.0
  %v587 = vmax.f32 %v461, 0.0
  %v588 = vmax.f32 %v466, 0.0
  %v589 = vmax.f32 %v469, 0.0
  %v590 = vmax.f32 %v474, 0.0
  %v591 = vmax.f32 %v477, 0.0
  %v592 = vmax.f32 %v482, 0.0
  %v593 = vmax.f32 %v485, 0.0
  %v594 = vmax.f32 %v490, 0.0
  %v595 = vmax.f32 %v493, 0.0
  %v596 = vmax.f32 %v498, 0.0
  %v597 = vmax.f32 %v501, 0.0
  %v598 = vmax.f32 %v506, 0.0
  %v599 = vmax.f32 %v509, 0.0
  %v600 = vmax.f32 %v514, 0.0
  %v601 = vmax.f32 %v517, 0.0
  %v602 = vmax.f32 %v522, 0.0
  %v603 = vmax.f32 %v525, 0.0
  %v604 = vmax.f32 %v530, 0.0
  %v605 = vmax.f32 %v533, 0.0
  %v606 = vmax.f32 %v538, 0.0
  %v607 = vmax.f32 %v541, 0.0
  %vm608 = vcmask 64512
  %609 = vst.msk [vmem:[%s3] sm:$0xff] %vm608, %v544
  %610 = vst.msk [vmem:[%s3 + $0x8] sm:$0xff] %vm608, %v545
  %611 = vst.msk [vmem:[%s3 + $0x10] sm:$0xff] %vm608, %v546
  %612 = vst.msk [vmem:[%s3 + $0x18] sm:$0xff] %vm608, %v547
  %613 = vst.msk [vmem:[%s3 + $0x20] sm:$0xff] %vm608, %v548
  %614 = vst.msk [vmem:[%s3 + $0x28] sm:$0xff] %vm608, %v549
  %615 = vst.msk [vmem:[%s3 + $0x30] sm:$0xff] %vm608, %v550
  %616 = vst.msk [vmem:[%s3 + $0x38] sm:$0xff] %vm608, %v551
  %617 = vst.msk [vmem:[%s3 + $0x40] sm:$0xff] %vm608, %v552
  %618 = vst.msk [vmem:[%s3 + $0x48] sm:$0xff] %vm608, %v553
  %619 = vst.msk [vmem:[%s3 + $0x50] sm:$0xff] %vm608, %v554
  %620 = vst.msk [vmem:[%s3 + $0x58] sm:$0xff] %vm608, %v555
  %621 = vst.msk [vmem:[%s3 + $0x60] sm:$0xff] %vm608, %v556
  %622 = vst.msk [vmem:[%s3 + $0x68] sm:$0xff] %vm608, %v557
  %623 = vst.msk [vmem:[%s3 + $0x70] sm:$0xff] %vm608, %v558
  %624 = vst.msk [vmem:[%s3 + $0x78] sm:$0xff] %vm608, %v559
  %625 = vst.msk [vmem:[%s3 + $0x80] sm:$0xff] %vm608, %v560
  %626 = vst.msk [vmem:[%s3 + $0x88] sm:$0xff] %vm608, %v561
  %627 = vst.msk [vmem:[%s3 + $0x90] sm:$0xff] %vm608, %v562
  %628 = vst.msk [vmem:[%s3 + $0x98] sm:$0xff] %vm608, %v563
  %629 = vst.msk [vmem:[%s3 + $0xa0] sm:$0xff] %vm608, %v564
  %630 = vst.msk [vmem:[%s3 + $0xa8] sm:$0xff] %vm608, %v565
  %631 = vst.msk [vmem:[%s3 + $0xb0] sm:$0xff] %vm608, %v566
  %632 = vst.msk [vmem:[%s3 + $0xb8] sm:$0xff] %vm608, %v567
  %633 = vst.msk [vmem:[%s3 + $0xc0] sm:$0xff] %vm608, %v568
  %634 = vst.msk [vmem:[%s3 + $0xc8] sm:$0xff] %vm608, %v569
  %635 = vst.msk [vmem:[%s3 + $0xd0] sm:$0xff] %vm608, %v570
  %636 = vst.msk [vmem:[%s3 + $0xd8] sm:$0xff] %vm608, %v571
  %637 = vst.msk [vmem:[%s3 + $0xe0] sm:$0xff] %vm608, %v572
  %638 = vst.msk [vmem:[%s3 + $0xe8] sm:$0xff] %vm608, %v573
  %639 = vst.msk [vmem:[%s3 + $0xf0] sm:$0xff] %vm608, %v574
  %640 = vst.msk [vmem:[%s3 + $0xf8] sm:$0xff] %vm608, %v575
  %641 = vst.msk [vmem:[%s3 + $0x100] sm:$0xff] %vm608, %v576
  %642 = vst.msk [vmem:[%s3 + $0x108] sm:$0xff] %vm608, %v577
  %643 = vst.msk [vmem:[%s3 + $0x110] sm:$0xff] %vm608, %v578
  %644 = vst.msk [vmem:[%s3 + $0x118] sm:$0xff] %vm608, %v579
  %645 = vst.msk [vmem:[%s3 + $0x120] sm:$0xff] %vm608, %v580
  %646 = vst.msk [vmem:[%s3 + $0x128] sm:$0xff] %vm608, %v581
  %647 = vst.msk [vmem:[%s3 + $0x130] sm:$0xff] %vm608, %v582
  %648 = vst.msk [vmem:[%s3 + $0x138] sm:$0xff] %vm608, %v583
  %649 = vst.msk [vmem:[%s3 + $0x140] sm:$0xff] %vm608, %v584
  %650 = vst.msk [vmem:[%s3 + $0x148] sm:$0xff] %vm608, %v585
  %651 = vst.msk [vmem:[%s3 + $0x150] sm:$0xff] %vm608, %v586
  %652 = vst.msk [vmem:[%s3 + $0x158] sm:$0xff] %vm608, %v587
  %653 = vst.msk [vmem:[%s3 + $0x160] sm:$0xff] %vm608, %v588
  %654 = vst.msk [vmem:[%s3 + $0x168] sm:$0xff] %vm608, %v589
  %655 = vst.msk [vmem:[%s3 + $0x170] sm:$0xff] %vm608, %v590
  %656 = vst.msk [vmem:[%s3 + $0x178] sm:$0xff] %vm608, %v591
  %657 = vst.msk [vmem:[%s3 + $0x180] sm:$0xff] %vm608, %v592
  %658 = vst.msk [vmem:[%s3 + $0x188] sm:$0xff] %vm608, %v593
  %659 = vst.msk [vmem:[%s3 + $0x190] sm:$0xff] %vm608, %v594
  %660 = vst.msk [vmem:[%s3 + $0x198] sm:$0xff] %vm608, %v595
  %661 = vst.msk [vmem:[%s3 + $0x1a0] sm:$0xff] %vm608, %v596
  %662 = vst.msk [vmem:[%s3 + $0x1a8] sm:$0xff] %vm608, %v597
  %663 = vst.msk [vmem:[%s3 + $0x1b0] sm:$0xff] %vm608, %v598
  %664 = vst.msk [vmem:[%s3 + $0x1b8] sm:$0xff] %vm608, %v599
  %665 = vst.msk [vmem:[%s3 + $0x1c0] sm:$0xff] %vm608, %v600
  %666 = vst.msk [vmem:[%s3 + $0x1c8] sm:$0xff] %vm608, %v601
  %667 = vst.msk [vmem:[%s3 + $0x1d0] sm:$0xff] %vm608, %v602
  %668 = vst.msk [vmem:[%s3 + $0x1d8] sm:$0xff] %vm608, %v603
  %669 = vst.msk [vmem:[%s3 + $0x1e0] sm:$0xff] %vm608, %v604
  %670 = vst.msk [vmem:[%s3 + $0x1e8] sm:$0xff] %vm608, %v605
  %671 = vst.msk [vmem:[%s3 + $0x1f0] sm:$0xff] %vm608, %v606
  %672 = vst.msk [vmem:[%s3 + $0x1f8] sm:$0xff] %vm608, %v607
  // Predicated region
  $region14: #{vision_transformer_forward.11} parent=0 // pred_check
    _
  $region15: #{vision_transformer_forward.11} parent=0 // pred_check_branch
    %674 = sbr.rel (0) target = $region17
  $region16: #{vision_transformer_forward.11} parent=0 // pred_region
    _
  $region17: #{vision_transformer_forward.11} parent=0 // pred_fallthru
    _
  // Predicated region
  $region18: #{vision_transformer_forward.11} parent=0 // pred_check
    _
  $region19: #{vision_transformer_forward.11} parent=0 // pred_check_branch
    %676 = sbr.rel (0) target = $region21
  $region20: #{vision_transformer_forward.11} parent=0 // pred_region
    _
  $region21: #{vision_transformer_forward.11} parent=0 // pred_fallthru
    _

// kernel: vision_transformer_forward.12
$region0: #{vision_transformer_forward.12}
  #allocation0 [shape = 'u32[]', space=smem, size = 0x4, offset = 0x4, fixed_abs, tag = 'smem constant byte address 0x4 - core index']
  #allocation1 [shape = 'u32[144,128]{1,0:T(1,128)}', space=vmem, size = 0x12000, scoped, tag = 'internal scratch']
  %s0 = inlined_call_operand.vmem [shape: f32[16,256], index: 0, kind: input, shape index: {}]
  %s1 = inlined_call_operand.vmem [shape: f32[16,64], index: 1, kind: output, shape index: {}]
  %s2 = sld [smem:[#allocation0]]
  $region14: #{vision_transformer_forward.12} parent=0
    _
  %s4 = ssub.s32 1, %s2
  %s5 = scalar_select 0, %s4, %s2
  // Predicated region
  $region2: #{vision_transformer_forward.12} parent=0 // pred_check
    _
  $region3: #{vision_transformer_forward.12} parent=0 // pred_check_branch
    %7 = sbr.rel (0) target = $region5
  $region4: #{vision_transformer_forward.12} parent=0 // pred_region
    _
  $region5: #{vision_transformer_forward.12} parent=0 // pred_fallthru
    _
  %v8 = vld [vmem:[%s0] sm:$0xff]
  %v9 = vld [vmem:[%s0 + $0x8] sm:$0xff]
  %v10 = vld [vmem:[%s0 + $0x10] sm:$0xff]
  %v11 = vld [vmem:[%s0 + $0x18] sm:$0xff]
  %v12 = vmax.f32 %v8, %v9
  %v13 = vmax.f32 %v10, %v11
  %16 = vrot.lane.b32.xlu0 %v12, 120
  %v17 = vpop.permute.xlu0 %16
  %18 = vrot.lane.b32.xlu0 %v13, 120
  %v19 = vpop.permute.xlu0 %18
  %v22 = vmax.f32 %v12, %v17
  %v23 = vmax.f32 %v13, %v19
  %26 = vrot.lane.b32.xlu0 %v22, 120
  %v27 = vpop.permute.xlu0 %26
  %28 = vrot.lane.b32.xlu0 %v23, 120
  %v29 = vpop.permute.xlu0 %28
  %32 = vrot.lane.b32.xlu0 %v22, 112
  %v33 = vpop.permute.xlu0 %32
  %34 = vrot.lane.b32.xlu0 %v23, 112
  %v35 = vpop.permute.xlu0 %34
  %38 = vrot.lane.b32.xlu0 %v22, 104
  %v39 = vpop.permute.xlu0 %38
  %40 = vrot.lane.b32.xlu0 %v23, 104
  %v41 = vpop.permute.xlu0 %40
  %44 = vrot.lane.b32.xlu0 %v22, 96
  %v45 = vpop.permute.xlu0 %44
  %46 = vrot.lane.b32.xlu0 %v23, 96
  %v47 = vpop.permute.xlu0 %46
  %50 = vrot.lane.b32.xlu0 %v22, 88
  %v51 = vpop.permute.xlu0 %50
  %52 = vrot.lane.b32.xlu0 %v23, 88
  %v53 = vpop.permute.xlu0 %52
  %56 = vrot.lane.b32.xlu0 %v22, 80
  %v57 = vpop.permute.xlu0 %56
  %58 = vrot.lane.b32.xlu0 %v23, 80
  %v59 = vpop.permute.xlu0 %58
  %62 = vrot.lane.b32.xlu0 %v22, 72
  %v63 = vpop.permute.xlu0 %62
  %64 = vrot.lane.b32.xlu0 %v23, 72
  %v65 = vpop.permute.xlu0 %64
  %vm68 = vcmask 64512
  %v69 = vsel %vm68, %v22, %v27
  %v70 = vsel %vm68, %v23, %v29
  %vm71 = vcmask 130048
  %v72 = vsel %vm71, %v69, %v33
  %v73 = vsel %vm71, %v70, %v35
  %vm74 = vcmask 195584
  %v75 = vsel %vm74, %v72, %v39
  %v76 = vsel %vm74, %v73, %v41
  %vm77 = vcmask 261120
  %v78 = vsel %vm77, %v75, %v45
  %v79 = vsel %vm77, %v76, %v47
  %vm80 = vcmask 326656
  %v81 = vsel %vm80, %v78, %v51
  %v82 = vsel %vm80, %v79, %v53
  %vm83 = vcmask 392192
  %v84 = vsel %vm83, %v81, %v57
  %v85 = vsel %vm83, %v82, %v59
  %vm86 = vcmask 457728
  %v87 = vsel %vm86, %v84, %v63
  %v88 = vsel %vm86, %v85, %v65
  %vm89 = vcmask 523264
  %90 = vst.msk [vmem:[%s1] sm:$0xff] %vm89, %v87
  %91 = vst.msk [vmem:[%s1 + $0x8] sm:$0xff] %vm89, %v88
  // Predicated region
  $region6: #{vision_transformer_forward.12} parent=0 // pred_check
    _
  $region7: #{vision_transformer_forward.12} parent=0 // pred_check_branch
    %93 = sbr.rel (0) target = $region9
  $region8: #{vision_transformer_forward.12} parent=0 // pred_region
    _
  $region9: #{vision_transformer_forward.12} parent=0 // pred_fallthru
    _
  // Predicated region
  $region10: #{vision_transformer_forward.12} parent=0 // pred_check
    _
  $region11: #{vision_transformer_forward.12} parent=0 // pred_check_branch
    %95 = sbr.rel (0) target = $region13
  $region12: #{vision_transformer_forward.12} parent=0 // pred_region
    _
  $region13: #{vision_transformer_forward.12} parent=0 // pred_fallthru
    _

// kernel: vision_transformer_forward.13
$region0: #{vision_transformer_forward.13}
  #allocation0 [shape = 'u32[]', space=smem, size = 0x4, offset = 0x4, fixed_abs, tag = 'smem constant byte address 0x4 - core index']
  #allocation1 [shape = 'u32[144,128]{1,0:T(1,128)}', space=vmem, size = 0x12000, scoped, tag = 'internal scratch']
  %s0 = inlined_call_operand.vmem [shape: f32[32,32], index: 0, kind: input, shape index: {}]
  %s1 = inlined_call_operand.vmem [shape: bf16[32,32], index: 1, kind: input, shape index: {}]
  %s2 = inlined_call_operand.vmem [shape: f32[1,32], index: 2, kind: input, shape index: {}]
  %s3 = inlined_call_operand.vmem [shape: f32[32,32], index: 3, kind: output, shape index: {}]
  %s4 = sld [smem:[#allocation0]]
  $region22: #{vision_transformer_forward.13} parent=0
    _
  %s6 = ssub.s32 1, %s4
  %s7 = scalar_select 0, %s6, %s4
  // Predicated region
  $region2: #{vision_transformer_forward.13} parent=0 // pred_check
    _
  $region3: #{vision_transformer_forward.13} parent=0 // pred_check_branch
    %9 = sbr.rel (0) target = $region5
  $region4: #{vision_transformer_forward.13} parent=0 // pred_region
    _
  $region5: #{vision_transformer_forward.13} parent=0 // pred_fallthru
    _
  // Predicated region
  $region6: #{vision_transformer_forward.13} parent=0 // pred_check
    _
  $region7: #{vision_transformer_forward.13} parent=0 // pred_check_branch
    %11 = sbr.rel (0) target = $region9
  $region8: #{vision_transformer_forward.13} parent=0 // pred_region
    _
  $region9: #{vision_transformer_forward.13} parent=0 // pred_fallthru
    _
  // Predicated region
  $region10: #{vision_transformer_forward.13} parent=0 // pred_check
    _
  $region11: #{vision_transformer_forward.13} parent=0 // pred_check_branch
    %13 = sbr.rel (0) target = $region13
  $region12: #{vision_transformer_forward.13} parent=0 // pred_region
    _
  $region13: #{vision_transformer_forward.13} parent=0 // pred_fallthru
    _
  %v15 = vld [vmem:[%s0] sm:$0xff]
  %v16 = vld [vmem:[%s0 + $0x8] sm:$0xff]
  %v17 = vld [vmem:[%s0 + $0x10] sm:$0xff]
  %v18 = vld [vmem:[%s0 + $0x18] sm:$0xff]
  %v19 = vpack.c.bf16 %v16, %v15
  %v20 = vpack.c.bf16 %v18, %v17
  %v21 = vld [vmem:[%s1] sm:$0xf]
  %v22 = vld [vmem:[%s1 + $0x4] sm:$0xf]
  %v23 = vld [vmem:[%s1 + $0x8] sm:$0xf]
  %v24 = vld [vmem:[%s1 + $0xc] sm:$0xf]
  %v25 = vld [vmem:[%s2] sm:$0x1]
  %v27 = vlaneseq
  %v28 = vshrl.u32 %v27, 7
  %v29 = vsub.s32 0, %v28
  %v30 = vrot.slane %v25, %v29
  %v36 = vunpack.c.l.b16 %v21
  %v37 = vunpack.c.l.b16 %v22
  %v38 = vunpack.c.l.b16 %v23
  %v39 = vunpack.c.l.b16 %v24
  %v40 = vpack.c.b16 %v37, %v36
  %v41 = vpack.c.b16 %v39, %v38
  %vm44 = vcmask 261120
  %v46 = vsel %vm44, %v19, 0
  %v49 = vsel %vm44, %v20, 0
  %51 = vmatprep.subr.bf16.mxu0 0
  %52 = vmatpush1.bf16.msra.mxu0 %v40
  %53 = vmatprep.subr.bf16.mxu0 0
  %54 = vmatpush1.bf16.msra.mxu0 %v41
  %55 = vmatprep.subr.bf16.mxu0 0
  %56 = vmatpush1.bf16.msra.mxu0 0
  %57 = vmatprep.subr.bf16.mxu0 0
  %58 = vmatpush1.bf16.msra.mxu0 0
  %59 = vmatprep.subr.bf16.mxu0 0
  %60 = vmatpush1.bf16.msra.mxu0 0
  %61 = vmatprep.subr.bf16.mxu0 0
  %62 = vmatpush1.bf16.msra.mxu0 0
  %63 = vmatprep.subr.bf16.mxu0 0
  %64 = vmatpush1.bf16.msra.mxu0 0
  %65 = vmatprep.subr.bf16.mxu0 0
  %66 = vmatpush1.bf16.msra.mxu0 0
  %67 = vmatprep.subr.bf16.mxu0 0
  %68 = vmatpush1.bf16.msra.mxu0 0
  %69 = vmatprep.subr.bf16.mxu0 0
  %70 = vmatpush1.bf16.msra.mxu0 0
  %71 = vmatprep.subr.bf16.mxu0 0
  %72 = vmatpush1.bf16.msra.mxu0 0
  %73 = vmatprep.subr.bf16.mxu0 0
  %74 = vmatpush1.bf16.msra.mxu0 0
  %75 = vmatprep.subr.bf16.mxu0 0
  %76 = vmatpush1.bf16.msra.mxu0 0
  %77 = vmatprep.subr.bf16.mxu0 0
  %78 = vmatpush1.bf16.msra.mxu0 0
  %79 = vmatprep.subr.bf16.mxu0 0
  %80 = vmatpush1.bf16.msra.mxu0 0
  %81 = vmatprep.subr.bf16.mxu0 0
  %82 = vmatpush1.bf16.msra.mxu0 0
  %83 = vmatprep.mubr.bf16.mxu0 0
  %84 = vmatmul.mubr.bf16.gmra.mrb[0].mxu0 %v46
  %v85 = vpop.f32.mrb[0].mxu0
  %v86 = vadd.f32 %v30, %v85
  %v87 = vpop.f32.mrb[0].mxu0
  %v88 = vpop.f32.mrb[0].mxu0
  %v89 = vadd.f32 %v30, %v88
  %v90 = vpop.f32.mrb[0].mxu0
  %91 = vmatprep.mubr.bf16.mxu0 0
  %92 = vmatmul.mubr.bf16.gmra.mrb[0].mxu0 %v49
  %v93 = vpop.f32.mrb[0].mxu0
  %v94 = vadd.f32 %v30, %v93
  %v95 = vpop.f32.mrb[0].mxu0
  %v96 = vpop.f32.mrb[0].mxu0
  %v97 = vadd.f32 %v30, %v96
  %v98 = vpop.f32.mrb[0].mxu0
  %99 = vdwg.mxu0
  %100 = vst.msk [vmem:[%s3] sm:$0xff] %vm44, %v86
  %101 = vst.msk [vmem:[%s3 + $0x8] sm:$0xff] %vm44, %v89
  %102 = vst.msk [vmem:[%s3 + $0x10] sm:$0xff] %vm44, %v94
  %103 = vst.msk [vmem:[%s3 + $0x18] sm:$0xff] %vm44, %v97
  // Predicated region
  $region14: #{vision_transformer_forward.13} parent=0 // pred_check
    _
  $region15: #{vision_transformer_forward.13} parent=0 // pred_check_branch
    %105 = sbr.rel (0) target = $region17
  $region16: #{vision_transformer_forward.13} parent=0 // pred_region
    _
  $region17: #{vision_transformer_forward.13} parent=0 // pred_fallthru
    _
  // Predicated region
  $region18: #{vision_transformer_forward.13} parent=0 // pred_check
    _
  $region19: #{vision_transformer_forward.13} parent=0 // pred_check_branch
    %107 = sbr.rel (0) target = $region21
  $region20: #{vision_transformer_forward.13} parent=0 // pred_region
    _
  $region21: #{vision_transformer_forward.13} parent=0 // pred_fallthru
    _

// kernel: vision_transformer_forward.16
$region0: #{vision_transformer_forward.16}
  #allocation0 [shape = 'u32[]', space=smem, size = 0x4, offset = 0x4, fixed_abs, tag = 'smem constant byte address 0x4 - core index']
  #allocation1 [shape = 'u32[144,128]{1,0:T(1,128)}', space=vmem, size = 0x12000, scoped, tag = 'internal scratch']
  %s0 = inlined_call_operand.vmem [shape: f32[32,288], index: 0, kind: input, shape index: {}]
  %s1 = inlined_call_operand.vmem [shape: bf16[288,16], index: 1, kind: input, shape index: {}]
  %s2 = inlined_call_operand.vmem [shape: f32[1,16], index: 2, kind: input, shape index: {}]
  %s3 = inlined_call_operand.vmem [shape: f32[32,16], index: 3, kind: output, shape index: {}]
  %s4 = sld [smem:[#allocation0]]
  $region22: #{vision_transformer_forward.16} parent=0
    _
  %s6 = ssub.s32 1, %s4
  %s7 = scalar_select 0, %s6, %s4
  // Predicated region
  $region2: #{vision_transformer_forward.16} parent=0 // pred_check
    _
  $region3: #{vision_transformer_forward.16} parent=0 // pred_check_branch
    %9 = sbr.rel (0) target = $region5
  $region4: #{vision_transformer_forward.16} parent=0 // pred_region
    _
  $region5: #{vision_transformer_forward.16} parent=0 // pred_fallthru
    _
  // Predicated region
  $region6: #{vision_transformer_forward.16} parent=0 // pred_check
    _
  $region7: #{vision_transformer_forward.16} parent=0 // pred_check_branch
    %11 = sbr.rel (0) target = $region9
  $region8: #{vision_transformer_forward.16} parent=0 // pred_region
    _
  $region9: #{vision_transformer_forward.16} parent=0 // pred_fallthru
    _
  // Predicated region
  $region10: #{vision_transformer_forward.16} parent=0 // pred_check
    _
  $region11: #{vision_transformer_forward.16} parent=0 // pred_check_branch
    %13 = sbr.rel (0) target = $region13
  $region12: #{vision_transformer_forward.16} parent=0 // pred_region
    _
  $region13: #{vision_transformer_forward.16} parent=0 // pred_fallthru
    _
  %v15 = vld [vmem:[%s0] sm:$0xff]
  %v16 = vld [vmem:[%s0 + $0x8] sm:$0xff]
  %v17 = vld [vmem:[%s0 + $0x10] sm:$0xff]
  %v18 = vld [vmem:[%s0 + $0x18] sm:$0xff]
  %v19 = vld [vmem:[%s0 + $0x20] sm:$0xff]
  %v20 = vld [vmem:[%s0 + $0x28] sm:$0xff]
  %v21 = vld [vmem:[%s0 + $0x30] sm:$0xff]
  %v22 = vld [vmem:[%s0 + $0x38] sm:$0xff]
  %v23 = vld [vmem:[%s0 + $0x40] sm:$0xff]
  %v24 = vld [vmem:[%s0 + $0x48] sm:$0xff]
  %v25 = vld [vmem:[%s0 + $0x50] sm:$0xff]
  %v26 = vld [vmem:[%s0 + $0x58] sm:$0xff]
  %v27 = vpack.c.bf16 %v18, %v15
  %v28 = vpack.c.bf16 %v19, %v16
  %v29 = vpack.c.bf16 %v20, %v17
  %v30 = vpack.c.bf16 %v24, %v21
  %v31 = vpack.c.bf16 %v25, %v22
  %v32 = vpack.c.bf16 %v26, %v23
  %v33 = vld [vmem:[%s1] sm:$0xf]
  %v34 = vld [vmem:[%s1 + $0x4] sm:$0xf]
  %v35 = vld [vmem:[%s1 + $0x8] sm:$0xf]
  %v36 = vld [vmem:[%s1 + $0xc] sm:$0xf]
  %v37 = vld [vmem:[%s1 + $0x10] sm:$0xf]
  %v38 = vld [vmem:[%s1 + $0x14] sm:$0xf]
  %v39 = vld [vmem:[%s1 + $0x18] sm:$0xf]
  %v40 = vld [vmem:[%s1 + $0x1c] sm:$0xf]
  %v41 = vld [vmem:[%s1 + $0x20] sm:$0xf]
  %v42 = vld [vmem:[%s1 + $0x24] sm:$0xf]
  %v43 = vld [vmem:[%s1 + $0x28] sm:$0xf]
  %v44 = vld [vmem:[%s1 + $0x2c] sm:$0xf]
  %v45 = vld [vmem:[%s1 + $0x30] sm:$0xf]
  %v46 = vld [vmem:[%s1 + $0x34] sm:$0xf]
  %v47 = vld [vmem:[%s1 + $0x38] sm:$0xf]
  %v48 = vld [vmem:[%s1 + $0x3c] sm:$0xf]
  %v49 = vld [vmem:[%s1 + $0x40] sm:$0xf]
  %v50 = vld [vmem:[%s1 + $0x44] sm:$0xf]
  %v51 = vld [vmem:[%s1 + $0x48] sm:$0xf]
  %v52 = vld [vmem:[%s1 + $0x4c] sm:$0xf]
  %v53 = vld [vmem:[%s1 + $0x50] sm:$0xf]
  %v54 = vld [vmem:[%s1 + $0x54] sm:$0xf]
  %v55 = vld [vmem:[%s1 + $0x58] sm:$0xf]
  %v56 = vld [vmem:[%s1 + $0x5c] sm:$0xf]
  %v57 = vld [vmem:[%s1 + $0x60] sm:$0xf]
  %v58 = vld [vmem:[%s1 + $0x64] sm:$0xf]
  %v59 = vld [vmem:[%s1 + $0x68] sm:$0xf]
  %v60 = vld [vmem:[%s1 + $0x6c] sm:$0xf]
  %v61 = vld [vmem:[%s1 + $0x70] sm:$0xf]
  %v62 = vld [vmem:[%s1 + $0x74] sm:$0xf]
  %v63 = vld [vmem:[%s1 + $0x78] sm:$0xf]
  %v64 = vld [vmem:[%s1 + $0x7c] sm:$0xf]
  %v65 = vld [vmem:[%s1 + $0x80] sm:$0xf]
  %v66 = vld [vmem:[%s1 + $0x84] sm:$0xf]
  %v67 = vld [vmem:[%s1 + $0x88] sm:$0xf]
  %v68 = vld [vmem:[%s1 + $0x8c] sm:$0xf]
  %v69 = vld [vmem:[%s2] sm:$0x1]
  %v71 = vlaneseq
  %v72 = vshrl.u32 %v71, 7
  %v73 = vsub.s32 0, %v72
  %v74 = vrot.slane %v69, %v73
  %v112 = vunpack.c.l.b16 %v33
  %v113 = vunpack.c.l.b16 %v34
  %v114 = vunpack.c.l.b16 %v35
  %v115 = vunpack.c.l.b16 %v36
  %v116 = vunpack.c.l.b16 %v37
  %v117 = vunpack.c.l.b16 %v38
  %v118 = vunpack.c.l.b16 %v39
  %v119 = vunpack.c.l.b16 %v40
  %v120 = vunpack.c.l.b16 %v41
  %v121 = vunpack.c.l.b16 %v42
  %v122 = vunpack.c.l.b16 %v43
  %v123 = vunpack.c.l.b16 %v44
  %v124 = vunpack.c.l.b16 %v45
  %v125 = vunpack.c.l.b16 %v46
  %v126 = vunpack.c.l.b16 %v47
  %v127 = vunpack.c.l.b16 %v48
  %v128 = vunpack.c.l.b16 %v49
  %v129 = vunpack.c.l.b16 %v50
  %v130 = vunpack.c.l.b16 %v51
  %v131 = vunpack.c.l.b16 %v52
  %v132 = vunpack.c.l.b16 %v53
  %v133 = vunpack.c.l.b16 %v54
  %v134 = vunpack.c.l.b16 %v55
  %v135 = vunpack.c.l.b16 %v56
  %v136 = vunpack.c.l.b16 %v57
  %v137 = vunpack.c.l.b16 %v58
  %v138 = vunpack.c.l.b16 %v59
  %v139 = vunpack.c.l.b16 %v60
  %v140 = vunpack.c.l.b16 %v61
  %v141 = vunpack.c.l.b16 %v62
  %v142 = vunpack.c.l.b16 %v63
  %v143 = vunpack.c.l.b16 %v64
  %v144 = vunpack.c.l.b16 %v65
  %v145 = vunpack.c.l.b16 %v66
  %v146 = vunpack.c.l.b16 %v67
  %v147 = vunpack.c.l.b16 %v68
  %v148 = vpack.c.b16 %v113, %v112
  %v149 = vpack.c.b16 %v115, %v114
  %v150 = vpack.c.b16 %v117, %v116
  %v151 = vpack.c.b16 %v119, %v118
  %v152 = vpack.c.b16 %v121, %v120
  %v153 = vpack.c.b16 %v123, %v122
  %v154 = vpack.c.b16 %v125, %v124
  %v155 = vpack.c.b16 %v127, %v126
  %v156 = vpack.c.b16 %v129, %v128
  %v157 = vpack.c.b16 %v131, %v130
  %v158 = vpack.c.b16 %v133, %v132
  %v159 = vpack.c.b16 %v135, %v134
  %v160 = vpack.c.b16 %v137, %v136
  %v161 = vpack.c.b16 %v139, %v138
  %v162 = vpack.c.b16 %v141, %v140
  %v163 = vpack.c.b16 %v143, %v142
  %v164 = vpack.c.b16 %v145, %v144
  %v165 = vpack.c.b16 %v147, %v146
  %vm184 = vcmask 261120
  %v186 = vsel %vm184, %v29, 0
  %v189 = vsel %vm184, %v32, 0
  %191 = vmatprep.subr.bf16.mxu0 0
  %192 = vmatpush1.bf16.msra.mxu0 %v148
  %193 = vmatprep.subr.bf16.mxu0 0
  %194 = vmatpush1.bf16.msra.mxu0 %v149
  %195 = vmatprep.subr.bf16.mxu0 0
  %196 = vmatpush1.bf16.msra.mxu0 %v150
  %197 = vmatprep.subr.bf16.mxu0 0
  %198 = vmatpush1.bf16.msra.mxu0 %v151
  %199 = vmatprep.subr.bf16.mxu0 0
  %200 = vmatpush1.bf16.msra.mxu0 %v152
  %201 = vmatprep.subr.bf16.mxu0 0
  %202 = vmatpush1.bf16.msra.mxu0 %v153
  %203 = vmatprep.subr.bf16.mxu0 0
  %204 = vmatpush1.bf16.msra.mxu0 %v154
  %205 = vmatprep.subr.bf16.mxu0 0
  %206 = vmatpush1.bf16.msra.mxu0 %v155
  %207 = vmatprep.subr.bf16.mxu0 0
  %208 = vmatpush1.bf16.msra.mxu0 %v156
  %209 = vmatprep.subr.bf16.mxu0 0
  %210 = vmatpush1.bf16.msra.mxu0 %v157
  %211 = vmatprep.subr.bf16.mxu0 0
  %212 = vmatpush1.bf16.msra.mxu0 %v158
  %213 = vmatprep.subr.bf16.mxu0 0
  %214 = vmatpush1.bf16.msra.mxu0 %v159
  %215 = vmatprep.subr.bf16.mxu0 0
  %216 = vmatpush1.bf16.msra.mxu0 %v160
  %217 = vmatprep.subr.bf16.mxu0 0
  %218 = vmatpush1.bf16.msra.mxu0 %v161
  %219 = vmatprep.subr.bf16.mxu0 0
  %220 = vmatpush1.bf16.msra.mxu0 %v162
  %221 = vmatprep.subr.bf16.mxu0 0
  %222 = vmatpush1.bf16.msra.mxu0 %v163
  %223 = vmatprep.mubr.bf16.mxu0 %v28
  %224 = vmatmul.mubr.bf16.gmra.mrb[0].mxu0 %v27
  %v225 = vpop.f32.mrb[0].mxu0
  %v226 = vadd.f32 %v74, %v225
  %v227 = vpop.f32.mrb[0].mxu0
  %v228 = vpop.f32.mrb[0].mxu0
  %v229 = vadd.f32 %v74, %v228
  %v230 = vpop.f32.mrb[0].mxu0
  %231 = vmatprep.mubr.bf16.mxu0 %v31
  %232 = vmatmul.mubr.bf16.gmra.mrb[0].mxu0 %v30
  %v233 = vpop.f32.mrb[0].mxu0
  %v234 = vadd.f32 %v74, %v233
  %v235 = vpop.f32.mrb[0].mxu0
  %v236 = vpop.f32.mrb[0].mxu0
  %v237 = vadd.f32 %v74, %v236
  %v238 = vpop.f32.mrb[0].mxu0
  %239 = vdwg.mxu0
  %240 = vmatprep.subr.bf16.mxu0 0
  %241 = vmatpush1.bf16.msra.mxu0 %v164
  %242 = vmatprep.subr.bf16.mxu0 0
  %243 = vmatpush1.bf16.msra.mxu0 %v165
  %244 = vmatprep.subr.bf16.mxu0 0
  %245 = vmatpush1.bf16.msra.mxu0 0
  %246 = vmatprep.subr.bf16.mxu0 0
  %247 = vmatpush1.bf16.msra.mxu0 0
  %248 = vmatprep.subr.bf16.mxu0 0
  %249 = vmatpush1.bf16.msra.mxu0 0
  %250 = vmatprep.subr.bf16.mxu0 0
  %251 = vmatpush1.bf16.msra.mxu0 0
  %252 = vmatprep.subr.bf16.mxu0 0
  %253 = vmatpush1.bf16.msra.mxu0 0
  %254 = vmatprep.subr.bf16.mxu0 0
  %255 = vmatpush1.bf16.msra.mxu0 0
  %256 = vmatprep.subr.bf16.mxu0 0
  %257 = vmatpush1.bf16.msra.mxu0 0
  %258 = vmatprep.subr.bf16.mxu0 0
  %259 = vmatpush1.bf16.msra.mxu0 0
  %260 = vmatprep.subr.bf16.mxu0 0
  %261 = vmatpush1.bf16.msra.mxu0 0
  %262 = vmatprep.subr.bf16.mxu0 0
  %263 = vmatpush1.bf16.msra.mxu0 0
  %264 = vmatprep.subr.bf16.mxu0 0
  %265 = vmatpush1.bf16.msra.mxu0 0
  %266 = vmatprep.subr.bf16.mxu0 0
  %267 = vmatpush1.bf16.msra.mxu0 0
  %268 = vmatprep.subr.bf16.mxu0 0
  %269 = vmatpush1.bf16.msra.mxu0 0
  %270 = vmatprep.subr.bf16.mxu0 0
  %271 = vmatpush1.bf16.msra.mxu0 0
  %272 = vmatprep.mubr.bf16.mxu0 0
  %273 = vmatmul.mubr.bf16.gmra.mrb[0].mxu0 %v186
  %v274 = vpop.f32.mrb[0].mxu0
  %v275 = vadd.f32 %v226, %v274
  %v276 = vpop.f32.mrb[0].mxu0
  %v277 = vpop.f32.mrb[0].mxu0
  %v278 = vadd.f32 %v229, %v277
  %v279 = vpop.f32.mrb[0].mxu0
  %280 = vmatprep.mubr.bf16.mxu0 0
  %281 = vmatmul.mubr.bf16.gmra.mrb[0].mxu0 %v189
  %v282 = vpop.f32.mrb[0].mxu0
  %v283 = vadd.f32 %v234, %v282
  %v284 = vpop.f32.mrb[0].mxu0
  %v285 = vpop.f32.mrb[0].mxu0
  %v286 = vadd.f32 %v237, %v285
  %v287 = vpop.f32.mrb[0].mxu0
  %288 = vdwg.mxu0
  %v289 = vmax.f32 %v275, 0.0
  %v290 = vmax.f32 %v278, 0.0
  %v291 = vmax.f32 %v283, 0.0
  %v292 = vmax.f32 %v286, 0.0
  %vm293 = vcmask 130048
  %294 = vst.msk [vmem:[%s3] sm:$0xff] %vm293, %v289
  %295 = vst.msk [vmem:[%s3 + $0x8] sm:$0xff] %vm293, %v290
  %296 = vst.msk [vmem:[%s3 + $0x10] sm:$0xff] %vm293, %v291
  %297 = vst.msk [vmem:[%s3 + $0x18] sm:$0xff] %vm293, %v292
  // Predicated region
  $region14: #{vision_transformer_forward.16} parent=0 // pred_check
    _
  $region15: #{vision_transformer_forward.16} parent=0 // pred_check_branch
    %299 = sbr.rel (0) target = $region17
  $region16: #{vision_transformer_forward.16} parent=0 // pred_region
    _
  $region17: #{vision_transformer_forward.16} parent=0 // pred_fallthru
    _
  // Predicated region
  $region18: #{vision_transformer_forward.16} parent=0 // pred_check
    _
  $region19: #{vision_transformer_forward.16} parent=0 // pred_check_branch
    %301 = sbr.rel (0) target = $region21
  $region20: #{vision_transformer_forward.16} parent=0 // pred_region
    _
  $region21: #{vision_transformer_forward.16} parent=0 // pred_fallthru
    _

// kernel: vision_transformer_forward.14
$region0: #{vision_transformer_forward.14}
  #allocation0 [shape = 'u32[]', space=smem, size = 0x4, offset = 0x4, fixed_abs, tag = 'smem constant byte address 0x4 - core index']
  #allocation1 [shape = 'u32[144,128]{1,0:T(1,128)}', space=vmem, size = 0x12000, scoped, tag = 'internal scratch']
  %s0 = inlined_call_operand.vmem [shape: f32[32,32], index: 0, kind: input, shape index: {}]
  %s1 = inlined_call_operand.vmem [shape: f32[1,32], index: 1, kind: input, shape index: {}]
  %s2 = inlined_call_operand.vmem [shape: f32[1,32], index: 2, kind: input, shape index: {}]
  %s3 = inlined_call_operand.vmem [shape: bf16[32,96], index: 3, kind: input, shape index: {}]
  %s4 = inlined_call_operand.vmem [shape: f32[1,96], index: 4, kind: input, shape index: {}]
  %s5 = inlined_call_operand.vmem [shape: bf16[32,32], index: 5, kind: input, shape index: {}]
  %s6 = inlined_call_operand.vmem [shape: f32[1,32], index: 6, kind: input, shape index: {}]
  %s7 = inlined_call_operand.vmem [shape: f32[1,32], index: 7, kind: input, shape index: {}]
  %s8 = inlined_call_operand.vmem [shape: f32[1,32], index: 8, kind: input, shape index: {}]
  %s9 = inlined_call_operand.vmem [shape: bf16[32,64], index: 9, kind: input, shape index: {}]
  %s10 = inlined_call_operand.vmem [shape: f32[1,64], index: 10, kind: input, shape index: {}]
  %s11 = inlined_call_operand.vmem [shape: bf16[64,32], index: 11, kind: input, shape index: {}]
  %s12 = inlined_call_operand.vmem [shape: f32[1,32], index: 12, kind: input, shape index: {}]
  %s13 = inlined_call_operand.vmem [shape: f32[1,32], index: 13, kind: input, shape index: {}]
  %s14 = inlined_call_operand.vmem [shape: f32[1,32], index: 14, kind: input, shape index: {}]
  %s15 = inlined_call_operand.vmem [shape: f32[32,32], index: 15, kind: output, shape index: {}]
  %s16 = sld [smem:[#allocation0]]
  $region70: #{vision_transformer_forward.14} parent=0
    _
  %s18 = ssub.s32 1, %s16
  %s19 = scalar_select 0, %s18, %s16
  // Predicated region
  $region2: #{vision_transformer_forward.14} parent=0 // pred_check
    _
  $region3: #{vision_transformer_forward.14} parent=0 // pred_check_branch
    %21 = sbr.rel (0) target = $region5
  $region4: #{vision_transformer_forward.14} parent=0 // pred_region
    _
  $region5: #{vision_transformer_forward.14} parent=0 // pred_fallthru
    _
  // Predicated region
  $region6: #{vision_transformer_forward.14} parent=0 // pred_check
    _
  $region7: #{vision_transformer_forward.14} parent=0 // pred_check_branch
    %23 = sbr.rel (0) target = $region9
  $region8: #{vision_transformer_forward.14} parent=0 // pred_region
    _
  $region9: #{vision_transformer_forward.14} parent=0 // pred_fallthru
    _
  // Predicated region
  $region10: #{vision_transformer_forward.14} parent=0 // pred_check
    _
  $region11: #{vision_transformer_forward.14} parent=0 // pred_check_branch
    %25 = sbr.rel (0) target = $region13
  $region12: #{vision_transformer_forward.14} parent=0 // pred_region
    _
  $region13: #{vision_transformer_forward.14} parent=0 // pred_fallthru
    _
  // Predicated region
  $region14: #{vision_transformer_forward.14} parent=0 // pred_check
    _
  $region15: #{vision_transformer_forward.14} parent=0 // pred_check_branch
    %27 = sbr.rel (0) target = $region17
  $region16: #{vision_transformer_forward.14} parent=0 // pred_region
    _
  $region17: #{vision_transformer_forward.14} parent=0 // pred_fallthru
    _
  // Predicated region
  $region18: #{vision_transformer_forward.14} parent=0 // pred_check
    _
  $region19: #{vision_transformer_forward.14} parent=0 // pred_check_branch
    %29 = sbr.rel (0) target = $region21
  $region20: #{vision_transformer_forward.14} parent=0 // pred_region
    _
  $region21: #{vision_transformer_forward.14} parent=0 // pred_fallthru
    _
  // Predicated region
  $region22: #{vision_transformer_forward.14} parent=0 // pred_check
    _
  $region23: #{vision_transformer_forward.14} parent=0 // pred_check_branch
    %31 = sbr.rel (0) target = $region25
  $region24: #{vision_transformer_forward.14} parent=0 // pred_region
    _
  $region25: #{vision_transformer_forward.14} parent=0 // pred_fallthru
    _
  // Predicated region
  $region26: #{vision_transformer_forward.14} parent=0 // pred_check
    _
  $region27: #{vision_transformer_forward.14} parent=0 // pred_check_branch
    %33 = sbr.rel (0) target = $region29
  $region28: #{vision_transformer_forward.14} parent=0 // pred_region
    _
  $region29: #{vision_transformer_forward.14} parent=0 // pred_fallthru
    _
  // Predicated region
  $region30: #{vision_transformer_forward.14} parent=0 // pred_check
    _
  $region31: #{vision_transformer_forward.14} parent=0 // pred_check_branch
    %35 = sbr.rel (0) target = $region33
  $region32: #{vision_transformer_forward.14} parent=0 // pred_region
    _
  $region33: #{vision_transformer_forward.14} parent=0 // pred_fallthru
    _
  // Predicated region
  $region34: #{vision_transformer_forward.14} parent=0 // pred_check
    _
  $region35: #{vision_transformer_forward.14} parent=0 // pred_check_branch
    %37 = sbr.rel (0) target = $region37
  $region36: #{vision_transformer_forward.14} parent=0 // pred_region
    _
  $region37: #{vision_transformer_forward.14} parent=0 // pred_fallthru
    _
  // Predicated region
  $region38: #{vision_transformer_forward.14} parent=0 // pred_check
    _
  $region39: #{vision_transformer_forward.14} parent=0 // pred_check_branch
    %39 = sbr.rel (0) target = $region41
  $region40: #{vision_transformer_forward.14} parent=0 // pred_region
    _
  $region41: #{vision_transformer_forward.14} parent=0 // pred_fallthru
    _
  // Predicated region
  $region42: #{vision_transformer_forward.14} parent=0 // pred_check
    _
  $region43: #{vision_transformer_forward.14} parent=0 // pred_check_branch
    %41 = sbr.rel (0) target = $region45
  $region44: #{vision_transformer_forward.14} parent=0 // pred_region
    _
  $region45: #{vision_transformer_forward.14} parent=0 // pred_fallthru
    _
  // Predicated region
  $region46: #{vision_transformer_forward.14} parent=0 // pred_check
    _
  $region47: #{vision_transformer_forward.14} parent=0 // pred_check_branch
    %43 = sbr.rel (0) target = $region49
  $region48: #{vision_transformer_forward.14} parent=0 // pred_region
    _
  $region49: #{vision_transformer_forward.14} parent=0 // pred_fallthru
    _
  // Predicated region
  $region50: #{vision_transformer_forward.14} parent=0 // pred_check
    _
  $region51: #{vision_transformer_forward.14} parent=0 // pred_check_branch
    %45 = sbr.rel (0) target = $region53
  $region52: #{vision_transformer_forward.14} parent=0 // pred_region
    _
  $region53: #{vision_transformer_forward.14} parent=0 // pred_fallthru
    _
  // Predicated region
  $region54: #{vision_transformer_forward.14} parent=0 // pred_check
    _
  $region55: #{vision_transformer_forward.14} parent=0 // pred_check_branch
    %47 = sbr.rel (0) target = $region57
  $region56: #{vision_transformer_forward.14} parent=0 // pred_region
    _
  $region57: #{vision_transformer_forward.14} parent=0 // pred_fallthru
    _
  // Predicated region
  $region58: #{vision_transformer_forward.14} parent=0 // pred_check
    _
  $region59: #{vision_transformer_forward.14} parent=0 // pred_check_branch
    %49 = sbr.rel (0) target = $region61
  $region60: #{vision_transformer_forward.14} parent=0 // pred_region
    _
  $region61: #{vision_transformer_forward.14} parent=0 // pred_fallthru
    _
  %v51 = vld [vmem:[%s0] sm:$0xff]
  %v52 = vld [vmem:[%s0 + $0x8] sm:$0xff]
  %v53 = vld [vmem:[%s0 + $0x10] sm:$0xff]
  %v54 = vld [vmem:[%s0 + $0x18] sm:$0xff]
  %v55 = vld [vmem:[%s1] sm:$0x1]
  %v56 = vld [vmem:[%s2] sm:$0x1]
  %vm57 = vcmask 261120
  %v58 = vsel %vm57, %v51, 0.0
  %59 = vadd.xlane.f32.xlu0 %v58
  %v60 = vpop.xlane.xlu0 %59
  %v61 = vsel %vm57, %v52, 0.0
  %62 = vadd.xlane.f32.xlu0 %v61
  %v63 = vpop.xlane.xlu0 %62
  %v64 = vsel %vm57, %v53, 0.0
  %65 = vadd.xlane.f32.xlu0 %v64
  %v66 = vpop.xlane.xlu0 %65
  %v67 = vsel %vm57, %v54, 0.0
  %68 = vadd.xlane.f32.xlu0 %v67
  %v69 = vpop.xlane.xlu0 %68
  %v70 = vrcp.pop 32.0
  %v71 = vmul.f32 %v60, %v70
  %v72 = vmul.f32 %v63, %v70
  %v73 = vmul.f32 %v66, %v70
  %v74 = vmul.f32 %v69, %v70
  %v75 = vsub.f32 %v51, %v71
  %v76 = vsub.f32 %v52, %v72
  %v77 = vsub.f32 %v53, %v73
  %v78 = vsub.f32 %v54, %v74
  %v79 = vmul.f32 %v75, %v75
  %v80 = vmul.f32 %v76, %v76
  %v81 = vmul.f32 %v77, %v77
  %v82 = vmul.f32 %v78, %v78
  %v83 = vsel %vm57, %v79, 0.0
  %84 = vadd.xlane.f32.xlu0 %v83
  %v85 = vpop.xlane.xlu0 %84
  %v86 = vsel %vm57, %v80, 0.0
  %87 = vadd.xlane.f32.xlu0 %v86
  %v88 = vpop.xlane.xlu0 %87
  %v89 = vsel %vm57, %v81, 0.0
  %90 = vadd.xlane.f32.xlu0 %v89
  %v91 = vpop.xlane.xlu0 %90
  %v92 = vsel %vm57, %v82, 0.0
  %93 = vadd.xlane.f32.xlu0 %v92
  %v94 = vpop.xlane.xlu0 %93
  %v95 = vmul.f32 %v85, %v70
  %v96 = vmul.f32 %v88, %v70
  %v97 = vmul.f32 %v91, %v70
  %v98 = vmul.f32 %v94, %v70
  %v99 = vadd.f32 %v95, 1e-06
  %v100 = vadd.f32 %v96, 1e-06
  %v101 = vadd.f32 %v97, 1e-06
  %v102 = vadd.f32 %v98, 1e-06
  %v103 = vrsqrt.pop %v99
  %v104 = vrsqrt.pop %v100
  %v105 = vrsqrt.pop %v101
  %v106 = vrsqrt.pop %v102
  %v107 = vmul.f32 %v75, %v103
  %v108 = vmul.f32 %v76, %v104
  %v109 = vmul.f32 %v77, %v105
  %v110 = vmul.f32 %v78, %v106
  %v112 = vlaneseq
  %v113 = vshrl.u32 %v112, 7
  %v114 = vsub.s32 0, %v113
  %v115 = vrot.slane %v55, %v114
  %v117 = vmul.f32 %v107, %v115
  %v118 = vmul.f32 %v108, %v115
  %v119 = vmul.f32 %v109, %v115
  %v120 = vmul.f32 %v110, %v115
  %v122 = vlaneseq
  %v123 = vshrl.u32 %v122, 7
  %v124 = vsub.s32 0, %v123
  %v125 = vrot.slane %v56, %v124
  %v127 = vadd.f32 %v117, %v125
  %v128 = vadd.f32 %v118, %v125
  %v129 = vadd.f32 %v119, %v125
  %v130 = vadd.f32 %v120, %v125
  %v131 = vpack.c.bf16 %v128, %v127
  %v132 = vpack.c.bf16 %v130, %v129
  %v133 = vld [vmem:[%s3] sm:$0xf]
  %v134 = vld [vmem:[%s3 + $0x4] sm:$0xf]
  %v135 = vld [vmem:[%s3 + $0x8] sm:$0xf]
  %v136 = vld [vmem:[%s3 + $0xc] sm:$0xf]
  %v137 = vld [vmem:[%s4] sm:$0x1]
  %v139 = vlaneseq
  %v140 = vshrl.u32 %v139, 7
  %v141 = vsub.s32 0, %v140
  %v142 = vrot.slane %v137, %v141
  %v148 = vunpack.c.l.b16 %v133
  %v149 = vunpack.c.l.b16 %v134
  %v150 = vunpack.c.l.b16 %v135
  %v151 = vunpack.c.l.b16 %v136
  %v152 = vpack.c.b16 %v149, %v148
  %v153 = vpack.c.b16 %v151, %v150
  %v157 = vsel %vm57, %v131, 0
  %v160 = vsel %vm57, %v132, 0
  %162 = vmatprep.subr.bf16.mxu0 0
  %163 = vmatpush1.bf16.msra.mxu0 %v152
  %164 = vmatprep.subr.bf16.mxu0 0
  %165 = vmatpush1.bf16.msra.mxu0 %v153
  %166 = vmatprep.subr.bf16.mxu0 0
  %167 = vmatpush1.bf16.msra.mxu0 0
  %168 = vmatprep.subr.bf16.mxu0 0
  %169 = vmatpush1.bf16.msra.mxu0 0
  %170 = vmatprep.subr.bf16.mxu0 0
  %171 = vmatpush1.bf16.msra.mxu0 0
  %172 = vmatprep.subr.bf16.mxu0 0
  %173 = vmatpush1.bf16.msra.mxu0 0
  %174 = vmatprep.subr.bf16.mxu0 0
  %175 = vmatpush1.bf16.msra.mxu0 0
  %176 = vmatprep.subr.bf16.mxu0 0
  %177 = vmatpush1.bf16.msra.mxu0 0
  %178 = vmatprep.subr.bf16.mxu0 0
  %179 = vmatpush1.bf16.msra.mxu0 0
  %180 = vmatprep.subr.bf16.mxu0 0
  %181 = vmatpush1.bf16.msra.mxu0 0
  %182 = vmatprep.subr.bf16.mxu0 0
  %183 = vmatpush1.bf16.msra.mxu0 0
  %184 = vmatprep.subr.bf16.mxu0 0
  %185 = vmatpush1.bf16.msra.mxu0 0
  %186 = vmatprep.subr.bf16.mxu0 0
  %187 = vmatpush1.bf16.msra.mxu0 0
  %188 = vmatprep.subr.bf16.mxu0 0
  %189 = vmatpush1.bf16.msra.mxu0 0
  %190 = vmatprep.subr.bf16.mxu0 0
  %191 = vmatpush1.bf16.msra.mxu0 0
  %192 = vmatprep.subr.bf16.mxu0 0
  %193 = vmatpush1.bf16.msra.mxu0 0
  %194 = vmatprep.mubr.bf16.mxu0 0
  %195 = vmatmul.mubr.bf16.gmra.mrb[0].mxu0 %v157
  %v196 = vpop.f32.mrb[0].mxu0
  %v197 = vadd.f32 %v142, %v196
  %v198 = vpop.f32.mrb[0].mxu0
  %v199 = vpop.f32.mrb[0].mxu0
  %v200 = vadd.f32 %v142, %v199
  %v201 = vpop.f32.mrb[0].mxu0
  %202 = vmatprep.mubr.bf16.mxu0 0
  %203 = vmatmul.mubr.bf16.gmra.mrb[0].mxu0 %v160
  %v204 = vpop.f32.mrb[0].mxu0
  %v205 = vadd.f32 %v142, %v204
  %v206 = vpop.f32.mrb[0].mxu0
  %v207 = vpop.f32.mrb[0].mxu0
  %v208 = vadd.f32 %v142, %v207
  %v209 = vpop.f32.mrb[0].mxu0
  %210 = vdwg.mxu0
  %213 = vrot.lane.b32.xlu0 %v197, 96
  %v214 = vpop.permute.xlu0 %213
  %215 = vrot.lane.b32.xlu0 %v200, 96
  %v216 = vpop.permute.xlu0 %215
  %vm217 = vcmask 64512
  %v218 = vsel %vm217, %v197, 0
  %v220 = vsel %vm217, %v200, 0
  %v222 = vsel %vm217, %v214, 0
  %v224 = vsel %vm217, %v216, 0
  %226 = vmatprep.subr.mxu0 0.0
  %227 = vmatpush1.xpose.msra.mxu0 %v222
  %228 = vmatprep.subr.mxu0 0.0
  %229 = vmatpush1.xpose.msra.mxu0 %v224
  %230 = vmatprep.subr.mxu0 0.0
  %231 = vmatpush1.xpose.msra.mxu0 0.0
  %232 = vmatprep.subr.mxu0 0.0
  %233 = vmatpush1.xpose.msra.mxu0 0.0
  %234 = vmatprep.subr.mxu0 0.0
  %235 = vmatpush1.xpose.msra.mxu0 0.0
  %236 = vmatprep.subr.mxu0 0.0
  %237 = vmatpush1.xpose.msra.mxu0 0.0
  %238 = vmatprep.subr.mxu0 0.0
  %239 = vmatpush1.xpose.msra.mxu0 0.0
  %240 = vmatprep.subr.mxu0 0.0
  %241 = vmatpush1.xpose.msra.mxu0 0.0
  %242 = vmatprep.subr.mxu0 0.0
  %243 = vmatpush1.xpose.msra.mxu0 0.0
  %244 = vmatprep.subr.mxu0 0.0
  %245 = vmatpush1.xpose.msra.mxu0 0.0
  %246 = vmatprep.subr.mxu0 0.0
  %247 = vmatpush1.xpose.msra.mxu0 0.0
  %248 = vmatprep.subr.mxu0 0.0
  %249 = vmatpush1.xpose.msra.mxu0 0.0
  %250 = vmatprep.subr.mxu0 0.0
  %251 = vmatpush1.xpose.msra.mxu0 0.0
  %252 = vmatprep.subr.mxu0 0.0
  %253 = vmatpush1.xpose.msra.mxu0 0.0
  %254 = vmatprep.subr.mxu0 0.0
  %255 = vmatpush1.xpose.msra.mxu0 0.0
  %256 = vmatprep.subr.mxu0 0.0
  %257 = vmatpush1.xpose.msra.mxu0 0.0
  %258 = vmatprep.subr.mxu0 0.0
  %259 = vmatpush1.xpose.msra.mxu0 0.0
  %260 = vmatprep.subr.mxu0 0.0
  %261 = vmatpush1.xpose.msra.mxu0 0.0
  %262 = vmatprep.subr.mxu0 0.0
  %263 = vmatpush1.xpose.msra.mxu0 0.0
  %264 = vmatprep.subr.mxu0 0.0
  %265 = vmatpush1.xpose.msra.mxu0 0.0
  %266 = vmatprep.subr.mxu0 0.0
  %267 = vmatpush1.xpose.msra.mxu0 0.0
  %268 = vmatprep.subr.mxu0 0.0
  %269 = vmatpush1.xpose.msra.mxu0 0.0
  %270 = vmatprep.subr.mxu0 0.0
  %271 = vmatpush1.xpose.msra.mxu0 0.0
  %272 = vmatprep.subr.mxu0 0.0
  %273 = vmatpush1.xpose.msra.mxu0 0.0
  %274 = vmatprep.subr.mxu0 0.0
  %275 = vmatpush1.xpose.msra.mxu0 0.0
  %276 = vmatprep.subr.mxu0 0.0
  %277 = vmatpush1.xpose.msra.mxu0 0.0
  %278 = vmatprep.subr.mxu0 0.0
  %279 = vmatpush1.xpose.msra.mxu0 0.0
  %280 = vmatprep.subr.mxu0 0.0
  %281 = vmatpush1.xpose.msra.mxu0 0.0
  %282 = vmatprep.subr.mxu0 0.0
  %283 = vmatpush1.xpose.msra.mxu0 0.0
  %284 = vmatprep.subr.mxu0 0.0
  %285 = vmatpush1.xpose.msra.mxu0 0.0
  %286 = vmatprep.subr.mxu0 0.0
  %287 = vmatpush1.xpose.msra.mxu0 0.0
  %288 = vmatprep.subr.mxu0 0.0
  %289 = vmatpush1.xpose.msra.mxu0 0.0
  %290 = vmatprep.mubr.f32.mxu0 0.0
  %291 = vmatmul.mubr.f32.gmra.mrb[0].mxu0 %v218
  %v292 = vpop.f32.mrb[0].mxu0
  %v293 = vadd.f32 0.0, %v292
  %v294 = vpop.f32.mrb[0].mxu0
  %295 = vmatprep.mubr.f32.mxu0 0.0
  %296 = vmatmul.mubr.f32.gmra.mrb[0].mxu0 %v220
  %v297 = vpop.f32.mrb[0].mxu0
  %v298 = vadd.f32 0.0, %v297
  %v299 = vpop.f32.mrb[0].mxu0
  %300 = vdwg.mxu0
  %v301 = vmul.f32 %v293, 0.35355338
  %v302 = vmul.f32 %v298, 0.35355338
  %vm303 = vcmask 130048
  %v304 = vsel %vm303, %v301, -inf
  %305 = vmax.xlane.f32.xlu0 %v304
  %v306 = vpop.xlane.xlu0 %305
  %v307 = vsel %vm303, %v302, -inf
  %308 = vmax.xlane.f32.xlu0 %v307
  %v309 = vpop.xlane.xlu0 %308
  %v310 = vsub.f32 %v301, %v306
  %v311 = vsub.f32 %v302, %v309
  %v312 = vmul.f32 %v310, 1.442695
  %v313 = vpow.pop %v312
  %v314 = vmul.f32 %v311, 1.442695
  %v315 = vpow.pop %v314
  %v316 = vsel %vm303, %v313, 0.0
  %317 = vadd.xlane.f32.xlu0 %v316
  %v318 = vpop.xlane.xlu0 %317
  %v319 = vsel %vm303, %v315, 0.0
  %320 = vadd.xlane.f32.xlu0 %v319
  %v321 = vpop.xlane.xlu0 %320
  %v322 = vrcp.pop %v318
  %v323 = vmul.f32 %v313, %v322
  %v324 = vrcp.pop %v321
  %v325 = vmul.f32 %v315, %v324
  %326 = vrot.lane.b32.xlu0 %v197, 64
  %v327 = vpop.permute.xlu0 %326
  %328 = vrot.lane.b32.xlu0 %v200, 64
  %v329 = vpop.permute.xlu0 %328
  %v333 = vsel %vm303, %v323, 0
  %v336 = vsel %vm303, %v325, 0
  %338 = vmatprep.subr.mxu0 0.0
  %339 = vmatpush1.msra.mxu0 %v327
  %340 = vmatprep.subr.mxu0 0.0
  %341 = vmatpush1.msra.mxu0 %v329
  %342 = vmatprep.subr.mxu0 0.0
  %343 = vmatpush1.msra.mxu0 0.0
  %344 = vmatprep.subr.mxu0 0.0
  %345 = vmatpush1.msra.mxu0 0.0
  %346 = vmatprep.subr.mxu0 0.0
  %347 = vmatpush1.msra.mxu0 0.0
  %348 = vmatprep.subr.mxu0 0.0
  %349 = vmatpush1.msra.mxu0 0.0
  %350 = vmatprep.subr.mxu0 0.0
  %351 = vmatpush1.msra.mxu0 0.0
  %352 = vmatprep.subr.mxu0 0.0
  %353 = vmatpush1.msra.mxu0 0.0
  %354 = vmatprep.subr.mxu0 0.0
  %355 = vmatpush1.msra.mxu0 0.0
  %356 = vmatprep.subr.mxu0 0.0
  %357 = vmatpush1.msra.mxu0 0.0
  %358 = vmatprep.subr.mxu0 0.0
  %359 = vmatpush1.msra.mxu0 0.0
  %360 = vmatprep.subr.mxu0 0.0
  %361 = vmatpush1.msra.mxu0 0.0
  %362 = vmatprep.subr.mxu0 0.0
  %363 = vmatpush1.msra.mxu0 0.0
  %364 = vmatprep.subr.mxu0 0.0
  %365 = vmatpush1.msra.mxu0 0.0
  %366 = vmatprep.subr.mxu0 0.0
  %367 = vmatpush1.msra.mxu0 0.0
  %368 = vmatprep.subr.mxu0 0.0
  %369 = vmatpush1.msra.mxu0 0.0
  %370 = vmatprep.subr.mxu0 0.0
  %371 = vmatpush1.msra.mxu0 0.0
  %372 = vmatprep.subr.mxu0 0.0
  %373 = vmatpush1.msra.mxu0 0.0
  %374 = vmatprep.subr.mxu0 0.0
  %375 = vmatpush1.msra.mxu0 0.0
  %376 = vmatprep.subr.mxu0 0.0
  %377 = vmatpush1.msra.mxu0 0.0
  %378 = vmatprep.subr.mxu0 0.0
  %379 = vmatpush1.msra.mxu0 0.0
  %380 = vmatprep.subr.mxu0 0.0
  %381 = vmatpush1.msra.mxu0 0.0
  %382 = vmatprep.subr.mxu0 0.0
  %383 = vmatpush1.msra.mxu0 0.0
  %384 = vmatprep.subr.mxu0 0.0
  %385 = vmatpush1.msra.mxu0 0.0
  %386 = vmatprep.subr.mxu0 0.0
  %387 = vmatpush1.msra.mxu0 0.0
  %388 = vmatprep.subr.mxu0 0.0
  %389 = vmatpush1.msra.mxu0 0.0
  %390 = vmatprep.subr.mxu0 0.0
  %391 = vmatpush1.msra.mxu0 0.0
  %392 = vmatprep.subr.mxu0 0.0
  %393 = vmatpush1.msra.mxu0 0.0
  %394 = vmatprep.subr.mxu0 0.0
  %395 = vmatpush1.msra.mxu0 0.0
  %396 = vmatprep.subr.mxu0 0.0
  %397 = vmatpush1.msra.mxu0 0.0
  %398 = vmatprep.subr.mxu0 0.0
  %399 = vmatpush1.msra.mxu0 0.0
  %400 = vmatprep.subr.mxu0 0.0
  %401 = vmatpush1.msra.mxu0 0.0
  %402 = vmatprep.mubr.f32.mxu0 0.0
  %403 = vmatmul.mubr.f32.gmra.mrb[0].mxu0 %v333
  %v404 = vpop.f32.mrb[0].mxu0
  %v405 = vadd.f32 0.0, %v404
  %v406 = vpop.f32.mrb[0].mxu0
  %407 = vmatprep.mubr.f32.mxu0 0.0
  %408 = vmatmul.mubr.f32.gmra.mrb[0].mxu0 %v336
  %v409 = vpop.f32.mrb[0].mxu0
  %v410 = vadd.f32 0.0, %v409
  %v411 = vpop.f32.mrb[0].mxu0
  %412 = vdwg.mxu0
  %413 = vrot.lane.b32.xlu0 %v197, 120
  %v414 = vpop.permute.xlu0 %413
  %415 = vrot.lane.b32.xlu0 %v200, 120
  %v416 = vpop.permute.xlu0 %415
  %417 = vrot.lane.b32.xlu0 %v197, 88
  %v418 = vpop.permute.xlu0 %417
  %419 = vrot.lane.b32.xlu0 %v200, 88
  %v420 = vpop.permute.xlu0 %419
  %v421 = vsel %vm217, %v414, 0
  %v423 = vsel %vm217, %v416, 0
  %v425 = vsel %vm217, %v418, 0
  %v427 = vsel %vm217, %v420, 0
  %429 = vmatprep.subr.mxu0 0.0
  %430 = vmatpush1.xpose.msra.mxu0 %v425
  %431 = vmatprep.subr.mxu0 0.0
  %432 = vmatpush1.xpose.msra.mxu0 %v427
  %433 = vmatprep.subr.mxu0 0.0
  %434 = vmatpush1.xpose.msra.mxu0 0.0
  %435 = vmatprep.subr.mxu0 0.0
  %436 = vmatpush1.xpose.msra.mxu0 0.0
  %437 = vmatprep.subr.mxu0 0.0
  %438 = vmatpush1.xpose.msra.mxu0 0.0
  %439 = vmatprep.subr.mxu0 0.0
  %440 = vmatpush1.xpose.msra.mxu0 0.0
  %441 = vmatprep.subr.mxu0 0.0
  %442 = vmatpush1.xpose.msra.mxu0 0.0
  %443 = vmatprep.subr.mxu0 0.0
  %444 = vmatpush1.xpose.msra.mxu0 0.0
  %445 = vmatprep.subr.mxu0 0.0
  %446 = vmatpush1.xpose.msra.mxu0 0.0
  %447 = vmatprep.subr.mxu0 0.0
  %448 = vmatpush1.xpose.msra.mxu0 0.0
  %449 = vmatprep.subr.mxu0 0.0
  %450 = vmatpush1.xpose.msra.mxu0 0.0
  %451 = vmatprep.subr.mxu0 0.0
  %452 = vmatpush1.xpose.msra.mxu0 0.0
  %453 = vmatprep.subr.mxu0 0.0
  %454 = vmatpush1.xpose.msra.mxu0 0.0
  %455 = vmatprep.subr.mxu0 0.0
  %456 = vmatpush1.xpose.msra.mxu0 0.0
  %457 = vmatprep.subr.mxu0 0.0
  %458 = vmatpush1.xpose.msra.mxu0 0.0
  %459 = vmatprep.subr.mxu0 0.0
  %460 = vmatpush1.xpose.msra.mxu0 0.0
  %461 = vmatprep.subr.mxu0 0.0
  %462 = vmatpush1.xpose.msra.mxu0 0.0
  %463 = vmatprep.subr.mxu0 0.0
  %464 = vmatpush1.xpose.msra.mxu0 0.0
  %465 = vmatprep.subr.mxu0 0.0
  %466 = vmatpush1.xpose.msra.mxu0 0.0
  %467 = vmatprep.subr.mxu0 0.0
  %468 = vmatpush1.xpose.msra.mxu0 0.0
  %469 = vmatprep.subr.mxu0 0.0
  %470 = vmatpush1.xpose.msra.mxu0 0.0
  %471 = vmatprep.subr.mxu0 0.0
  %472 = vmatpush1.xpose.msra.mxu0 0.0
  %473 = vmatprep.subr.mxu0 0.0
  %474 = vmatpush1.xpose.msra.mxu0 0.0
  %475 = vmatprep.subr.mxu0 0.0
  %476 = vmatpush1.xpose.msra.mxu0 0.0
  %477 = vmatprep.subr.mxu0 0.0
  %478 = vmatpush1.xpose.msra.mxu0 0.0
  %479 = vmatprep.subr.mxu0 0.0
  %480 = vmatpush1.xpose.msra.mxu0 0.0
  %481 = vmatprep.subr.mxu0 0.0
  %482 = vmatpush1.xpose.msra.mxu0 0.0
  %483 = vmatprep.subr.mxu0 0.0
  %484 = vmatpush1.xpose.msra.mxu0 0.0
  %485 = vmatprep.subr.mxu0 0.0
  %486 = vmatpush1.xpose.msra.mxu0 0.0
  %487 = vmatprep.subr.mxu0 0.0
  %488 = vmatpush1.xpose.msra.mxu0 0.0
  %489 = vmatprep.subr.mxu0 0.0
  %490 = vmatpush1.xpose.msra.mxu0 0.0
  %491 = vmatprep.subr.mxu0 0.0
  %492 = vmatpush1.xpose.msra.mxu0 0.0
  %493 = vmatprep.mubr.f32.mxu0 0.0
  %494 = vmatmul.mubr.f32.gmra.mrb[0].mxu0 %v421
  %v495 = vpop.f32.mrb[0].mxu0
  %v496 = vadd.f32 0.0, %v495
  %v497 = vpop.f32.mrb[0].mxu0
  %498 = vmatprep.mubr.f32.mxu0 0.0
  %499 = vmatmul.mubr.f32.gmra.mrb[0].mxu0 %v423
  %v500 = vpop.f32.mrb[0].mxu0
  %v501 = vadd.f32 0.0, %v500
  %v502 = vpop.f32.mrb[0].mxu0
  %503 = vdwg.mxu0
  %v504 = vmul.f32 %v496, 0.35355338
  %v505 = vmul.f32 %v501, 0.35355338
  %v506 = vsel %vm303, %v504, -inf
  %507 = vmax.xlane.f32.xlu0 %v506
  %v508 = vpop.xlane.xlu0 %507
  %v509 = vsel %vm303, %v505, -inf
  %510 = vmax.xlane.f32.xlu0 %v509
  %v511 = vpop.xlane.xlu0 %510
  %v512 = vsub.f32 %v504, %v508
  %v513 = vsub.f32 %v505, %v511
  %v514 = vmul.f32 %v512, 1.442695
  %v515 = vpow.pop %v514
  %v516 = vmul.f32 %v513, 1.442695
  %v517 = vpow.pop %v516
  %v518 = vsel %vm303, %v515, 0.0
  %519 = vadd.xlane.f32.xlu0 %v518
  %v520 = vpop.xlane.xlu0 %519
  %v521 = vsel %vm303, %v517, 0.0
  %522 = vadd.xlane.f32.xlu0 %v521
  %v523 = vpop.xlane.xlu0 %522
  %v524 = vrcp.pop %v520
  %v525 = vmul.f32 %v515, %v524
  %v526 = vrcp.pop %v523
  %v527 = vmul.f32 %v517, %v526
  %528 = vrot.lane.b32.xlu0 %v197, 56
  %v529 = vpop.permute.xlu0 %528
  %530 = vrot.lane.b32.xlu0 %v200, 56
  %v531 = vpop.permute.xlu0 %530
  %v535 = vsel %vm303, %v525, 0
  %v538 = vsel %vm303, %v527, 0
  %540 = vmatprep.subr.mxu0 0.0
  %541 = vmatpush1.msra.mxu0 %v529
  %542 = vmatprep.subr.mxu0 0.0
  %543 = vmatpush1.msra.mxu0 %v531
  %544 = vmatprep.subr.mxu0 0.0
  %545 = vmatpush1.msra.mxu0 0.0
  %546 = vmatprep.subr.mxu0 0.0
  %547 = vmatpush1.msra.mxu0 0.0
  %548 = vmatprep.subr.mxu0 0.0
  %549 = vmatpush1.msra.mxu0 0.0
  %550 = vmatprep.subr.mxu0 0.0
  %551 = vmatpush1.msra.mxu0 0.0
  %552 = vmatprep.subr.mxu0 0.0
  %553 = vmatpush1.msra.mxu0 0.0
  %554 = vmatprep.subr.mxu0 0.0
  %555 = vmatpush1.msra.mxu0 0.0
  %556 = vmatprep.subr.mxu0 0.0
  %557 = vmatpush1.msra.mxu0 0.0
  %558 = vmatprep.subr.mxu0 0.0
  %559 = vmatpush1.msra.mxu0 0.0
  %560 = vmatprep.subr.mxu0 0.0
  %561 = vmatpush1.msra.mxu0 0.0
  %562 = vmatprep.subr.mxu0 0.0
  %563 = vmatpush1.msra.mxu0 0.0
  %564 = vmatprep.subr.mxu0 0.0
  %565 = vmatpush1.msra.mxu0 0.0
  %566 = vmatprep.subr.mxu0 0.0
  %567 = vmatpush1.msra.mxu0 0.0
  %568 = vmatprep.subr.mxu0 0.0
  %569 = vmatpush1.msra.mxu0 0.0
  %570 = vmatprep.subr.mxu0 0.0
  %571 = vmatpush1.msra.mxu0 0.0
  %572 = vmatprep.subr.mxu0 0.0
  %573 = vmatpush1.msra.mxu0 0.0
  %574 = vmatprep.subr.mxu0 0.0
  %575 = vmatpush1.msra.mxu0 0.0
  %576 = vmatprep.subr.mxu0 0.0
  %577 = vmatpush1.msra.mxu0 0.0
  %578 = vmatprep.subr.mxu0 0.0
  %579 = vmatpush1.msra.mxu0 0.0
  %580 = vmatprep.subr.mxu0 0.0
  %581 = vmatpush1.msra.mxu0 0.0
  %582 = vmatprep.subr.mxu0 0.0
  %583 = vmatpush1.msra.mxu0 0.0
  %584 = vmatprep.subr.mxu0 0.0
  %585 = vmatpush1.msra.mxu0 0.0
  %586 = vmatprep.subr.mxu0 0.0
  %587 = vmatpush1.msra.mxu0 0.0
  %588 = vmatprep.subr.mxu0 0.0
  %589 = vmatpush1.msra.mxu0 0.0
  %590 = vmatprep.subr.mxu0 0.0
  %591 = vmatpush1.msra.mxu0 0.0
  %592 = vmatprep.subr.mxu0 0.0
  %593 = vmatpush1.msra.mxu0 0.0
  %594 = vmatprep.subr.mxu0 0.0
  %595 = vmatpush1.msra.mxu0 0.0
  %596 = vmatprep.subr.mxu0 0.0
  %597 = vmatpush1.msra.mxu0 0.0
  %598 = vmatprep.subr.mxu0 0.0
  %599 = vmatpush1.msra.mxu0 0.0
  %600 = vmatprep.subr.mxu0 0.0
  %601 = vmatpush1.msra.mxu0 0.0
  %602 = vmatprep.subr.mxu0 0.0
  %603 = vmatpush1.msra.mxu0 0.0
  %604 = vmatprep.mubr.f32.mxu0 0.0
  %605 = vmatmul.mubr.f32.gmra.mrb[0].mxu0 %v535
  %v606 = vpop.f32.mrb[0].mxu0
  %v607 = vadd.f32 0.0, %v606
  %v608 = vpop.f32.mrb[0].mxu0
  %609 = vmatprep.mubr.f32.mxu0 0.0
  %610 = vmatmul.mubr.f32.gmra.mrb[0].mxu0 %v538
  %v611 = vpop.f32.mrb[0].mxu0
  %v612 = vadd.f32 0.0, %v611
  %v613 = vpop.f32.mrb[0].mxu0
  %614 = vdwg.mxu0
  %615 = vrot.lane.b32.xlu0 %v197, 112
  %v616 = vpop.permute.xlu0 %615
  %617 = vrot.lane.b32.xlu0 %v200, 112
  %v618 = vpop.permute.xlu0 %617
  %619 = vrot.lane.b32.xlu0 %v197, 80
  %v620 = vpop.permute.xlu0 %619
  %621 = vrot.lane.b32.xlu0 %v200, 80
  %v622 = vpop.permute.xlu0 %621
  %v623 = vsel %vm217, %v616, 0
  %v625 = vsel %vm217, %v618, 0
  %v627 = vsel %vm217, %v620, 0
  %v629 = vsel %vm217, %v622, 0
  %631 = vmatprep.subr.mxu0 0.0
  %632 = vmatpush1.xpose.msra.mxu0 %v627
  %633 = vmatprep.subr.mxu0 0.0
  %634 = vmatpush1.xpose.msra.mxu0 %v629
  %635 = vmatprep.subr.mxu0 0.0
  %636 = vmatpush1.xpose.msra.mxu0 0.0
  %637 = vmatprep.subr.mxu0 0.0
  %638 = vmatpush1.xpose.msra.mxu0 0.0
  %639 = vmatprep.subr.mxu0 0.0
  %640 = vmatpush1.xpose.msra.mxu0 0.0
  %641 = vmatprep.subr.mxu0 0.0
  %642 = vmatpush1.xpose.msra.mxu0 0.0
  %643 = vmatprep.subr.mxu0 0.0
  %644 = vmatpush1.xpose.msra.mxu0 0.0
  %645 = vmatprep.subr.mxu0 0.0
  %646 = vmatpush1.xpose.msra.mxu0 0.0
  %647 = vmatprep.subr.mxu0 0.0
  %648 = vmatpush1.xpose.msra.mxu0 0.0
  %649 = vmatprep.subr.mxu0 0.0
  %650 = vmatpush1.xpose.msra.mxu0 0.0
  %651 = vmatprep.subr.mxu0 0.0
  %652 = vmatpush1.xpose.msra.mxu0 0.0
  %653 = vmatprep.subr.mxu0 0.0
  %654 = vmatpush1.xpose.msra.mxu0 0.0
  %655 = vmatprep.subr.mxu0 0.0
  %656 = vmatpush1.xpose.msra.mxu0 0.0
  %657 = vmatprep.subr.mxu0 0.0
  %658 = vmatpush1.xpose.msra.mxu0 0.0
  %659 = vmatprep.subr.mxu0 0.0
  %660 = vmatpush1.xpose.msra.mxu0 0.0
  %661 = vmatprep.subr.mxu0 0.0
  %662 = vmatpush1.xpose.msra.mxu0 0.0
  %663 = vmatprep.subr.mxu0 0.0
  %664 = vmatpush1.xpose.msra.mxu0 0.0
  %665 = vmatprep.subr.mxu0 0.0
  %666 = vmatpush1.xpose.msra.mxu0 0.0
  %667 = vmatprep.subr.mxu0 0.0
  %668 = vmatpush1.xpose.msra.mxu0 0.0
  %669 = vmatprep.subr.mxu0 0.0
  %670 = vmatpush1.xpose.msra.mxu0 0.0
  %671 = vmatprep.subr.mxu0 0.0
  %672 = vmatpush1.xpose.msra.mxu0 0.0
  %673 = vmatprep.subr.mxu0 0.0
  %674 = vmatpush1.xpose.msra.mxu0 0.0
  %675 = vmatprep.subr.mxu0 0.0
  %676 = vmatpush1.xpose.msra.mxu0 0.0
  %677 = vmatprep.subr.mxu0 0.0
  %678 = vmatpush1.xpose.msra.mxu0 0.0
  %679 = vmatprep.subr.mxu0 0.0
  %680 = vmatpush1.xpose.msra.mxu0 0.0
  %681 = vmatprep.subr.mxu0 0.0
  %682 = vmatpush1.xpose.msra.mxu0 0.0
  %683 = vmatprep.subr.mxu0 0.0
  %684 = vmatpush1.xpose.msra.mxu0 0.0
  %685 = vmatprep.subr.mxu0 0.0
  %686 = vmatpush1.xpose.msra.mxu0 0.0
  %687 = vmatprep.subr.mxu0 0.0
  %688 = vmatpush1.xpose.msra.mxu0 0.0
  %689 = vmatprep.subr.mxu0 0.0
  %690 = vmatpush1.xpose.msra.mxu0 0.0
  %691 = vmatprep.subr.mxu0 0.0
  %692 = vmatpush1.xpose.msra.mxu0 0.0
  %693 = vmatprep.subr.mxu0 0.0
  %694 = vmatpush1.xpose.msra.mxu0 0.0
  %695 = vmatprep.mubr.f32.mxu0 0.0
  %696 = vmatmul.mubr.f32.gmra.mrb[0].mxu0 %v623
  %v697 = vpop.f32.mrb[0].mxu0
  %v698 = vadd.f32 0.0, %v697
  %v699 = vpop.f32.mrb[0].mxu0
  %700 = vmatprep.mubr.f32.mxu0 0.0
  %701 = vmatmul.mubr.f32.gmra.mrb[0].mxu0 %v625
  %v702 = vpop.f32.mrb[0].mxu0
  %v703 = vadd.f32 0.0, %v702
  %v704 = vpop.f32.mrb[0].mxu0
  %705 = vdwg.mxu0
  %v706 = vmul.f32 %v698, 0.35355338
  %v707 = vmul.f32 %v703, 0.35355338
  %v708 = vsel %vm303, %v706, -inf
  %709 = vmax.xlane.f32.xlu0 %v708
  %v710 = vpop.xlane.xlu0 %709
  %v711 = vsel %vm303, %v707, -inf
  %712 = vmax.xlane.f32.xlu0 %v711
  %v713 = vpop.xlane.xlu0 %712
  %v714 = vsub.f32 %v706, %v710
  %v715 = vsub.f32 %v707, %v713
  %v716 = vmul.f32 %v714, 1.442695
  %v717 = vpow.pop %v716
  %v718 = vmul.f32 %v715, 1.442695
  %v719 = vpow.pop %v718
  %v720 = vsel %vm303, %v717, 0.0
  %721 = vadd.xlane.f32.xlu0 %v720
  %v722 = vpop.xlane.xlu0 %721
  %v723 = vsel %vm303, %v719, 0.0
  %724 = vadd.xlane.f32.xlu0 %v723
  %v725 = vpop.xlane.xlu0 %724
  %v726 = vrcp.pop %v722
  %v727 = vmul.f32 %v717, %v726
  %v728 = vrcp.pop %v725
  %v729 = vmul.f32 %v719, %v728
  %730 = vrot.lane.b32.xlu0 %v197, 48
  %v731 = vpop.permute.xlu0 %730
  %732 = vrot.lane.b32.xlu0 %v200, 48
  %v733 = vpop.permute.xlu0 %732
  %v737 = vsel %vm303, %v727, 0
  %v740 = vsel %vm303, %v729, 0
  %742 = vmatprep.subr.mxu0 0.0
  %743 = vmatpush1.msra.mxu0 %v731
  %744 = vmatprep.subr.mxu0 0.0
  %745 = vmatpush1.msra.mxu0 %v733
  %746 = vmatprep.subr.mxu0 0.0
  %747 = vmatpush1.msra.mxu0 0.0
  %748 = vmatprep.subr.mxu0 0.0
  %749 = vmatpush1.msra.mxu0 0.0
  %750 = vmatprep.subr.mxu0 0.0
  %751 = vmatpush1.msra.mxu0 0.0
  %752 = vmatprep.subr.mxu0 0.0
  %753 = vmatpush1.msra.mxu0 0.0
  %754 = vmatprep.subr.mxu0 0.0
  %755 = vmatpush1.msra.mxu0 0.0
  %756 = vmatprep.subr.mxu0 0.0
  %757 = vmatpush1.msra.mxu0 0.0
  %758 = vmatprep.subr.mxu0 0.0
  %759 = vmatpush1.msra.mxu0 0.0
  %760 = vmatprep.subr.mxu0 0.0
  %761 = vmatpush1.msra.mxu0 0.0
  %762 = vmatprep.subr.mxu0 0.0
  %763 = vmatpush1.msra.mxu0 0.0
  %764 = vmatprep.subr.mxu0 0.0
  %765 = vmatpush1.msra.mxu0 0.0
  %766 = vmatprep.subr.mxu0 0.0
  %767 = vmatpush1.msra.mxu0 0.0
  %768 = vmatprep.subr.mxu0 0.0
  %769 = vmatpush1.msra.mxu0 0.0
  %770 = vmatprep.subr.mxu0 0.0
  %771 = vmatpush1.msra.mxu0 0.0
  %772 = vmatprep.subr.mxu0 0.0
  %773 = vmatpush1.msra.mxu0 0.0
  %774 = vmatprep.subr.mxu0 0.0
  %775 = vmatpush1.msra.mxu0 0.0
  %776 = vmatprep.subr.mxu0 0.0
  %777 = vmatpush1.msra.mxu0 0.0
  %778 = vmatprep.subr.mxu0 0.0
  %779 = vmatpush1.msra.mxu0 0.0
  %780 = vmatprep.subr.mxu0 0.0
  %781 = vmatpush1.msra.mxu0 0.0
  %782 = vmatprep.subr.mxu0 0.0
  %783 = vmatpush1.msra.mxu0 0.0
  %784 = vmatprep.subr.mxu0 0.0
  %785 = vmatpush1.msra.mxu0 0.0
  %786 = vmatprep.subr.mxu0 0.0
  %787 = vmatpush1.msra.mxu0 0.0
  %788 = vmatprep.subr.mxu0 0.0
  %789 = vmatpush1.msra.mxu0 0.0
  %790 = vmatprep.subr.mxu0 0.0
  %791 = vmatpush1.msra.mxu0 0.0
  %792 = vmatprep.subr.mxu0 0.0
  %793 = vmatpush1.msra.mxu0 0.0
  %794 = vmatprep.subr.mxu0 0.0
  %795 = vmatpush1.msra.mxu0 0.0
  %796 = vmatprep.subr.mxu0 0.0
  %797 = vmatpush1.msra.mxu0 0.0
  %798 = vmatprep.subr.mxu0 0.0
  %799 = vmatpush1.msra.mxu0 0.0
  %800 = vmatprep.subr.mxu0 0.0
  %801 = vmatpush1.msra.mxu0 0.0
  %802 = vmatprep.subr.mxu0 0.0
  %803 = vmatpush1.msra.mxu0 0.0
  %804 = vmatprep.subr.mxu0 0.0
  %805 = vmatpush1.msra.mxu0 0.0
  %806 = vmatprep.mubr.f32.mxu0 0.0
  %807 = vmatmul.mubr.f32.gmra.mrb[0].mxu0 %v737
  %v808 = vpop.f32.mrb[0].mxu0
  %v809 = vadd.f32 0.0, %v808
  %v810 = vpop.f32.mrb[0].mxu0
  %811 = vmatprep.mubr.f32.mxu0 0.0
  %812 = vmatmul.mubr.f32.gmra.mrb[0].mxu0 %v740
  %v813 = vpop.f32.mrb[0].mxu0
  %v814 = vadd.f32 0.0, %v813
  %v815 = vpop.f32.mrb[0].mxu0
  %816 = vdwg.mxu0
  %817 = vrot.lane.b32.xlu0 %v197, 104
  %v818 = vpop.permute.xlu0 %817
  %819 = vrot.lane.b32.xlu0 %v200, 104
  %v820 = vpop.permute.xlu0 %819
  %821 = vrot.lane.b32.xlu0 %v197, 72
  %v822 = vpop.permute.xlu0 %821
  %823 = vrot.lane.b32.xlu0 %v200, 72
  %v824 = vpop.permute.xlu0 %823
  %v825 = vsel %vm217, %v818, 0
  %v827 = vsel %vm217, %v820, 0
  %v829 = vsel %vm217, %v822, 0
  %v831 = vsel %vm217, %v824, 0
  %833 = vmatprep.subr.mxu0 0.0
  %834 = vmatpush1.xpose.msra.mxu0 %v829
  %835 = vmatprep.subr.mxu0 0.0
  %836 = vmatpush1.xpose.msra.mxu0 %v831
  %837 = vmatprep.subr.mxu0 0.0
  %838 = vmatpush1.xpose.msra.mxu0 0.0
  %839 = vmatprep.subr.mxu0 0.0
  %840 = vmatpush1.xpose.msra.mxu0 0.0
  %841 = vmatprep.subr.mxu0 0.0
  %842 = vmatpush1.xpose.msra.mxu0 0.0
  %843 = vmatprep.subr.mxu0 0.0
  %844 = vmatpush1.xpose.msra.mxu0 0.0
  %845 = vmatprep.subr.mxu0 0.0
  %846 = vmatpush1.xpose.msra.mxu0 0.0
  %847 = vmatprep.subr.mxu0 0.0
  %848 = vmatpush1.xpose.msra.mxu0 0.0
  %849 = vmatprep.subr.mxu0 0.0
  %850 = vmatpush1.xpose.msra.mxu0 0.0
  %851 = vmatprep.subr.mxu0 0.0
  %852 = vmatpush1.xpose.msra.mxu0 0.0
  %853 = vmatprep.subr.mxu0 0.0
  %854 = vmatpush1.xpose.msra.mxu0 0.0
  %855 = vmatprep.subr.mxu0 0.0
  %856 = vmatpush1.xpose.msra.mxu0 0.0
  %857 = vmatprep.subr.mxu0 0.0
  %858 = vmatpush1.xpose.msra.mxu0 0.0
  %859 = vmatprep.subr.mxu0 0.0
  %860 = vmatpush1.xpose.msra.mxu0 0.0
  %861 = vmatprep.subr.mxu0 0.0
  %862 = vmatpush1.xpose.msra.mxu0 0.0
  %863 = vmatprep.subr.mxu0 0.0
  %864 = vmatpush1.xpose.msra.mxu0 0.0
  %865 = vmatprep.subr.mxu0 0.0
  %866 = vmatpush1.xpose.msra.mxu0 0.0
  %867 = vmatprep.subr.mxu0 0.0
  %868 = vmatpush1.xpose.msra.mxu0 0.0
  %869 = vmatprep.subr.mxu0 0.0
  %870 = vmatpush1.xpose.msra.mxu0 0.0
  %871 = vmatprep.subr.mxu0 0.0
  %872 = vmatpush1.xpose.msra.mxu0 0.0
  %873 = vmatprep.subr.mxu0 0.0
  %874 = vmatpush1.xpose.msra.mxu0 0.0
  %875 = vmatprep.subr.mxu0 0.0
  %876 = vmatpush1.xpose.msra.mxu0 0.0
  %877 = vmatprep.subr.mxu0 0.0
  %878 = vmatpush1.xpose.msra.mxu0 0.0
  %879 = vmatprep.subr.mxu0 0.0
  %880 = vmatpush1.xpose.msra.mxu0 0.0
  %881 = vmatprep.subr.mxu0 0.0
  %882 = vmatpush1.xpose.msra.mxu0 0.0
  %883 = vmatprep.subr.mxu0 0.0
  %884 = vmatpush1.xpose.msra.mxu0 0.0
  %885 = vmatprep.subr.mxu0 0.0
  %886 = vmatpush1.xpose.msra.mxu0 0.0
  %887 = vmatprep.subr.mxu0 0.0
  %888 = vmatpush1.xpose.msra.mxu0 0.0
  %889 = vmatprep.subr.mxu0 0.0
  %890 = vmatpush1.xpose.msra.mxu0 0.0
  %891 = vmatprep.subr.mxu0 0.0
  %892 = vmatpush1.xpose.msra.mxu0 0.0
  %893 = vmatprep.subr.mxu0 0.0
  %894 = vmatpush1.xpose.msra.mxu0 0.0
  %895 = vmatprep.subr.mxu0 0.0
  %896 = vmatpush1.xpose.msra.mxu0 0.0
  %897 = vmatprep.mubr.f32.mxu0 0.0
  %898 = vmatmul.mubr.f32.gmra.mrb[0].mxu0 %v825
  %v899 = vpop.f32.mrb[0].mxu0
  %v900 = vadd.f32 0.0, %v899
  %v901 = vpop.f32.mrb[0].mxu0
  %902 = vmatprep.mubr.f32.mxu0 0.0
  %903 = vmatmul.mubr.f32.gmra.mrb[0].mxu0 %v827
  %v904 = vpop.f32.mrb[0].mxu0
  %v905 = vadd.f32 0.0, %v904
  %v906 = vpop.f32.mrb[0].mxu0
  %907 = vdwg.mxu0
  %v908 = vmul.f32 %v900, 0.35355338
  %v909 = vmul.f32 %v905, 0.35355338
  %v910 = vsel %vm303, %v908, -inf
  %911 = vmax.xlane.f32.xlu0 %v910
  %v912 = vpop.xlane.xlu0 %911
  %v913 = vsel %vm303, %v909, -inf
  %914 = vmax.xlane.f32.xlu0 %v913
  %v915 = vpop.xlane.xlu0 %914
  %v916 = vsub.f32 %v908, %v912
  %v917 = vsub.f32 %v909, %v915
  %v918 = vmul.f32 %v916, 1.442695
  %v919 = vpow.pop %v918
  %v920 = vmul.f32 %v917, 1.442695
  %v921 = vpow.pop %v920
  %v922 = vsel %vm303, %v919, 0.0
  %923 = vadd.xlane.f32.xlu0 %v922
  %v924 = vpop.xlane.xlu0 %923
  %v925 = vsel %vm303, %v921, 0.0
  %926 = vadd.xlane.f32.xlu0 %v925
  %v927 = vpop.xlane.xlu0 %926
  %v928 = vrcp.pop %v924
  %v929 = vmul.f32 %v919, %v928
  %v930 = vrcp.pop %v927
  %v931 = vmul.f32 %v921, %v930
  %932 = vrot.lane.b32.xlu0 %v197, 40
  %v933 = vpop.permute.xlu0 %932
  %934 = vrot.lane.b32.xlu0 %v200, 40
  %v935 = vpop.permute.xlu0 %934
  %v939 = vsel %vm303, %v929, 0
  %v942 = vsel %vm303, %v931, 0
  %944 = vmatprep.subr.mxu0 0.0
  %945 = vmatpush1.msra.mxu0 %v933
  %946 = vmatprep.subr.mxu0 0.0
  %947 = vmatpush1.msra.mxu0 %v935
  %948 = vmatprep.subr.mxu0 0.0
  %949 = vmatpush1.msra.mxu0 0.0
  %950 = vmatprep.subr.mxu0 0.0
  %951 = vmatpush1.msra.mxu0 0.0
  %952 = vmatprep.subr.mxu0 0.0
  %953 = vmatpush1.msra.mxu0 0.0
  %954 = vmatprep.subr.mxu0 0.0
  %955 = vmatpush1.msra.mxu0 0.0
  %956 = vmatprep.subr.mxu0 0.0
  %957 = vmatpush1.msra.mxu0 0.0
  %958 = vmatprep.subr.mxu0 0.0
  %959 = vmatpush1.msra.mxu0 0.0
  %960 = vmatprep.subr.mxu0 0.0
  %961 = vmatpush1.msra.mxu0 0.0
  %962 = vmatprep.subr.mxu0 0.0
  %963 = vmatpush1.msra.mxu0 0.0
  %964 = vmatprep.subr.mxu0 0.0
  %965 = vmatpush1.msra.mxu0 0.0
  %966 = vmatprep.subr.mxu0 0.0
  %967 = vmatpush1.msra.mxu0 0.0
  %968 = vmatprep.subr.mxu0 0.0
  %969 = vmatpush1.msra.mxu0 0.0
  %970 = vmatprep.subr.mxu0 0.0
  %971 = vmatpush1.msra.mxu0 0.0
  %972 = vmatprep.subr.mxu0 0.0
  %973 = vmatpush1.msra.mxu0 0.0
  %974 = vmatprep.subr.mxu0 0.0
  %975 = vmatpush1.msra.mxu0 0.0
  %976 = vmatprep.subr.mxu0 0.0
  %977 = vmatpush1.msra.mxu0 0.0
  %978 = vmatprep.subr.mxu0 0.0
  %979 = vmatpush1.msra.mxu0 0.0
  %980 = vmatprep.subr.mxu0 0.0
  %981 = vmatpush1.msra.mxu0 0.0
  %982 = vmatprep.subr.mxu0 0.0
  %983 = vmatpush1.msra.mxu0 0.0
  %984 = vmatprep.subr.mxu0 0.0
  %985 = vmatpush1.msra.mxu0 0.0
  %986 = vmatprep.subr.mxu0 0.0
  %987 = vmatpush1.msra.mxu0 0.0
  %988 = vmatprep.subr.mxu0 0.0
  %989 = vmatpush1.msra.mxu0 0.0
  %990 = vmatprep.subr.mxu0 0.0
  %991 = vmatpush1.msra.mxu0 0.0
  %992 = vmatprep.subr.mxu0 0.0
  %993 = vmatpush1.msra.mxu0 0.0
  %994 = vmatprep.subr.mxu0 0.0
  %995 = vmatpush1.msra.mxu0 0.0
  %996 = vmatprep.subr.mxu0 0.0
  %997 = vmatpush1.msra.mxu0 0.0
  %998 = vmatprep.subr.mxu0 0.0
  %999 = vmatpush1.msra.mxu0 0.0
  %1000 = vmatprep.subr.mxu0 0.0
  %1001 = vmatpush1.msra.mxu0 0.0
  %1002 = vmatprep.subr.mxu0 0.0
  %1003 = vmatpush1.msra.mxu0 0.0
  %1004 = vmatprep.subr.mxu0 0.0
  %1005 = vmatpush1.msra.mxu0 0.0
  %1006 = vmatprep.subr.mxu0 0.0
  %1007 = vmatpush1.msra.mxu0 0.0
  %1008 = vmatprep.mubr.f32.mxu0 0.0
  %1009 = vmatmul.mubr.f32.gmra.mrb[0].mxu0 %v939
  %v1010 = vpop.f32.mrb[0].mxu0
  %v1011 = vadd.f32 0.0, %v1010
  %v1012 = vpop.f32.mrb[0].mxu0
  %1013 = vmatprep.mubr.f32.mxu0 0.0
  %1014 = vmatmul.mubr.f32.gmra.mrb[0].mxu0 %v942
  %v1015 = vpop.f32.mrb[0].mxu0
  %v1016 = vadd.f32 0.0, %v1015
  %v1017 = vpop.f32.mrb[0].mxu0
  %1018 = vdwg.mxu0
  %1021 = vrot.lane.b32.xlu0 %v607, 8
  %v1022 = vpop.permute.xlu0 %1021
  %1023 = vrot.lane.b32.xlu0 %v612, 8
  %v1024 = vpop.permute.xlu0 %1023
  %1029 = vrot.lane.b32.xlu0 %v809, 16
  %v1030 = vpop.permute.xlu0 %1029
  %1031 = vrot.lane.b32.xlu0 %v814, 16
  %v1032 = vpop.permute.xlu0 %1031
  %1037 = vrot.lane.b32.xlu0 %v1011, 24
  %v1038 = vpop.permute.xlu0 %1037
  %1039 = vrot.lane.b32.xlu0 %v1016, 24
  %v1040 = vpop.permute.xlu0 %1039
  %v1043 = vsel %vm217, %v405, %v1022
  %v1044 = vsel %vm217, %v410, %v1024
  %v1045 = vsel %vm303, %v1043, %v1030
  %v1046 = vsel %vm303, %v1044, %v1032
  %vm1047 = vcmask 195584
  %v1048 = vsel %vm1047, %v1045, %v1038
  %v1049 = vsel %vm1047, %v1046, %v1040
  %1052 = vrot.lane.b32.xlu0 %v205, 96
  %v1053 = vpop.permute.xlu0 %1052
  %1054 = vrot.lane.b32.xlu0 %v208, 96
  %v1055 = vpop.permute.xlu0 %1054
  %v1056 = vsel %vm217, %v205, 0
  %v1058 = vsel %vm217, %v208, 0
  %v1060 = vsel %vm217, %v1053, 0
  %v1062 = vsel %vm217, %v1055, 0
  %1064 = vmatprep.subr.mxu0 0.0
  %1065 = vmatpush1.xpose.msra.mxu0 %v1060
  %1066 = vmatprep.subr.mxu0 0.0
  %1067 = vmatpush1.xpose.msra.mxu0 %v1062
  %1068 = vmatprep.subr.mxu0 0.0
  %1069 = vmatpush1.xpose.msra.mxu0 0.0
  %1070 = vmatprep.subr.mxu0 0.0
  %1071 = vmatpush1.xpose.msra.mxu0 0.0
  %1072 = vmatprep.subr.mxu0 0.0
  %1073 = vmatpush1.xpose.msra.mxu0 0.0
  %1074 = vmatprep.subr.mxu0 0.0
  %1075 = vmatpush1.xpose.msra.mxu0 0.0
  %1076 = vmatprep.subr.mxu0 0.0
  %1077 = vmatpush1.xpose.msra.mxu0 0.0
  %1078 = vmatprep.subr.mxu0 0.0
  %1079 = vmatpush1.xpose.msra.mxu0 0.0
  %1080 = vmatprep.subr.mxu0 0.0
  %1081 = vmatpush1.xpose.msra.mxu0 0.0
  %1082 = vmatprep.subr.mxu0 0.0
  %1083 = vmatpush1.xpose.msra.mxu0 0.0
  %1084 = vmatprep.subr.mxu0 0.0
  %1085 = vmatpush1.xpose.msra.mxu0 0.0
  %1086 = vmatprep.subr.mxu0 0.0
  %1087 = vmatpush1.xpose.msra.mxu0 0.0
  %1088 = vmatprep.subr.mxu0 0.0
  %1089 = vmatpush1.xpose.msra.mxu0 0.0
  %1090 = vmatprep.subr.mxu0 0.0
  %1091 = vmatpush1.xpose.msra.mxu0 0.0
  %1092 = vmatprep.subr.mxu0 0.0
  %1093 = vmatpush1.xpose.msra.mxu0 0.0
  %1094 = vmatprep.subr.mxu0 0.0
  %1095 = vmatpush1.xpose.msra.mxu0 0.0
  %1096 = vmatprep.subr.mxu0 0.0
  %1097 = vmatpush1.xpose.msra.mxu0 0.0
  %1098 = vmatprep.subr.mxu0 0.0
  %1099 = vmatpush1.xpose.msra.mxu0 0.0
  %1100 = vmatprep.subr.mxu0 0.0
  %1101 = vmatpush1.xpose.msra.mxu0 0.0
  %1102 = vmatprep.subr.mxu0 0.0
  %1103 = vmatpush1.xpose.msra.mxu0 0.0
  %1104 = vmatprep.subr.mxu0 0.0
  %1105 = vmatpush1.xpose.msra.mxu0 0.0
  %1106 = vmatprep.subr.mxu0 0.0
  %1107 = vmatpush1.xpose.msra.mxu0 0.0
  %1108 = vmatprep.subr.mxu0 0.0
  %1109 = vmatpush1.xpose.msra.mxu0 0.0
  %1110 = vmatprep.subr.mxu0 0.0
  %1111 = vmatpush1.xpose.msra.mxu0 0.0
  %1112 = vmatprep.subr.mxu0 0.0
  %1113 = vmatpush1.xpose.msra.mxu0 0.0
  %1114 = vmatprep.subr.mxu0 0.0
  %1115 = vmatpush1.xpose.msra.mxu0 0.0
  %1116 = vmatprep.subr.mxu0 0.0
  %1117 = vmatpush1.xpose.msra.mxu0 0.0
  %1118 = vmatprep.subr.mxu0 0.0
  %1119 = vmatpush1.xpose.msra.mxu0 0.0
  %1120 = vmatprep.subr.mxu0 0.0
  %1121 = vmatpush1.xpose.msra.mxu0 0.0
  %1122 = vmatprep.subr.mxu0 0.0
  %1123 = vmatpush1.xpose.msra.mxu0 0.0
  %1124 = vmatprep.subr.mxu0 0.0
  %1125 = vmatpush1.xpose.msra.mxu0 0.0
  %1126 = vmatprep.subr.mxu0 0.0
  %1127 = vmatpush1.xpose.msra.mxu0 0.0
  %1128 = vmatprep.mubr.f32.mxu0 0.0
  %1129 = vmatmul.mubr.f32.gmra.mrb[0].mxu0 %v1056
  %v1130 = vpop.f32.mrb[0].mxu0
  %v1131 = vadd.f32 0.0, %v1130
  %v1132 = vpop.f32.mrb[0].mxu0
  %1133 = vmatprep.mubr.f32.mxu0 0.0
  %1134 = vmatmul.mubr.f32.gmra.mrb[0].mxu0 %v1058
  %v1135 = vpop.f32.mrb[0].mxu0
  %v1136 = vadd.f32 0.0, %v1135
  %v1137 = vpop.f32.mrb[0].mxu0
  %1138 = vdwg.mxu0
  %v1139 = vmul.f32 %v1131, 0.35355338
  %v1140 = vmul.f32 %v1136, 0.35355338
  %v1141 = vsel %vm303, %v1139, -inf
  %1142 = vmax.xlane.f32.xlu0 %v1141
  %v1143 = vpop.xlane.xlu0 %1142
  %v1144 = vsel %vm303, %v1140, -inf
  %1145 = vmax.xlane.f32.xlu0 %v1144
  %v1146 = vpop.xlane.xlu0 %1145
  %v1147 = vsub.f32 %v1139, %v1143
  %v1148 = vsub.f32 %v1140, %v1146
  %v1149 = vmul.f32 %v1147, 1.442695
  %v1150 = vpow.pop %v1149
  %v1151 = vmul.f32 %v1148, 1.442695
  %v1152 = vpow.pop %v1151
  %v1153 = vsel %vm303, %v1150, 0.0
  %1154 = vadd.xlane.f32.xlu0 %v1153
  %v1155 = vpop.xlane.xlu0 %1154
  %v1156 = vsel %vm303, %v1152, 0.0
  %1157 = vadd.xlane.f32.xlu0 %v1156
  %v1158 = vpop.xlane.xlu0 %1157
  %v1159 = vrcp.pop %v1155
  %v1160 = vmul.f32 %v1150, %v1159
  %v1161 = vrcp.pop %v1158
  %v1162 = vmul.f32 %v1152, %v1161
  %1163 = vrot.lane.b32.xlu0 %v205, 64
  %v1164 = vpop.permute.xlu0 %1163
  %1165 = vrot.lane.b32.xlu0 %v208, 64
  %v1166 = vpop.permute.xlu0 %1165
  %v1170 = vsel %vm303, %v1160, 0
  %v1173 = vsel %vm303, %v1162, 0
  %1175 = vmatprep.subr.mxu0 0.0
  %1176 = vmatpush1.msra.mxu0 %v1164
  %1177 = vmatprep.subr.mxu0 0.0
  %1178 = vmatpush1.msra.mxu0 %v1166
  %1179 = vmatprep.subr.mxu0 0.0
  %1180 = vmatpush1.msra.mxu0 0.0
  %1181 = vmatprep.subr.mxu0 0.0
  %1182 = vmatpush1.msra.mxu0 0.0
  %1183 = vmatprep.subr.mxu0 0.0
  %1184 = vmatpush1.msra.mxu0 0.0
  %1185 = vmatprep.subr.mxu0 0.0
  %1186 = vmatpush1.msra.mxu0 0.0
  %1187 = vmatprep.subr.mxu0 0.0
  %1188 = vmatpush1.msra.mxu0 0.0
  %1189 = vmatprep.subr.mxu0 0.0
  %1190 = vmatpush1.msra.mxu0 0.0
  %1191 = vmatprep.subr.mxu0 0.0
  %1192 = vmatpush1.msra.mxu0 0.0
  %1193 = vmatprep.subr.mxu0 0.0
  %1194 = vmatpush1.msra.mxu0 0.0
  %1195 = vmatprep.subr.mxu0 0.0
  %1196 = vmatpush1.msra.mxu0 0.0
  %1197 = vmatprep.subr.mxu0 0.0
  %1198 = vmatpush1.msra.mxu0 0.0
  %1199 = vmatprep.subr.mxu0 0.0
  %1200 = vmatpush1.msra.mxu0 0.0
  %1201 = vmatprep.subr.mxu0 0.0
  %1202 = vmatpush1.msra.mxu0 0.0
  %1203 = vmatprep.subr.mxu0 0.0
  %1204 = vmatpush1.msra.mxu0 0.0
  %1205 = vmatprep.subr.mxu0 0.0
  %1206 = vmatpush1.msra.mxu0 0.0
  %1207 = vmatprep.subr.mxu0 0.0
  %1208 = vmatpush1.msra.mxu0 0.0
  %1209 = vmatprep.subr.mxu0 0.0
  %1210 = vmatpush1.msra.mxu0 0.0
  %1211 = vmatprep.subr.mxu0 0.0
  %1212 = vmatpush1.msra.mxu0 0.0
  %1213 = vmatprep.subr.mxu0 0.0
  %1214 = vmatpush1.msra.mxu0 0.0
  %1215 = vmatprep.subr.mxu0 0.0
  %1216 = vmatpush1.msra.mxu0 0.0
  %1217 = vmatprep.subr.mxu0 0.0
  %1218 = vmatpush1.msra.mxu0 0.0
  %1219 = vmatprep.subr.mxu0 0.0
  %1220 = vmatpush1.msra.mxu0 0.0
  %1221 = vmatprep.subr.mxu0 0.0
  %1222 = vmatpush1.msra.mxu0 0.0
  %1223 = vmatprep.subr.mxu0 0.0
  %1224 = vmatpush1.msra.mxu0 0.0
  %1225 = vmatprep.subr.mxu0 0.0
  %1226 = vmatpush1.msra.mxu0 0.0
  %1227 = vmatprep.subr.mxu0 0.0
  %1228 = vmatpush1.msra.mxu0 0.0
  %1229 = vmatprep.subr.mxu0 0.0
  %1230 = vmatpush1.msra.mxu0 0.0
  %1231 = vmatprep.subr.mxu0 0.0
  %1232 = vmatpush1.msra.mxu0 0.0
  %1233 = vmatprep.subr.mxu0 0.0
  %1234 = vmatpush1.msra.mxu0 0.0
  %1235 = vmatprep.subr.mxu0 0.0
  %1236 = vmatpush1.msra.mxu0 0.0
  %1237 = vmatprep.subr.mxu0 0.0
  %1238 = vmatpush1.msra.mxu0 0.0
  %1239 = vmatprep.mubr.f32.mxu0 0.0
  %1240 = vmatmul.mubr.f32.gmra.mrb[0].mxu0 %v1170
  %v1241 = vpop.f32.mrb[0].mxu0
  %v1242 = vadd.f32 0.0, %v1241
  %v1243 = vpop.f32.mrb[0].mxu0
  %1244 = vmatprep.mubr.f32.mxu0 0.0
  %1245 = vmatmul.mubr.f32.gmra.mrb[0].mxu0 %v1173
  %v1246 = vpop.f32.mrb[0].mxu0
  %v1247 = vadd.f32 0.0, %v1246
  %v1248 = vpop.f32.mrb[0].mxu0
  %1249 = vdwg.mxu0
  %1250 = vrot.lane.b32.xlu0 %v205, 120
  %v1251 = vpop.permute.xlu0 %1250
  %1252 = vrot.lane.b32.xlu0 %v208, 120
  %v1253 = vpop.permute.xlu0 %1252
  %1254 = vrot.lane.b32.xlu0 %v205, 88
  %v1255 = vpop.permute.xlu0 %1254
  %1256 = vrot.lane.b32.xlu0 %v208, 88
  %v1257 = vpop.permute.xlu0 %1256
  %v1258 = vsel %vm217, %v1251, 0
  %v1260 = vsel %vm217, %v1253, 0
  %v1262 = vsel %vm217, %v1255, 0
  %v1264 = vsel %vm217, %v1257, 0
  %1266 = vmatprep.subr.mxu0 0.0
  %1267 = vmatpush1.xpose.msra.mxu0 %v1262
  %1268 = vmatprep.subr.mxu0 0.0
  %1269 = vmatpush1.xpose.msra.mxu0 %v1264
  %1270 = vmatprep.subr.mxu0 0.0
  %1271 = vmatpush1.xpose.msra.mxu0 0.0
  %1272 = vmatprep.subr.mxu0 0.0
  %1273 = vmatpush1.xpose.msra.mxu0 0.0
  %1274 = vmatprep.subr.mxu0 0.0
  %1275 = vmatpush1.xpose.msra.mxu0 0.0
  %1276 = vmatprep.subr.mxu0 0.0
  %1277 = vmatpush1.xpose.msra.mxu0 0.0
  %1278 = vmatprep.subr.mxu0 0.0
  %1279 = vmatpush1.xpose.msra.mxu0 0.0
  %1280 = vmatprep.subr.mxu0 0.0
  %1281 = vmatpush1.xpose.msra.mxu0 0.0
  %1282 = vmatprep.subr.mxu0 0.0
  %1283 = vmatpush1.xpose.msra.mxu0 0.0
  %1284 = vmatprep.subr.mxu0 0.0
  %1285 = vmatpush1.xpose.msra.mxu0 0.0
  %1286 = vmatprep.subr.mxu0 0.0
  %1287 = vmatpush1.xpose.msra.mxu0 0.0
  %1288 = vmatprep.subr.mxu0 0.0
  %1289 = vmatpush1.xpose.msra.mxu0 0.0
  %1290 = vmatprep.subr.mxu0 0.0
  %1291 = vmatpush1.xpose.msra.mxu0 0.0
  %1292 = vmatprep.subr.mxu0 0.0
  %1293 = vmatpush1.xpose.msra.mxu0 0.0
  %1294 = vmatprep.subr.mxu0 0.0
  %1295 = vmatpush1.xpose.msra.mxu0 0.0
  %1296 = vmatprep.subr.mxu0 0.0
  %1297 = vmatpush1.xpose.msra.mxu0 0.0
  %1298 = vmatprep.subr.mxu0 0.0
  %1299 = vmatpush1.xpose.msra.mxu0 0.0
  %1300 = vmatprep.subr.mxu0 0.0
  %1301 = vmatpush1.xpose.msra.mxu0 0.0
  %1302 = vmatprep.subr.mxu0 0.0
  %1303 = vmatpush1.xpose.msra.mxu0 0.0
  %1304 = vmatprep.subr.mxu0 0.0
  %1305 = vmatpush1.xpose.msra.mxu0 0.0
  %1306 = vmatprep.subr.mxu0 0.0
  %1307 = vmatpush1.xpose.msra.mxu0 0.0
  %1308 = vmatprep.subr.mxu0 0.0
  %1309 = vmatpush1.xpose.msra.mxu0 0.0
  %1310 = vmatprep.subr.mxu0 0.0
  %1311 = vmatpush1.xpose.msra.mxu0 0.0
  %1312 = vmatprep.subr.mxu0 0.0
  %1313 = vmatpush1.xpose.msra.mxu0 0.0
  %1314 = vmatprep.subr.mxu0 0.0
  %1315 = vmatpush1.xpose.msra.mxu0 0.0
  %1316 = vmatprep.subr.mxu0 0.0
  %1317 = vmatpush1.xpose.msra.mxu0 0.0
  %1318 = vmatprep.subr.mxu0 0.0
  %1319 = vmatpush1.xpose.msra.mxu0 0.0
  %1320 = vmatprep.subr.mxu0 0.0
  %1321 = vmatpush1.xpose.msra.mxu0 0.0
  %1322 = vmatprep.subr.mxu0 0.0
  %1323 = vmatpush1.xpose.msra.mxu0 0.0
  %1324 = vmatprep.subr.mxu0 0.0
  %1325 = vmatpush1.xpose.msra.mxu0 0.0
  %1326 = vmatprep.subr.mxu0 0.0
  %1327 = vmatpush1.xpose.msra.mxu0 0.0
  %1328 = vmatprep.subr.mxu0 0.0
  %1329 = vmatpush1.xpose.msra.mxu0 0.0
  %1330 = vmatprep.mubr.f32.mxu0 0.0
  %1331 = vmatmul.mubr.f32.gmra.mrb[0].mxu0 %v1258
  %v1332 = vpop.f32.mrb[0].mxu0
  %v1333 = vadd.f32 0.0, %v1332
  %v1334 = vpop.f32.mrb[0].mxu0
  %1335 = vmatprep.mubr.f32.mxu0 0.0
  %1336 = vmatmul.mubr.f32.gmra.mrb[0].mxu0 %v1260
  %v1337 = vpop.f32.mrb[0].mxu0
  %v1338 = vadd.f32 0.0, %v1337
  %v1339 = vpop.f32.mrb[0].mxu0
  %1340 = vdwg.mxu0
  %v1341 = vmul.f32 %v1333, 0.35355338
  %v1342 = vmul.f32 %v1338, 0.35355338
  %v1343 = vsel %vm303, %v1341, -inf
  %1344 = vmax.xlane.f32.xlu0 %v1343
  %v1345 = vpop.xlane.xlu0 %1344
  %v1346 = vsel %vm303, %v1342, -inf
  %1347 = vmax.xlane.f32.xlu0 %v1346
  %v1348 = vpop.xlane.xlu0 %1347
  %v1349 = vsub.f32 %v1341, %v1345
  %v1350 = vsub.f32 %v1342, %v1348
  %v1351 = vmul.f32 %v1349, 1.442695
  %v1352 = vpow.pop %v1351
  %v1353 = vmul.f32 %v1350, 1.442695
  %v1354 = vpow.pop %v1353
  %v1355 = vsel %vm303, %v1352, 0.0
  %1356 = vadd.xlane.f32.xlu0 %v1355
  %v1357 = vpop.xlane.xlu0 %1356
  %v1358 = vsel %vm303, %v1354, 0.0
  %1359 = vadd.xlane.f32.xlu0 %v1358
  %v1360 = vpop.xlane.xlu0 %1359
  %v1361 = vrcp.pop %v1357
  %v1362 = vmul.f32 %v1352, %v1361
  %v1363 = vrcp.pop %v1360
  %v1364 = vmul.f32 %v1354, %v1363
  %1365 = vrot.lane.b32.xlu0 %v205, 56
  %v1366 = vpop.permute.xlu0 %1365
  %1367 = vrot.lane.b32.xlu0 %v208, 56
  %v1368 = vpop.permute.xlu0 %1367
  %v1372 = vsel %vm303, %v1362, 0
  %v1375 = vsel %vm303, %v1364, 0
  %1377 = vmatprep.subr.mxu0 0.0
  %1378 = vmatpush1.msra.mxu0 %v1366
  %1379 = vmatprep.subr.mxu0 0.0
  %1380 = vmatpush1.msra.mxu0 %v1368
  %1381 = vmatprep.subr.mxu0 0.0
  %1382 = vmatpush1.msra.mxu0 0.0
  %1383 = vmatprep.subr.mxu0 0.0
  %1384 = vmatpush1.msra.mxu0 0.0
  %1385 = vmatprep.subr.mxu0 0.0
  %1386 = vmatpush1.msra.mxu0 0.0
  %1387 = vmatprep.subr.mxu0 0.0
  %1388 = vmatpush1.msra.mxu0 0.0
  %1389 = vmatprep.subr.mxu0 0.0
  %1390 = vmatpush1.msra.mxu0 0.0
  %1391 = vmatprep.subr.mxu0 0.0
  %1392 = vmatpush1.msra.mxu0 0.0
  %1393 = vmatprep.subr.mxu0 0.0
  %1394 = vmatpush1.msra.mxu0 0.0
  %1395 = vmatprep.subr.mxu0 0.0
  %1396 = vmatpush1.msra.mxu0 0.0
  %1397 = vmatprep.subr.mxu0 0.0
  %1398 = vmatpush1.msra.mxu0 0.0
  %1399 = vmatprep.subr.mxu0 0.0
  %1400 = vmatpush1.msra.mxu0 0.0
  %1401 = vmatprep.subr.mxu0 0.0
  %1402 = vmatpush1.msra.mxu0 0.0
  %1403 = vmatprep.subr.mxu0 0.0
  %1404 = vmatpush1.msra.mxu0 0.0
  %1405 = vmatprep.subr.mxu0 0.0
  %1406 = vmatpush1.msra.mxu0 0.0
  %1407 = vmatprep.subr.mxu0 0.0
  %1408 = vmatpush1.msra.mxu0 0.0
  %1409 = vmatprep.subr.mxu0 0.0
  %1410 = vmatpush1.msra.mxu0 0.0
  %1411 = vmatprep.subr.mxu0 0.0
  %1412 = vmatpush1.msra.mxu0 0.0
  %1413 = vmatprep.subr.mxu0 0.0
  %1414 = vmatpush1.msra.mxu0 0.0
  %1415 = vmatprep.subr.mxu0 0.0
  %1416 = vmatpush1.msra.mxu0 0.0
  %1417 = vmatprep.subr.mxu0 0.0
  %1418 = vmatpush1.msra.mxu0 0.0
  %1419 = vmatprep.subr.mxu0 0.0
  %1420 = vmatpush1.msra.mxu0 0.0
  %1421 = vmatprep.subr.mxu0 0.0
  %1422 = vmatpush1.msra.mxu0 0.0
  %1423 = vmatprep.subr.mxu0 0.0
  %1424 = vmatpush1.msra.mxu0 0.0
  %1425 = vmatprep.subr.mxu0 0.0
  %1426 = vmatpush1.msra.mxu0 0.0
  %1427 = vmatprep.subr.mxu0 0.0
  %1428 = vmatpush1.msra.mxu0 0.0
  %1429 = vmatprep.subr.mxu0 0.0
  %1430 = vmatpush1.msra.mxu0 0.0
  %1431 = vmatprep.subr.mxu0 0.0
  %1432 = vmatpush1.msra.mxu0 0.0
  %1433 = vmatprep.subr.mxu0 0.0
  %1434 = vmatpush1.msra.mxu0 0.0
  %1435 = vmatprep.subr.mxu0 0.0
  %1436 = vmatpush1.msra.mxu0 0.0
  %1437 = vmatprep.subr.mxu0 0.0
  %1438 = vmatpush1.msra.mxu0 0.0
  %1439 = vmatprep.subr.mxu0 0.0
  %1440 = vmatpush1.msra.mxu0 0.0
  %1441 = vmatprep.mubr.f32.mxu0 0.0
  %1442 = vmatmul.mubr.f32.gmra.mrb[0].mxu0 %v1372
  %v1443 = vpop.f32.mrb[0].mxu0
  %v1444 = vadd.f32 0.0, %v1443
  %v1445 = vpop.f32.mrb[0].mxu0
  %1446 = vmatprep.mubr.f32.mxu0 0.0
  %1447 = vmatmul.mubr.f32.gmra.mrb[0].mxu0 %v1375
  %v1448 = vpop.f32.mrb[0].mxu0
  %v1449 = vadd.f32 0.0, %v1448
  %v1450 = vpop.f32.mrb[0].mxu0
  %1451 = vdwg.mxu0
  %1452 = vrot.lane.b32.xlu0 %v205, 112
  %v1453 = vpop.permute.xlu0 %1452
  %1454 = vrot.lane.b32.xlu0 %v208, 112
  %v1455 = vpop.permute.xlu0 %1454
  %1456 = vrot.lane.b32.xlu0 %v205, 80
  %v1457 = vpop.permute.xlu0 %1456
  %1458 = vrot.lane.b32.xlu0 %v208, 80
  %v1459 = vpop.permute.xlu0 %1458
  %v1460 = vsel %vm217, %v1453, 0
  %v1462 = vsel %vm217, %v1455, 0
  %v1464 = vsel %vm217, %v1457, 0
  %v1466 = vsel %vm217, %v1459, 0
  %1468 = vmatprep.subr.mxu0 0.0
  %1469 = vmatpush1.xpose.msra.mxu0 %v1464
  %1470 = vmatprep.subr.mxu0 0.0
  %1471 = vmatpush1.xpose.msra.mxu0 %v1466
  %1472 = vmatprep.subr.mxu0 0.0
  %1473 = vmatpush1.xpose.msra.mxu0 0.0
  %1474 = vmatprep.subr.mxu0 0.0
  %1475 = vmatpush1.xpose.msra.mxu0 0.0
  %1476 = vmatprep.subr.mxu0 0.0
  %1477 = vmatpush1.xpose.msra.mxu0 0.0
  %1478 = vmatprep.subr.mxu0 0.0
  %1479 = vmatpush1.xpose.msra.mxu0 0.0
  %1480 = vmatprep.subr.mxu0 0.0
  %1481 = vmatpush1.xpose.msra.mxu0 0.0
  %1482 = vmatprep.subr.mxu0 0.0
  %1483 = vmatpush1.xpose.msra.mxu0 0.0
  %1484 = vmatprep.subr.mxu0 0.0
  %1485 = vmatpush1.xpose.msra.mxu0 0.0
  %1486 = vmatprep.subr.mxu0 0.0
  %1487 = vmatpush1.xpose.msra.mxu0 0.0
  %1488 = vmatprep.subr.mxu0 0.0
  %1489 = vmatpush1.xpose.msra.mxu0 0.0
  %1490 = vmatprep.subr.mxu0 0.0
  %1491 = vmatpush1.xpose.msra.mxu0 0.0
  %1492 = vmatprep.subr.mxu0 0.0
  %1493 = vmatpush1.xpose.msra.mxu0 0.0
  %1494 = vmatprep.subr.mxu0 0.0
  %1495 = vmatpush1.xpose.msra.mxu0 0.0
  %1496 = vmatprep.subr.mxu0 0.0
  %1497 = vmatpush1.xpose.msra.mxu0 0.0
  %1498 = vmatprep.subr.mxu0 0.0
  %1499 = vmatpush1.xpose.msra.mxu0 0.0
  %1500 = vmatprep.subr.mxu0 0.0
  %1501 = vmatpush1.xpose.msra.mxu0 0.0
  %1502 = vmatprep.subr.mxu0 0.0
  %1503 = vmatpush1.xpose.msra.mxu0 0.0
  %1504 = vmatprep.subr.mxu0 0.0
  %1505 = vmatpush1.xpose.msra.mxu0 0.0
  %1506 = vmatprep.subr.mxu0 0.0
  %1507 = vmatpush1.xpose.msra.mxu0 0.0
  %1508 = vmatprep.subr.mxu0 0.0
  %1509 = vmatpush1.xpose.msra.mxu0 0.0
  %1510 = vmatprep.subr.mxu0 0.0
  %1511 = vmatpush1.xpose.msra.mxu0 0.0
  %1512 = vmatprep.subr.mxu0 0.0
  %1513 = vmatpush1.xpose.msra.mxu0 0.0
  %1514 = vmatprep.subr.mxu0 0.0
  %1515 = vmatpush1.xpose.msra.mxu0 0.0
  %1516 = vmatprep.subr.mxu0 0.0
  %1517 = vmatpush1.xpose.msra.mxu0 0.0
  %1518 = vmatprep.subr.mxu0 0.0
  %1519 = vmatpush1.xpose.msra.mxu0 0.0
  %1520 = vmatprep.subr.mxu0 0.0
  %1521 = vmatpush1.xpose.msra.mxu0 0.0
  %1522 = vmatprep.subr.mxu0 0.0
  %1523 = vmatpush1.xpose.msra.mxu0 0.0
  %1524 = vmatprep.subr.mxu0 0.0
  %1525 = vmatpush1.xpose.msra.mxu0 0.0
  %1526 = vmatprep.subr.mxu0 0.0
  %1527 = vmatpush1.xpose.msra.mxu0 0.0
  %1528 = vmatprep.subr.mxu0 0.0
  %1529 = vmatpush1.xpose.msra.mxu0 0.0
  %1530 = vmatprep.subr.mxu0 0.0
  %1531 = vmatpush1.xpose.msra.mxu0 0.0
  %1532 = vmatprep.mubr.f32.mxu0 0.0
  %1533 = vmatmul.mubr.f32.gmra.mrb[0].mxu0 %v1460
  %v1534 = vpop.f32.mrb[0].mxu0
  %v1535 = vadd.f32 0.0, %v1534
  %v1536 = vpop.f32.mrb[0].mxu0
  %1537 = vmatprep.mubr.f32.mxu0 0.0
  %1538 = vmatmul.mubr.f32.gmra.mrb[0].mxu0 %v1462
  %v1539 = vpop.f32.mrb[0].mxu0
  %v1540 = vadd.f32 0.0, %v1539
  %v1541 = vpop.f32.mrb[0].mxu0
  %1542 = vdwg.mxu0
  %v1543 = vmul.f32 %v1535, 0.35355338
  %v1544 = vmul.f32 %v1540, 0.35355338
  %v1545 = vsel %vm303, %v1543, -inf
  %1546 = vmax.xlane.f32.xlu0 %v1545
  %v1547 = vpop.xlane.xlu0 %1546
  %v1548 = vsel %vm303, %v1544, -inf
  %1549 = vmax.xlane.f32.xlu0 %v1548
  %v1550 = vpop.xlane.xlu0 %1549
  %v1551 = vsub.f32 %v1543, %v1547
  %v1552 = vsub.f32 %v1544, %v1550
  %v1553 = vmul.f32 %v1551, 1.442695
  %v1554 = vpow.pop %v1553
  %v1555 = vmul.f32 %v1552, 1.442695
  %v1556 = vpow.pop %v1555
  %v1557 = vsel %vm303, %v1554, 0.0
  %1558 = vadd.xlane.f32.xlu0 %v1557
  %v1559 = vpop.xlane.xlu0 %1558
  %v1560 = vsel %vm303, %v1556, 0.0
  %1561 = vadd.xlane.f32.xlu0 %v1560
  %v1562 = vpop.xlane.xlu0 %1561
  %v1563 = vrcp.pop %v1559
  %v1564 = vmul.f32 %v1554, %v1563
  %v1565 = vrcp.pop %v1562
  %v1566 = vmul.f32 %v1556, %v1565
  %1567 = vrot.lane.b32.xlu0 %v205, 48
  %v1568 = vpop.permute.xlu0 %1567
  %1569 = vrot.lane.b32.xlu0 %v208, 48
  %v1570 = vpop.permute.xlu0 %1569
  %v1574 = vsel %vm303, %v1564, 0
  %v1577 = vsel %vm303, %v1566, 0
  %1579 = vmatprep.subr.mxu0 0.0
  %1580 = vmatpush1.msra.mxu0 %v1568
  %1581 = vmatprep.subr.mxu0 0.0
  %1582 = vmatpush1.msra.mxu0 %v1570
  %1583 = vmatprep.subr.mxu0 0.0
  %1584 = vmatpush1.msra.mxu0 0.0
  %1585 = vmatprep.subr.mxu0 0.0
  %1586 = vmatpush1.msra.mxu0 0.0
  %1587 = vmatprep.subr.mxu0 0.0
  %1588 = vmatpush1.msra.mxu0 0.0
  %1589 = vmatprep.subr.mxu0 0.0
  %1590 = vmatpush1.msra.mxu0 0.0
  %1591 = vmatprep.subr.mxu0 0.0
  %1592 = vmatpush1.msra.mxu0 0.0
  %1593 = vmatprep.subr.mxu0 0.0
  %1594 = vmatpush1.msra.mxu0 0.0
  %1595 = vmatprep.subr.mxu0 0.0
  %1596 = vmatpush1.msra.mxu0 0.0
  %1597 = vmatprep.subr.mxu0 0.0
  %1598 = vmatpush1.msra.mxu0 0.0
  %1599 = vmatprep.subr.mxu0 0.0
  %1600 = vmatpush1.msra.mxu0 0.0
  %1601 = vmatprep.subr.mxu0 0.0
  %1602 = vmatpush1.msra.mxu0 0.0
  %1603 = vmatprep.subr.mxu0 0.0
  %1604 = vmatpush1.msra.mxu0 0.0
  %1605 = vmatprep.subr.mxu0 0.0
  %1606 = vmatpush1.msra.mxu0 0.0
  %1607 = vmatprep.subr.mxu0 0.0
  %1608 = vmatpush1.msra.mxu0 0.0
  %1609 = vmatprep.subr.mxu0 0.0
  %1610 = vmatpush1.msra.mxu0 0.0
  %1611 = vmatprep.subr.mxu0 0.0
  %1612 = vmatpush1.msra.mxu0 0.0
  %1613 = vmatprep.subr.mxu0 0.0
  %1614 = vmatpush1.msra.mxu0 0.0
  %1615 = vmatprep.subr.mxu0 0.0
  %1616 = vmatpush1.msra.mxu0 0.0
  %1617 = vmatprep.subr.mxu0 0.0
  %1618 = vmatpush1.msra.mxu0 0.0
  %1619 = vmatprep.subr.mxu0 0.0
  %1620 = vmatpush1.msra.mxu0 0.0
  %1621 = vmatprep.subr.mxu0 0.0
  %1622 = vmatpush1.msra.mxu0 0.0
  %1623 = vmatprep.subr.mxu0 0.0
  %1624 = vmatpush1.msra.mxu0 0.0
  %1625 = vmatprep.subr.mxu0 0.0
  %1626 = vmatpush1.msra.mxu0 0.0
  %1627 = vmatprep.subr.mxu0 0.0
  %1628 = vmatpush1.msra.mxu0 0.0
  %1629 = vmatprep.subr.mxu0 0.0
  %1630 = vmatpush1.msra.mxu0 0.0
  %1631 = vmatprep.subr.mxu0 0.0
  %1632 = vmatpush1.msra.mxu0 0.0
  %1633 = vmatprep.subr.mxu0 0.0
  %1634 = vmatpush1.msra.mxu0 0.0
  %1635 = vmatprep.subr.mxu0 0.0
  %1636 = vmatpush1.msra.mxu0 0.0
  %1637 = vmatprep.subr.mxu0 0.0
  %1638 = vmatpush1.msra.mxu0 0.0
  %1639 = vmatprep.subr.mxu0 0.0
  %1640 = vmatpush1.msra.mxu0 0.0
  %1641 = vmatprep.subr.mxu0 0.0
  %1642 = vmatpush1.msra.mxu0 0.0
  %1643 = vmatprep.mubr.f32.mxu0 0.0
  %1644 = vmatmul.mubr.f32.gmra.mrb[0].mxu0 %v1574
  %v1645 = vpop.f32.mrb[0].mxu0
  %v1646 = vadd.f32 0.0, %v1645
  %v1647 = vpop.f32.mrb[0].mxu0
  %1648 = vmatprep.mubr.f32.mxu0 0.0
  %1649 = vmatmul.mubr.f32.gmra.mrb[0].mxu0 %v1577
  %v1650 = vpop.f32.mrb[0].mxu0
  %v1651 = vadd.f32 0.0, %v1650
  %v1652 = vpop.f32.mrb[0].mxu0
  %1653 = vdwg.mxu0
  %1654 = vrot.lane.b32.xlu0 %v205, 104
  %v1655 = vpop.permute.xlu0 %1654
  %1656 = vrot.lane.b32.xlu0 %v208, 104
  %v1657 = vpop.permute.xlu0 %1656
  %1658 = vrot.lane.b32.xlu0 %v205, 72
  %v1659 = vpop.permute.xlu0 %1658
  %1660 = vrot.lane.b32.xlu0 %v208, 72
  %v1661 = vpop.permute.xlu0 %1660
  %v1662 = vsel %vm217, %v1655, 0
  %v1664 = vsel %vm217, %v1657, 0
  %v1666 = vsel %vm217, %v1659, 0
  %v1668 = vsel %vm217, %v1661, 0
  %1670 = vmatprep.subr.mxu0 0.0
  %1671 = vmatpush1.xpose.msra.mxu0 %v1666
  %1672 = vmatprep.subr.mxu0 0.0
  %1673 = vmatpush1.xpose.msra.mxu0 %v1668
  %1674 = vmatprep.subr.mxu0 0.0
  %1675 = vmatpush1.xpose.msra.mxu0 0.0
  %1676 = vmatprep.subr.mxu0 0.0
  %1677 = vmatpush1.xpose.msra.mxu0 0.0
  %1678 = vmatprep.subr.mxu0 0.0
  %1679 = vmatpush1.xpose.msra.mxu0 0.0
  %1680 = vmatprep.subr.mxu0 0.0
  %1681 = vmatpush1.xpose.msra.mxu0 0.0
  %1682 = vmatprep.subr.mxu0 0.0
  %1683 = vmatpush1.xpose.msra.mxu0 0.0
  %1684 = vmatprep.subr.mxu0 0.0
  %1685 = vmatpush1.xpose.msra.mxu0 0.0
  %1686 = vmatprep.subr.mxu0 0.0
  %1687 = vmatpush1.xpose.msra.mxu0 0.0
  %1688 = vmatprep.subr.mxu0 0.0
  %1689 = vmatpush1.xpose.msra.mxu0 0.0
  %1690 = vmatprep.subr.mxu0 0.0
  %1691 = vmatpush1.xpose.msra.mxu0 0.0
  %1692 = vmatprep.subr.mxu0 0.0
  %1693 = vmatpush1.xpose.msra.mxu0 0.0
  %1694 = vmatprep.subr.mxu0 0.0
  %1695 = vmatpush1.xpose.msra.mxu0 0.0
  %1696 = vmatprep.subr.mxu0 0.0
  %1697 = vmatpush1.xpose.msra.mxu0 0.0
  %1698 = vmatprep.subr.mxu0 0.0
  %1699 = vmatpush1.xpose.msra.mxu0 0.0
  %1700 = vmatprep.subr.mxu0 0.0
  %1701 = vmatpush1.xpose.msra.mxu0 0.0
  %1702 = vmatprep.subr.mxu0 0.0
  %1703 = vmatpush1.xpose.msra.mxu0 0.0
  %1704 = vmatprep.subr.mxu0 0.0
  %1705 = vmatpush1.xpose.msra.mxu0 0.0
  %1706 = vmatprep.subr.mxu0 0.0
  %1707 = vmatpush1.xpose.msra.mxu0 0.0
  %1708 = vmatprep.subr.mxu0 0.0
  %1709 = vmatpush1.xpose.msra.mxu0 0.0
  %1710 = vmatprep.subr.mxu0 0.0
  %1711 = vmatpush1.xpose.msra.mxu0 0.0
  %1712 = vmatprep.subr.mxu0 0.0
  %1713 = vmatpush1.xpose.msra.mxu0 0.0
  %1714 = vmatprep.subr.mxu0 0.0
  %1715 = vmatpush1.xpose.msra.mxu0 0.0
  %1716 = vmatprep.subr.mxu0 0.0
  %1717 = vmatpush1.xpose.msra.mxu0 0.0
  %1718 = vmatprep.subr.mxu0 0.0
  %1719 = vmatpush1.xpose.msra.mxu0 0.0
  %1720 = vmatprep.subr.mxu0 0.0
  %1721 = vmatpush1.xpose.msra.mxu0 0.0
  %1722 = vmatprep.subr.mxu0 0.0
  %1723 = vmatpush1.xpose.msra.mxu0 0.0
  %1724 = vmatprep.subr.mxu0 0.0
  %1725 = vmatpush1.xpose.msra.mxu0 0.0
  %1726 = vmatprep.subr.mxu0 0.0
  %1727 = vmatpush1.xpose.msra.mxu0 0.0
  %1728 = vmatprep.subr.mxu0 0.0
  %1729 = vmatpush1.xpose.msra.mxu0 0.0
  %1730 = vmatprep.subr.mxu0 0.0
  %1731 = vmatpush1.xpose.msra.mxu0 0.0
  %1732 = vmatprep.subr.mxu0 0.0
  %1733 = vmatpush1.xpose.msra.mxu0 0.0
  %1734 = vmatprep.mubr.f32.mxu0 0.0
  %1735 = vmatmul.mubr.f32.gmra.mrb[0].mxu0 %v1662
  %v1736 = vpop.f32.mrb[0].mxu0
  %v1737 = vadd.f32 0.0, %v1736
  %v1738 = vpop.f32.mrb[0].mxu0
  %1739 = vmatprep.mubr.f32.mxu0 0.0
  %1740 = vmatmul.mubr.f32.gmra.mrb[0].mxu0 %v1664
  %v1741 = vpop.f32.mrb[0].mxu0
  %v1742 = vadd.f32 0.0, %v1741
  %v1743 = vpop.f32.mrb[0].mxu0
  %1744 = vdwg.mxu0
  %v1745 = vmul.f32 %v1737, 0.35355338
  %v1746 = vmul.f32 %v1742, 0.35355338
  %v1747 = vsel %vm303, %v1745, -inf
  %1748 = vmax.xlane.f32.xlu0 %v1747
  %v1749 = vpop.xlane.xlu0 %1748
  %v1750 = vsel %vm303, %v1746, -inf
  %1751 = vmax.xlane.f32.xlu0 %v1750
  %v1752 = vpop.xlane.xlu0 %1751
  %v1753 = vsub.f32 %v1745, %v1749
  %v1754 = vsub.f32 %v1746, %v1752
  %v1755 = vmul.f32 %v1753, 1.442695
  %v1756 = vpow.pop %v1755
  %v1757 = vmul.f32 %v1754, 1.442695
  %v1758 = vpow.pop %v1757
  %v1759 = vsel %vm303, %v1756, 0.0
  %1760 = vadd.xlane.f32.xlu0 %v1759
  %v1761 = vpop.xlane.xlu0 %1760
  %v1762 = vsel %vm303, %v1758, 0.0
  %1763 = vadd.xlane.f32.xlu0 %v1762
  %v1764 = vpop.xlane.xlu0 %1763
  %v1765 = vrcp.pop %v1761
  %v1766 = vmul.f32 %v1756, %v1765
  %v1767 = vrcp.pop %v1764
  %v1768 = vmul.f32 %v1758, %v1767
  %1769 = vrot.lane.b32.xlu0 %v205, 40
  %v1770 = vpop.permute.xlu0 %1769
  %1771 = vrot.lane.b32.xlu0 %v208, 40
  %v1772 = vpop.permute.xlu0 %1771
  %v1776 = vsel %vm303, %v1766, 0
  %v1779 = vsel %vm303, %v1768, 0
  %1781 = vmatprep.subr.mxu0 0.0
  %1782 = vmatpush1.msra.mxu0 %v1770
  %1783 = vmatprep.subr.mxu0 0.0
  %1784 = vmatpush1.msra.mxu0 %v1772
  %1785 = vmatprep.subr.mxu0 0.0
  %1786 = vmatpush1.msra.mxu0 0.0
  %1787 = vmatprep.subr.mxu0 0.0
  %1788 = vmatpush1.msra.mxu0 0.0
  %1789 = vmatprep.subr.mxu0 0.0
  %1790 = vmatpush1.msra.mxu0 0.0
  %1791 = vmatprep.subr.mxu0 0.0
  %1792 = vmatpush1.msra.mxu0 0.0
  %1793 = vmatprep.subr.mxu0 0.0
  %1794 = vmatpush1.msra.mxu0 0.0
  %1795 = vmatprep.subr.mxu0 0.0
  %1796 = vmatpush1.msra.mxu0 0.0
  %1797 = vmatprep.subr.mxu0 0.0
  %1798 = vmatpush1.msra.mxu0 0.0
  %1799 = vmatprep.subr.mxu0 0.0
  %1800 = vmatpush1.msra.mxu0 0.0
  %1801 = vmatprep.subr.mxu0 0.0
  %1802 = vmatpush1.msra.mxu0 0.0
  %1803 = vmatprep.subr.mxu0 0.0
  %1804 = vmatpush1.msra.mxu0 0.0
  %1805 = vmatprep.subr.mxu0 0.0
  %1806 = vmatpush1.msra.mxu0 0.0
  %1807 = vmatprep.subr.mxu0 0.0
  %1808 = vmatpush1.msra.mxu0 0.0
  %1809 = vmatprep.subr.mxu0 0.0
  %1810 = vmatpush1.msra.mxu0 0.0
  %1811 = vmatprep.subr.mxu0 0.0
  %1812 = vmatpush1.msra.mxu0 0.0
  %1813 = vmatprep.subr.mxu0 0.0
  %1814 = vmatpush1.msra.mxu0 0.0
  %1815 = vmatprep.subr.mxu0 0.0
  %1816 = vmatpush1.msra.mxu0 0.0
  %1817 = vmatprep.subr.mxu0 0.0
  %1818 = vmatpush1.msra.mxu0 0.0
  %1819 = vmatprep.subr.mxu0 0.0
  %1820 = vmatpush1.msra.mxu0 0.0
  %1821 = vmatprep.subr.mxu0 0.0
  %1822 = vmatpush1.msra.mxu0 0.0
  %1823 = vmatprep.subr.mxu0 0.0
  %1824 = vmatpush1.msra.mxu0 0.0
  %1825 = vmatprep.subr.mxu0 0.0
  %1826 = vmatpush1.msra.mxu0 0.0
  %1827 = vmatprep.subr.mxu0 0.0
  %1828 = vmatpush1.msra.mxu0 0.0
  %1829 = vmatprep.subr.mxu0 0.0
  %1830 = vmatpush1.msra.mxu0 0.0
  %1831 = vmatprep.subr.mxu0 0.0
  %1832 = vmatpush1.msra.mxu0 0.0
  %1833 = vmatprep.subr.mxu0 0.0
  %1834 = vmatpush1.msra.mxu0 0.0
  %1835 = vmatprep.subr.mxu0 0.0
  %1836 = vmatpush1.msra.mxu0 0.0
  %1837 = vmatprep.subr.mxu0 0.0
  %1838 = vmatpush1.msra.mxu0 0.0
  %1839 = vmatprep.subr.mxu0 0.0
  %1840 = vmatpush1.msra.mxu0 0.0
  %1841 = vmatprep.subr.mxu0 0.0
  %1842 = vmatpush1.msra.mxu0 0.0
  %1843 = vmatprep.subr.mxu0 0.0
  %1844 = vmatpush1.msra.mxu0 0.0
  %1845 = vmatprep.mubr.f32.mxu0 0.0
  %1846 = vmatmul.mubr.f32.gmra.mrb[0].mxu0 %v1776
  %v1847 = vpop.f32.mrb[0].mxu0
  %v1848 = vadd.f32 0.0, %v1847
  %v1849 = vpop.f32.mrb[0].mxu0
  %1850 = vmatprep.mubr.f32.mxu0 0.0
  %1851 = vmatmul.mubr.f32.gmra.mrb[0].mxu0 %v1779
  %v1852 = vpop.f32.mrb[0].mxu0
  %v1853 = vadd.f32 0.0, %v1852
  %v1854 = vpop.f32.mrb[0].mxu0
  %1855 = vdwg.mxu0
  %1858 = vrot.lane.b32.xlu0 %v1444, 8
  %v1859 = vpop.permute.xlu0 %1858
  %1860 = vrot.lane.b32.xlu0 %v1449, 8
  %v1861 = vpop.permute.xlu0 %1860
  %1866 = vrot.lane.b32.xlu0 %v1646, 16
  %v1867 = vpop.permute.xlu0 %1866
  %1868 = vrot.lane.b32.xlu0 %v1651, 16
  %v1869 = vpop.permute.xlu0 %1868
  %1874 = vrot.lane.b32.xlu0 %v1848, 24
  %v1875 = vpop.permute.xlu0 %1874
  %1876 = vrot.lane.b32.xlu0 %v1853, 24
  %v1877 = vpop.permute.xlu0 %1876
  %v1880 = vsel %vm217, %v1242, %v1859
  %v1881 = vsel %vm217, %v1247, %v1861
  %v1882 = vsel %vm303, %v1880, %v1867
  %v1883 = vsel %vm303, %v1881, %v1869
  %v1884 = vsel %vm1047, %v1882, %v1875
  %v1885 = vsel %vm1047, %v1883, %v1877
  %v1886 = vpack.c.bf16 %v1049, %v1048
  %v1887 = vpack.c.bf16 %v1885, %v1884
  %v1888 = vld [vmem:[%s5] sm:$0xf]
  %v1889 = vld [vmem:[%s5 + $0x4] sm:$0xf]
  %v1890 = vld [vmem:[%s5 + $0x8] sm:$0xf]
  %v1891 = vld [vmem:[%s5 + $0xc] sm:$0xf]
  %v1892 = vld [vmem:[%s6] sm:$0x1]
  %v1894 = vlaneseq
  %v1895 = vshrl.u32 %v1894, 7
  %v1896 = vsub.s32 0, %v1895
  %v1897 = vrot.slane %v1892, %v1896
  %v1903 = vunpack.c.l.b16 %v1888
  %v1904 = vunpack.c.l.b16 %v1889
  %v1905 = vunpack.c.l.b16 %v1890
  %v1906 = vunpack.c.l.b16 %v1891
  %v1907 = vpack.c.b16 %v1904, %v1903
  %v1908 = vpack.c.b16 %v1906, %v1905
  %v1912 = vsel %vm57, %v1886, 0
  %v1915 = vsel %vm57, %v1887, 0
  %1917 = vmatprep.subr.bf16.mxu0 0
  %1918 = vmatpush1.bf16.msra.mxu0 %v1907
  %1919 = vmatprep.subr.bf16.mxu0 0
  %1920 = vmatpush1.bf16.msra.mxu0 %v1908
  %1921 = vmatprep.subr.bf16.mxu0 0
  %1922 = vmatpush1.bf16.msra.mxu0 0
  %1923 = vmatprep.subr.bf16.mxu0 0
  %1924 = vmatpush1.bf16.msra.mxu0 0
  %1925 = vmatprep.subr.bf16.mxu0 0
  %1926 = vmatpush1.bf16.msra.mxu0 0
  %1927 = vmatprep.subr.bf16.mxu0 0
  %1928 = vmatpush1.bf16.msra.mxu0 0
  %1929 = vmatprep.subr.bf16.mxu0 0
  %1930 = vmatpush1.bf16.msra.mxu0 0
  %1931 = vmatprep.subr.bf16.mxu0 0
  %1932 = vmatpush1.bf16.msra.mxu0 0
  %1933 = vmatprep.subr.bf16.mxu0 0
  %1934 = vmatpush1.bf16.msra.mxu0 0
  %1935 = vmatprep.subr.bf16.mxu0 0
  %1936 = vmatpush1.bf16.msra.mxu0 0
  %1937 = vmatprep.subr.bf16.mxu0 0
  %1938 = vmatpush1.bf16.msra.mxu0 0
  %1939 = vmatprep.subr.bf16.mxu0 0
  %1940 = vmatpush1.bf16.msra.mxu0 0
  %1941 = vmatprep.subr.bf16.mxu0 0
  %1942 = vmatpush1.bf16.msra.mxu0 0
  %1943 = vmatprep.subr.bf16.mxu0 0
  %1944 = vmatpush1.bf16.msra.mxu0 0
  %1945 = vmatprep.subr.bf16.mxu0 0
  %1946 = vmatpush1.bf16.msra.mxu0 0
  %1947 = vmatprep.subr.bf16.mxu0 0
  %1948 = vmatpush1.bf16.msra.mxu0 0
  %1949 = vmatprep.mubr.bf16.mxu0 0
  %1950 = vmatmul.mubr.bf16.gmra.mrb[0].mxu0 %v1912
  %v1951 = vpop.f32.mrb[0].mxu0
  %v1952 = vadd.f32 %v1897, %v1951
  %v1953 = vpop.f32.mrb[0].mxu0
  %v1954 = vpop.f32.mrb[0].mxu0
  %v1955 = vadd.f32 %v1897, %v1954
  %v1956 = vpop.f32.mrb[0].mxu0
  %1957 = vmatprep.mubr.bf16.mxu0 0
  %1958 = vmatmul.mubr.bf16.gmra.mrb[0].mxu0 %v1915
  %v1959 = vpop.f32.mrb[0].mxu0
  %v1960 = vadd.f32 %v1897, %v1959
  %v1961 = vpop.f32.mrb[0].mxu0
  %v1962 = vpop.f32.mrb[0].mxu0
  %v1963 = vadd.f32 %v1897, %v1962
  %v1964 = vpop.f32.mrb[0].mxu0
  %1965 = vdwg.mxu0
  %v1966 = vadd.f32 %v51, %v1952
  %v1967 = vadd.f32 %v52, %v1955
  %v1968 = vadd.f32 %v53, %v1960
  %v1969 = vadd.f32 %v54, %v1963
  %v1970 = vld [vmem:[%s7] sm:$0x1]
  %v1971 = vld [vmem:[%s8] sm:$0x1]
  %v1972 = vsel %vm57, %v1966, 0.0
  %1973 = vadd.xlane.f32.xlu0 %v1972
  %v1974 = vpop.xlane.xlu0 %1973
  %v1975 = vsel %vm57, %v1967, 0.0
  %1976 = vadd.xlane.f32.xlu0 %v1975
  %v1977 = vpop.xlane.xlu0 %1976
  %v1978 = vsel %vm57, %v1968, 0.0
  %1979 = vadd.xlane.f32.xlu0 %v1978
  %v1980 = vpop.xlane.xlu0 %1979
  %v1981 = vsel %vm57, %v1969, 0.0
  %1982 = vadd.xlane.f32.xlu0 %v1981
  %v1983 = vpop.xlane.xlu0 %1982
  %v1984 = vmul.f32 %v1974, %v70
  %v1985 = vmul.f32 %v1977, %v70
  %v1986 = vmul.f32 %v1980, %v70
  %v1987 = vmul.f32 %v1983, %v70
  %v1988 = vsub.f32 %v1966, %v1984
  %v1989 = vsub.f32 %v1967, %v1985
  %v1990 = vsub.f32 %v1968, %v1986
  %v1991 = vsub.f32 %v1969, %v1987
  %v1992 = vmul.f32 %v1988, %v1988
  %v1993 = vmul.f32 %v1989, %v1989
  %v1994 = vmul.f32 %v1990, %v1990
  %v1995 = vmul.f32 %v1991, %v1991
  %v1996 = vsel %vm57, %v1992, 0.0
  %1997 = vadd.xlane.f32.xlu0 %v1996
  %v1998 = vpop.xlane.xlu0 %1997
  %v1999 = vsel %vm57, %v1993, 0.0
  %2000 = vadd.xlane.f32.xlu0 %v1999
  %v2001 = vpop.xlane.xlu0 %2000
  %v2002 = vsel %vm57, %v1994, 0.0
  %2003 = vadd.xlane.f32.xlu0 %v2002
  %v2004 = vpop.xlane.xlu0 %2003
  %v2005 = vsel %vm57, %v1995, 0.0
  %2006 = vadd.xlane.f32.xlu0 %v2005
  %v2007 = vpop.xlane.xlu0 %2006
  %v2008 = vmul.f32 %v1998, %v70
  %v2009 = vmul.f32 %v2001, %v70
  %v2010 = vmul.f32 %v2004, %v70
  %v2011 = vmul.f32 %v2007, %v70
  %v2012 = vadd.f32 %v2008, 1e-06
  %v2013 = vadd.f32 %v2009, 1e-06
  %v2014 = vadd.f32 %v2010, 1e-06
  %v2015 = vadd.f32 %v2011, 1e-06
  %v2016 = vrsqrt.pop %v2012
  %v2017 = vrsqrt.pop %v2013
  %v2018 = vrsqrt.pop %v2014
  %v2019 = vrsqrt.pop %v2015
  %v2020 = vmul.f32 %v1988, %v2016
  %v2021 = vmul.f32 %v1989, %v2017
  %v2022 = vmul.f32 %v1990, %v2018
  %v2023 = vmul.f32 %v1991, %v2019
  %v2025 = vlaneseq
  %v2026 = vshrl.u32 %v2025, 7
  %v2027 = vsub.s32 0, %v2026
  %v2028 = vrot.slane %v1970, %v2027
  %v2030 = vmul.f32 %v2020, %v2028
  %v2031 = vmul.f32 %v2021, %v2028
  %v2032 = vmul.f32 %v2022, %v2028
  %v2033 = vmul.f32 %v2023, %v2028
  %v2035 = vlaneseq
  %v2036 = vshrl.u32 %v2035, 7
  %v2037 = vsub.s32 0, %v2036
  %v2038 = vrot.slane %v1971, %v2037
  %v2040 = vadd.f32 %v2030, %v2038
  %v2041 = vadd.f32 %v2031, %v2038
  %v2042 = vadd.f32 %v2032, %v2038
  %v2043 = vadd.f32 %v2033, %v2038
  %v2044 = vpack.c.bf16 %v2041, %v2040
  %v2045 = vpack.c.bf16 %v2043, %v2042
  %v2046 = vld [vmem:[%s9] sm:$0xf]
  %v2047 = vld [vmem:[%s9 + $0x4] sm:$0xf]
  %v2048 = vld [vmem:[%s9 + $0x8] sm:$0xf]
  %v2049 = vld [vmem:[%s9 + $0xc] sm:$0xf]
  %v2050 = vld [vmem:[%s10] sm:$0x1]
  %v2052 = vlaneseq
  %v2053 = vshrl.u32 %v2052, 7
  %v2054 = vsub.s32 0, %v2053
  %v2055 = vrot.slane %v2050, %v2054
  %v2061 = vunpack.c.l.b16 %v2046
  %v2062 = vunpack.c.l.b16 %v2047
  %v2063 = vunpack.c.l.b16 %v2048
  %v2064 = vunpack.c.l.b16 %v2049
  %v2065 = vpack.c.b16 %v2062, %v2061
  %v2066 = vpack.c.b16 %v2064, %v2063
  %v2070 = vsel %vm57, %v2044, 0
  %v2073 = vsel %vm57, %v2045, 0
  %2075 = vmatprep.subr.bf16.mxu0 0
  %2076 = vmatpush1.bf16.msra.mxu0 %v2065
  %2077 = vmatprep.subr.bf16.mxu0 0
  %2078 = vmatpush1.bf16.msra.mxu0 %v2066
  %2079 = vmatprep.subr.bf16.mxu0 0
  %2080 = vmatpush1.bf16.msra.mxu0 0
  %2081 = vmatprep.subr.bf16.mxu0 0
  %2082 = vmatpush1.bf16.msra.mxu0 0
  %2083 = vmatprep.subr.bf16.mxu0 0
  %2084 = vmatpush1.bf16.msra.mxu0 0
  %2085 = vmatprep.subr.bf16.mxu0 0
  %2086 = vmatpush1.bf16.msra.mxu0 0
  %2087 = vmatprep.subr.bf16.mxu0 0
  %2088 = vmatpush1.bf16.msra.mxu0 0
  %2089 = vmatprep.subr.bf16.mxu0 0
  %2090 = vmatpush1.bf16.msra.mxu0 0
  %2091 = vmatprep.subr.bf16.mxu0 0
  %2092 = vmatpush1.bf16.msra.mxu0 0
  %2093 = vmatprep.subr.bf16.mxu0 0
  %2094 = vmatpush1.bf16.msra.mxu0 0
  %2095 = vmatprep.subr.bf16.mxu0 0
  %2096 = vmatpush1.bf16.msra.mxu0 0
  %2097 = vmatprep.subr.bf16.mxu0 0
  %2098 = vmatpush1.bf16.msra.mxu0 0
  %2099 = vmatprep.subr.bf16.mxu0 0
  %2100 = vmatpush1.bf16.msra.mxu0 0
  %2101 = vmatprep.subr.bf16.mxu0 0
  %2102 = vmatpush1.bf16.msra.mxu0 0
  %2103 = vmatprep.subr.bf16.mxu0 0
  %2104 = vmatpush1.bf16.msra.mxu0 0
  %2105 = vmatprep.subr.bf16.mxu0 0
  %2106 = vmatpush1.bf16.msra.mxu0 0
  %2107 = vmatprep.mubr.bf16.mxu0 0
  %2108 = vmatmul.mubr.bf16.gmra.mrb[0].mxu0 %v2070
  %v2109 = vpop.f32.mrb[0].mxu0
  %v2110 = vadd.f32 %v2055, %v2109
  %v2111 = vpop.f32.mrb[0].mxu0
  %v2112 = vpop.f32.mrb[0].mxu0
  %v2113 = vadd.f32 %v2055, %v2112
  %v2114 = vpop.f32.mrb[0].mxu0
  %2115 = vmatprep.mubr.bf16.mxu0 0
  %2116 = vmatmul.mubr.bf16.gmra.mrb[0].mxu0 %v2073
  %v2117 = vpop.f32.mrb[0].mxu0
  %v2118 = vadd.f32 %v2055, %v2117
  %v2119 = vpop.f32.mrb[0].mxu0
  %v2120 = vpop.f32.mrb[0].mxu0
  %v2121 = vadd.f32 %v2055, %v2120
  %v2122 = vpop.f32.mrb[0].mxu0
  %2123 = vdwg.mxu0
  %v2124 = vmul.f32 %v2110, %v2110
  %v2125 = vmul.f32 %v2113, %v2113
  %v2126 = vmul.f32 %v2118, %v2118
  %v2127 = vmul.f32 %v2121, %v2121
  %v2128 = vmul.f32 %v2110, %v2124
  %v2129 = vmul.f32 %v2113, %v2125
  %v2130 = vmul.f32 %v2118, %v2126
  %v2131 = vmul.f32 %v2121, %v2127
  %v2132 = vmul.f32 %v2128, 0.044715
  %v2133 = vmul.f32 %v2129, 0.044715
  %v2134 = vmul.f32 %v2130, 0.044715
  %v2135 = vmul.f32 %v2131, 0.044715
  %v2136 = vadd.f32 %v2110, %v2132
  %v2137 = vadd.f32 %v2113, %v2133
  %v2138 = vadd.f32 %v2118, %v2134
  %v2139 = vadd.f32 %v2121, %v2135
  %v2140 = vmul.f32 %v2136, 0.7978846
  %v2141 = vmul.f32 %v2137, 0.7978846
  %v2142 = vmul.f32 %v2138, 0.7978846
  %v2143 = vmul.f32 %v2139, 0.7978846
  %v2144 = vtanh.pop %v2140
  %v2145 = vtanh.pop %v2141
  %v2146 = vtanh.pop %v2142
  %v2147 = vtanh.pop %v2143
  %v2148 = vadd.f32 %v2144, 1.0
  %v2149 = vadd.f32 %v2145, 1.0
  %v2150 = vadd.f32 %v2146, 1.0
  %v2151 = vadd.f32 %v2147, 1.0
  %v2152 = vmul.f32 %v2148, 0.5
  %v2153 = vmul.f32 %v2149, 0.5
  %v2154 = vmul.f32 %v2150, 0.5
  %v2155 = vmul.f32 %v2151, 0.5
  %v2156 = vmul.f32 %v2110, %v2152
  %v2157 = vmul.f32 %v2113, %v2153
  %v2158 = vmul.f32 %v2118, %v2154
  %v2159 = vmul.f32 %v2121, %v2155
  %v2160 = vpack.c.bf16 %v2157, %v2156
  %v2161 = vpack.c.bf16 %v2159, %v2158
  %v2162 = vld [vmem:[%s11] sm:$0xf]
  %v2163 = vld [vmem:[%s11 + $0x4] sm:$0xf]
  %v2164 = vld [vmem:[%s11 + $0x8] sm:$0xf]
  %v2165 = vld [vmem:[%s11 + $0xc] sm:$0xf]
  %v2166 = vld [vmem:[%s11 + $0x10] sm:$0xf]
  %v2167 = vld [vmem:[%s11 + $0x14] sm:$0xf]
  %v2168 = vld [vmem:[%s11 + $0x18] sm:$0xf]
  %v2169 = vld [vmem:[%s11 + $0x1c] sm:$0xf]
  %v2170 = vld [vmem:[%s12] sm:$0x1]
  %v2172 = vlaneseq
  %v2173 = vshrl.u32 %v2172, 7
  %v2174 = vsub.s32 0, %v2173
  %v2175 = vrot.slane %v2170, %v2174
  %v2185 = vunpack.c.l.b16 %v2162
  %v2186 = vunpack.c.l.b16 %v2163
  %v2187 = vunpack.c.l.b16 %v2164
  %v2188 = vunpack.c.l.b16 %v2165
  %v2189 = vunpack.c.l.b16 %v2166
  %v2190 = vunpack.c.l.b16 %v2167
  %v2191 = vunpack.c.l.b16 %v2168
  %v2192 = vunpack.c.l.b16 %v2169
  %v2193 = vpack.c.b16 %v2186, %v2185
  %v2194 = vpack.c.b16 %v2188, %v2187
  %v2195 = vpack.c.b16 %v2190, %v2189
  %v2196 = vpack.c.b16 %v2192, %v2191
  %vm2201 = vcmask 523264
  %v2203 = vsel %vm2201, %v2160, 0
  %v2206 = vsel %vm2201, %v2161, 0
  %2208 = vmatprep.subr.bf16.mxu0 0
  %2209 = vmatpush1.bf16.msra.mxu0 %v2193
  %2210 = vmatprep.subr.bf16.mxu0 0
  %2211 = vmatpush1.bf16.msra.mxu0 %v2194
  %2212 = vmatprep.subr.bf16.mxu0 0
  %2213 = vmatpush1.bf16.msra.mxu0 %v2195
  %2214 = vmatprep.subr.bf16.mxu0 0
  %2215 = vmatpush1.bf16.msra.mxu0 %v2196
  %2216 = vmatprep.subr.bf16.mxu0 0
  %2217 = vmatpush1.bf16.msra.mxu0 0
  %2218 = vmatprep.subr.bf16.mxu0 0
  %2219 = vmatpush1.bf16.msra.mxu0 0
  %2220 = vmatprep.subr.bf16.mxu0 0
  %2221 = vmatpush1.bf16.msra.mxu0 0
  %2222 = vmatprep.subr.bf16.mxu0 0
  %2223 = vmatpush1.bf16.msra.mxu0 0
  %2224 = vmatprep.subr.bf16.mxu0 0
  %2225 = vmatpush1.bf16.msra.mxu0 0
  %2226 = vmatprep.subr.bf16.mxu0 0
  %2227 = vmatpush1.bf16.msra.mxu0 0
  %2228 = vmatprep.subr.bf16.mxu0 0
  %2229 = vmatpush1.bf16.msra.mxu0 0
  %2230 = vmatprep.subr.bf16.mxu0 0
  %2231 = vmatpush1.bf16.msra.mxu0 0
  %2232 = vmatprep.subr.bf16.mxu0 0
  %2233 = vmatpush1.bf16.msra.mxu0 0
  %2234 = vmatprep.subr.bf16.mxu0 0
  %2235 = vmatpush1.bf16.msra.mxu0 0
  %2236 = vmatprep.subr.bf16.mxu0 0
  %2237 = vmatpush1.bf16.msra.mxu0 0
  %2238 = vmatprep.subr.bf16.mxu0 0
  %2239 = vmatpush1.bf16.msra.mxu0 0
  %2240 = vmatprep.mubr.bf16.mxu0 0
  %2241 = vmatmul.mubr.bf16.gmra.mrb[0].mxu0 %v2203
  %v2242 = vpop.f32.mrb[0].mxu0
  %v2243 = vadd.f32 %v2175, %v2242
  %v2244 = vpop.f32.mrb[0].mxu0
  %v2245 = vpop.f32.mrb[0].mxu0
  %v2246 = vadd.f32 %v2175, %v2245
  %v2247 = vpop.f32.mrb[0].mxu0
  %2248 = vmatprep.mubr.bf16.mxu0 0
  %2249 = vmatmul.mubr.bf16.gmra.mrb[0].mxu0 %v2206
  %v2250 = vpop.f32.mrb[0].mxu0
  %v2251 = vadd.f32 %v2175, %v2250
  %v2252 = vpop.f32.mrb[0].mxu0
  %v2253 = vpop.f32.mrb[0].mxu0
  %v2254 = vadd.f32 %v2175, %v2253
  %v2255 = vpop.f32.mrb[0].mxu0
  %2256 = vdwg.mxu0
  %v2257 = vadd.f32 %v1966, %v2243
  %v2258 = vadd.f32 %v1967, %v2246
  %v2259 = vadd.f32 %v1968, %v2251
  %v2260 = vadd.f32 %v1969, %v2254
  %2261 = vst.msk [vmem:[%s15] sm:$0xff] %vm57, %v2257
  %2262 = vst.msk [vmem:[%s15 + $0x8] sm:$0xff] %vm57, %v2258
  %2263 = vst.msk [vmem:[%s15 + $0x10] sm:$0xff] %vm57, %v2259
  %2264 = vst.msk [vmem:[%s15 + $0x18] sm:$0xff] %vm57, %v2260
  // Predicated region
  $region62: #{vision_transformer_forward.14} parent=0 // pred_check
    _
  $region63: #{vision_transformer_forward.14} parent=0 // pred_check_branch
    %2266 = sbr.rel (0) target = $region65
  $region64: #{vision_transformer_forward.14} parent=0 // pred_region
    _
  $region65: #{vision_transformer_forward.14} parent=0 // pred_fallthru
    _
  // Predicated region
  $region66: #{vision_transformer_forward.14} parent=0 // pred_check
    _
  $region67: #{vision_transformer_forward.14} parent=0 // pred_check_branch
    %2268 = sbr.rel (0) target = $region69
  $region68: #{vision_transformer_forward.14} parent=0 // pred_region
    _
  $region69: #{vision_transformer_forward.14} parent=0 // pred_fallthru
    _

// kernel: vision_transformer_forward.15
$region0: #{vision_transformer_forward.15}
  #allocation0 [shape = 'u32[]', space=smem, size = 0x4, offset = 0x4, fixed_abs, tag = 'smem constant byte address 0x4 - core index']
  #allocation1 [shape = 'u32[144,128]{1,0:T(1,128)}', space=vmem, size = 0x12000, scoped, tag = 'internal scratch']
  %s0 = inlined_call_operand.vmem [shape: f32[32,32], index: 0, kind: input, shape index: {}]
  %s1 = inlined_call_operand.vmem [shape: f32[1,32], index: 1, kind: input, shape index: {}]
  %s2 = inlined_call_operand.vmem [shape: f32[1,32], index: 2, kind: input, shape index: {}]
  %s3 = inlined_call_operand.vmem [shape: bf16[32,96], index: 3, kind: input, shape index: {}]
  %s4 = inlined_call_operand.vmem [shape: f32[1,96], index: 4, kind: input, shape index: {}]
  %s5 = inlined_call_operand.vmem [shape: bf16[32,32], index: 5, kind: input, shape index: {}]
  %s6 = inlined_call_operand.vmem [shape: f32[1,32], index: 6, kind: input, shape index: {}]
  %s7 = inlined_call_operand.vmem [shape: f32[1,32], index: 7, kind: input, shape index: {}]
  %s8 = inlined_call_operand.vmem [shape: f32[1,32], index: 8, kind: input, shape index: {}]
  %s9 = inlined_call_operand.vmem [shape: bf16[32,64], index: 9, kind: input, shape index: {}]
  %s10 = inlined_call_operand.vmem [shape: f32[1,64], index: 10, kind: input, shape index: {}]
  %s11 = inlined_call_operand.vmem [shape: bf16[64,32], index: 11, kind: input, shape index: {}]
  %s12 = inlined_call_operand.vmem [shape: f32[1,32], index: 12, kind: input, shape index: {}]
  %s13 = inlined_call_operand.vmem [shape: f32[1,32], index: 13, kind: input, shape index: {}]
  %s14 = inlined_call_operand.vmem [shape: f32[1,32], index: 14, kind: input, shape index: {}]
  %s15 = inlined_call_operand.vmem [shape: f32[32,32], index: 15, kind: output, shape index: {}]
  %s16 = sld [smem:[#allocation0]]
  $region70: #{vision_transformer_forward.15} parent=0
    _
  %s18 = ssub.s32 1, %s16
  %s19 = scalar_select 0, %s18, %s16
  // Predicated region
  $region2: #{vision_transformer_forward.15} parent=0 // pred_check
    _
  $region3: #{vision_transformer_forward.15} parent=0 // pred_check_branch
    %21 = sbr.rel (0) target = $region5
  $region4: #{vision_transformer_forward.15} parent=0 // pred_region
    _
  $region5: #{vision_transformer_forward.15} parent=0 // pred_fallthru
    _
  // Predicated region
  $region6: #{vision_transformer_forward.15} parent=0 // pred_check
    _
  $region7: #{vision_transformer_forward.15} parent=0 // pred_check_branch
    %23 = sbr.rel (0) target = $region9
  $region8: #{vision_transformer_forward.15} parent=0 // pred_region
    _
  $region9: #{vision_transformer_forward.15} parent=0 // pred_fallthru
    _
  // Predicated region
  $region10: #{vision_transformer_forward.15} parent=0 // pred_check
    _
  $region11: #{vision_transformer_forward.15} parent=0 // pred_check_branch
    %25 = sbr.rel (0) target = $region13
  $region12: #{vision_transformer_forward.15} parent=0 // pred_region
    _
  $region13: #{vision_transformer_forward.15} parent=0 // pred_fallthru
    _
  // Predicated region
  $region14: #{vision_transformer_forward.15} parent=0 // pred_check
    _
  $region15: #{vision_transformer_forward.15} parent=0 // pred_check_branch
    %27 = sbr.rel (0) target = $region17
  $region16: #{vision_transformer_forward.15} parent=0 // pred_region
    _
  $region17: #{vision_transformer_forward.15} parent=0 // pred_fallthru
    _
  // Predicated region
  $region18: #{vision_transformer_forward.15} parent=0 // pred_check
    _
  $region19: #{vision_transformer_forward.15} parent=0 // pred_check_branch
    %29 = sbr.rel (0) target = $region21
  $region20: #{vision_transformer_forward.15} parent=0 // pred_region
    _
  $region21: #{vision_transformer_forward.15} parent=0 // pred_fallthru
    _
  // Predicated region
  $region22: #{vision_transformer_forward.15} parent=0 // pred_check
    _
  $region23: #{vision_transformer_forward.15} parent=0 // pred_check_branch
    %31 = sbr.rel (0) target = $region25
  $region24: #{vision_transformer_forward.15} parent=0 // pred_region
    _
  $region25: #{vision_transformer_forward.15} parent=0 // pred_fallthru
    _
  // Predicated region
  $region26: #{vision_transformer_forward.15} parent=0 // pred_check
    _
  $region27: #{vision_transformer_forward.15} parent=0 // pred_check_branch
    %33 = sbr.rel (0) target = $region29
  $region28: #{vision_transformer_forward.15} parent=0 // pred_region
    _
  $region29: #{vision_transformer_forward.15} parent=0 // pred_fallthru
    _
  // Predicated region
  $region30: #{vision_transformer_forward.15} parent=0 // pred_check
    _
  $region31: #{vision_transformer_forward.15} parent=0 // pred_check_branch
    %35 = sbr.rel (0) target = $region33
  $region32: #{vision_transformer_forward.15} parent=0 // pred_region
    _
  $region33: #{vision_transformer_forward.15} parent=0 // pred_fallthru
    _
  // Predicated region
  $region34: #{vision_transformer_forward.15} parent=0 // pred_check
    _
  $region35: #{vision_transformer_forward.15} parent=0 // pred_check_branch
    %37 = sbr.rel (0) target = $region37
  $region36: #{vision_transformer_forward.15} parent=0 // pred_region
    _
  $region37: #{vision_transformer_forward.15} parent=0 // pred_fallthru
    _
  // Predicated region
  $region38: #{vision_transformer_forward.15} parent=0 // pred_check
    _
  $region39: #{vision_transformer_forward.15} parent=0 // pred_check_branch
    %39 = sbr.rel (0) target = $region41
  $region40: #{vision_transformer_forward.15} parent=0 // pred_region
    _
  $region41: #{vision_transformer_forward.15} parent=0 // pred_fallthru
    _
  // Predicated region
  $region42: #{vision_transformer_forward.15} parent=0 // pred_check
    _
  $region43: #{vision_transformer_forward.15} parent=0 // pred_check_branch
    %41 = sbr.rel (0) target = $region45
  $region44: #{vision_transformer_forward.15} parent=0 // pred_region
    _
  $region45: #{vision_transformer_forward.15} parent=0 // pred_fallthru
    _
  // Predicated region
  $region46: #{vision_transformer_forward.15} parent=0 // pred_check
    _
  $region47: #{vision_transformer_forward.15} parent=0 // pred_check_branch
    %43 = sbr.rel (0) target = $region49
  $region48: #{vision_transformer_forward.15} parent=0 // pred_region
    _
  $region49: #{vision_transformer_forward.15} parent=0 // pred_fallthru
    _
  // Predicated region
  $region50: #{vision_transformer_forward.15} parent=0 // pred_check
    _
  $region51: #{vision_transformer_forward.15} parent=0 // pred_check_branch
    %45 = sbr.rel (0) target = $region53
  $region52: #{vision_transformer_forward.15} parent=0 // pred_region
    _
  $region53: #{vision_transformer_forward.15} parent=0 // pred_fallthru
    _
  // Predicated region
  $region54: #{vision_transformer_forward.15} parent=0 // pred_check
    _
  $region55: #{vision_transformer_forward.15} parent=0 // pred_check_branch
    %47 = sbr.rel (0) target = $region57
  $region56: #{vision_transformer_forward.15} parent=0 // pred_region
    _
  $region57: #{vision_transformer_forward.15} parent=0 // pred_fallthru
    _
  // Predicated region
  $region58: #{vision_transformer_forward.15} parent=0 // pred_check
    _
  $region59: #{vision_transformer_forward.15} parent=0 // pred_check_branch
    %49 = sbr.rel (0) target = $region61
  $region60: #{vision_transformer_forward.15} parent=0 // pred_region
    _
  $region61: #{vision_transformer_forward.15} parent=0 // pred_fallthru
    _
  %v51 = vld [vmem:[%s0] sm:$0xff]
  %v52 = vld [vmem:[%s0 + $0x8] sm:$0xff]
  %v53 = vld [vmem:[%s0 + $0x10] sm:$0xff]
  %v54 = vld [vmem:[%s0 + $0x18] sm:$0xff]
  %v55 = vld [vmem:[%s1] sm:$0x1]
  %v56 = vld [vmem:[%s2] sm:$0x1]
  %vm57 = vcmask 261120
  %v58 = vsel %vm57, %v51, 0.0
  %59 = vadd.xlane.f32.xlu0 %v58
  %v60 = vpop.xlane.xlu0 %59
  %v61 = vsel %vm57, %v52, 0.0
  %62 = vadd.xlane.f32.xlu0 %v61
  %v63 = vpop.xlane.xlu0 %62
  %v64 = vsel %vm57, %v53, 0.0
  %65 = vadd.xlane.f32.xlu0 %v64
  %v66 = vpop.xlane.xlu0 %65
  %v67 = vsel %vm57, %v54, 0.0
  %68 = vadd.xlane.f32.xlu0 %v67
  %v69 = vpop.xlane.xlu0 %68
  %v70 = vrcp.pop 32.0
  %v71 = vmul.f32 %v60, %v70
  %v72 = vmul.f32 %v63, %v70
  %v73 = vmul.f32 %v66, %v70
  %v74 = vmul.f32 %v69, %v70
  %v75 = vsub.f32 %v51, %v71
  %v76 = vsub.f32 %v52, %v72
  %v77 = vsub.f32 %v53, %v73
  %v78 = vsub.f32 %v54, %v74
  %v79 = vmul.f32 %v75, %v75
  %v80 = vmul.f32 %v76, %v76
  %v81 = vmul.f32 %v77, %v77
  %v82 = vmul.f32 %v78, %v78
  %v83 = vsel %vm57, %v79, 0.0
  %84 = vadd.xlane.f32.xlu0 %v83
  %v85 = vpop.xlane.xlu0 %84
  %v86 = vsel %vm57, %v80, 0.0
  %87 = vadd.xlane.f32.xlu0 %v86
  %v88 = vpop.xlane.xlu0 %87
  %v89 = vsel %vm57, %v81, 0.0
  %90 = vadd.xlane.f32.xlu0 %v89
  %v91 = vpop.xlane.xlu0 %90
  %v92 = vsel %vm57, %v82, 0.0
  %93 = vadd.xlane.f32.xlu0 %v92
  %v94 = vpop.xlane.xlu0 %93
  %v95 = vmul.f32 %v85, %v70
  %v96 = vmul.f32 %v88, %v70
  %v97 = vmul.f32 %v91, %v70
  %v98 = vmul.f32 %v94, %v70
  %v99 = vadd.f32 %v95, 1e-06
  %v100 = vadd.f32 %v96, 1e-06
  %v101 = vadd.f32 %v97, 1e-06
  %v102 = vadd.f32 %v98, 1e-06
  %v103 = vrsqrt.pop %v99
  %v104 = vrsqrt.pop %v100
  %v105 = vrsqrt.pop %v101
  %v106 = vrsqrt.pop %v102
  %v107 = vmul.f32 %v75, %v103
  %v108 = vmul.f32 %v76, %v104
  %v109 = vmul.f32 %v77, %v105
  %v110 = vmul.f32 %v78, %v106
  %v112 = vlaneseq
  %v113 = vshrl.u32 %v112, 7
  %v114 = vsub.s32 0, %v113
  %v115 = vrot.slane %v55, %v114
  %v117 = vmul.f32 %v107, %v115
  %v118 = vmul.f32 %v108, %v115
  %v119 = vmul.f32 %v109, %v115
  %v120 = vmul.f32 %v110, %v115
  %v122 = vlaneseq
  %v123 = vshrl.u32 %v122, 7
  %v124 = vsub.s32 0, %v123
  %v125 = vrot.slane %v56, %v124
  %v127 = vadd.f32 %v117, %v125
  %v128 = vadd.f32 %v118, %v125
  %v129 = vadd.f32 %v119, %v125
  %v130 = vadd.f32 %v120, %v125
  %v131 = vpack.c.bf16 %v128, %v127
  %v132 = vpack.c.bf16 %v130, %v129
  %v133 = vld [vmem:[%s3] sm:$0xf]
  %v134 = vld [vmem:[%s3 + $0x4] sm:$0xf]
  %v135 = vld [vmem:[%s3 + $0x8] sm:$0xf]
  %v136 = vld [vmem:[%s3 + $0xc] sm:$0xf]
  %v137 = vld [vmem:[%s4] sm:$0x1]
  %v139 = vlaneseq
  %v140 = vshrl.u32 %v139, 7
  %v141 = vsub.s32 0, %v140
  %v142 = vrot.slane %v137, %v141
  %v148 = vunpack.c.l.b16 %v133
  %v149 = vunpack.c.l.b16 %v134
  %v150 = vunpack.c.l.b16 %v135
  %v151 = vunpack.c.l.b16 %v136
  %v152 = vpack.c.b16 %v149, %v148
  %v153 = vpack.c.b16 %v151, %v150
  %v157 = vsel %vm57, %v131, 0
  %v160 = vsel %vm57, %v132, 0
  %162 = vmatprep.subr.bf16.mxu0 0
  %163 = vmatpush1.bf16.msra.mxu0 %v152
  %164 = vmatprep.subr.bf16.mxu0 0
  %165 = vmatpush1.bf16.msra.mxu0 %v153
  %166 = vmatprep.subr.bf16.mxu0 0
  %167 = vmatpush1.bf16.msra.mxu0 0
  %168 = vmatprep.subr.bf16.mxu0 0
  %169 = vmatpush1.bf16.msra.mxu0 0
  %170 = vmatprep.subr.bf16.mxu0 0
  %171 = vmatpush1.bf16.msra.mxu0 0
  %172 = vmatprep.subr.bf16.mxu0 0
  %173 = vmatpush1.bf16.msra.mxu0 0
  %174 = vmatprep.subr.bf16.mxu0 0
  %175 = vmatpush1.bf16.msra.mxu0 0
  %176 = vmatprep.subr.bf16.mxu0 0
  %177 = vmatpush1.bf16.msra.mxu0 0
  %178 = vmatprep.subr.bf16.mxu0 0
  %179 = vmatpush1.bf16.msra.mxu0 0
  %180 = vmatprep.subr.bf16.mxu0 0
  %181 = vmatpush1.bf16.msra.mxu0 0
  %182 = vmatprep.subr.bf16.mxu0 0
  %183 = vmatpush1.bf16.msra.mxu0 0
  %184 = vmatprep.subr.bf16.mxu0 0
  %185 = vmatpush1.bf16.msra.mxu0 0
  %186 = vmatprep.subr.bf16.mxu0 0
  %187 = vmatpush1.bf16.msra.mxu0 0
  %188 = vmatprep.subr.bf16.mxu0 0
  %189 = vmatpush1.bf16.msra.mxu0 0
  %190 = vmatprep.subr.bf16.mxu0 0
  %191 = vmatpush1.bf16.msra.mxu0 0
  %192 = vmatprep.subr.bf16.mxu0 0
  %193 = vmatpush1.bf16.msra.mxu0 0
  %194 = vmatprep.mubr.bf16.mxu0 0
  %195 = vmatmul.mubr.bf16.gmra.mrb[0].mxu0 %v157
  %v196 = vpop.f32.mrb[0].mxu0
  %v197 = vadd.f32 %v142, %v196
  %v198 = vpop.f32.mrb[0].mxu0
  %v199 = vpop.f32.mrb[0].mxu0
  %v200 = vadd.f32 %v142, %v199
  %v201 = vpop.f32.mrb[0].mxu0
  %202 = vmatprep.mubr.bf16.mxu0 0
  %203 = vmatmul.mubr.bf16.gmra.mrb[0].mxu0 %v160
  %v204 = vpop.f32.mrb[0].mxu0
  %v205 = vadd.f32 %v142, %v204
  %v206 = vpop.f32.mrb[0].mxu0
  %v207 = vpop.f32.mrb[0].mxu0
  %v208 = vadd.f32 %v142, %v207
  %v209 = vpop.f32.mrb[0].mxu0
  %210 = vdwg.mxu0
  %213 = vrot.lane.b32.xlu0 %v197, 96
  %v214 = vpop.permute.xlu0 %213
  %215 = vrot.lane.b32.xlu0 %v200, 96
  %v216 = vpop.permute.xlu0 %215
  %vm217 = vcmask 64512
  %v218 = vsel %vm217, %v197, 0
  %v220 = vsel %vm217, %v200, 0
  %v222 = vsel %vm217, %v214, 0
  %v224 = vsel %vm217, %v216, 0
  %226 = vmatprep.subr.mxu0 0.0
  %227 = vmatpush1.xpose.msra.mxu0 %v222
  %228 = vmatprep.subr.mxu0 0.0
  %229 = vmatpush1.xpose.msra.mxu0 %v224
  %230 = vmatprep.subr.mxu0 0.0
  %231 = vmatpush1.xpose.msra.mxu0 0.0
  %232 = vmatprep.subr.mxu0 0.0
  %233 = vmatpush1.xpose.msra.mxu0 0.0
  %234 = vmatprep.subr.mxu0 0.0
  %235 = vmatpush1.xpose.msra.mxu0 0.0
  %236 = vmatprep.subr.mxu0 0.0
  %237 = vmatpush1.xpose.msra.mxu0 0.0
  %238 = vmatprep.subr.mxu0 0.0
  %239 = vmatpush1.xpose.msra.mxu0 0.0
  %240 = vmatprep.subr.mxu0 0.0
  %241 = vmatpush1.xpose.msra.mxu0 0.0
  %242 = vmatprep.subr.mxu0 0.0
  %243 = vmatpush1.xpose.msra.mxu0 0.0
  %244 = vmatprep.subr.mxu0 0.0
  %245 = vmatpush1.xpose.msra.mxu0 0.0
  %246 = vmatprep.subr.mxu0 0.0
  %247 = vmatpush1.xpose.msra.mxu0 0.0
  %248 = vmatprep.subr.mxu0 0.0
  %249 = vmatpush1.xpose.msra.mxu0 0.0
  %250 = vmatprep.subr.mxu0 0.0
  %251 = vmatpush1.xpose.msra.mxu0 0.0
  %252 = vmatprep.subr.mxu0 0.0
  %253 = vmatpush1.xpose.msra.mxu0 0.0
  %254 = vmatprep.subr.mxu0 0.0
  %255 = vmatpush1.xpose.msra.mxu0 0.0
  %256 = vmatprep.subr.mxu0 0.0
  %257 = vmatpush1.xpose.msra.mxu0 0.0
  %258 = vmatprep.subr.mxu0 0.0
  %259 = vmatpush1.xpose.msra.mxu0 0.0
  %260 = vmatprep.subr.mxu0 0.0
  %261 = vmatpush1.xpose.msra.mxu0 0.0
  %262 = vmatprep.subr.mxu0 0.0
  %263 = vmatpush1.xpose.msra.mxu0 0.0
  %264 = vmatprep.subr.mxu0 0.0
  %265 = vmatpush1.xpose.msra.mxu0 0.0
  %266 = vmatprep.subr.mxu0 0.0
  %267 = vmatpush1.xpose.msra.mxu0 0.0
  %268 = vmatprep.subr.mxu0 0.0
  %269 = vmatpush1.xpose.msra.mxu0 0.0
  %270 = vmatprep.subr.mxu0 0.0
  %271 = vmatpush1.xpose.msra.mxu0 0.0
  %272 = vmatprep.subr.mxu0 0.0
  %273 = vmatpush1.xpose.msra.mxu0 0.0
  %274 = vmatprep.subr.mxu0 0.0
  %275 = vmatpush1.xpose.msra.mxu0 0.0
  %276 = vmatprep.subr.mxu0 0.0
  %277 = vmatpush1.xpose.msra.mxu0 0.0
  %278 = vmatprep.subr.mxu0 0.0
  %279 = vmatpush1.xpose.msra.mxu0 0.0
  %280 = vmatprep.subr.mxu0 0.0
  %281 = vmatpush1.xpose.msra.mxu0 0.0
  %282 = vmatprep.subr.mxu0 0.0
  %283 = vmatpush1.xpose.msra.mxu0 0.0
  %284 = vmatprep.subr.mxu0 0.0
  %285 = vmatpush1.xpose.msra.mxu0 0.0
  %286 = vmatprep.subr.mxu0 0.0
  %287 = vmatpush1.xpose.msra.mxu0 0.0
  %288 = vmatprep.subr.mxu0 0.0
  %289 = vmatpush1.xpose.msra.mxu0 0.0
  %290 = vmatprep.mubr.f32.mxu0 0.0
  %291 = vmatmul.mubr.f32.gmra.mrb[0].mxu0 %v218
  %v292 = vpop.f32.mrb[0].mxu0
  %v293 = vadd.f32 0.0, %v292
  %v294 = vpop.f32.mrb[0].mxu0
  %295 = vmatprep.mubr.f32.mxu0 0.0
  %296 = vmatmul.mubr.f32.gmra.mrb[0].mxu0 %v220
  %v297 = vpop.f32.mrb[0].mxu0
  %v298 = vadd.f32 0.0, %v297
  %v299 = vpop.f32.mrb[0].mxu0
  %300 = vdwg.mxu0
  %v301 = vmul.f32 %v293, 0.35355338
  %v302 = vmul.f32 %v298, 0.35355338
  %vm303 = vcmask 130048
  %v304 = vsel %vm303, %v301, -inf
  %305 = vmax.xlane.f32.xlu0 %v304
  %v306 = vpop.xlane.xlu0 %305
  %v307 = vsel %vm303, %v302, -inf
  %308 = vmax.xlane.f32.xlu0 %v307
  %v309 = vpop.xlane.xlu0 %308
  %v310 = vsub.f32 %v301, %v306
  %v311 = vsub.f32 %v302, %v309
  %v312 = vmul.f32 %v310, 1.442695
  %v313 = vpow.pop %v312
  %v314 = vmul.f32 %v311, 1.442695
  %v315 = vpow.pop %v314
  %v316 = vsel %vm303, %v313, 0.0
  %317 = vadd.xlane.f32.xlu0 %v316
  %v318 = vpop.xlane.xlu0 %317
  %v319 = vsel %vm303, %v315, 0.0
  %320 = vadd.xlane.f32.xlu0 %v319
  %v321 = vpop.xlane.xlu0 %320
  %v322 = vrcp.pop %v318
  %v323 = vmul.f32 %v313, %v322
  %v324 = vrcp.pop %v321
  %v325 = vmul.f32 %v315, %v324
  %326 = vrot.lane.b32.xlu0 %v197, 64
  %v327 = vpop.permute.xlu0 %326
  %328 = vrot.lane.b32.xlu0 %v200, 64
  %v329 = vpop.permute.xlu0 %328
  %v333 = vsel %vm303, %v323, 0
  %v336 = vsel %vm303, %v325, 0
  %338 = vmatprep.subr.mxu0 0.0
  %339 = vmatpush1.msra.mxu0 %v327
  %340 = vmatprep.subr.mxu0 0.0
  %341 = vmatpush1.msra.mxu0 %v329
  %342 = vmatprep.subr.mxu0 0.0
  %343 = vmatpush1.msra.mxu0 0.0
  %344 = vmatprep.subr.mxu0 0.0
  %345 = vmatpush1.msra.mxu0 0.0
  %346 = vmatprep.subr.mxu0 0.0
  %347 = vmatpush1.msra.mxu0 0.0
  %348 = vmatprep.subr.mxu0 0.0
  %349 = vmatpush1.msra.mxu0 0.0
  %350 = vmatprep.subr.mxu0 0.0
  %351 = vmatpush1.msra.mxu0 0.0
  %352 = vmatprep.subr.mxu0 0.0
  %353 = vmatpush1.msra.mxu0 0.0
  %354 = vmatprep.subr.mxu0 0.0
  %355 = vmatpush1.msra.mxu0 0.0
  %356 = vmatprep.subr.mxu0 0.0
  %357 = vmatpush1.msra.mxu0 0.0
  %358 = vmatprep.subr.mxu0 0.0
  %359 = vmatpush1.msra.mxu0 0.0
  %360 = vmatprep.subr.mxu0 0.0
  %361 = vmatpush1.msra.mxu0 0.0
  %362 = vmatprep.subr.mxu0 0.0
  %363 = vmatpush1.msra.mxu0 0.0
  %364 = vmatprep.subr.mxu0 0.0
  %365 = vmatpush1.msra.mxu0 0.0
  %366 = vmatprep.subr.mxu0 0.0
  %367 = vmatpush1.msra.mxu0 0.0
  %368 = vmatprep.subr.mxu0 0.0
  %369 = vmatpush1.msra.mxu0 0.0
  %370 = vmatprep.subr.mxu0 0.0
  %371 = vmatpush1.msra.mxu0 0.0
  %372 = vmatprep.subr.mxu0 0.0
  %373 = vmatpush1.msra.mxu0 0.0
  %374 = vmatprep.subr.mxu0 0.0
  %375 = vmatpush1.msra.mxu0 0.0
  %376 = vmatprep.subr.mxu0 0.0
  %377 = vmatpush1.msra.mxu0 0.0
  %378 = vmatprep.subr.mxu0 0.0
  %379 = vmatpush1.msra.mxu0 0.0
  %380 = vmatprep.subr.mxu0 0.0
  %381 = vmatpush1.msra.mxu0 0.0
  %382 = vmatprep.subr.mxu0 0.0
  %383 = vmatpush1.msra.mxu0 0.0
  %384 = vmatprep.subr.mxu0 0.0
  %385 = vmatpush1.msra.mxu0 0.0
  %386 = vmatprep.subr.mxu0 0.0
  %387 = vmatpush1.msra.mxu0 0.0
  %388 = vmatprep.subr.mxu0 0.0
  %389 = vmatpush1.msra.mxu0 0.0
  %390 = vmatprep.subr.mxu0 0.0
  %391 = vmatpush1.msra.mxu0 0.0
  %392 = vmatprep.subr.mxu0 0.0
  %393 = vmatpush1.msra.mxu0 0.0
  %394 = vmatprep.subr.mxu0 0.0
  %395 = vmatpush1.msra.mxu0 0.0
  %396 = vmatprep.subr.mxu0 0.0
  %397 = vmatpush1.msra.mxu0 0.0
  %398 = vmatprep.subr.mxu0 0.0
  %399 = vmatpush1.msra.mxu0 0.0
  %400 = vmatprep.subr.mxu0 0.0
  %401 = vmatpush1.msra.mxu0 0.0
  %402 = vmatprep.mubr.f32.mxu0 0.0
  %403 = vmatmul.mubr.f32.gmra.mrb[0].mxu0 %v333
  %v404 = vpop.f32.mrb[0].mxu0
  %v405 = vadd.f32 0.0, %v404
  %v406 = vpop.f32.mrb[0].mxu0
  %407 = vmatprep.mubr.f32.mxu0 0.0
  %408 = vmatmul.mubr.f32.gmra.mrb[0].mxu0 %v336
  %v409 = vpop.f32.mrb[0].mxu0
  %v410 = vadd.f32 0.0, %v409
  %v411 = vpop.f32.mrb[0].mxu0
  %412 = vdwg.mxu0
  %413 = vrot.lane.b32.xlu0 %v197, 120
  %v414 = vpop.permute.xlu0 %413
  %415 = vrot.lane.b32.xlu0 %v200, 120
  %v416 = vpop.permute.xlu0 %415
  %417 = vrot.lane.b32.xlu0 %v197, 88
  %v418 = vpop.permute.xlu0 %417
  %419 = vrot.lane.b32.xlu0 %v200, 88
  %v420 = vpop.permute.xlu0 %419
  %v421 = vsel %vm217, %v414, 0
  %v423 = vsel %vm217, %v416, 0
  %v425 = vsel %vm217, %v418, 0
  %v427 = vsel %vm217, %v420, 0
  %429 = vmatprep.subr.mxu0 0.0
  %430 = vmatpush1.xpose.msra.mxu0 %v425
  %431 = vmatprep.subr.mxu0 0.0
  %432 = vmatpush1.xpose.msra.mxu0 %v427
  %433 = vmatprep.subr.mxu0 0.0
  %434 = vmatpush1.xpose.msra.mxu0 0.0
  %435 = vmatprep.subr.mxu0 0.0
  %436 = vmatpush1.xpose.msra.mxu0 0.0
  %437 = vmatprep.subr.mxu0 0.0
  %438 = vmatpush1.xpose.msra.mxu0 0.0
  %439 = vmatprep.subr.mxu0 0.0
  %440 = vmatpush1.xpose.msra.mxu0 0.0
  %441 = vmatprep.subr.mxu0 0.0
  %442 = vmatpush1.xpose.msra.mxu0 0.0
  %443 = vmatprep.subr.mxu0 0.0
  %444 = vmatpush1.xpose.msra.mxu0 0.0
  %445 = vmatprep.subr.mxu0 0.0
  %446 = vmatpush1.xpose.msra.mxu0 0.0
  %447 = vmatprep.subr.mxu0 0.0
  %448 = vmatpush1.xpose.msra.mxu0 0.0
  %449 = vmatprep.subr.mxu0 0.0
  %450 = vmatpush1.xpose.msra.mxu0 0.0
  %451 = vmatprep.subr.mxu0 0.0
  %452 = vmatpush1.xpose.msra.mxu0 0.0
  %453 = vmatprep.subr.mxu0 0.0
  %454 = vmatpush1.xpose.msra.mxu0 0.0
  %455 = vmatprep.subr.mxu0 0.0
  %456 = vmatpush1.xpose.msra.mxu0 0.0
  %457 = vmatprep.subr.mxu0 0.0
  %458 = vmatpush1.xpose.msra.mxu0 0.0
  %459 = vmatprep.subr.mxu0 0.0
  %460 = vmatpush1.xpose.msra.mxu0 0.0
  %461 = vmatprep.subr.mxu0 0.0
  %462 = vmatpush1.xpose.msra.mxu0 0.0
  %463 = vmatprep.subr.mxu0 0.0
  %464 = vmatpush1.xpose.msra.mxu0 0.0
  %465 = vmatprep.subr.mxu0 0.0
  %466 = vmatpush1.xpose.msra.mxu0 0.0
  %467 = vmatprep.subr.mxu0 0.0
  %468 = vmatpush1.xpose.msra.mxu0 0.0
  %469 = vmatprep.subr.mxu0 0.0
  %470 = vmatpush1.xpose.msra.mxu0 0.0
  %471 = vmatprep.subr.mxu0 0.0
  %472 = vmatpush1.xpose.msra.mxu0 0.0
  %473 = vmatprep.subr.mxu0 0.0
  %474 = vmatpush1.xpose.msra.mxu0 0.0
  %475 = vmatprep.subr.mxu0 0.0
  %476 = vmatpush1.xpose.msra.mxu0 0.0
  %477 = vmatprep.subr.mxu0 0.0
  %478 = vmatpush1.xpose.msra.mxu0 0.0
  %479 = vmatprep.subr.mxu0 0.0
  %480 = vmatpush1.xpose.msra.mxu0 0.0
  %481 = vmatprep.subr.mxu0 0.0
  %482 = vmatpush1.xpose.msra.mxu0 0.0
  %483 = vmatprep.subr.mxu0 0.0
  %484 = vmatpush1.xpose.msra.mxu0 0.0
  %485 = vmatprep.subr.mxu0 0.0
  %486 = vmatpush1.xpose.msra.mxu0 0.0
  %487 = vmatprep.subr.mxu0 0.0
  %488 = vmatpush1.xpose.msra.mxu0 0.0
  %489 = vmatprep.subr.mxu0 0.0
  %490 = vmatpush1.xpose.msra.mxu0 0.0
  %491 = vmatprep.subr.mxu0 0.0
  %492 = vmatpush1.xpose.msra.mxu0 0.0
  %493 = vmatprep.mubr.f32.mxu0 0.0
  %494 = vmatmul.mubr.f32.gmra.mrb[0].mxu0 %v421
  %v495 = vpop.f32.mrb[0].mxu0
  %v496 = vadd.f32 0.0, %v495
  %v497 = vpop.f32.mrb[0].mxu0
  %498 = vmatprep.mubr.f32.mxu0 0.0
  %499 = vmatmul.mubr.f32.gmra.mrb[0].mxu0 %v423
  %v500 = vpop.f32.mrb[0].mxu0
  %v501 = vadd.f32 0.0, %v500
  %v502 = vpop.f32.mrb[0].mxu0
  %503 = vdwg.mxu0
  %v504 = vmul.f32 %v496, 0.35355338
  %v505 = vmul.f32 %v501, 0.35355338
  %v506 = vsel %vm303, %v504, -inf
  %507 = vmax.xlane.f32.xlu0 %v506
  %v508 = vpop.xlane.xlu0 %507
  %v509 = vsel %vm303, %v505, -inf
  %510 = vmax.xlane.f32.xlu0 %v509
  %v511 = vpop.xlane.xlu0 %510
  %v512 = vsub.f32 %v504, %v508
  %v513 = vsub.f32 %v505, %v511
  %v514 = vmul.f32 %v512, 1.442695
  %v515 = vpow.pop %v514
  %v516 = vmul.f32 %v513, 1.442695
  %v517 = vpow.pop %v516
  %v518 = vsel %vm303, %v515, 0.0
  %519 = vadd.xlane.f32.xlu0 %v518
  %v520 = vpop.xlane.xlu0 %519
  %v521 = vsel %vm303, %v517, 0.0
  %522 = vadd.xlane.f32.xlu0 %v521
  %v523 = vpop.xlane.xlu0 %522
  %v524 = vrcp.pop %v520
  %v525 = vmul.f32 %v515, %v524
  %v526 = vrcp.pop %v523
  %v527 = vmul.f32 %v517, %v526
  %528 = vrot.lane.b32.xlu0 %v197, 56
  %v529 = vpop.permute.xlu0 %528
  %530 = vrot.lane.b32.xlu0 %v200, 56
  %v531 = vpop.permute.xlu0 %530
  %v535 = vsel %vm303, %v525, 0
  %v538 = vsel %vm303, %v527, 0
  %540 = vmatprep.subr.mxu0 0.0
  %541 = vmatpush1.msra.mxu0 %v529
  %542 = vmatprep.subr.mxu0 0.0
  %543 = vmatpush1.msra.mxu0 %v531
  %544 = vmatprep.subr.mxu0 0.0
  %545 = vmatpush1.msra.mxu0 0.0
  %546 = vmatprep.subr.mxu0 0.0
  %547 = vmatpush1.msra.mxu0 0.0
  %548 = vmatprep.subr.mxu0 0.0
  %549 = vmatpush1.msra.mxu0 0.0
  %550 = vmatprep.subr.mxu0 0.0
  %551 = vmatpush1.msra.mxu0 0.0
  %552 = vmatprep.subr.mxu0 0.0
  %553 = vmatpush1.msra.mxu0 0.0
  %554 = vmatprep.subr.mxu0 0.0
  %555 = vmatpush1.msra.mxu0 0.0
  %556 = vmatprep.subr.mxu0 0.0
  %557 = vmatpush1.msra.mxu0 0.0
  %558 = vmatprep.subr.mxu0 0.0
  %559 = vmatpush1.msra.mxu0 0.0
  %560 = vmatprep.subr.mxu0 0.0
  %561 = vmatpush1.msra.mxu0 0.0
  %562 = vmatprep.subr.mxu0 0.0
  %563 = vmatpush1.msra.mxu0 0.0
  %564 = vmatprep.subr.mxu0 0.0
  %565 = vmatpush1.msra.mxu0 0.0
  %566 = vmatprep.subr.mxu0 0.0
  %567 = vmatpush1.msra.mxu0 0.0
  %568 = vmatprep.subr.mxu0 0.0
  %569 = vmatpush1.msra.mxu0 0.0
  %570 = vmatprep.subr.mxu0 0.0
  %571 = vmatpush1.msra.mxu0 0.0
  %572 = vmatprep.subr.mxu0 0.0
  %573 = vmatpush1.msra.mxu0 0.0
  %574 = vmatprep.subr.mxu0 0.0
  %575 = vmatpush1.msra.mxu0 0.0
  %576 = vmatprep.subr.mxu0 0.0
  %577 = vmatpush1.msra.mxu0 0.0
  %578 = vmatprep.subr.mxu0 0.0
  %579 = vmatpush1.msra.mxu0 0.0
  %580 = vmatprep.subr.mxu0 0.0
  %581 = vmatpush1.msra.mxu0 0.0
  %582 = vmatprep.subr.mxu0 0.0
  %583 = vmatpush1.msra.mxu0 0.0
  %584 = vmatprep.subr.mxu0 0.0
  %585 = vmatpush1.msra.mxu0 0.0
  %586 = vmatprep.subr.mxu0 0.0
  %587 = vmatpush1.msra.mxu0 0.0
  %588 = vmatprep.subr.mxu0 0.0
  %589 = vmatpush1.msra.mxu0 0.0
  %590 = vmatprep.subr.mxu0 0.0
  %591 = vmatpush1.msra.mxu0 0.0
  %592 = vmatprep.subr.mxu0 0.0
  %593 = vmatpush1.msra.mxu0 0.0
  %594 = vmatprep.subr.mxu0 0.0
  %595 = vmatpush1.msra.mxu0 0.0
  %596 = vmatprep.subr.mxu0 0.0
  %597 = vmatpush1.msra.mxu0 0.0
  %598 = vmatprep.subr.mxu0 0.0
  %599 = vmatpush1.msra.mxu0 0.0
  %600 = vmatprep.subr.mxu0 0.0
  %601 = vmatpush1.msra.mxu0 0.0
  %602 = vmatprep.subr.mxu0 0.0
  %603 = vmatpush1.msra.mxu0 0.0
  %604 = vmatprep.mubr.f32.mxu0 0.0
  %605 = vmatmul.mubr.f32.gmra.mrb[0].mxu0 %v535
  %v606 = vpop.f32.mrb[0].mxu0
  %v607 = vadd.f32 0.0, %v606
  %v608 = vpop.f32.mrb[0].mxu0
  %609 = vmatprep.mubr.f32.mxu0 0.0
  %610 = vmatmul.mubr.f32.gmra.mrb[0].mxu0 %v538
  %v611 = vpop.f32.mrb[0].mxu0
  %v612 = vadd.f32 0.0, %v611
  %v613 = vpop.f32.mrb[0].mxu0
  %614 = vdwg.mxu0
  %615 = vrot.lane.b32.xlu0 %v197, 112
  %v616 = vpop.permute.xlu0 %615
  %617 = vrot.lane.b32.xlu0 %v200, 112
  %v618 = vpop.permute.xlu0 %617
  %619 = vrot.lane.b32.xlu0 %v197, 80
  %v620 = vpop.permute.xlu0 %619
  %621 = vrot.lane.b32.xlu0 %v200, 80
  %v622 = vpop.permute.xlu0 %621
  %v623 = vsel %vm217, %v616, 0
  %v625 = vsel %vm217, %v618, 0
  %v627 = vsel %vm217, %v620, 0
  %v629 = vsel %vm217, %v622, 0
  %631 = vmatprep.subr.mxu0 0.0
  %632 = vmatpush1.xpose.msra.mxu0 %v627
  %633 = vmatprep.subr.mxu0 0.0
  %634 = vmatpush1.xpose.msra.mxu0 %v629
  %635 = vmatprep.subr.mxu0 0.0
  %636 = vmatpush1.xpose.msra.mxu0 0.0
  %637 = vmatprep.subr.mxu0 0.0
  %638 = vmatpush1.xpose.msra.mxu0 0.0
  %639 = vmatprep.subr.mxu0 0.0
  %640 = vmatpush1.xpose.msra.mxu0 0.0
  %641 = vmatprep.subr.mxu0 0.0
  %642 = vmatpush1.xpose.msra.mxu0 0.0
  %643 = vmatprep.subr.mxu0 0.0
  %644 = vmatpush1.xpose.msra.mxu0 0.0
  %645 = vmatprep.subr.mxu0 0.0
  %646 = vmatpush1.xpose.msra.mxu0 0.0
  %647 = vmatprep.subr.mxu0 0.0
  %648 = vmatpush1.xpose.msra.mxu0 0.0
  %649 = vmatprep.subr.mxu0 0.0
  %650 = vmatpush1.xpose.msra.mxu0 0.0
  %651 = vmatprep.subr.mxu0 0.0
  %652 = vmatpush1.xpose.msra.mxu0 0.0
  %653 = vmatprep.subr.mxu0 0.0
  %654 = vmatpush1.xpose.msra.mxu0 0.0
  %655 = vmatprep.subr.mxu0 0.0
  %656 = vmatpush1.xpose.msra.mxu0 0.0
  %657 = vmatprep.subr.mxu0 0.0
  %658 = vmatpush1.xpose.msra.mxu0 0.0
  %659 = vmatprep.subr.mxu0 0.0
  %660 = vmatpush1.xpose.msra.mxu0 0.0
  %661 = vmatprep.subr.mxu0 0.0
  %662 = vmatpush1.xpose.msra.mxu0 0.0
  %663 = vmatprep.subr.mxu0 0.0
  %664 = vmatpush1.xpose.msra.mxu0 0.0
  %665 = vmatprep.subr.mxu0 0.0
  %666 = vmatpush1.xpose.msra.mxu0 0.0
  %667 = vmatprep.subr.mxu0 0.0
  %668 = vmatpush1.xpose.msra.mxu0 0.0
  %669 = vmatprep.subr.mxu0 0.0
  %670 = vmatpush1.xpose.msra.mxu0 0.0
  %671 = vmatprep.subr.mxu0 0.0
  %672 = vmatpush1.xpose.msra.mxu0 0.0
  %673 = vmatprep.subr.mxu0 0.0
  %674 = vmatpush1.xpose.msra.mxu0 0.0
  %675 = vmatprep.subr.mxu0 0.0
  %676 = vmatpush1.xpose.msra.mxu0 0.0
  %677 = vmatprep.subr.mxu0 0.0
  %678 = vmatpush1.xpose.msra.mxu0 0.0
  %679 = vmatprep.subr.mxu0 0.0
  %680 = vmatpush1.xpose.msra.mxu0 0.0
  %681 = vmatprep.subr.mxu0 0.0
  %682 = vmatpush1.xpose.msra.mxu0 0.0
  %683 = vmatprep.subr.mxu0 0.0
  %684 = vmatpush1.xpose.msra.mxu0 0.0
  %685 = vmatprep.subr.mxu0 0.0
  %686 = vmatpush1.xpose.msra.mxu0 0.0
  %687 = vmatprep.subr.mxu0 0.0
  %688 = vmatpush1.xpose.msra.mxu0 0.0
  %689 = vmatprep.subr.mxu0 0.0
  %690 = vmatpush1.xpose.msra.mxu0 0.0
  %691 = vmatprep.subr.mxu0 0.0
  %692 = vmatpush1.xpose.msra.mxu0 0.0
  %693 = vmatprep.subr.mxu0 0.0
  %694 = vmatpush1.xpose.msra.mxu0 0.0
  %695 = vmatprep.mubr.f32.mxu0 0.0
  %696 = vmatmul.mubr.f32.gmra.mrb[0].mxu0 %v623
  %v697 = vpop.f32.mrb[0].mxu0
  %v698 = vadd.f32 0.0, %v697
  %v699 = vpop.f32.mrb[0].mxu0
  %700 = vmatprep.mubr.f32.mxu0 0.0
  %701 = vmatmul.mubr.f32.gmra.mrb[0].mxu0 %v625
  %v702 = vpop.f32.mrb[0].mxu0
  %v703 = vadd.f32 0.0, %v702
  %v704 = vpop.f32.mrb[0].mxu0
  %705 = vdwg.mxu0
  %v706 = vmul.f32 %v698, 0.35355338
  %v707 = vmul.f32 %v703, 0.35355338
  %v708 = vsel %vm303, %v706, -inf
  %709 = vmax.xlane.f32.xlu0 %v708
  %v710 = vpop.xlane.xlu0 %709
  %v711 = vsel %vm303, %v707, -inf
  %712 = vmax.xlane.f32.xlu0 %v711
  %v713 = vpop.xlane.xlu0 %712
  %v714 = vsub.f32 %v706, %v710
  %v715 = vsub.f32 %v707, %v713
  %v716 = vmul.f32 %v714, 1.442695
  %v717 = vpow.pop %v716
  %v718 = vmul.f32 %v715, 1.442695
  %v719 = vpow.pop %v718
  %v720 = vsel %vm303, %v717, 0.0
  %721 = vadd.xlane.f32.xlu0 %v720
  %v722 = vpop.xlane.xlu0 %721
  %v723 = vsel %vm303, %v719, 0.0
  %724 = vadd.xlane.f32.xlu0 %v723
  %v725 = vpop.xlane.xlu0 %724
  %v726 = vrcp.pop %v722
  %v727 = vmul.f32 %v717, %v726
  %v728 = vrcp.pop %v725
  %v729 = vmul.f32 %v719, %v728
  %730 = vrot.lane.b32.xlu0 %v197, 48
  %v731 = vpop.permute.xlu0 %730
  %732 = vrot.lane.b32.xlu0 %v200, 48
  %v733 = vpop.permute.xlu0 %732
  %v737 = vsel %vm303, %v727, 0
  %v740 = vsel %vm303, %v729, 0
  %742 = vmatprep.subr.mxu0 0.0
  %743 = vmatpush1.msra.mxu0 %v731
  %744 = vmatprep.subr.mxu0 0.0
  %745 = vmatpush1.msra.mxu0 %v733
  %746 = vmatprep.subr.mxu0 0.0
  %747 = vmatpush1.msra.mxu0 0.0
  %748 = vmatprep.subr.mxu0 0.0
  %749 = vmatpush1.msra.mxu0 0.0
  %750 = vmatprep.subr.mxu0 0.0
  %751 = vmatpush1.msra.mxu0 0.0
  %752 = vmatprep.subr.mxu0 0.0
  %753 = vmatpush1.msra.mxu0 0.0
  %754 = vmatprep.subr.mxu0 0.0
  %755 = vmatpush1.msra.mxu0 0.0
  %756 = vmatprep.subr.mxu0 0.0
  %757 = vmatpush1.msra.mxu0 0.0
  %758 = vmatprep.subr.mxu0 0.0
  %759 = vmatpush1.msra.mxu0 0.0
  %760 = vmatprep.subr.mxu0 0.0
  %761 = vmatpush1.msra.mxu0 0.0
  %762 = vmatprep.subr.mxu0 0.0
  %763 = vmatpush1.msra.mxu0 0.0
  %764 = vmatprep.subr.mxu0 0.0
  %765 = vmatpush1.msra.mxu0 0.0
  %766 = vmatprep.subr.mxu0 0.0
  %767 = vmatpush1.msra.mxu0 0.0
  %768 = vmatprep.subr.mxu0 0.0
  %769 = vmatpush1.msra.mxu0 0.0
  %770 = vmatprep.subr.mxu0 0.0
  %771 = vmatpush1.msra.mxu0 0.0
  %772 = vmatprep.subr.mxu0 0.0
  %773 = vmatpush1.msra.mxu0 0.0
  %774 = vmatprep.subr.mxu0 0.0
  %775 = vmatpush1.msra.mxu0 0.0
  %776 = vmatprep.subr.mxu0 0.0
  %777 = vmatpush1.msra.mxu0 0.0
  %778 = vmatprep.subr.mxu0 0.0
  %779 = vmatpush1.msra.mxu0 0.0
  %780 = vmatprep.subr.mxu0 0.0
  %781 = vmatpush1.msra.mxu0 0.0
  %782 = vmatprep.subr.mxu0 0.0
  %783 = vmatpush1.msra.mxu0 0.0
  %784 = vmatprep.subr.mxu0 0.0
  %785 = vmatpush1.msra.mxu0 0.0
  %786 = vmatprep.subr.mxu0 0.0
  %787 = vmatpush1.msra.mxu0 0.0
  %788 = vmatprep.subr.mxu0 0.0
  %789 = vmatpush1.msra.mxu0 0.0
  %790 = vmatprep.subr.mxu0 0.0
  %791 = vmatpush1.msra.mxu0 0.0
  %792 = vmatprep.subr.mxu0 0.0
  %793 = vmatpush1.msra.mxu0 0.0
  %794 = vmatprep.subr.mxu0 0.0
  %795 = vmatpush1.msra.mxu0 0.0
  %796 = vmatprep.subr.mxu0 0.0
  %797 = vmatpush1.msra.mxu0 0.0
  %798 = vmatprep.subr.mxu0 0.0
  %799 = vmatpush1.msra.mxu0 0.0
  %800 = vmatprep.subr.mxu0 0.0
  %801 = vmatpush1.msra.mxu0 0.0
  %802 = vmatprep.subr.mxu0 0.0
  %803 = vmatpush1.msra.mxu0 0.0
  %804 = vmatprep.subr.mxu0 0.0
  %805 = vmatpush1.msra.mxu0 0.0
  %806 = vmatprep.mubr.f32.mxu0 0.0
  %807 = vmatmul.mubr.f32.gmra.mrb[0].mxu0 %v737
  %v808 = vpop.f32.mrb[0].mxu0
  %v809 = vadd.f32 0.0, %v808
  %v810 = vpop.f32.mrb[0].mxu0
  %811 = vmatprep.mubr.f32.mxu0 0.0
  %812 = vmatmul.mubr.f32.gmra.mrb[0].mxu0 %v740
  %v813 = vpop.f32.mrb[0].mxu0
  %v814 = vadd.f32 0.0, %v813
  %v815 = vpop.f32.mrb[0].mxu0
  %816 = vdwg.mxu0
  %817 = vrot.lane.b32.xlu0 %v197, 104
  %v818 = vpop.permute.xlu0 %817
  %819 = vrot.lane.b32.xlu0 %v200, 104
  %v820 = vpop.permute.xlu0 %819
  %821 = vrot.lane.b32.xlu0 %v197, 72
  %v822 = vpop.permute.xlu0 %821
  %823 = vrot.lane.b32.xlu0 %v200, 72
  %v824 = vpop.permute.xlu0 %823
  %v825 = vsel %vm217, %v818, 0
  %v827 = vsel %vm217, %v820, 0
  %v829 = vsel %vm217, %v822, 0
  %v831 = vsel %vm217, %v824, 0
  %833 = vmatprep.subr.mxu0 0.0
  %834 = vmatpush1.xpose.msra.mxu0 %v829
  %835 = vmatprep.subr.mxu0 0.0
  %836 = vmatpush1.xpose.msra.mxu0 %v831
  %837 = vmatprep.subr.mxu0 0.0
  %838 = vmatpush1.xpose.msra.mxu0 0.0
  %839 = vmatprep.subr.mxu0 0.0
  %840 = vmatpush1.xpose.msra.mxu0 0.0
  %841 = vmatprep.subr.mxu0 0.0
  %842 = vmatpush1.xpose.msra.mxu0 0.0
  %843 = vmatprep.subr.mxu0 0.0
  %844 = vmatpush1.xpose.msra.mxu0 0.0
  %845 = vmatprep.subr.mxu0 0.0
  %846 = vmatpush1.xpose.msra.mxu0 0.0
  %847 = vmatprep.subr.mxu0 0.0
  %848 = vmatpush1.xpose.msra.mxu0 0.0
  %849 = vmatprep.subr.mxu0 0.0
  %850 = vmatpush1.xpose.msra.mxu0 0.0
  %851 = vmatprep.subr.mxu0 0.0
  %852 = vmatpush1.xpose.msra.mxu0 0.0
  %853 = vmatprep.subr.mxu0 0.0
  %854 = vmatpush1.xpose.msra.mxu0 0.0
  %855 = vmatprep.subr.mxu0 0.0
  %856 = vmatpush1.xpose.msra.mxu0 0.0
  %857 = vmatprep.subr.mxu0 0.0
  %858 = vmatpush1.xpose.msra.mxu0 0.0
  %859 = vmatprep.subr.mxu0 0.0
  %860 = vmatpush1.xpose.msra.mxu0 0.0
  %861 = vmatprep.subr.mxu0 0.0
  %862 = vmatpush1.xpose.msra.mxu0 0.0
  %863 = vmatprep.subr.mxu0 0.0
  %864 = vmatpush1.xpose.msra.mxu0 0.0
  %865 = vmatprep.subr.mxu0 0.0
  %866 = vmatpush1.xpose.msra.mxu0 0.0
  %867 = vmatprep.subr.mxu0 0.0
  %868 = vmatpush1.xpose.msra.mxu0 0.0
  %869 = vmatprep.subr.mxu0 0.0
  %870 = vmatpush1.xpose.msra.mxu0 0.0
  %871 = vmatprep.subr.mxu0 0.0
  %872 = vmatpush1.xpose.msra.mxu0 0.0
  %873 = vmatprep.subr.mxu0 0.0
  %874 = vmatpush1.xpose.msra.mxu0 0.0
  %875 = vmatprep.subr.mxu0 0.0
  %876 = vmatpush1.xpose.msra.mxu0 0.0
  %877 = vmatprep.subr.mxu0 0.0
  %878 = vmatpush1.xpose.msra.mxu0 0.0
  %879 = vmatprep.subr.mxu0 0.0
  %880 = vmatpush1.xpose.msra.mxu0 0.0
  %881 = vmatprep.subr.mxu0 0.0
  %882 = vmatpush1.xpose.msra.mxu0 0.0
  %883 = vmatprep.subr.mxu0 0.0
  %884 = vmatpush1.xpose.msra.mxu0 0.0
  %885 = vmatprep.subr.mxu0 0.0
  %886 = vmatpush1.xpose.msra.mxu0 0.0
  %887 = vmatprep.subr.mxu0 0.0
  %888 = vmatpush1.xpose.msra.mxu0 0.0
  %889 = vmatprep.subr.mxu0 0.0
  %890 = vmatpush1.xpose.msra.mxu0 0.0
  %891 = vmatprep.subr.mxu0 0.0
  %892 = vmatpush1.xpose.msra.mxu0 0.0
  %893 = vmatprep.subr.mxu0 0.0
  %894 = vmatpush1.xpose.msra.mxu0 0.0
  %895 = vmatprep.subr.mxu0 0.0
  %896 = vmatpush1.xpose.msra.mxu0 0.0
  %897 = vmatprep.mubr.f32.mxu0 0.0
  %898 = vmatmul.mubr.f32.gmra.mrb[0].mxu0 %v825
  %v899 = vpop.f32.mrb[0].mxu0
  %v900 = vadd.f32 0.0, %v899
  %v901 = vpop.f32.mrb[0].mxu0
  %902 = vmatprep.mubr.f32.mxu0 0.0
  %903 = vmatmul.mubr.f32.gmra.mrb[0].mxu0 %v827
  %v904 = vpop.f32.mrb[0].mxu0
  %v905 = vadd.f32 0.0, %v904
  %v906 = vpop.f32.mrb[0].mxu0
  %907 = vdwg.mxu0
  %v908 = vmul.f32 %v900, 0.35355338
  %v909 = vmul.f32 %v905, 0.35355338
  %v910 = vsel %vm303, %v908, -inf
  %911 = vmax.xlane.f32.xlu0 %v910
  %v912 = vpop.xlane.xlu0 %911
  %v913 = vsel %vm303, %v909, -inf
  %914 = vmax.xlane.f32.xlu0 %v913
  %v915 = vpop.xlane.xlu0 %914
  %v916 = vsub.f32 %v908, %v912
  %v917 = vsub.f32 %v909, %v915
  %v918 = vmul.f32 %v916, 1.442695
  %v919 = vpow.pop %v918
  %v920 = vmul.f32 %v917, 1.442695
  %v921 = vpow.pop %v920
  %v922 = vsel %vm303, %v919, 0.0
  %923 = vadd.xlane.f32.xlu0 %v922
  %v924 = vpop.xlane.xlu0 %923
  %v925 = vsel %vm303, %v921, 0.0
  %926 = vadd.xlane.f32.xlu0 %v925
  %v927 = vpop.xlane.xlu0 %926
  %v928 = vrcp.pop %v924
  %v929 = vmul.f32 %v919, %v928
  %v930 = vrcp.pop %v927
  %v931 = vmul.f32 %v921, %v930
  %932 = vrot.lane.b32.xlu0 %v197, 40
  %v933 = vpop.permute.xlu0 %932
  %934 = vrot.lane.b32.xlu0 %v200, 40
  %v935 = vpop.permute.xlu0 %934
  %v939 = vsel %vm303, %v929, 0
  %v942 = vsel %vm303, %v931, 0
  %944 = vmatprep.subr.mxu0 0.0
  %945 = vmatpush1.msra.mxu0 %v933
  %946 = vmatprep.subr.mxu0 0.0
  %947 = vmatpush1.msra.mxu0 %v935
  %948 = vmatprep.subr.mxu0 0.0
  %949 = vmatpush1.msra.mxu0 0.0
  %950 = vmatprep.subr.mxu0 0.0
  %951 = vmatpush1.msra.mxu0 0.0
  %952 = vmatprep.subr.mxu0 0.0
  %953 = vmatpush1.msra.mxu0 0.0
  %954 = vmatprep.subr.mxu0 0.0
  %955 = vmatpush1.msra.mxu0 0.0
  %956 = vmatprep.subr.mxu0 0.0
  %957 = vmatpush1.msra.mxu0 0.0
  %958 = vmatprep.subr.mxu0 0.0
  %959 = vmatpush1.msra.mxu0 0.0
  %960 = vmatprep.subr.mxu0 0.0
  %961 = vmatpush1.msra.mxu0 0.0
  %962 = vmatprep.subr.mxu0 0.0
  %963 = vmatpush1.msra.mxu0 0.0
  %964 = vmatprep.subr.mxu0 0.0
  %965 = vmatpush1.msra.mxu0 0.0
  %966 = vmatprep.subr.mxu0 0.0
  %967 = vmatpush1.msra.mxu0 0.0
  %968 = vmatprep.subr.mxu0 0.0
  %969 = vmatpush1.msra.mxu0 0.0
  %970 = vmatprep.subr.mxu0 0.0
  %971 = vmatpush1.msra.mxu0 0.0
  %972 = vmatprep.subr.mxu0 0.0
  %973 = vmatpush1.msra.mxu0 0.0
  %974 = vmatprep.subr.mxu0 0.0
  %975 = vmatpush1.msra.mxu0 0.0
  %976 = vmatprep.subr.mxu0 0.0
  %977 = vmatpush1.msra.mxu0 0.0
  %978 = vmatprep.subr.mxu0 0.0
  %979 = vmatpush1.msra.mxu0 0.0
  %980 = vmatprep.subr.mxu0 0.0
  %981 = vmatpush1.msra.mxu0 0.0
  %982 = vmatprep.subr.mxu0 0.0
  %983 = vmatpush1.msra.mxu0 0.0
  %984 = vmatprep.subr.mxu0 0.0
  %985 = vmatpush1.msra.mxu0 0.0
  %986 = vmatprep.subr.mxu0 0.0
  %987 = vmatpush1.msra.mxu0 0.0
  %988 = vmatprep.subr.mxu0 0.0
  %989 = vmatpush1.msra.mxu0 0.0
  %990 = vmatprep.subr.mxu0 0.0
  %991 = vmatpush1.msra.mxu0 0.0
  %992 = vmatprep.subr.mxu0 0.0
  %993 = vmatpush1.msra.mxu0 0.0
  %994 = vmatprep.subr.mxu0 0.0
  %995 = vmatpush1.msra.mxu0 0.0
  %996 = vmatprep.subr.mxu0 0.0
  %997 = vmatpush1.msra.mxu0 0.0
  %998 = vmatprep.subr.mxu0 0.0
  %999 = vmatpush1.msra.mxu0 0.0
  %1000 = vmatprep.subr.mxu0 0.0
  %1001 = vmatpush1.msra.mxu0 0.0
  %1002 = vmatprep.subr.mxu0 0.0
  %1003 = vmatpush1.msra.mxu0 0.0
  %1004 = vmatprep.subr.mxu0 0.0
  %1005 = vmatpush1.msra.mxu0 0.0
  %1006 = vmatprep.subr.mxu0 0.0
  %1007 = vmatpush1.msra.mxu0 0.0
  %1008 = vmatprep.mubr.f32.mxu0 0.0
  %1009 = vmatmul.mubr.f32.gmra.mrb[0].mxu0 %v939
  %v1010 = vpop.f32.mrb[0].mxu0
  %v1011 = vadd.f32 0.0, %v1010
  %v1012 = vpop.f32.mrb[0].mxu0
  %1013 = vmatprep.mubr.f32.mxu0 0.0
  %1014 = vmatmul.mubr.f32.gmra.mrb[0].mxu0 %v942
  %v1015 = vpop.f32.mrb[0].mxu0
  %v1016 = vadd.f32 0.0, %v1015
  %v1017 = vpop.f32.mrb[0].mxu0
  %1018 = vdwg.mxu0
  %1021 = vrot.lane.b32.xlu0 %v607, 8
  %v1022 = vpop.permute.xlu0 %1021
  %1023 = vrot.lane.b32.xlu0 %v612, 8
  %v1024 = vpop.permute.xlu0 %1023
  %1029 = vrot.lane.b32.xlu0 %v809, 16
  %v1030 = vpop.permute.xlu0 %1029
  %1031 = vrot.lane.b32.xlu0 %v814, 16
  %v1032 = vpop.permute.xlu0 %1031
  %1037 = vrot.lane.b32.xlu0 %v1011, 24
  %v1038 = vpop.permute.xlu0 %1037
  %1039 = vrot.lane.b32.xlu0 %v1016, 24
  %v1040 = vpop.permute.xlu0 %1039
  %v1043 = vsel %vm217, %v405, %v1022
  %v1044 = vsel %vm217, %v410, %v1024
  %v1045 = vsel %vm303, %v1043, %v1030
  %v1046 = vsel %vm303, %v1044, %v1032
  %vm1047 = vcmask 195584
  %v1048 = vsel %vm1047, %v1045, %v1038
  %v1049 = vsel %vm1047, %v1046, %v1040
  %1052 = vrot.lane.b32.xlu0 %v205, 96
  %v1053 = vpop.permute.xlu0 %1052
  %1054 = vrot.lane.b32.xlu0 %v208, 96
  %v1055 = vpop.permute.xlu0 %1054
  %v1056 = vsel %vm217, %v205, 0
  %v1058 = vsel %vm217, %v208, 0
  %v1060 = vsel %vm217, %v1053, 0
  %v1062 = vsel %vm217, %v1055, 0
  %1064 = vmatprep.subr.mxu0 0.0
  %1065 = vmatpush1.xpose.msra.mxu0 %v1060
  %1066 = vmatprep.subr.mxu0 0.0
  %1067 = vmatpush1.xpose.msra.mxu0 %v1062
  %1068 = vmatprep.subr.mxu0 0.0
  %1069 = vmatpush1.xpose.msra.mxu0 0.0
  %1070 = vmatprep.subr.mxu0 0.0
  %1071 = vmatpush1.xpose.msra.mxu0 0.0
  %1072 = vmatprep.subr.mxu0 0.0
  %1073 = vmatpush1.xpose.msra.mxu0 0.0
  %1074 = vmatprep.subr.mxu0 0.0
  %1075 = vmatpush1.xpose.msra.mxu0 0.0
  %1076 = vmatprep.subr.mxu0 0.0
  %1077 = vmatpush1.xpose.msra.mxu0 0.0
  %1078 = vmatprep.subr.mxu0 0.0
  %1079 = vmatpush1.xpose.msra.mxu0 0.0
  %1080 = vmatprep.subr.mxu0 0.0
  %1081 = vmatpush1.xpose.msra.mxu0 0.0
  %1082 = vmatprep.subr.mxu0 0.0
  %1083 = vmatpush1.xpose.msra.mxu0 0.0
  %1084 = vmatprep.subr.mxu0 0.0
  %1085 = vmatpush1.xpose.msra.mxu0 0.0
  %1086 = vmatprep.subr.mxu0 0.0
  %1087 = vmatpush1.xpose.msra.mxu0 0.0
  %1088 = vmatprep.subr.mxu0 0.0
  %1089 = vmatpush1.xpose.msra.mxu0 0.0
  %1090 = vmatprep.subr.mxu0 0.0
  %1091 = vmatpush1.xpose.msra.mxu0 0.0
  %1092 = vmatprep.subr.mxu0 0.0
  %1093 = vmatpush1.xpose.msra.mxu0 0.0
  %1094 = vmatprep.subr.mxu0 0.0
  %1095 = vmatpush1.xpose.msra.mxu0 0.0
  %1096 = vmatprep.subr.mxu0 0.0
  %1097 = vmatpush1.xpose.msra.mxu0 0.0
  %1098 = vmatprep.subr.mxu0 0.0
  %1099 = vmatpush1.xpose.msra.mxu0 0.0
  %1100 = vmatprep.subr.mxu0 0.0
  %1101 = vmatpush1.xpose.msra.mxu0 0.0
  %1102 = vmatprep.subr.mxu0 0.0
  %1103 = vmatpush1.xpose.msra.mxu0 0.0
  %1104 = vmatprep.subr.mxu0 0.0
  %1105 = vmatpush1.xpose.msra.mxu0 0.0
  %1106 = vmatprep.subr.mxu0 0.0
  %1107 = vmatpush1.xpose.msra.mxu0 0.0
  %1108 = vmatprep.subr.mxu0 0.0
  %1109 = vmatpush1.xpose.msra.mxu0 0.0
  %1110 = vmatprep.subr.mxu0 0.0
  %1111 = vmatpush1.xpose.msra.mxu0 0.0
  %1112 = vmatprep.subr.mxu0 0.0
  %1113 = vmatpush1.xpose.msra.mxu0 0.0
  %1114 = vmatprep.subr.mxu0 0.0
  %1115 = vmatpush1.xpose.msra.mxu0 0.0
  %1116 = vmatprep.subr.mxu0 0.0
  %1117 = vmatpush1.xpose.msra.mxu0 0.0
  %1118 = vmatprep.subr.mxu0 0.0
  %1119 = vmatpush1.xpose.msra.mxu0 0.0
  %1120 = vmatprep.subr.mxu0 0.0
  %1121 = vmatpush1.xpose.msra.mxu0 0.0
  %1122 = vmatprep.subr.mxu0 0.0
  %1123 = vmatpush1.xpose.msra.mxu0 0.0
  %1124 = vmatprep.subr.mxu0 0.0
  %1125 = vmatpush1.xpose.msra.mxu0 0.0
  %1126 = vmatprep.subr.mxu0 0.0
  %1127 = vmatpush1.xpose.msra.mxu0 0.0
  %1128 = vmatprep.mubr.f32.mxu0 0.0
  %1129 = vmatmul.mubr.f32.gmra.mrb[0].mxu0 %v1056
  %v1130 = vpop.f32.mrb[0].mxu0
  %v1131 = vadd.f32 0.0, %v1130
  %v1132 = vpop.f32.mrb[0].mxu0
  %1133 = vmatprep.mubr.f32.mxu0 0.0
  %1134 = vmatmul.mubr.f32.gmra.mrb[0].mxu0 %v1058
  %v1135 = vpop.f32.mrb[0].mxu0
  %v1136 = vadd.f32 0.0, %v1135
  %v1137 = vpop.f32.mrb[0].mxu0
  %1138 = vdwg.mxu0
  %v1139 = vmul.f32 %v1131, 0.35355338
  %v1140 = vmul.f32 %v1136, 0.35355338
  %v1141 = vsel %vm303, %v1139, -inf
  %1142 = vmax.xlane.f32.xlu0 %v1141
  %v1143 = vpop.xlane.xlu0 %1142
  %v1144 = vsel %vm303, %v1140, -inf
  %1145 = vmax.xlane.f32.xlu0 %v1144
  %v1146 = vpop.xlane.xlu0 %1145
  %v1147 = vsub.f32 %v1139, %v1143
  %v1148 = vsub.f32 %v1140, %v1146
  %v1149 = vmul.f32 %v1147, 1.442695
  %v1150 = vpow.pop %v1149
  %v1151 = vmul.f32 %v1148, 1.442695
  %v1152 = vpow.pop %v1151
  %v1153 = vsel %vm303, %v1150, 0.0
  %1154 = vadd.xlane.f32.xlu0 %v1153
  %v1155 = vpop.xlane.xlu0 %1154
  %v1156 = vsel %vm303, %v1152, 0.0
  %1157 = vadd.xlane.f32.xlu0 %v1156
  %v1158 = vpop.xlane.xlu0 %1157
  %v1159 = vrcp.pop %v1155
  %v1160 = vmul.f32 %v1150, %v1159
  %v1161 = vrcp.pop %v1158
  %v1162 = vmul.f32 %v1152, %v1161
  %1163 = vrot.lane.b32.xlu0 %v205, 64
  %v1164 = vpop.permute.xlu0 %1163
  %1165 = vrot.lane.b32.xlu0 %v208, 64
  %v1166 = vpop.permute.xlu0 %1165
  %v1170 = vsel %vm303, %v1160, 0
  %v1173 = vsel %vm303, %v1162, 0
  %1175 = vmatprep.subr.mxu0 0.0
  %1176 = vmatpush1.msra.mxu0 %v1164
  %1177 = vmatprep.subr.mxu0 0.0
  %1178 = vmatpush1.msra.mxu0 %v1166
  %1179 = vmatprep.subr.mxu0 0.0
  %1180 = vmatpush1.msra.mxu0 0.0
  %1181 = vmatprep.subr.mxu0 0.0
  %1182 = vmatpush1.msra.mxu0 0.0
  %1183 = vmatprep.subr.mxu0 0.0
  %1184 = vmatpush1.msra.mxu0 0.0
  %1185 = vmatprep.subr.mxu0 0.0
  %1186 = vmatpush1.msra.mxu0 0.0
  %1187 = vmatprep.subr.mxu0 0.0
  %1188 = vmatpush1.msra.mxu0 0.0
  %1189 = vmatprep.subr.mxu0 0.0
  %1190 = vmatpush1.msra.mxu0 0.0
  %1191 = vmatprep.subr.mxu0 0.0
  %1192 = vmatpush1.msra.mxu0 0.0
  %1193 = vmatprep.subr.mxu0 0.0
  %1194 = vmatpush1.msra.mxu0 0.0
  %1195 = vmatprep.subr.mxu0 0.0
  %1196 = vmatpush1.msra.mxu0 0.0
  %1197 = vmatprep.subr.mxu0 0.0
  %1198 = vmatpush1.msra.mxu0 0.0
  %1199 = vmatprep.subr.mxu0 0.0
  %1200 = vmatpush1.msra.mxu0 0.0
  %1201 = vmatprep.subr.mxu0 0.0
  %1202 = vmatpush1.msra.mxu0 0.0
  %1203 = vmatprep.subr.mxu0 0.0
  %1204 = vmatpush1.msra.mxu0 0.0
  %1205 = vmatprep.subr.mxu0 0.0
  %1206 = vmatpush1.msra.mxu0 0.0
  %1207 = vmatprep.subr.mxu0 0.0
  %1208 = vmatpush1.msra.mxu0 0.0
  %1209 = vmatprep.subr.mxu0 0.0
  %1210 = vmatpush1.msra.mxu0 0.0
  %1211 = vmatprep.subr.mxu0 0.0
  %1212 = vmatpush1.msra.mxu0 0.0
  %1213 = vmatprep.subr.mxu0 0.0
  %1214 = vmatpush1.msra.mxu0 0.0
  %1215 = vmatprep.subr.mxu0 0.0
  %1216 = vmatpush1.msra.mxu0 0.0
  %1217 = vmatprep.subr.mxu0 0.0
  %1218 = vmatpush1.msra.mxu0 0.0
  %1219 = vmatprep.subr.mxu0 0.0
  %1220 = vmatpush1.msra.mxu0 0.0
  %1221 = vmatprep.subr.mxu0 0.0
  %1222 = vmatpush1.msra.mxu0 0.0
  %1223 = vmatprep.subr.mxu0 0.0
  %1224 = vmatpush1.msra.mxu0 0.0
  %1225 = vmatprep.subr.mxu0 0.0
  %1226 = vmatpush1.msra.mxu0 0.0
  %1227 = vmatprep.subr.mxu0 0.0
  %1228 = vmatpush1.msra.mxu0 0.0
  %1229 = vmatprep.subr.mxu0 0.0
  %1230 = vmatpush1.msra.mxu0 0.0
  %1231 = vmatprep.subr.mxu0 0.0
  %1232 = vmatpush1.msra.mxu0 0.0
  %1233 = vmatprep.subr.mxu0 0.0
  %1234 = vmatpush1.msra.mxu0 0.0
  %1235 = vmatprep.subr.mxu0 0.0
  %1236 = vmatpush1.msra.mxu0 0.0
  %1237 = vmatprep.subr.mxu0 0.0
  %1238 = vmatpush1.msra.mxu0 0.0
  %1239 = vmatprep.mubr.f32.mxu0 0.0
  %1240 = vmatmul.mubr.f32.gmra.mrb[0].mxu0 %v1170
  %v1241 = vpop.f32.mrb[0].mxu0
  %v1242 = vadd.f32 0.0, %v1241
  %v1243 = vpop.f32.mrb[0].mxu0
  %1244 = vmatprep.mubr.f32.mxu0 0.0
  %1245 = vmatmul.mubr.f32.gmra.mrb[0].mxu0 %v1173
  %v1246 = vpop.f32.mrb[0].mxu0
  %v1247 = vadd.f32 0.0, %v1246
  %v1248 = vpop.f32.mrb[0].mxu0
  %1249 = vdwg.mxu0
  %1250 = vrot.lane.b32.xlu0 %v205, 120
  %v1251 = vpop.permute.xlu0 %1250
  %1252 = vrot.lane.b32.xlu0 %v208, 120
  %v1253 = vpop.permute.xlu0 %1252
  %1254 = vrot.lane.b32.xlu0 %v205, 88
  %v1255 = vpop.permute.xlu0 %1254
  %1256 = vrot.lane.b32.xlu0 %v208, 88
  %v1257 = vpop.permute.xlu0 %1256
  %v1258 = vsel %vm217, %v1251, 0
  %v1260 = vsel %vm217, %v1253, 0
  %v1262 = vsel %vm217, %v1255, 0
  %v1264 = vsel %vm217, %v1257, 0
  %1266 = vmatprep.subr.mxu0 0.0
  %1267 = vmatpush1.xpose.msra.mxu0 %v1262
  %1268 = vmatprep.subr.mxu0 0.0
  %1269 = vmatpush1.xpose.msra.mxu0 %v1264
  %1270 = vmatprep.subr.mxu0 0.0
  %1271 = vmatpush1.xpose.msra.mxu0 0.0
  %1272 = vmatprep.subr.mxu0 0.0
  %1273 = vmatpush1.xpose.msra.mxu0 0.0
  %1274 = vmatprep.subr.mxu0 0.0
  %1275 = vmatpush1.xpose.msra.mxu0 0.0
  %1276 = vmatprep.subr.mxu0 0.0
  %1277 = vmatpush1.xpose.msra.mxu0 0.0
  %1278 = vmatprep.subr.mxu0 0.0
  %1279 = vmatpush1.xpose.msra.mxu0 0.0
  %1280 = vmatprep.subr.mxu0 0.0
  %1281 = vmatpush1.xpose.msra.mxu0 0.0
  %1282 = vmatprep.subr.mxu0 0.0
  %1283 = vmatpush1.xpose.msra.mxu0 0.0
  %1284 = vmatprep.subr.mxu0 0.0
  %1285 = vmatpush1.xpose.msra.mxu0 0.0
  %1286 = vmatprep.subr.mxu0 0.0
  %1287 = vmatpush1.xpose.msra.mxu0 0.0
  %1288 = vmatprep.subr.mxu0 0.0
  %1289 = vmatpush1.xpose.msra.mxu0 0.0
  %1290 = vmatprep.subr.mxu0 0.0
  %1291 = vmatpush1.xpose.msra.mxu0 0.0
  %1292 = vmatprep.subr.mxu0 0.0
  %1293 = vmatpush1.xpose.msra.mxu0 0.0
  %1294 = vmatprep.subr.mxu0 0.0
  %1295 = vmatpush1.xpose.msra.mxu0 0.0
  %1296 = vmatprep.subr.mxu0 0.0
  %1297 = vmatpush1.xpose.msra.mxu0 0.0
  %1298 = vmatprep.subr.mxu0 0.0
  %1299 = vmatpush1.xpose.msra.mxu0 0.0
  %1300 = vmatprep.subr.mxu0 0.0
  %1301 = vmatpush1.xpose.msra.mxu0 0.0
  %1302 = vmatprep.subr.mxu0 0.0
  %1303 = vmatpush1.xpose.msra.mxu0 0.0
  %1304 = vmatprep.subr.mxu0 0.0
  %1305 = vmatpush1.xpose.msra.mxu0 0.0
  %1306 = vmatprep.subr.mxu0 0.0
  %1307 = vmatpush1.xpose.msra.mxu0 0.0
  %1308 = vmatprep.subr.mxu0 0.0
  %1309 = vmatpush1.xpose.msra.mxu0 0.0
  %1310 = vmatprep.subr.mxu0 0.0
  %1311 = vmatpush1.xpose.msra.mxu0 0.0
  %1312 = vmatprep.subr.mxu0 0.0
  %1313 = vmatpush1.xpose.msra.mxu0 0.0
  %1314 = vmatprep.subr.mxu0 0.0
  %1315 = vmatpush1.xpose.msra.mxu0 0.0
  %1316 = vmatprep.subr.mxu0 0.0
  %1317 = vmatpush1.xpose.msra.mxu0 0.0
  %1318 = vmatprep.subr.mxu0 0.0
  %1319 = vmatpush1.xpose.msra.mxu0 0.0
  %1320 = vmatprep.subr.mxu0 0.0
  %1321 = vmatpush1.xpose.msra.mxu0 0.0
  %1322 = vmatprep.subr.mxu0 0.0
  %1323 = vmatpush1.xpose.msra.mxu0 0.0
  %1324 = vmatprep.subr.mxu0 0.0
  %1325 = vmatpush1.xpose.msra.mxu0 0.0
  %1326 = vmatprep.subr.mxu0 0.0
  %1327 = vmatpush1.xpose.msra.mxu0 0.0
  %1328 = vmatprep.subr.mxu0 0.0
  %1329 = vmatpush1.xpose.msra.mxu0 0.0
  %1330 = vmatprep.mubr.f32.mxu0 0.0
  %1331 = vmatmul.mubr.f32.gmra.mrb[0].mxu0 %v1258
  %v1332 = vpop.f32.mrb[0].mxu0
  %v1333 = vadd.f32 0.0, %v1332
  %v1334 = vpop.f32.mrb[0].mxu0
  %1335 = vmatprep.mubr.f32.mxu0 0.0
  %1336 = vmatmul.mubr.f32.gmra.mrb[0].mxu0 %v1260
  %v1337 = vpop.f32.mrb[0].mxu0
  %v1338 = vadd.f32 0.0, %v1337
  %v1339 = vpop.f32.mrb[0].mxu0
  %1340 = vdwg.mxu0
  %v1341 = vmul.f32 %v1333, 0.35355338
  %v1342 = vmul.f32 %v1338, 0.35355338
  %v1343 = vsel %vm303, %v1341, -inf
  %1344 = vmax.xlane.f32.xlu0 %v1343
  %v1345 = vpop.xlane.xlu0 %1344
  %v1346 = vsel %vm303, %v1342, -inf
  %1347 = vmax.xlane.f32.xlu0 %v1346
  %v1348 = vpop.xlane.xlu0 %1347
  %v1349 = vsub.f32 %v1341, %v1345
  %v1350 = vsub.f32 %v1342, %v1348
  %v1351 = vmul.f32 %v1349, 1.442695
  %v1352 = vpow.pop %v1351
  %v1353 = vmul.f32 %v1350, 1.442695
  %v1354 = vpow.pop %v1353
  %v1355 = vsel %vm303, %v1352, 0.0
  %1356 = vadd.xlane.f32.xlu0 %v1355
  %v1357 = vpop.xlane.xlu0 %1356
  %v1358 = vsel %vm303, %v1354, 0.0
  %1359 = vadd.xlane.f32.xlu0 %v1358
  %v1360 = vpop.xlane.xlu0 %1359
  %v1361 = vrcp.pop %v1357
  %v1362 = vmul.f32 %v1352, %v1361
  %v1363 = vrcp.pop %v1360
  %v1364 = vmul.f32 %v1354, %v1363
  %1365 = vrot.lane.b32.xlu0 %v205, 56
  %v1366 = vpop.permute.xlu0 %1365
  %1367 = vrot.lane.b32.xlu0 %v208, 56
  %v1368 = vpop.permute.xlu0 %1367
  %v1372 = vsel %vm303, %v1362, 0
  %v1375 = vsel %vm303, %v1364, 0
  %1377 = vmatprep.subr.mxu0 0.0
  %1378 = vmatpush1.msra.mxu0 %v1366
  %1379 = vmatprep.subr.mxu0 0.0
  %1380 = vmatpush1.msra.mxu0 %v1368
  %1381 = vmatprep.subr.mxu0 0.0
  %1382 = vmatpush1.msra.mxu0 0.0
  %1383 = vmatprep.subr.mxu0 0.0
  %1384 = vmatpush1.msra.mxu0 0.0
  %1385 = vmatprep.subr.mxu0 0.0
  %1386 = vmatpush1.msra.mxu0 0.0
  %1387 = vmatprep.subr.mxu0 0.0
  %1388 = vmatpush1.msra.mxu0 0.0
  %1389 = vmatprep.subr.mxu0 0.0
  %1390 = vmatpush1.msra.mxu0 0.0
  %1391 = vmatprep.subr.mxu0 0.0
  %1392 = vmatpush1.msra.mxu0 0.0
  %1393 = vmatprep.subr.mxu0 0.0
  %1394 = vmatpush1.msra.mxu0 0.0
  %1395 = vmatprep.subr.mxu0 0.0
  %1396 = vmatpush1.msra.mxu0 0.0
  %1397 = vmatprep.subr.mxu0 0.0
  %1398 = vmatpush1.msra.mxu0 0.0
  %1399 = vmatprep.subr.mxu0 0.0
  %1400 = vmatpush1.msra.mxu0 0.0
  %1401 = vmatprep.subr.mxu0 0.0
  %1402 = vmatpush1.msra.mxu0 0.0
  %1403 = vmatprep.subr.mxu0 0.0
  %1404 = vmatpush1.msra.mxu0 0.0
  %1405 = vmatprep.subr.mxu0 0.0
  %1406 = vmatpush1.msra.mxu0 0.0
  %1407 = vmatprep.subr.mxu0 0.0
  %1408 = vmatpush1.msra.mxu0 0.0
  %1409 = vmatprep.subr.mxu0 0.0
  %1410 = vmatpush1.msra.mxu0 0.0
  %1411 = vmatprep.subr.mxu0 0.0
  %1412 = vmatpush1.msra.mxu0 0.0
  %1413 = vmatprep.subr.mxu0 0.0
  %1414 = vmatpush1.msra.mxu0 0.0
  %1415 = vmatprep.subr.mxu0 0.0
  %1416 = vmatpush1.msra.mxu0 0.0
  %1417 = vmatprep.subr.mxu0 0.0
  %1418 = vmatpush1.msra.mxu0 0.0
  %1419 = vmatprep.subr.mxu0 0.0
  %1420 = vmatpush1.msra.mxu0 0.0
  %1421 = vmatprep.subr.mxu0 0.0
  %1422 = vmatpush1.msra.mxu0 0.0
  %1423 = vmatprep.subr.mxu0 0.0
  %1424 = vmatpush1.msra.mxu0 0.0
  %1425 = vmatprep.subr.mxu0 0.0
  %1426 = vmatpush1.msra.mxu0 0.0
  %1427 = vmatprep.subr.mxu0 0.0
  %1428 = vmatpush1.msra.mxu0 0.0
  %1429 = vmatprep.subr.mxu0 0.0
  %1430 = vmatpush1.msra.mxu0 0.0
  %1431 = vmatprep.subr.mxu0 0.0
  %1432 = vmatpush1.msra.mxu0 0.0
  %1433 = vmatprep.subr.mxu0 0.0
  %1434 = vmatpush1.msra.mxu0 0.0
  %1435 = vmatprep.subr.mxu0 0.0
  %1436 = vmatpush1.msra.mxu0 0.0
  %1437 = vmatprep.subr.mxu0 0.0
  %1438 = vmatpush1.msra.mxu0 0.0
  %1439 = vmatprep.subr.mxu0 0.0
  %1440 = vmatpush1.msra.mxu0 0.0
  %1441 = vmatprep.mubr.f32.mxu0 0.0
  %1442 = vmatmul.mubr.f32.gmra.mrb[0].mxu0 %v1372
  %v1443 = vpop.f32.mrb[0].mxu0
  %v1444 = vadd.f32 0.0, %v1443
  %v1445 = vpop.f32.mrb[0].mxu0
  %1446 = vmatprep.mubr.f32.mxu0 0.0
  %1447 = vmatmul.mubr.f32.gmra.mrb[0].mxu0 %v1375
  %v1448 = vpop.f32.mrb[0].mxu0
  %v1449 = vadd.f32 0.0, %v1448
  %v1450 = vpop.f32.mrb[0].mxu0
  %1451 = vdwg.mxu0
  %1452 = vrot.lane.b32.xlu0 %v205, 112
  %v1453 = vpop.permute.xlu0 %1452
  %1454 = vrot.lane.b32.xlu0 %v208, 112
  %v1455 = vpop.permute.xlu0 %1454
  %1456 = vrot.lane.b32.xlu0 %v205, 80
  %v1457 = vpop.permute.xlu0 %1456
  %1458 = vrot.lane.b32.xlu0 %v208, 80
  %v1459 = vpop.permute.xlu0 %1458
  %v1460 = vsel %vm217, %v1453, 0
  %v1462 = vsel %vm217, %v1455, 0
  %v1464 = vsel %vm217, %v1457, 0
  %v1466 = vsel %vm217, %v1459, 0
  %1468 = vmatprep.subr.mxu0 0.0
  %1469 = vmatpush1.xpose.msra.mxu0 %v1464
  %1470 = vmatprep.subr.mxu0 0.0
  %1471 = vmatpush1.xpose.msra.mxu0 %v1466
  %1472 = vmatprep.subr.mxu0 0.0
  %1473 = vmatpush1.xpose.msra.mxu0 0.0
  %1474 = vmatprep.subr.mxu0 0.0
  %1475 = vmatpush1.xpose.msra.mxu0 0.0
  %1476 = vmatprep.subr.mxu0 0.0
  %1477 = vmatpush1.xpose.msra.mxu0 0.0
  %1478 = vmatprep.subr.mxu0 0.0
  %1479 = vmatpush1.xpose.msra.mxu0 0.0
  %1480 = vmatprep.subr.mxu0 0.0
  %1481 = vmatpush1.xpose.msra.mxu0 0.0
  %1482 = vmatprep.subr.mxu0 0.0
  %1483 = vmatpush1.xpose.msra.mxu0 0.0
  %1484 = vmatprep.subr.mxu0 0.0
  %1485 = vmatpush1.xpose.msra.mxu0 0.0
  %1486 = vmatprep.subr.mxu0 0.0
  %1487 = vmatpush1.xpose.msra.mxu0 0.0
  %1488 = vmatprep.subr.mxu0 0.0
  %1489 = vmatpush1.xpose.msra.mxu0 0.0
  %1490 = vmatprep.subr.mxu0 0.0
  %1491 = vmatpush1.xpose.msra.mxu0 0.0
  %1492 = vmatprep.subr.mxu0 0.0
  %1493 = vmatpush1.xpose.msra.mxu0 0.0
  %1494 = vmatprep.subr.mxu0 0.0
  %1495 = vmatpush1.xpose.msra.mxu0 0.0
  %1496 = vmatprep.subr.mxu0 0.0
  %1497 = vmatpush1.xpose.msra.mxu0 0.0
  %1498 = vmatprep.subr.mxu0 0.0
  %1499 = vmatpush1.xpose.msra.mxu0 0.0
  %1500 = vmatprep.subr.mxu0 0.0
  %1501 = vmatpush1.xpose.msra.mxu0 0.0
  %1502 = vmatprep.subr.mxu0 0.0
  %1503 = vmatpush1.xpose.msra.mxu0 0.0
  %1504 = vmatprep.subr.mxu0 0.0
  %1505 = vmatpush1.xpose.msra.mxu0 0.0
  %1506 = vmatprep.subr.mxu0 0.0
  %1507 = vmatpush1.xpose.msra.mxu0 0.0
  %1508 = vmatprep.subr.mxu0 0.0
  %1509 = vmatpush1.xpose.msra.mxu0 0.0
  %1510 = vmatprep.subr.mxu0 0.0
  %1511 = vmatpush1.xpose.msra.mxu0 0.0
  %1512 = vmatprep.subr.mxu0 0.0
  %1513 = vmatpush1.xpose.msra.mxu0 0.0
  %1514 = vmatprep.subr.mxu0 0.0
  %1515 = vmatpush1.xpose.msra.mxu0 0.0
  %1516 = vmatprep.subr.mxu0 0.0
  %1517 = vmatpush1.xpose.msra.mxu0 0.0
  %1518 = vmatprep.subr.mxu0 0.0
  %1519 = vmatpush1.xpose.msra.mxu0 0.0
  %1520 = vmatprep.subr.mxu0 0.0
  %1521 = vmatpush1.xpose.msra.mxu0 0.0
  %1522 = vmatprep.subr.mxu0 0.0
  %1523 = vmatpush1.xpose.msra.mxu0 0.0
  %1524 = vmatprep.subr.mxu0 0.0
  %1525 = vmatpush1.xpose.msra.mxu0 0.0
  %1526 = vmatprep.subr.mxu0 0.0
  %1527 = vmatpush1.xpose.msra.mxu0 0.0
  %1528 = vmatprep.subr.mxu0 0.0
  %1529 = vmatpush1.xpose.msra.mxu0 0.0
  %1530 = vmatprep.subr.mxu0 0.0
  %1531 = vmatpush1.xpose.msra.mxu0 0.0
  %1532 = vmatprep.mubr.f32.mxu0 0.0
  %1533 = vmatmul.mubr.f32.gmra.mrb[0].mxu0 %v1460
  %v1534 = vpop.f32.mrb[0].mxu0
  %v1535 = vadd.f32 0.0, %v1534
  %v1536 = vpop.f32.mrb[0].mxu0
  %1537 = vmatprep.mubr.f32.mxu0 0.0
  %1538 = vmatmul.mubr.f32.gmra.mrb[0].mxu0 %v1462
  %v1539 = vpop.f32.mrb[0].mxu0
  %v1540 = vadd.f32 0.0, %v1539
  %v1541 = vpop.f32.mrb[0].mxu0
  %1542 = vdwg.mxu0
  %v1543 = vmul.f32 %v1535, 0.35355338
  %v1544 = vmul.f32 %v1540, 0.35355338
  %v1545 = vsel %vm303, %v1543, -inf
  %1546 = vmax.xlane.f32.xlu0 %v1545
  %v1547 = vpop.xlane.xlu0 %1546
  %v1548 = vsel %vm303, %v1544, -inf
  %1549 = vmax.xlane.f32.xlu0 %v1548
  %v1550 = vpop.xlane.xlu0 %1549
  %v1551 = vsub.f32 %v1543, %v1547
  %v1552 = vsub.f32 %v1544, %v1550
  %v1553 = vmul.f32 %v1551, 1.442695
  %v1554 = vpow.pop %v1553
  %v1555 = vmul.f32 %v1552, 1.442695
  %v1556 = vpow.pop %v1555
  %v1557 = vsel %vm303, %v1554, 0.0
  %1558 = vadd.xlane.f32.xlu0 %v1557
  %v1559 = vpop.xlane.xlu0 %1558
  %v1560 = vsel %vm303, %v1556, 0.0
  %1561 = vadd.xlane.f32.xlu0 %v1560
  %v1562 = vpop.xlane.xlu0 %1561
  %v1563 = vrcp.pop %v1559
  %v1564 = vmul.f32 %v1554, %v1563
  %v1565 = vrcp.pop %v1562
  %v1566 = vmul.f32 %v1556, %v1565
  %1567 = vrot.lane.b32.xlu0 %v205, 48
  %v1568 = vpop.permute.xlu0 %1567
  %1569 = vrot.lane.b32.xlu0 %v208, 48
  %v1570 = vpop.permute.xlu0 %1569
  %v1574 = vsel %vm303, %v1564, 0
  %v1577 = vsel %vm303, %v1566, 0
  %1579 = vmatprep.subr.mxu0 0.0
  %1580 = vmatpush1.msra.mxu0 %v1568
  %1581 = vmatprep.subr.mxu0 0.0
  %1582 = vmatpush1.msra.mxu0 %v1570
  %1583 = vmatprep.subr.mxu0 0.0
  %1584 = vmatpush1.msra.mxu0 0.0
  %1585 = vmatprep.subr.mxu0 0.0
  %1586 = vmatpush1.msra.mxu0 0.0
  %1587 = vmatprep.subr.mxu0 0.0
  %1588 = vmatpush1.msra.mxu0 0.0
  %1589 = vmatprep.subr.mxu0 0.0
  %1590 = vmatpush1.msra.mxu0 0.0
  %1591 = vmatprep.subr.mxu0 0.0
  %1592 = vmatpush1.msra.mxu0 0.0
  %1593 = vmatprep.subr.mxu0 0.0
  %1594 = vmatpush1.msra.mxu0 0.0
  %1595 = vmatprep.subr.mxu0 0.0
  %1596 = vmatpush1.msra.mxu0 0.0
  %1597 = vmatprep.subr.mxu0 0.0
  %1598 = vmatpush1.msra.mxu0 0.0
  %1599 = vmatprep.subr.mxu0 0.0
  %1600 = vmatpush1.msra.mxu0 0.0
  %1601 = vmatprep.subr.mxu0 0.0
  %1602 = vmatpush1.msra.mxu0 0.0
  %1603 = vmatprep.subr.mxu0 0.0
  %1604 = vmatpush1.msra.mxu0 0.0
  %1605 = vmatprep.subr.mxu0 0.0
  %1606 = vmatpush1.msra.mxu0 0.0
  %1607 = vmatprep.subr.mxu0 0.0
  %1608 = vmatpush1.msra.mxu0 0.0
  %1609 = vmatprep.subr.mxu0 0.0
  %1610 = vmatpush1.msra.mxu0 0.0
  %1611 = vmatprep.subr.mxu0 0.0
  %1612 = vmatpush1.msra.mxu0 0.0
  %1613 = vmatprep.subr.mxu0 0.0
  %1614 = vmatpush1.msra.mxu0 0.0
  %1615 = vmatprep.subr.mxu0 0.0
  %1616 = vmatpush1.msra.mxu0 0.0
  %1617 = vmatprep.subr.mxu0 0.0
  %1618 = vmatpush1.msra.mxu0 0.0
  %1619 = vmatprep.subr.mxu0 0.0
  %1620 = vmatpush1.msra.mxu0 0.0
  %1621 = vmatprep.subr.mxu0 0.0
  %1622 = vmatpush1.msra.mxu0 0.0
  %1623 = vmatprep.subr.mxu0 0.0
  %1624 = vmatpush1.msra.mxu0 0.0
  %1625 = vmatprep.subr.mxu0 0.0
  %1626 = vmatpush1.msra.mxu0 0.0
  %1627 = vmatprep.subr.mxu0 0.0
  %1628 = vmatpush1.msra.mxu0 0.0
  %1629 = vmatprep.subr.mxu0 0.0
  %1630 = vmatpush1.msra.mxu0 0.0
  %1631 = vmatprep.subr.mxu0 0.0
  %1632 = vmatpush1.msra.mxu0 0.0
  %1633 = vmatprep.subr.mxu0 0.0
  %1634 = vmatpush1.msra.mxu0 0.0
  %1635 = vmatprep.subr.mxu0 0.0
  %1636 = vmatpush1.msra.mxu0 0.0
  %1637 = vmatprep.subr.mxu0 0.0
  %1638 = vmatpush1.msra.mxu0 0.0
  %1639 = vmatprep.subr.mxu0 0.0
  %1640 = vmatpush1.msra.mxu0 0.0
  %1641 = vmatprep.subr.mxu0 0.0
  %1642 = vmatpush1.msra.mxu0 0.0
  %1643 = vmatprep.mubr.f32.mxu0 0.0
  %1644 = vmatmul.mubr.f32.gmra.mrb[0].mxu0 %v1574
  %v1645 = vpop.f32.mrb[0].mxu0
  %v1646 = vadd.f32 0.0, %v1645
  %v1647 = vpop.f32.mrb[0].mxu0
  %1648 = vmatprep.mubr.f32.mxu0 0.0
  %1649 = vmatmul.mubr.f32.gmra.mrb[0].mxu0 %v1577
  %v1650 = vpop.f32.mrb[0].mxu0
  %v1651 = vadd.f32 0.0, %v1650
  %v1652 = vpop.f32.mrb[0].mxu0
  %1653 = vdwg.mxu0
  %1654 = vrot.lane.b32.xlu0 %v205, 104
  %v1655 = vpop.permute.xlu0 %1654
  %1656 = vrot.lane.b32.xlu0 %v208, 104
  %v1657 = vpop.permute.xlu0 %1656
  %1658 = vrot.lane.b32.xlu0 %v205, 72
  %v1659 = vpop.permute.xlu0 %1658
  %1660 = vrot.lane.b32.xlu0 %v208, 72
  %v1661 = vpop.permute.xlu0 %1660
  %v1662 = vsel %vm217, %v1655, 0
  %v1664 = vsel %vm217, %v1657, 0
  %v1666 = vsel %vm217, %v1659, 0
  %v1668 = vsel %vm217, %v1661, 0
  %1670 = vmatprep.subr.mxu0 0.0
  %1671 = vmatpush1.xpose.msra.mxu0 %v1666
  %1672 = vmatprep.subr.mxu0 0.0
  %1673 = vmatpush1.xpose.msra.mxu0 %v1668
  %1674 = vmatprep.subr.mxu0 0.0
  %1675 = vmatpush1.xpose.msra.mxu0 0.0
  %1676 = vmatprep.subr.mxu0 0.0
  %1677 = vmatpush1.xpose.msra.mxu0 0.0
  %1678 = vmatprep.subr.mxu0 0.0
  %1679 = vmatpush1.xpose.msra.mxu0 0.0
  %1680 = vmatprep.subr.mxu0 0.0
  %1681 = vmatpush1.xpose.msra.mxu0 0.0
  %1682 = vmatprep.subr.mxu0 0.0
  %1683 = vmatpush1.xpose.msra.mxu0 0.0
  %1684 = vmatprep.subr.mxu0 0.0
  %1685 = vmatpush1.xpose.msra.mxu0 0.0
  %1686 = vmatprep.subr.mxu0 0.0
  %1687 = vmatpush1.xpose.msra.mxu0 0.0
  %1688 = vmatprep.subr.mxu0 0.0
  %1689 = vmatpush1.xpose.msra.mxu0 0.0
  %1690 = vmatprep.subr.mxu0 0.0
  %1691 = vmatpush1.xpose.msra.mxu0 0.0
  %1692 = vmatprep.subr.mxu0 0.0
  %1693 = vmatpush1.xpose.msra.mxu0 0.0
  %1694 = vmatprep.subr.mxu0 0.0
  %1695 = vmatpush1.xpose.msra.mxu0 0.0
  %1696 = vmatprep.subr.mxu0 0.0
  %1697 = vmatpush1.xpose.msra.mxu0 0.0
  %1698 = vmatprep.subr.mxu0 0.0
  %1699 = vmatpush1.xpose.msra.mxu0 0.0
  %1700 = vmatprep.subr.mxu0 0.0
  %1701 = vmatpush1.xpose.msra.mxu0 0.0
  %1702 = vmatprep.subr.mxu0 0.0
  %1703 = vmatpush1.xpose.msra.mxu0 0.0
  %1704 = vmatprep.subr.mxu0 0.0
  %1705 = vmatpush1.xpose.msra.mxu0 0.0
  %1706 = vmatprep.subr.mxu0 0.0
  %1707 = vmatpush1.xpose.msra.mxu0 0.0
  %1708 = vmatprep.subr.mxu0 0.0
  %1709 = vmatpush1.xpose.msra.mxu0 0.0
  %1710 = vmatprep.subr.mxu0 0.0
  %1711 = vmatpush1.xpose.msra.mxu0 0.0
  %1712 = vmatprep.subr.mxu0 0.0
  %1713 = vmatpush1.xpose.msra.mxu0 0.0
  %1714 = vmatprep.subr.mxu0 0.0
  %1715 = vmatpush1.xpose.msra.mxu0 0.0
  %1716 = vmatprep.subr.mxu0 0.0
  %1717 = vmatpush1.xpose.msra.mxu0 0.0
  %1718 = vmatprep.subr.mxu0 0.0
  %1719 = vmatpush1.xpose.msra.mxu0 0.0
  %1720 = vmatprep.subr.mxu0 0.0
  %1721 = vmatpush1.xpose.msra.mxu0 0.0
  %1722 = vmatprep.subr.mxu0 0.0
  %1723 = vmatpush1.xpose.msra.mxu0 0.0
  %1724 = vmatprep.subr.mxu0 0.0
  %1725 = vmatpush1.xpose.msra.mxu0 0.0
  %1726 = vmatprep.subr.mxu0 0.0
  %1727 = vmatpush1.xpose.msra.mxu0 0.0
  %1728 = vmatprep.subr.mxu0 0.0
  %1729 = vmatpush1.xpose.msra.mxu0 0.0
  %1730 = vmatprep.subr.mxu0 0.0
  %1731 = vmatpush1.xpose.msra.mxu0 0.0
  %1732 = vmatprep.subr.mxu0 0.0
  %1733 = vmatpush1.xpose.msra.mxu0 0.0
  %1734 = vmatprep.mubr.f32.mxu0 0.0
  %1735 = vmatmul.mubr.f32.gmra.mrb[0].mxu0 %v1662
  %v1736 = vpop.f32.mrb[0].mxu0
  %v1737 = vadd.f32 0.0, %v1736
  %v1738 = vpop.f32.mrb[0].mxu0
  %1739 = vmatprep.mubr.f32.mxu0 0.0
  %1740 = vmatmul.mubr.f32.gmra.mrb[0].mxu0 %v1664
  %v1741 = vpop.f32.mrb[0].mxu0
  %v1742 = vadd.f32 0.0, %v1741
  %v1743 = vpop.f32.mrb[0].mxu0
  %1744 = vdwg.mxu0
  %v1745 = vmul.f32 %v1737, 0.35355338
  %v1746 = vmul.f32 %v1742, 0.35355338
  %v1747 = vsel %vm303, %v1745, -inf
  %1748 = vmax.xlane.f32.xlu0 %v1747
  %v1749 = vpop.xlane.xlu0 %1748
  %v1750 = vsel %vm303, %v1746, -inf
  %1751 = vmax.xlane.f32.xlu0 %v1750
  %v1752 = vpop.xlane.xlu0 %1751
  %v1753 = vsub.f32 %v1745, %v1749
  %v1754 = vsub.f32 %v1746, %v1752
  %v1755 = vmul.f32 %v1753, 1.442695
  %v1756 = vpow.pop %v1755
  %v1757 = vmul.f32 %v1754, 1.442695
  %v1758 = vpow.pop %v1757
  %v1759 = vsel %vm303, %v1756, 0.0
  %1760 = vadd.xlane.f32.xlu0 %v1759
  %v1761 = vpop.xlane.xlu0 %1760
  %v1762 = vsel %vm303, %v1758, 0.0
  %1763 = vadd.xlane.f32.xlu0 %v1762
  %v1764 = vpop.xlane.xlu0 %1763
  %v1765 = vrcp.pop %v1761
  %v1766 = vmul.f32 %v1756, %v1765
  %v1767 = vrcp.pop %v1764
  %v1768 = vmul.f32 %v1758, %v1767
  %1769 = vrot.lane.b32.xlu0 %v205, 40
  %v1770 = vpop.permute.xlu0 %1769
  %1771 = vrot.lane.b32.xlu0 %v208, 40
  %v1772 = vpop.permute.xlu0 %1771
  %v1776 = vsel %vm303, %v1766, 0
  %v1779 = vsel %vm303, %v1768, 0
  %1781 = vmatprep.subr.mxu0 0.0
  %1782 = vmatpush1.msra.mxu0 %v1770
  %1783 = vmatprep.subr.mxu0 0.0
  %1784 = vmatpush1.msra.mxu0 %v1772
  %1785 = vmatprep.subr.mxu0 0.0
  %1786 = vmatpush1.msra.mxu0 0.0
  %1787 = vmatprep.subr.mxu0 0.0
  %1788 = vmatpush1.msra.mxu0 0.0
  %1789 = vmatprep.subr.mxu0 0.0
  %1790 = vmatpush1.msra.mxu0 0.0
  %1791 = vmatprep.subr.mxu0 0.0
  %1792 = vmatpush1.msra.mxu0 0.0
  %1793 = vmatprep.subr.mxu0 0.0
  %1794 = vmatpush1.msra.mxu0 0.0
  %1795 = vmatprep.subr.mxu0 0.0
  %1796 = vmatpush1.msra.mxu0 0.0
  %1797 = vmatprep.subr.mxu0 0.0
  %1798 = vmatpush1.msra.mxu0 0.0
  %1799 = vmatprep.subr.mxu0 0.0
  %1800 = vmatpush1.msra.mxu0 0.0
  %1801 = vmatprep.subr.mxu0 0.0
  %1802 = vmatpush1.msra.mxu0 0.0
  %1803 = vmatprep.subr.mxu0 0.0
  %1804 = vmatpush1.msra.mxu0 0.0
  %1805 = vmatprep.subr.mxu0 0.0
  %1806 = vmatpush1.msra.mxu0 0.0
  %1807 = vmatprep.subr.mxu0 0.0
  %1808 = vmatpush1.msra.mxu0 0.0
  %1809 = vmatprep.subr.mxu0 0.0
  %1810 = vmatpush1.msra.mxu0 0.0
  %1811 = vmatprep.subr.mxu0 0.0
  %1812 = vmatpush1.msra.mxu0 0.0
  %1813 = vmatprep.subr.mxu0 0.0
  %1814 = vmatpush1.msra.mxu0 0.0
  %1815 = vmatprep.subr.mxu0 0.0
  %1816 = vmatpush1.msra.mxu0 0.0
  %1817 = vmatprep.subr.mxu0 0.0
  %1818 = vmatpush1.msra.mxu0 0.0
  %1819 = vmatprep.subr.mxu0 0.0
  %1820 = vmatpush1.msra.mxu0 0.0
  %1821 = vmatprep.subr.mxu0 0.0
  %1822 = vmatpush1.msra.mxu0 0.0
  %1823 = vmatprep.subr.mxu0 0.0
  %1824 = vmatpush1.msra.mxu0 0.0
  %1825 = vmatprep.subr.mxu0 0.0
  %1826 = vmatpush1.msra.mxu0 0.0
  %1827 = vmatprep.subr.mxu0 0.0
  %1828 = vmatpush1.msra.mxu0 0.0
  %1829 = vmatprep.subr.mxu0 0.0
  %1830 = vmatpush1.msra.mxu0 0.0
  %1831 = vmatprep.subr.mxu0 0.0
  %1832 = vmatpush1.msra.mxu0 0.0
  %1833 = vmatprep.subr.mxu0 0.0
  %1834 = vmatpush1.msra.mxu0 0.0
  %1835 = vmatprep.subr.mxu0 0.0
  %1836 = vmatpush1.msra.mxu0 0.0
  %1837 = vmatprep.subr.mxu0 0.0
  %1838 = vmatpush1.msra.mxu0 0.0
  %1839 = vmatprep.subr.mxu0 0.0
  %1840 = vmatpush1.msra.mxu0 0.0
  %1841 = vmatprep.subr.mxu0 0.0
  %1842 = vmatpush1.msra.mxu0 0.0
  %1843 = vmatprep.subr.mxu0 0.0
  %1844 = vmatpush1.msra.mxu0 0.0
  %1845 = vmatprep.mubr.f32.mxu0 0.0
  %1846 = vmatmul.mubr.f32.gmra.mrb[0].mxu0 %v1776
  %v1847 = vpop.f32.mrb[0].mxu0
  %v1848 = vadd.f32 0.0, %v1847
  %v1849 = vpop.f32.mrb[0].mxu0
  %1850 = vmatprep.mubr.f32.mxu0 0.0
  %1851 = vmatmul.mubr.f32.gmra.mrb[0].mxu0 %v1779
  %v1852 = vpop.f32.mrb[0].mxu0
  %v1853 = vadd.f32 0.0, %v1852
  %v1854 = vpop.f32.mrb[0].mxu0
  %1855 = vdwg.mxu0
  %1858 = vrot.lane.b32.xlu0 %v1444, 8
  %v1859 = vpop.permute.xlu0 %1858
  %1860 = vrot.lane.b32.xlu0 %v1449, 8
  %v1861 = vpop.permute.xlu0 %1860
  %1866 = vrot.lane.b32.xlu0 %v1646, 16
  %v1867 = vpop.permute.xlu0 %1866
  %1868 = vrot.lane.b32.xlu0 %v1651, 16
  %v1869 = vpop.permute.xlu0 %1868
  %1874 = vrot.lane.b32.xlu0 %v1848, 24
  %v1875 = vpop.permute.xlu0 %1874
  %1876 = vrot.lane.b32.xlu0 %v1853, 24
  %v1877 = vpop.permute.xlu0 %1876
  %v1880 = vsel %vm217, %v1242, %v1859
  %v1881 = vsel %vm217, %v1247, %v1861
  %v1882 = vsel %vm303, %v1880, %v1867
  %v1883 = vsel %vm303, %v1881, %v1869
  %v1884 = vsel %vm1047, %v1882, %v1875
  %v1885 = vsel %vm1047, %v1883, %v1877
  %v1886 = vpack.c.bf16 %v1049, %v1048
  %v1887 = vpack.c.bf16 %v1885, %v1884
  %v1888 = vld [vmem:[%s5] sm:$0xf]
  %v1889 = vld [vmem:[%s5 + $0x4] sm:$0xf]
  %v1890 = vld [vmem:[%s5 + $0x8] sm:$0xf]
  %v1891 = vld [vmem:[%s5 + $0xc] sm:$0xf]
  %v1892 = vld [vmem:[%s6] sm:$0x1]
  %v1894 = vlaneseq
  %v1895 = vshrl.u32 %v1894, 7
  %v1896 = vsub.s32 0, %v1895
  %v1897 = vrot.slane %v1892, %v1896
  %v1903 = vunpack.c.l.b16 %v1888
  %v1904 = vunpack.c.l.b16 %v1889
  %v1905 = vunpack.c.l.b16 %v1890
  %v1906 = vunpack.c.l.b16 %v1891
  %v1907 = vpack.c.b16 %v1904, %v1903
  %v1908 = vpack.c.b16 %v1906, %v1905
  %v1912 = vsel %vm57, %v1886, 0
  %v1915 = vsel %vm57, %v1887, 0
  %1917 = vmatprep.subr.bf16.mxu0 0
  %1918 = vmatpush1.bf16.msra.mxu0 %v1907
  %1919 = vmatprep.subr.bf16.mxu0 0
  %1920 = vmatpush1.bf16.msra.mxu0 %v1908
  %1921 = vmatprep.subr.bf16.mxu0 0
  %1922 = vmatpush1.bf16.msra.mxu0 0
  %1923 = vmatprep.subr.bf16.mxu0 0
  %1924 = vmatpush1.bf16.msra.mxu0 0
  %1925 = vmatprep.subr.bf16.mxu0 0
  %1926 = vmatpush1.bf16.msra.mxu0 0
  %1927 = vmatprep.subr.bf16.mxu0 0
  %1928 = vmatpush1.bf16.msra.mxu0 0
  %1929 = vmatprep.subr.bf16.mxu0 0
  %1930 = vmatpush1.bf16.msra.mxu0 0
  %1931 = vmatprep.subr.bf16.mxu0 0
  %1932 = vmatpush1.bf16.msra.mxu0 0
  %1933 = vmatprep.subr.bf16.mxu0 0
  %1934 = vmatpush1.bf16.msra.mxu0 0
  %1935 = vmatprep.subr.bf16.mxu0 0
  %1936 = vmatpush1.bf16.msra.mxu0 0
  %1937 = vmatprep.subr.bf16.mxu0 0
  %1938 = vmatpush1.bf16.msra.mxu0 0
  %1939 = vmatprep.subr.bf16.mxu0 0
  %1940 = vmatpush1.bf16.msra.mxu0 0
  %1941 = vmatprep.subr.bf16.mxu0 0
  %1942 = vmatpush1.bf16.msra.mxu0 0
  %1943 = vmatprep.subr.bf16.mxu0 0
  %1944 = vmatpush1.bf16.msra.mxu0 0
  %1945 = vmatprep.subr.bf16.mxu0 0
  %1946 = vmatpush1.bf16.msra.mxu0 0
  %1947 = vmatprep.subr.bf16.mxu0 0
  %1948 = vmatpush1.bf16.msra.mxu0 0
  %1949 = vmatprep.mubr.bf16.mxu0 0
  %1950 = vmatmul.mubr.bf16.gmra.mrb[0].mxu0 %v1912
  %v1951 = vpop.f32.mrb[0].mxu0
  %v1952 = vadd.f32 %v1897, %v1951
  %v1953 = vpop.f32.mrb[0].mxu0
  %v1954 = vpop.f32.mrb[0].mxu0
  %v1955 = vadd.f32 %v1897, %v1954
  %v1956 = vpop.f32.mrb[0].mxu0
  %1957 = vmatprep.mubr.bf16.mxu0 0
  %1958 = vmatmul.mubr.bf16.gmra.mrb[0].mxu0 %v1915
  %v1959 = vpop.f32.mrb[0].mxu0
  %v1960 = vadd.f32 %v1897, %v1959
  %v1961 = vpop.f32.mrb[0].mxu0
  %v1962 = vpop.f32.mrb[0].mxu0
  %v1963 = vadd.f32 %v1897, %v1962
  %v1964 = vpop.f32.mrb[0].mxu0
  %1965 = vdwg.mxu0
  %v1966 = vadd.f32 %v51, %v1952
  %v1967 = vadd.f32 %v52, %v1955
  %v1968 = vadd.f32 %v53, %v1960
  %v1969 = vadd.f32 %v54, %v1963
  %v1970 = vld [vmem:[%s7] sm:$0x1]
  %v1971 = vld [vmem:[%s8] sm:$0x1]
  %v1972 = vsel %vm57, %v1966, 0.0
  %1973 = vadd.xlane.f32.xlu0 %v1972
  %v1974 = vpop.xlane.xlu0 %1973
  %v1975 = vsel %vm57, %v1967, 0.0
  %1976 = vadd.xlane.f32.xlu0 %v1975
  %v1977 = vpop.xlane.xlu0 %1976
  %v1978 = vsel %vm57, %v1968, 0.0
  %1979 = vadd.xlane.f32.xlu0 %v1978
  %v1980 = vpop.xlane.xlu0 %1979
  %v1981 = vsel %vm57, %v1969, 0.0
  %1982 = vadd.xlane.f32.xlu0 %v1981
  %v1983 = vpop.xlane.xlu0 %1982
  %v1984 = vmul.f32 %v1974, %v70
  %v1985 = vmul.f32 %v1977, %v70
  %v1986 = vmul.f32 %v1980, %v70
  %v1987 = vmul.f32 %v1983, %v70
  %v1988 = vsub.f32 %v1966, %v1984
  %v1989 = vsub.f32 %v1967, %v1985
  %v1990 = vsub.f32 %v1968, %v1986
  %v1991 = vsub.f32 %v1969, %v1987
  %v1992 = vmul.f32 %v1988, %v1988
  %v1993 = vmul.f32 %v1989, %v1989
  %v1994 = vmul.f32 %v1990, %v1990
  %v1995 = vmul.f32 %v1991, %v1991
  %v1996 = vsel %vm57, %v1992, 0.0
  %1997 = vadd.xlane.f32.xlu0 %v1996
  %v1998 = vpop.xlane.xlu0 %1997
  %v1999 = vsel %vm57, %v1993, 0.0
  %2000 = vadd.xlane.f32.xlu0 %v1999
  %v2001 = vpop.xlane.xlu0 %2000
  %v2002 = vsel %vm57, %v1994, 0.0
  %2003 = vadd.xlane.f32.xlu0 %v2002
  %v2004 = vpop.xlane.xlu0 %2003
  %v2005 = vsel %vm57, %v1995, 0.0
  %2006 = vadd.xlane.f32.xlu0 %v2005
  %v2007 = vpop.xlane.xlu0 %2006
  %v2008 = vmul.f32 %v1998, %v70
  %v2009 = vmul.f32 %v2001, %v70
  %v2010 = vmul.f32 %v2004, %v70
  %v2011 = vmul.f32 %v2007, %v70
  %v2012 = vadd.f32 %v2008, 1e-06
  %v2013 = vadd.f32 %v2009, 1e-06
  %v2014 = vadd.f32 %v2010, 1e-06
  %v2015 = vadd.f32 %v2011, 1e-06
  %v2016 = vrsqrt.pop %v2012
  %v2017 = vrsqrt.pop %v2013
  %v2018 = vrsqrt.pop %v2014
  %v2019 = vrsqrt.pop %v2015
  %v2020 = vmul.f32 %v1988, %v2016
  %v2021 = vmul.f32 %v1989, %v2017
  %v2022 = vmul.f32 %v1990, %v2018
  %v2023 = vmul.f32 %v1991, %v2019
  %v2025 = vlaneseq
  %v2026 = vshrl.u32 %v2025, 7
  %v2027 = vsub.s32 0, %v2026
  %v2028 = vrot.slane %v1970, %v2027
  %v2030 = vmul.f32 %v2020, %v2028
  %v2031 = vmul.f32 %v2021, %v2028
  %v2032 = vmul.f32 %v2022, %v2028
  %v2033 = vmul.f32 %v2023, %v2028
  %v2035 = vlaneseq
  %v2036 = vshrl.u32 %v2035, 7
  %v2037 = vsub.s32 0, %v2036
  %v2038 = vrot.slane %v1971, %v2037
  %v2040 = vadd.f32 %v2030, %v2038
  %v2041 = vadd.f32 %v2031, %v2038
  %v2042 = vadd.f32 %v2032, %v2038
  %v2043 = vadd.f32 %v2033, %v2038
  %v2044 = vpack.c.bf16 %v2041, %v2040
  %v2045 = vpack.c.bf16 %v2043, %v2042
  %v2046 = vld [vmem:[%s9] sm:$0xf]
  %v2047 = vld [vmem:[%s9 + $0x4] sm:$0xf]
  %v2048 = vld [vmem:[%s9 + $0x8] sm:$0xf]
  %v2049 = vld [vmem:[%s9 + $0xc] sm:$0xf]
  %v2050 = vld [vmem:[%s10] sm:$0x1]
  %v2052 = vlaneseq
  %v2053 = vshrl.u32 %v2052, 7
  %v2054 = vsub.s32 0, %v2053
  %v2055 = vrot.slane %v2050, %v2054
  %v2061 = vunpack.c.l.b16 %v2046
  %v2062 = vunpack.c.l.b16 %v2047
  %v2063 = vunpack.c.l.b16 %v2048
  %v2064 = vunpack.c.l.b16 %v2049
  %v2065 = vpack.c.b16 %v2062, %v2061
  %v2066 = vpack.c.b16 %v2064, %v2063
  %v2070 = vsel %vm57, %v2044, 0
  %v2073 = vsel %vm57, %v2045, 0
  %2075 = vmatprep.subr.bf16.mxu0 0
  %2076 = vmatpush1.bf16.msra.mxu0 %v2065
  %2077 = vmatprep.subr.bf16.mxu0 0
  %2078 = vmatpush1.bf16.msra.mxu0 %v2066
  %2079 = vmatprep.subr.bf16.mxu0 0
  %2080 = vmatpush1.bf16.msra.mxu0 0
  %2081 = vmatprep.subr.bf16.mxu0 0
  %2082 = vmatpush1.bf16.msra.mxu0 0
  %2083 = vmatprep.subr.bf16.mxu0 0
  %2084 = vmatpush1.bf16.msra.mxu0 0
  %2085 = vmatprep.subr.bf16.mxu0 0
  %2086 = vmatpush1.bf16.msra.mxu0 0
  %2087 = vmatprep.subr.bf16.mxu0 0
  %2088 = vmatpush1.bf16.msra.mxu0 0
  %2089 = vmatprep.subr.bf16.mxu0 0
  %2090 = vmatpush1.bf16.msra.mxu0 0
  %2091 = vmatprep.subr.bf16.mxu0 0
  %2092 = vmatpush1.bf16.msra.mxu0 0
  %2093 = vmatprep.subr.bf16.mxu0 0
  %2094 = vmatpush1.bf16.msra.mxu0 0
  %2095 = vmatprep.subr.bf16.mxu0 0
  %2096 = vmatpush1.bf16.msra.mxu0 0
  %2097 = vmatprep.subr.bf16.mxu0 0
  %2098 = vmatpush1.bf16.msra.mxu0 0
  %2099 = vmatprep.subr.bf16.mxu0 0
  %2100 = vmatpush1.bf16.msra.mxu0 0
  %2101 = vmatprep.subr.bf16.mxu0 0
  %2102 = vmatpush1.bf16.msra.mxu0 0
  %2103 = vmatprep.subr.bf16.mxu0 0
  %2104 = vmatpush1.bf16.msra.mxu0 0
  %2105 = vmatprep.subr.bf16.mxu0 0
  %2106 = vmatpush1.bf16.msra.mxu0 0
  %2107 = vmatprep.mubr.bf16.mxu0 0
  %2108 = vmatmul.mubr.bf16.gmra.mrb[0].mxu0 %v2070
  %v2109 = vpop.f32.mrb[0].mxu0
  %v2110 = vadd.f32 %v2055, %v2109
  %v2111 = vpop.f32.mrb[0].mxu0
  %v2112 = vpop.f32.mrb[0].mxu0
  %v2113 = vadd.f32 %v2055, %v2112
  %v2114 = vpop.f32.mrb[0].mxu0
  %2115 = vmatprep.mubr.bf16.mxu0 0
  %2116 = vmatmul.mubr.bf16.gmra.mrb[0].mxu0 %v2073
  %v2117 = vpop.f32.mrb[0].mxu0
  %v2118 = vadd.f32 %v2055, %v2117
  %v2119 = vpop.f32.mrb[0].mxu0
  %v2120 = vpop.f32.mrb[0].mxu0
  %v2121 = vadd.f32 %v2055, %v2120
  %v2122 = vpop.f32.mrb[0].mxu0
  %2123 = vdwg.mxu0
  %v2124 = vmul.f32 %v2110, %v2110
  %v2125 = vmul.f32 %v2113, %v2113
  %v2126 = vmul.f32 %v2118, %v2118
  %v2127 = vmul.f32 %v2121, %v2121
  %v2128 = vmul.f32 %v2110, %v2124
  %v2129 = vmul.f32 %v2113, %v2125
  %v2130 = vmul.f32 %v2118, %v2126
  %v2131 = vmul.f32 %v2121, %v2127
  %v2132 = vmul.f32 %v2128, 0.044715
  %v2133 = vmul.f32 %v2129, 0.044715
  %v2134 = vmul.f32 %v2130, 0.044715
  %v2135 = vmul.f32 %v2131, 0.044715
  %v2136 = vadd.f32 %v2110, %v2132
  %v2137 = vadd.f32 %v2113, %v2133
  %v2138 = vadd.f32 %v2118, %v2134
  %v2139 = vadd.f32 %v2121, %v2135
  %v2140 = vmul.f32 %v2136, 0.7978846
  %v2141 = vmul.f32 %v2137, 0.7978846
  %v2142 = vmul.f32 %v2138, 0.7978846
  %v2143 = vmul.f32 %v2139, 0.7978846
  %v2144 = vtanh.pop %v2140
  %v2145 = vtanh.pop %v2141
  %v2146 = vtanh.pop %v2142
  %v2147 = vtanh.pop %v2143
  %v2148 = vadd.f32 %v2144, 1.0
  %v2149 = vadd.f32 %v2145, 1.0
  %v2150 = vadd.f32 %v2146, 1.0
  %v2151 = vadd.f32 %v2147, 1.0
  %v2152 = vmul.f32 %v2148, 0.5
  %v2153 = vmul.f32 %v2149, 0.5
  %v2154 = vmul.f32 %v2150, 0.5
  %v2155 = vmul.f32 %v2151, 0.5
  %v2156 = vmul.f32 %v2110, %v2152
  %v2157 = vmul.f32 %v2113, %v2153
  %v2158 = vmul.f32 %v2118, %v2154
  %v2159 = vmul.f32 %v2121, %v2155
  %v2160 = vpack.c.bf16 %v2157, %v2156
  %v2161 = vpack.c.bf16 %v2159, %v2158
  %v2162 = vld [vmem:[%s11] sm:$0xf]
  %v2163 = vld [vmem:[%s11 + $0x4] sm:$0xf]
  %v2164 = vld [vmem:[%s11 + $0x8] sm:$0xf]
  %v2165 = vld [vmem:[%s11 + $0xc] sm:$0xf]
  %v2166 = vld [vmem:[%s11 + $0x10] sm:$0xf]
  %v2167 = vld [vmem:[%s11 + $0x14] sm:$0xf]
  %v2168 = vld [vmem:[%s11 + $0x18] sm:$0xf]
  %v2169 = vld [vmem:[%s11 + $0x1c] sm:$0xf]
  %v2170 = vld [vmem:[%s12] sm:$0x1]
  %v2172 = vlaneseq
  %v2173 = vshrl.u32 %v2172, 7
  %v2174 = vsub.s32 0, %v2173
  %v2175 = vrot.slane %v2170, %v2174
  %v2185 = vunpack.c.l.b16 %v2162
  %v2186 = vunpack.c.l.b16 %v2163
  %v2187 = vunpack.c.l.b16 %v2164
  %v2188 = vunpack.c.l.b16 %v2165
  %v2189 = vunpack.c.l.b16 %v2166
  %v2190 = vunpack.c.l.b16 %v2167
  %v2191 = vunpack.c.l.b16 %v2168
  %v2192 = vunpack.c.l.b16 %v2169
  %v2193 = vpack.c.b16 %v2186, %v2185
  %v2194 = vpack.c.b16 %v2188, %v2187
  %v2195 = vpack.c.b16 %v2190, %v2189
  %v2196 = vpack.c.b16 %v2192, %v2191
  %vm2201 = vcmask 523264
  %v2203 = vsel %vm2201, %v2160, 0
  %v2206 = vsel %vm2201, %v2161, 0
  %2208 = vmatprep.subr.bf16.mxu0 0
  %2209 = vmatpush1.bf16.msra.mxu0 %v2193
  %2210 = vmatprep.subr.bf16.mxu0 0
  %2211 = vmatpush1.bf16.msra.mxu0 %v2194
  %2212 = vmatprep.subr.bf16.mxu0 0
  %2213 = vmatpush1.bf16.msra.mxu0 %v2195
  %2214 = vmatprep.subr.bf16.mxu0 0
  %2215 = vmatpush1.bf16.msra.mxu0 %v2196
  %2216 = vmatprep.subr.bf16.mxu0 0
  %2217 = vmatpush1.bf16.msra.mxu0 0
  %2218 = vmatprep.subr.bf16.mxu0 0
  %2219 = vmatpush1.bf16.msra.mxu0 0
  %2220 = vmatprep.subr.bf16.mxu0 0
  %2221 = vmatpush1.bf16.msra.mxu0 0
  %2222 = vmatprep.subr.bf16.mxu0 0
  %2223 = vmatpush1.bf16.msra.mxu0 0
  %2224 = vmatprep.subr.bf16.mxu0 0
  %2225 = vmatpush1.bf16.msra.mxu0 0
  %2226 = vmatprep.subr.bf16.mxu0 0
  %2227 = vmatpush1.bf16.msra.mxu0 0
  %2228 = vmatprep.subr.bf16.mxu0 0
  %2229 = vmatpush1.bf16.msra.mxu0 0
  %2230 = vmatprep.subr.bf16.mxu0 0
  %2231 = vmatpush1.bf16.msra.mxu0 0
  %2232 = vmatprep.subr.bf16.mxu0 0
  %2233 = vmatpush1.bf16.msra.mxu0 0
  %2234 = vmatprep.subr.bf16.mxu0 0
  %2235 = vmatpush1.bf16.msra.mxu0 0
  %2236 = vmatprep.subr.bf16.mxu0 0
  %2237 = vmatpush1.bf16.msra.mxu0 0
  %2238 = vmatprep.subr.bf16.mxu0 0
  %2239 = vmatpush1.bf16.msra.mxu0 0
  %2240 = vmatprep.mubr.bf16.mxu0 0
  %2241 = vmatmul.mubr.bf16.gmra.mrb[0].mxu0 %v2203
  %v2242 = vpop.f32.mrb[0].mxu0
  %v2243 = vadd.f32 %v2175, %v2242
  %v2244 = vpop.f32.mrb[0].mxu0
  %v2245 = vpop.f32.mrb[0].mxu0
  %v2246 = vadd.f32 %v2175, %v2245
  %v2247 = vpop.f32.mrb[0].mxu0
  %2248 = vmatprep.mubr.bf16.mxu0 0
  %2249 = vmatmul.mubr.bf16.gmra.mrb[0].mxu0 %v2206
  %v2250 = vpop.f32.mrb[0].mxu0
  %v2251 = vadd.f32 %v2175, %v2250
  %v2252 = vpop.f32.mrb[0].mxu0
  %v2253 = vpop.f32.mrb[0].mxu0
  %v2254 = vadd.f32 %v2175, %v2253
  %v2255 = vpop.f32.mrb[0].mxu0
  %2256 = vdwg.mxu0
  %v2257 = vadd.f32 %v1966, %v2243
  %v2258 = vadd.f32 %v1967, %v2246
  %v2259 = vadd.f32 %v1968, %v2251
  %v2260 = vadd.f32 %v1969, %v2254
  %v2261 = vld [vmem:[%s13] sm:$0x1]
  %v2262 = vld [vmem:[%s14] sm:$0x1]
  %v2263 = vsel %vm57, %v2257, 0.0
  %2264 = vadd.xlane.f32.xlu0 %v2263
  %v2265 = vpop.xlane.xlu0 %2264
  %v2266 = vsel %vm57, %v2258, 0.0
  %2267 = vadd.xlane.f32.xlu0 %v2266
  %v2268 = vpop.xlane.xlu0 %2267
  %v2269 = vsel %vm57, %v2259, 0.0
  %2270 = vadd.xlane.f32.xlu0 %v2269
  %v2271 = vpop.xlane.xlu0 %2270
  %v2272 = vsel %vm57, %v2260, 0.0
  %2273 = vadd.xlane.f32.xlu0 %v2272
  %v2274 = vpop.xlane.xlu0 %2273
  %v2275 = vmul.f32 %v2265, %v70
  %v2276 = vmul.f32 %v2268, %v70
  %v2277 = vmul.f32 %v2271, %v70
  %v2278 = vmul.f32 %v2274, %v70
  %v2279 = vsub.f32 %v2257, %v2275
  %v2280 = vsub.f32 %v2258, %v2276
  %v2281 = vsub.f32 %v2259, %v2277
  %v2282 = vsub.f32 %v2260, %v2278
  %v2283 = vmul.f32 %v2279, %v2279
  %v2284 = vmul.f32 %v2280, %v2280
  %v2285 = vmul.f32 %v2281, %v2281
  %v2286 = vmul.f32 %v2282, %v2282
  %v2287 = vsel %vm57, %v2283, 0.0
  %2288 = vadd.xlane.f32.xlu0 %v2287
  %v2289 = vpop.xlane.xlu0 %2288
  %v2290 = vsel %vm57, %v2284, 0.0
  %2291 = vadd.xlane.f32.xlu0 %v2290
  %v2292 = vpop.xlane.xlu0 %2291
  %v2293 = vsel %vm57, %v2285, 0.0
  %2294 = vadd.xlane.f32.xlu0 %v2293
  %v2295 = vpop.xlane.xlu0 %2294
  %v2296 = vsel %vm57, %v2286, 0.0
  %2297 = vadd.xlane.f32.xlu0 %v2296
  %v2298 = vpop.xlane.xlu0 %2297
  %v2299 = vmul.f32 %v2289, %v70
  %v2300 = vmul.f32 %v2292, %v70
  %v2301 = vmul.f32 %v2295, %v70
  %v2302 = vmul.f32 %v2298, %v70
  %v2303 = vadd.f32 %v2299, 1e-06
  %v2304 = vadd.f32 %v2300, 1e-06
  %v2305 = vadd.f32 %v2301, 1e-06
  %v2306 = vadd.f32 %v2302, 1e-06
  %v2307 = vrsqrt.pop %v2303
  %v2308 = vrsqrt.pop %v2304
  %v2309 = vrsqrt.pop %v2305
  %v2310 = vrsqrt.pop %v2306
  %v2311 = vmul.f32 %v2279, %v2307
  %v2312 = vmul.f32 %v2280, %v2308
  %v2313 = vmul.f32 %v2281, %v2309
  %v2314 = vmul.f32 %v2282, %v2310
  %v2316 = vlaneseq
  %v2317 = vshrl.u32 %v2316, 7
  %v2318 = vsub.s32 0, %v2317
  %v2319 = vrot.slane %v2261, %v2318
  %v2321 = vmul.f32 %v2311, %v2319
  %v2322 = vmul.f32 %v2312, %v2319
  %v2323 = vmul.f32 %v2313, %v2319
  %v2324 = vmul.f32 %v2314, %v2319
  %v2326 = vlaneseq
  %v2327 = vshrl.u32 %v2326, 7
  %v2328 = vsub.s32 0, %v2327
  %v2329 = vrot.slane %v2262, %v2328
  %v2331 = vadd.f32 %v2321, %v2329
  %v2332 = vadd.f32 %v2322, %v2329
  %v2333 = vadd.f32 %v2323, %v2329
  %v2334 = vadd.f32 %v2324, %v2329
  %2335 = vst.msk [vmem:[%s15] sm:$0xff] %vm57, %v2331
  %2336 = vst.msk [vmem:[%s15 + $0x8] sm:$0xff] %vm57, %v2332
  %2337 = vst.msk [vmem:[%s15 + $0x10] sm:$0xff] %vm57, %v2333
  %2338 = vst.msk [vmem:[%s15 + $0x18] sm:$0xff] %vm57, %v2334
  // Predicated region
  $region62: #{vision_transformer_forward.15} parent=0 // pred_check
    _
  $region63: #{vision_transformer_forward.15} parent=0 // pred_check_branch
    %2340 = sbr.rel (0) target = $region65
  $region64: #{vision_transformer_forward.15} parent=0 // pred_region
    _
  $region65: #{vision_transformer_forward.15} parent=0 // pred_fallthru
    _
  // Predicated region
  $region66: #{vision_transformer_forward.15} parent=0 // pred_check
    _
  $region67: #{vision_transformer_forward.15} parent=0 // pred_check_branch
    %2342 = sbr.rel (0) target = $region69
  $region68: #{vision_transformer_forward.15} parent=0 // pred_region
    _
  $region69: #{vision_transformer_forward.15} parent=0 // pred_fallthru
    _

// kernel: vision_transformer_forward.17
$region0: #{vision_transformer_forward.17}
  #allocation0 [shape = 'u32[]', space=smem, size = 0x4, offset = 0x4, fixed_abs, tag = 'smem constant byte address 0x4 - core index']
  #allocation1 [shape = 'u32[144,128]{1,0:T(1,128)}', space=vmem, size = 0x12000, scoped, tag = 'internal scratch']
  %s0 = inlined_call_operand.vmem [shape: f32[128,144], index: 0, kind: input, shape index: {}]
  %s1 = inlined_call_operand.vmem [shape: bf16[144,16], index: 1, kind: input, shape index: {}]
  %s2 = inlined_call_operand.vmem [shape: f32[1,16], index: 2, kind: input, shape index: {}]
  %s3 = inlined_call_operand.vmem [shape: f32[128,16], index: 3, kind: output, shape index: {}]
  %s4 = sld [smem:[#allocation0]]
  $region22: #{vision_transformer_forward.17} parent=0
    _
  %s6 = ssub.s32 1, %s4
  %s7 = scalar_select 0, %s6, %s4
  // Predicated region
  $region2: #{vision_transformer_forward.17} parent=0 // pred_check
    _
  $region3: #{vision_transformer_forward.17} parent=0 // pred_check_branch
    %9 = sbr.rel (0) target = $region5
  $region4: #{vision_transformer_forward.17} parent=0 // pred_region
    _
  $region5: #{vision_transformer_forward.17} parent=0 // pred_fallthru
    _
  // Predicated region
  $region6: #{vision_transformer_forward.17} parent=0 // pred_check
    _
  $region7: #{vision_transformer_forward.17} parent=0 // pred_check_branch
    %11 = sbr.rel (0) target = $region9
  $region8: #{vision_transformer_forward.17} parent=0 // pred_region
    _
  $region9: #{vision_transformer_forward.17} parent=0 // pred_fallthru
    _
  // Predicated region
  $region10: #{vision_transformer_forward.17} parent=0 // pred_check
    _
  $region11: #{vision_transformer_forward.17} parent=0 // pred_check_branch
    %13 = sbr.rel (0) target = $region13
  $region12: #{vision_transformer_forward.17} parent=0 // pred_region
    _
  $region13: #{vision_transformer_forward.17} parent=0 // pred_fallthru
    _
  %v15 = vld [vmem:[%s0] sm:$0xff]
  %v16 = vld [vmem:[%s0 + $0x8] sm:$0xff]
  %v17 = vld [vmem:[%s0 + $0x10] sm:$0xff]
  %v18 = vld [vmem:[%s0 + $0x18] sm:$0xff]
  %v19 = vld [vmem:[%s0 + $0x20] sm:$0xff]
  %v20 = vld [vmem:[%s0 + $0x28] sm:$0xff]
  %v21 = vld [vmem:[%s0 + $0x30] sm:$0xff]
  %v22 = vld [vmem:[%s0 + $0x38] sm:$0xff]
  %v23 = vld [vmem:[%s0 + $0x40] sm:$0xff]
  %v24 = vld [vmem:[%s0 + $0x48] sm:$0xff]
  %v25 = vld [vmem:[%s0 + $0x50] sm:$0xff]
  %v26 = vld [vmem:[%s0 + $0x58] sm:$0xff]
  %v27 = vld [vmem:[%s0 + $0x60] sm:$0xff]
  %v28 = vld [vmem:[%s0 + $0x68] sm:$0xff]
  %v29 = vld [vmem:[%s0 + $0x70] sm:$0xff]
  %v30 = vld [vmem:[%s0 + $0x78] sm:$0xff]
  %v31 = vld [vmem:[%s0 + $0x80] sm:$0xff]
  %v32 = vld [vmem:[%s0 + $0x88] sm:$0xff]
  %v33 = vld [vmem:[%s0 + $0x90] sm:$0xff]
  %v34 = vld [vmem:[%s0 + $0x98] sm:$0xff]
  %v35 = vld [vmem:[%s0 + $0xa0] sm:$0xff]
  %v36 = vld [vmem:[%s0 + $0xa8] sm:$0xff]
  %v37 = vld [vmem:[%s0 + $0xb0] sm:$0xff]
  %v38 = vld [vmem:[%s0 + $0xb8] sm:$0xff]
  %v39 = vld [vmem:[%s0 + $0xc0] sm:$0xff]
  %v40 = vld [vmem:[%s0 + $0xc8] sm:$0xff]
  %v41 = vld [vmem:[%s0 + $0xd0] sm:$0xff]
  %v42 = vld [vmem:[%s0 + $0xd8] sm:$0xff]
  %v43 = vld [vmem:[%s0 + $0xe0] sm:$0xff]
  %v44 = vld [vmem:[%s0 + $0xe8] sm:$0xff]
  %v45 = vld [vmem:[%s0 + $0xf0] sm:$0xff]
  %v46 = vld [vmem:[%s0 + $0xf8] sm:$0xff]
  %v47 = vpack.c.bf16 %v17, %v15
  %v48 = vpack.c.bf16 %v18, %v16
  %v49 = vpack.c.bf16 %v21, %v19
  %v50 = vpack.c.bf16 %v22, %v20
  %v51 = vpack.c.bf16 %v25, %v23
  %v52 = vpack.c.bf16 %v26, %v24
  %v53 = vpack.c.bf16 %v29, %v27
  %v54 = vpack.c.bf16 %v30, %v28
  %v55 = vpack.c.bf16 %v33, %v31
  %v56 = vpack.c.bf16 %v34, %v32
  %v57 = vpack.c.bf16 %v37, %v35
  %v58 = vpack.c.bf16 %v38, %v36
  %v59 = vpack.c.bf16 %v41, %v39
  %v60 = vpack.c.bf16 %v42, %v40
  %v61 = vpack.c.bf16 %v45, %v43
  %v62 = vpack.c.bf16 %v46, %v44
  %v63 = vld [vmem:[%s1] sm:$0xf]
  %v64 = vld [vmem:[%s1 + $0x4] sm:$0xf]
  %v65 = vld [vmem:[%s1 + $0x8] sm:$0xf]
  %v66 = vld [vmem:[%s1 + $0xc] sm:$0xf]
  %v67 = vld [vmem:[%s1 + $0x10] sm:$0xf]
  %v68 = vld [vmem:[%s1 + $0x14] sm:$0xf]
  %v69 = vld [vmem:[%s1 + $0x18] sm:$0xf]
  %v70 = vld [vmem:[%s1 + $0x1c] sm:$0xf]
  %v71 = vld [vmem:[%s1 + $0x20] sm:$0xf]
  %v72 = vld [vmem:[%s1 + $0x24] sm:$0xf]
  %v73 = vld [vmem:[%s1 + $0x28] sm:$0xf]
  %v74 = vld [vmem:[%s1 + $0x2c] sm:$0xf]
  %v75 = vld [vmem:[%s1 + $0x30] sm:$0xf]
  %v76 = vld [vmem:[%s1 + $0x34] sm:$0xf]
  %v77 = vld [vmem:[%s1 + $0x38] sm:$0xf]
  %v78 = vld [vmem:[%s1 + $0x3c] sm:$0xf]
  %v79 = vld [vmem:[%s1 + $0x40] sm:$0xf]
  %v80 = vld [vmem:[%s1 + $0x44] sm:$0xf]
  %v81 = vld [vmem:[%s2] sm:$0x1]
  %v83 = vlaneseq
  %v84 = vshrl.u32 %v83, 7
  %v85 = vsub.s32 0, %v84
  %v86 = vrot.slane %v81, %v85
  %v106 = vunpack.c.l.b16 %v63
  %v107 = vunpack.c.l.b16 %v64
  %v108 = vunpack.c.l.b16 %v65
  %v109 = vunpack.c.l.b16 %v66
  %v110 = vunpack.c.l.b16 %v67
  %v111 = vunpack.c.l.b16 %v68
  %v112 = vunpack.c.l.b16 %v69
  %v113 = vunpack.c.l.b16 %v70
  %v114 = vunpack.c.l.b16 %v71
  %v115 = vunpack.c.l.b16 %v72
  %v116 = vunpack.c.l.b16 %v73
  %v117 = vunpack.c.l.b16 %v74
  %v118 = vunpack.c.l.b16 %v75
  %v119 = vunpack.c.l.b16 %v76
  %v120 = vunpack.c.l.b16 %v77
  %v121 = vunpack.c.l.b16 %v78
  %v122 = vunpack.c.l.b16 %v79
  %v123 = vunpack.c.l.b16 %v80
  %v124 = vpack.c.b16 %v107, %v106
  %v125 = vpack.c.b16 %v109, %v108
  %v126 = vpack.c.b16 %v111, %v110
  %v127 = vpack.c.b16 %v113, %v112
  %v128 = vpack.c.b16 %v115, %v114
  %v129 = vpack.c.b16 %v117, %v116
  %v130 = vpack.c.b16 %v119, %v118
  %v131 = vpack.c.b16 %v121, %v120
  %v132 = vpack.c.b16 %v123, %v122
  %vm142 = vcmask 130048
  %v144 = vsel %vm142, %v48, 0
  %v147 = vsel %vm142, %v50, 0
  %v150 = vsel %vm142, %v52, 0
  %v153 = vsel %vm142, %v54, 0
  %v156 = vsel %vm142, %v56, 0
  %v159 = vsel %vm142, %v58, 0
  %v162 = vsel %vm142, %v60, 0
  %v165 = vsel %vm142, %v62, 0
  %167 = vmatprep.subr.bf16.mxu0 0
  %168 = vmatpush1.bf16.msra.mxu0 %v124
  %169 = vmatprep.subr.bf16.mxu0 0
  %170 = vmatpush1.bf16.msra.mxu0 %v125
  %171 = vmatprep.subr.bf16.mxu0 0
  %172 = vmatpush1.bf16.msra.mxu0 %v126
  %173 = vmatprep.subr.bf16.mxu0 0
  %174 = vmatpush1.bf16.msra.mxu0 %v127
  %175 = vmatprep.subr.bf16.mxu0 0
  %176 = vmatpush1.bf16.msra.mxu0 %v128
  %177 = vmatprep.subr.bf16.mxu0 0
  %178 = vmatpush1.bf16.msra.mxu0 %v129
  %179 = vmatprep.subr.bf16.mxu0 0
  %180 = vmatpush1.bf16.msra.mxu0 %v130
  %181 = vmatprep.subr.bf16.mxu0 0
  %182 = vmatpush1.bf16.msra.mxu0 %v131
  %183 = vmatprep.subr.bf16.mxu0 0
  %184 = vmatpush1.bf16.msra.mxu0 %v132
  %185 = vmatprep.subr.bf16.mxu0 0
  %186 = vmatpush1.bf16.msra.mxu0 0
  %187 = vmatprep.subr.bf16.mxu0 0
  %188 = vmatpush1.bf16.msra.mxu0 0
  %189 = vmatprep.subr.bf16.mxu0 0
  %190 = vmatpush1.bf16.msra.mxu0 0
  %191 = vmatprep.subr.bf16.mxu0 0
  %192 = vmatpush1.bf16.msra.mxu0 0
  %193 = vmatprep.subr.bf16.mxu0 0
  %194 = vmatpush1.bf16.msra.mxu0 0
  %195 = vmatprep.subr.bf16.mxu0 0
  %196 = vmatpush1.bf16.msra.mxu0 0
  %197 = vmatprep.subr.bf16.mxu0 0
  %198 = vmatpush1.bf16.msra.mxu0 0
  %199 = vmatprep.mubr.bf16.mxu0 %v144
  %200 = vmatmul.mubr.bf16.gmra.mrb[0].mxu0 %v47
  %v201 = vpop.f32.mrb[0].mxu0
  %v202 = vadd.f32 %v86, %v201
  %v203 = vpop.f32.mrb[0].mxu0
  %v204 = vpop.f32.mrb[0].mxu0
  %v205 = vadd.f32 %v86, %v204
  %v206 = vpop.f32.mrb[0].mxu0
  %207 = vmatprep.mubr.bf16.mxu0 %v147
  %208 = vmatmul.mubr.bf16.gmra.mrb[0].mxu0 %v49
  %v209 = vpop.f32.mrb[0].mxu0
  %v210 = vadd.f32 %v86, %v209
  %v211 = vpop.f32.mrb[0].mxu0
  %v212 = vpop.f32.mrb[0].mxu0
  %v213 = vadd.f32 %v86, %v212
  %v214 = vpop.f32.mrb[0].mxu0
  %215 = vmatprep.mubr.bf16.mxu0 %v150
  %216 = vmatmul.mubr.bf16.gmra.mrb[0].mxu0 %v51
  %v217 = vpop.f32.mrb[0].mxu0
  %v218 = vadd.f32 %v86, %v217
  %v219 = vpop.f32.mrb[0].mxu0
  %v220 = vpop.f32.mrb[0].mxu0
  %v221 = vadd.f32 %v86, %v220
  %v222 = vpop.f32.mrb[0].mxu0
  %223 = vmatprep.mubr.bf16.mxu0 %v153
  %224 = vmatmul.mubr.bf16.gmra.mrb[0].mxu0 %v53
  %v225 = vpop.f32.mrb[0].mxu0
  %v226 = vadd.f32 %v86, %v225
  %v227 = vpop.f32.mrb[0].mxu0
  %v228 = vpop.f32.mrb[0].mxu0
  %v229 = vadd.f32 %v86, %v228
  %v230 = vpop.f32.mrb[0].mxu0
  %231 = vmatprep.mubr.bf16.mxu0 %v156
  %232 = vmatmul.mubr.bf16.gmra.mrb[0].mxu0 %v55
  %v233 = vpop.f32.mrb[0].mxu0
  %v234 = vadd.f32 %v86, %v233
  %v235 = vpop.f32.mrb[0].mxu0
  %v236 = vpop.f32.mrb[0].mxu0
  %v237 = vadd.f32 %v86, %v236
  %v238 = vpop.f32.mrb[0].mxu0
  %239 = vmatprep.mubr.bf16.mxu0 %v159
  %240 = vmatmul.mubr.bf16.gmra.mrb[0].mxu0 %v57
  %v241 = vpop.f32.mrb[0].mxu0
  %v242 = vadd.f32 %v86, %v241
  %v243 = vpop.f32.mrb[0].mxu0
  %v244 = vpop.f32.mrb[0].mxu0
  %v245 = vadd.f32 %v86, %v244
  %v246 = vpop.f32.mrb[0].mxu0
  %247 = vmatprep.mubr.bf16.mxu0 %v162
  %248 = vmatmul.mubr.bf16.gmra.mrb[0].mxu0 %v59
  %v249 = vpop.f32.mrb[0].mxu0
  %v250 = vadd.f32 %v86, %v249
  %v251 = vpop.f32.mrb[0].mxu0
  %v252 = vpop.f32.mrb[0].mxu0
  %v253 = vadd.f32 %v86, %v252
  %v254 = vpop.f32.mrb[0].mxu0
  %255 = vmatprep.mubr.bf16.mxu0 %v165
  %256 = vmatmul.mubr.bf16.gmra.mrb[0].mxu0 %v61
  %v257 = vpop.f32.mrb[0].mxu0
  %v258 = vadd.f32 %v86, %v257
  %v259 = vpop.f32.mrb[0].mxu0
  %v260 = vpop.f32.mrb[0].mxu0
  %v261 = vadd.f32 %v86, %v260
  %v262 = vpop.f32.mrb[0].mxu0
  %263 = vdwg.mxu0
  %v264 = vmax.f32 %v202, 0.0
  %v265 = vmax.f32 %v205, 0.0
  %v266 = vmax.f32 %v210, 0.0
  %v267 = vmax.f32 %v213, 0.0
  %v268 = vmax.f32 %v218, 0.0
  %v269 = vmax.f32 %v221, 0.0
  %v270 = vmax.f32 %v226, 0.0
  %v271 = vmax.f32 %v229, 0.0
  %v272 = vmax.f32 %v234, 0.0
  %v273 = vmax.f32 %v237, 0.0
  %v274 = vmax.f32 %v242, 0.0
  %v275 = vmax.f32 %v245, 0.0
  %v276 = vmax.f32 %v250, 0.0
  %v277 = vmax.f32 %v253, 0.0
  %v278 = vmax.f32 %v258, 0.0
  %v279 = vmax.f32 %v261, 0.0
  %280 = vst.msk [vmem:[%s3] sm:$0xff] %vm142, %v264
  %281 = vst.msk [vmem:[%s3 + $0x8] sm:$0xff] %vm142, %v265
  %282 = vst.msk [vmem:[%s3 + $0x10] sm:$0xff] %vm142, %v266
  %283 = vst.msk [vmem:[%s3 + $0x18] sm:$0xff] %vm142, %v267
  %284 = vst.msk [vmem:[%s3 + $0x20] sm:$0xff] %vm142, %v268
  %285 = vst.msk [vmem:[%s3 + $0x28] sm:$0xff] %vm142, %v269
  %286 = vst.msk [vmem:[%s3 + $0x30] sm:$0xff] %vm142, %v270
  %287 = vst.msk [vmem:[%s3 + $0x38] sm:$0xff] %vm142, %v271
  %288 = vst.msk [vmem:[%s3 + $0x40] sm:$0xff] %vm142, %v272
  %289 = vst.msk [vmem:[%s3 + $0x48] sm:$0xff] %vm142, %v273
  %290 = vst.msk [vmem:[%s3 + $0x50] sm:$0xff] %vm142, %v274
  %291 = vst.msk [vmem:[%s3 + $0x58] sm:$0xff] %vm142, %v275
  %292 = vst.msk [vmem:[%s3 + $0x60] sm:$0xff] %vm142, %v276
  %293 = vst.msk [vmem:[%s3 + $0x68] sm:$0xff] %vm142, %v277
  %294 = vst.msk [vmem:[%s3 + $0x70] sm:$0xff] %vm142, %v278
  %295 = vst.msk [vmem:[%s3 + $0x78] sm:$0xff] %vm142, %v279
  // Predicated region
  $region14: #{vision_transformer_forward.17} parent=0 // pred_check
    _
  $region15: #{vision_transformer_forward.17} parent=0 // pred_check_branch
    %297 = sbr.rel (0) target = $region17
  $region16: #{vision_transformer_forward.17} parent=0 // pred_region
    _
  $region17: #{vision_transformer_forward.17} parent=0 // pred_fallthru
    _
  // Predicated region
  $region18: #{vision_transformer_forward.17} parent=0 // pred_check
    _
  $region19: #{vision_transformer_forward.17} parent=0 // pred_check_branch
    %299 = sbr.rel (0) target = $region21
  $region20: #{vision_transformer_forward.17} parent=0 // pred_region
    _
  $region21: #{vision_transformer_forward.17} parent=0 // pred_fallthru
    _

// kernel: vision_transformer_forward.18
$region0: #{vision_transformer_forward.18}
  #allocation0 [shape = 'u32[]', space=smem, size = 0x4, offset = 0x4, fixed_abs, tag = 'smem constant byte address 0x4 - core index']
  #allocation1 [shape = 'u32[144,128]{1,0:T(1,128)}', space=vmem, size = 0x12000, scoped, tag = 'internal scratch']
  %s0 = inlined_call_operand.vmem [shape: f32[512,216], index: 0, kind: input, shape index: {}]
  %s1 = inlined_call_operand.vmem [shape: bf16[216,8], index: 1, kind: input, shape index: {}]
  %s2 = inlined_call_operand.vmem [shape: f32[1,8], index: 2, kind: input, shape index: {}]
  %s3 = inlined_call_operand.vmem [shape: f32[512,8], index: 3, kind: output, shape index: {}]
  %s4 = sld [smem:[#allocation0]]
  $region22: #{vision_transformer_forward.18} parent=0
    _
  %s6 = ssub.s32 1, %s4
  %s7 = scalar_select 0, %s6, %s4
  // Predicated region
  $region2: #{vision_transformer_forward.18} parent=0 // pred_check
    _
  $region3: #{vision_transformer_forward.18} parent=0 // pred_check_branch
    %9 = sbr.rel (0) target = $region5
  $region4: #{vision_transformer_forward.18} parent=0 // pred_region
    _
  $region5: #{vision_transformer_forward.18} parent=0 // pred_fallthru
    _
  // Predicated region
  $region6: #{vision_transformer_forward.18} parent=0 // pred_check
    _
  $region7: #{vision_transformer_forward.18} parent=0 // pred_check_branch
    %11 = sbr.rel (0) target = $region9
  $region8: #{vision_transformer_forward.18} parent=0 // pred_region
    _
  $region9: #{vision_transformer_forward.18} parent=0 // pred_fallthru
    _
  // Predicated region
  $region10: #{vision_transformer_forward.18} parent=0 // pred_check
    _
  $region11: #{vision_transformer_forward.18} parent=0 // pred_check_branch
    %13 = sbr.rel (0) target = $region13
  $region12: #{vision_transformer_forward.18} parent=0 // pred_region
    _
  $region13: #{vision_transformer_forward.18} parent=0 // pred_fallthru
    _
  %v15 = vld [vmem:[%s0] sm:$0xff]
  %v16 = vld [vmem:[%s0 + $0x8] sm:$0xff]
  %v17 = vld [vmem:[%s0 + $0x10] sm:$0xff]
  %v18 = vld [vmem:[%s0 + $0x18] sm:$0xff]
  %v19 = vld [vmem:[%s0 + $0x20] sm:$0xff]
  %v20 = vld [vmem:[%s0 + $0x28] sm:$0xff]
  %v21 = vld [vmem:[%s0 + $0x30] sm:$0xff]
  %v22 = vld [vmem:[%s0 + $0x38] sm:$0xff]
  %v23 = vld [vmem:[%s0 + $0x40] sm:$0xff]
  %v24 = vld [vmem:[%s0 + $0x48] sm:$0xff]
  %v25 = vld [vmem:[%s0 + $0x50] sm:$0xff]
  %v26 = vld [vmem:[%s0 + $0x58] sm:$0xff]
  %v27 = vld [vmem:[%s0 + $0x60] sm:$0xff]
  %v28 = vld [vmem:[%s0 + $0x68] sm:$0xff]
  %v29 = vld [vmem:[%s0 + $0x70] sm:$0xff]
  %v30 = vld [vmem:[%s0 + $0x78] sm:$0xff]
  %v31 = vld [vmem:[%s0 + $0x80] sm:$0xff]
  %v32 = vld [vmem:[%s0 + $0x88] sm:$0xff]
  %v33 = vld [vmem:[%s0 + $0x90] sm:$0xff]
  %v34 = vld [vmem:[%s0 + $0x98] sm:$0xff]
  %v35 = vld [vmem:[%s0 + $0xa0] sm:$0xff]
  %v36 = vld [vmem:[%s0 + $0xa8] sm:$0xff]
  %v37 = vld [vmem:[%s0 + $0xb0] sm:$0xff]
  %v38 = vld [vmem:[%s0 + $0xb8] sm:$0xff]
  %v39 = vld [vmem:[%s0 + $0xc0] sm:$0xff]
  %v40 = vld [vmem:[%s0 + $0xc8] sm:$0xff]
  %v41 = vld [vmem:[%s0 + $0xd0] sm:$0xff]
  %v42 = vld [vmem:[%s0 + $0xd8] sm:$0xff]
  %v43 = vld [vmem:[%s0 + $0xe0] sm:$0xff]
  %v44 = vld [vmem:[%s0 + $0xe8] sm:$0xff]
  %v45 = vld [vmem:[%s0 + $0xf0] sm:$0xff]
  %v46 = vld [vmem:[%s0 + $0xf8] sm:$0xff]
  %v47 = vld [vmem:[%s0 + $0x100] sm:$0xff]
  %v48 = vld [vmem:[%s0 + $0x108] sm:$0xff]
  %v49 = vld [vmem:[%s0 + $0x110] sm:$0xff]
  %v50 = vld [vmem:[%s0 + $0x118] sm:$0xff]
  %v51 = vld [vmem:[%s0 + $0x120] sm:$0xff]
  %v52 = vld [vmem:[%s0 + $0x128] sm:$0xff]
  %v53 = vld [vmem:[%s0 + $0x130] sm:$0xff]
  %v54 = vld [vmem:[%s0 + $0x138] sm:$0xff]
  %v55 = vld [vmem:[%s0 + $0x140] sm:$0xff]
  %v56 = vld [vmem:[%s0 + $0x148] sm:$0xff]
  %v57 = vld [vmem:[%s0 + $0x150] sm:$0xff]
  %v58 = vld [vmem:[%s0 + $0x158] sm:$0xff]
  %v59 = vld [vmem:[%s0 + $0x160] sm:$0xff]
  %v60 = vld [vmem:[%s0 + $0x168] sm:$0xff]
  %v61 = vld [vmem:[%s0 + $0x170] sm:$0xff]
  %v62 = vld [vmem:[%s0 + $0x178] sm:$0xff]
  %v63 = vld [vmem:[%s0 + $0x180] sm:$0xff]
  %v64 = vld [vmem:[%s0 + $0x188] sm:$0xff]
  %v65 = vld [vmem:[%s0 + $0x190] sm:$0xff]
  %v66 = vld [vmem:[%s0 + $0x198] sm:$0xff]
  %v67 = vld [vmem:[%s0 + $0x1a0] sm:$0xff]
  %v68 = vld [vmem:[%s0 + $0x1a8] sm:$0xff]
  %v69 = vld [vmem:[%s0 + $0x1b0] sm:$0xff]
  %v70 = vld [vmem:[%s0 + $0x1b8] sm:$0xff]
  %v71 = vld [vmem:[%s0 + $0x1c0] sm:$0xff]
  %v72 = vld [vmem:[%s0 + $0x1c8] sm:$0xff]
  %v73 = vld [vmem:[%s0 + $0x1d0] sm:$0xff]
  %v74 = vld [vmem:[%s0 + $0x1d8] sm:$0xff]
  %v75 = vld [vmem:[%s0 + $0x1e0] sm:$0xff]
  %v76 = vld [vmem:[%s0 + $0x1e8] sm:$0xff]
  %v77 = vld [vmem:[%s0 + $0x1f0] sm:$0xff]
  %v78 = vld [vmem:[%s0 + $0x1f8] sm:$0xff]
  %v79 = vld [vmem:[%s0 + $0x200] sm:$0xff]
  %v80 = vld [vmem:[%s0 + $0x208] sm:$0xff]
  %v81 = vld [vmem:[%s0 + $0x210] sm:$0xff]
  %v82 = vld [vmem:[%s0 + $0x218] sm:$0xff]
  %v83 = vld [vmem:[%s0 + $0x220] sm:$0xff]
  %v84 = vld [vmem:[%s0 + $0x228] sm:$0xff]
  %v85 = vld [vmem:[%s0 + $0x230] sm:$0xff]
  %v86 = vld [vmem:[%s0 + $0x238] sm:$0xff]
  %v87 = vld [vmem:[%s0 + $0x240] sm:$0xff]
  %v88 = vld [vmem:[%s0 + $0x248] sm:$0xff]
  %v89 = vld [vmem:[%s0 + $0x250] sm:$0xff]
  %v90 = vld [vmem:[%s0 + $0x258] sm:$0xff]
  %v91 = vld [vmem:[%s0 + $0x260] sm:$0xff]
  %v92 = vld [vmem:[%s0 + $0x268] sm:$0xff]
  %v93 = vld [vmem:[%s0 + $0x270] sm:$0xff]
  %v94 = vld [vmem:[%s0 + $0x278] sm:$0xff]
  %v95 = vld [vmem:[%s0 + $0x280] sm:$0xff]
  %v96 = vld [vmem:[%s0 + $0x288] sm:$0xff]
  %v97 = vld [vmem:[%s0 + $0x290] sm:$0xff]
  %v98 = vld [vmem:[%s0 + $0x298] sm:$0xff]
  %v99 = vld [vmem:[%s0 + $0x2a0] sm:$0xff]
  %v100 = vld [vmem:[%s0 + $0x2a8] sm:$0xff]
  %v101 = vld [vmem:[%s0 + $0x2b0] sm:$0xff]
  %v102 = vld [vmem:[%s0 + $0x2b8] sm:$0xff]
  %v103 = vld [vmem:[%s0 + $0x2c0] sm:$0xff]
  %v104 = vld [vmem:[%s0 + $0x2c8] sm:$0xff]
  %v105 = vld [vmem:[%s0 + $0x2d0] sm:$0xff]
  %v106 = vld [vmem:[%s0 + $0x2d8] sm:$0xff]
  %v107 = vld [vmem:[%s0 + $0x2e0] sm:$0xff]
  %v108 = vld [vmem:[%s0 + $0x2e8] sm:$0xff]
  %v109 = vld [vmem:[%s0 + $0x2f0] sm:$0xff]
  %v110 = vld [vmem:[%s0 + $0x2f8] sm:$0xff]
  %v111 = vld [vmem:[%s0 + $0x300] sm:$0xff]
  %v112 = vld [vmem:[%s0 + $0x308] sm:$0xff]
  %v113 = vld [vmem:[%s0 + $0x310] sm:$0xff]
  %v114 = vld [vmem:[%s0 + $0x318] sm:$0xff]
  %v115 = vld [vmem:[%s0 + $0x320] sm:$0xff]
  %v116 = vld [vmem:[%s0 + $0x328] sm:$0xff]
  %v117 = vld [vmem:[%s0 + $0x330] sm:$0xff]
  %v118 = vld [vmem:[%s0 + $0x338] sm:$0xff]
  %v119 = vld [vmem:[%s0 + $0x340] sm:$0xff]
  %v120 = vld [vmem:[%s0 + $0x348] sm:$0xff]
  %v121 = vld [vmem:[%s0 + $0x350] sm:$0xff]
  %v122 = vld [vmem:[%s0 + $0x358] sm:$0xff]
  %v123 = vld [vmem:[%s0 + $0x360] sm:$0xff]
  %v124 = vld [vmem:[%s0 + $0x368] sm:$0xff]
  %v125 = vld [vmem:[%s0 + $0x370] sm:$0xff]
  %v126 = vld [vmem:[%s0 + $0x378] sm:$0xff]
  %v127 = vld [vmem:[%s0 + $0x380] sm:$0xff]
  %v128 = vld [vmem:[%s0 + $0x388] sm:$0xff]
  %v129 = vld [vmem:[%s0 + $0x390] sm:$0xff]
  %v130 = vld [vmem:[%s0 + $0x398] sm:$0xff]
  %v131 = vld [vmem:[%s0 + $0x3a0] sm:$0xff]
  %v132 = vld [vmem:[%s0 + $0x3a8] sm:$0xff]
  %v133 = vld [vmem:[%s0 + $0x3b0] sm:$0xff]
  %v134 = vld [vmem:[%s0 + $0x3b8] sm:$0xff]
  %v135 = vld [vmem:[%s0 + $0x3c0] sm:$0xff]
  %v136 = vld [vmem:[%s0 + $0x3c8] sm:$0xff]
  %v137 = vld [vmem:[%s0 + $0x3d0] sm:$0xff]
  %v138 = vld [vmem:[%s0 + $0x3d8] sm:$0xff]
  %v139 = vld [vmem:[%s0 + $0x3e0] sm:$0xff]
  %v140 = vld [vmem:[%s0 + $0x3e8] sm:$0xff]
  %v141 = vld [vmem:[%s0 + $0x3f0] sm:$0xff]
  %v142 = vld [vmem:[%s0 + $0x3f8] sm:$0xff]
  %v143 = vpack.c.bf16 %v17, %v15
  %v144 = vpack.c.bf16 %v18, %v16
  %v145 = vpack.c.bf16 %v21, %v19
  %v146 = vpack.c.bf16 %v22, %v20
  %v147 = vpack.c.bf16 %v25, %v23
  %v148 = vpack.c.bf16 %v26, %v24
  %v149 = vpack.c.bf16 %v29, %v27
  %v150 = vpack.c.bf16 %v30, %v28
  %v151 = vpack.c.bf16 %v33, %v31
  %v152 = vpack.c.bf16 %v34, %v32
  %v153 = vpack.c.bf16 %v37, %v35
  %v154 = vpack.c.bf16 %v38, %v36
  %v155 = vpack.c.bf16 %v41, %v39
  %v156 = vpack.c.bf16 %v42, %v40
  %v157 = vpack.c.bf16 %v45, %v43
  %v158 = vpack.c.bf16 %v46, %v44
  %v159 = vpack.c.bf16 %v49, %v47
  %v160 = vpack.c.bf16 %v50, %v48
  %v161 = vpack.c.bf16 %v53, %v51
  %v162 = vpack.c.bf16 %v54, %v52
  %v163 = vpack.c.bf16 %v57, %v55
  %v164 = vpack.c.bf16 %v58, %v56
  %v165 = vpack.c.bf16 %v61, %v59
  %v166 = vpack.c.bf16 %v62, %v60
  %v167 = vpack.c.bf16 %v65, %v63
  %v168 = vpack.c.bf16 %v66, %v64
  %v169 = vpack.c.bf16 %v69, %v67
  %v170 = vpack.c.bf16 %v70, %v68
  %v171 = vpack.c.bf16 %v73, %v71
  %v172 = vpack.c.bf16 %v74, %v72
  %v173 = vpack.c.bf16 %v77, %v75
  %v174 = vpack.c.bf16 %v78, %v76
  %v175 = vpack.c.bf16 %v81, %v79
  %v176 = vpack.c.bf16 %v82, %v80
  %v177 = vpack.c.bf16 %v85, %v83
  %v178 = vpack.c.bf16 %v86, %v84
  %v179 = vpack.c.bf16 %v89, %v87
  %v180 = vpack.c.bf16 %v90, %v88
  %v181 = vpack.c.bf16 %v93, %v91
  %v182 = vpack.c.bf16 %v94, %v92
  %v183 = vpack.c.bf16 %v97, %v95
  %v184 = vpack.c.bf16 %v98, %v96
  %v185 = vpack.c.bf16 %v101, %v99
  %v186 = vpack.c.bf16 %v102, %v100
  %v187 = vpack.c.bf16 %v105, %v103
  %v188 = vpack.c.bf16 %v106, %v104
  %v189 = vpack.c.bf16 %v109, %v107
  %v190 = vpack.c.bf16 %v110, %v108
  %v191 = vpack.c.bf16 %v113, %v111
  %v192 = vpack.c.bf16 %v114, %v112
  %v193 = vpack.c.bf16 %v117, %v115
  %v194 = vpack.c.bf16 %v118, %v116
  %v195 = vpack.c.bf16 %v121, %v119
  %v196 = vpack.c.bf16 %v122, %v120
  %v197 = vpack.c.bf16 %v125, %v123
  %v198 = vpack.c.bf16 %v126, %v124
  %v199 = vpack.c.bf16 %v129, %v127
  %v200 = vpack.c.bf16 %v130, %v128
  %v201 = vpack.c.bf16 %v133, %v131
  %v202 = vpack.c.bf16 %v134, %v132
  %v203 = vpack.c.bf16 %v137, %v135
  %v204 = vpack.c.bf16 %v138, %v136
  %v205 = vpack.c.bf16 %v141, %v139
  %v206 = vpack.c.bf16 %v142, %v140
  %v207 = vld [vmem:[%s1] sm:$0xf]
  %v208 = vld [vmem:[%s1 + $0x4] sm:$0xf]
  %v209 = vld [vmem:[%s1 + $0x8] sm:$0xf]
  %v210 = vld [vmem:[%s1 + $0xc] sm:$0xf]
  %v211 = vld [vmem:[%s1 + $0x10] sm:$0xf]
  %v212 = vld [vmem:[%s1 + $0x14] sm:$0xf]
  %v213 = vld [vmem:[%s1 + $0x18] sm:$0xf]
  %v214 = vld [vmem:[%s1 + $0x1c] sm:$0xf]
  %v215 = vld [vmem:[%s1 + $0x20] sm:$0xf]
  %v216 = vld [vmem:[%s1 + $0x24] sm:$0xf]
  %v217 = vld [vmem:[%s1 + $0x28] sm:$0xf]
  %v218 = vld [vmem:[%s1 + $0x2c] sm:$0xf]
  %v219 = vld [vmem:[%s1 + $0x30] sm:$0xf]
  %v220 = vld [vmem:[%s1 + $0x34] sm:$0xf]
  %v221 = vld [vmem:[%s1 + $0x38] sm:$0xf]
  %v222 = vld [vmem:[%s1 + $0x3c] sm:$0xf]
  %v223 = vld [vmem:[%s1 + $0x40] sm:$0xf]
  %v224 = vld [vmem:[%s1 + $0x44] sm:$0xf]
  %v225 = vld [vmem:[%s1 + $0x48] sm:$0xf]
  %v226 = vld [vmem:[%s1 + $0x4c] sm:$0xf]
  %v227 = vld [vmem:[%s1 + $0x50] sm:$0xf]
  %v228 = vld [vmem:[%s1 + $0x54] sm:$0xf]
  %v229 = vld [vmem:[%s1 + $0x58] sm:$0xf]
  %v230 = vld [vmem:[%s1 + $0x5c] sm:$0xf]
  %v231 = vld [vmem:[%s1 + $0x60] sm:$0xf]
  %v232 = vld [vmem:[%s1 + $0x64] sm:$0xf]
  %v233 = vld [vmem:[%s1 + $0x68] sm:$0xf]
  %v234 = vld [vmem:[%s2] sm:$0x1]
  %v236 = vlaneseq
  %v237 = vshrl.u32 %v236, 7
  %v238 = vsub.s32 0, %v237
  %v239 = vrot.slane %v234, %v238
  %v268 = vunpack.c.l.b16 %v207
  %v269 = vunpack.c.l.b16 %v208
  %v270 = vunpack.c.l.b16 %v209
  %v271 = vunpack.c.l.b16 %v210
  %v272 = vunpack.c.l.b16 %v211
  %v273 = vunpack.c.l.b16 %v212
  %v274 = vunpack.c.l.b16 %v213
  %v275 = vunpack.c.l.b16 %v214
  %v276 = vunpack.c.l.b16 %v215
  %v277 = vunpack.c.l.b16 %v216
  %v278 = vunpack.c.l.b16 %v217
  %v279 = vunpack.c.l.b16 %v218
  %v280 = vunpack.c.l.b16 %v219
  %v281 = vunpack.c.l.b16 %v220
  %v282 = vunpack.c.l.b16 %v221
  %v283 = vunpack.c.l.b16 %v222
  %v284 = vunpack.c.l.b16 %v223
  %v285 = vunpack.c.l.b16 %v224
  %v286 = vunpack.c.l.b16 %v225
  %v287 = vunpack.c.l.b16 %v226
  %v288 = vunpack.c.l.b16 %v227
  %v289 = vunpack.c.l.b16 %v228
  %v290 = vunpack.c.l.b16 %v229
  %v291 = vunpack.c.l.b16 %v230
  %v292 = vunpack.c.l.b16 %v231
  %v293 = vunpack.c.l.b16 %v232
  %v294 = vunpack.c.l.b16 %v233
  %v295 = vpack.c.b16 %v269, %v268
  %v296 = vpack.c.b16 %v271, %v270
  %v297 = vpack.c.b16 %v273, %v272
  %v298 = vpack.c.b16 %v275, %v274
  %v299 = vpack.c.b16 %v277, %v276
  %v300 = vpack.c.b16 %v279, %v278
  %v301 = vpack.c.b16 %v281, %v280
  %v302 = vpack.c.b16 %v283, %v282
  %v303 = vpack.c.b16 %v285, %v284
  %v304 = vpack.c.b16 %v287, %v286
  %v305 = vpack.c.b16 %v289, %v288
  %v306 = vpack.c.b16 %v291, %v290
  %v307 = vpack.c.b16 %v293, %v292
  %v308 = vpack.c.b16 %v294, %v294
  %vm322 = vcmask 719872
  %v324 = vsel %vm322, %v144, 0
  %v327 = vsel %vm322, %v146, 0
  %v330 = vsel %vm322, %v148, 0
  %v333 = vsel %vm322, %v150, 0
  %v336 = vsel %vm322, %v152, 0
  %v339 = vsel %vm322, %v154, 0
  %v342 = vsel %vm322, %v156, 0
  %v345 = vsel %vm322, %v158, 0
  %v348 = vsel %vm322, %v160, 0
  %v351 = vsel %vm322, %v162, 0
  %v354 = vsel %vm322, %v164, 0
  %v357 = vsel %vm322, %v166, 0
  %v360 = vsel %vm322, %v168, 0
  %v363 = vsel %vm322, %v170, 0
  %v366 = vsel %vm322, %v172, 0
  %v369 = vsel %vm322, %v174, 0
  %v372 = vsel %vm322, %v176, 0
  %v375 = vsel %vm322, %v178, 0
  %v378 = vsel %vm322, %v180, 0
  %v381 = vsel %vm322, %v182, 0
  %v384 = vsel %vm322, %v184, 0
  %v387 = vsel %vm322, %v186, 0
  %v390 = vsel %vm322, %v188, 0
  %v393 = vsel %vm322, %v190, 0
  %v396 = vsel %vm322, %v192, 0
  %v399 = vsel %vm322, %v194, 0
  %v402 = vsel %vm322, %v196, 0
  %v405 = vsel %vm322, %v198, 0
  %v408 = vsel %vm322, %v200, 0
  %v411 = vsel %vm322, %v202, 0
  %v414 = vsel %vm322, %v204, 0
  %v417 = vsel %vm322, %v206, 0
  %vm419 = vcmask 1043456
  %v421 = vsel %vm419, %v308, 0
  %423 = vmatprep.subr.bf16.mxu0 0
  %424 = vmatpush1.bf16.msra.mxu0 %v295
  %425 = vmatprep.subr.bf16.mxu0 0
  %426 = vmatpush1.bf16.msra.mxu0 %v296
  %427 = vmatprep.subr.bf16.mxu0 0
  %428 = vmatpush1.bf16.msra.mxu0 %v297
  %429 = vmatprep.subr.bf16.mxu0 0
  %430 = vmatpush1.bf16.msra.mxu0 %v298
  %431 = vmatprep.subr.bf16.mxu0 0
  %432 = vmatpush1.bf16.msra.mxu0 %v299
  %433 = vmatprep.subr.bf16.mxu0 0
  %434 = vmatpush1.bf16.msra.mxu0 %v300
  %435 = vmatprep.subr.bf16.mxu0 0
  %436 = vmatpush1.bf16.msra.mxu0 %v301
  %437 = vmatprep.subr.bf16.mxu0 0
  %438 = vmatpush1.bf16.msra.mxu0 %v302
  %439 = vmatprep.subr.bf16.mxu0 0
  %440 = vmatpush1.bf16.msra.mxu0 %v303
  %441 = vmatprep.subr.bf16.mxu0 0
  %442 = vmatpush1.bf16.msra.mxu0 %v304
  %443 = vmatprep.subr.bf16.mxu0 0
  %444 = vmatpush1.bf16.msra.mxu0 %v305
  %445 = vmatprep.subr.bf16.mxu0 0
  %446 = vmatpush1.bf16.msra.mxu0 %v306
  %447 = vmatprep.subr.bf16.mxu0 0
  %448 = vmatpush1.bf16.msra.mxu0 %v307
  %449 = vmatprep.subr.bf16.mxu0 0
  %450 = vmatpush1.bf16.msra.mxu0 %v421
  %451 = vmatprep.subr.bf16.mxu0 0
  %452 = vmatpush1.bf16.msra.mxu0 0
  %453 = vmatprep.subr.bf16.mxu0 0
  %454 = vmatpush1.bf16.msra.mxu0 0
  %455 = vmatprep.mubr.bf16.mxu0 %v324
  %456 = vmatmul.mubr.bf16.gmra.mrb[0].mxu0 %v143
  %v457 = vpop.f32.mrb[0].mxu0
  %v458 = vadd.f32 %v239, %v457
  %v459 = vpop.f32.mrb[0].mxu0
  %v460 = vpop.f32.mrb[0].mxu0
  %v461 = vadd.f32 %v239, %v460
  %v462 = vpop.f32.mrb[0].mxu0
  %463 = vmatprep.mubr.bf16.mxu0 %v327
  %464 = vmatmul.mubr.bf16.gmra.mrb[0].mxu0 %v145
  %v465 = vpop.f32.mrb[0].mxu0
  %v466 = vadd.f32 %v239, %v465
  %v467 = vpop.f32.mrb[0].mxu0
  %v468 = vpop.f32.mrb[0].mxu0
  %v469 = vadd.f32 %v239, %v468
  %v470 = vpop.f32.mrb[0].mxu0
  %471 = vmatprep.mubr.bf16.mxu0 %v330
  %472 = vmatmul.mubr.bf16.gmra.mrb[0].mxu0 %v147
  %v473 = vpop.f32.mrb[0].mxu0
  %v474 = vadd.f32 %v239, %v473
  %v475 = vpop.f32.mrb[0].mxu0
  %v476 = vpop.f32.mrb[0].mxu0
  %v477 = vadd.f32 %v239, %v476
  %v478 = vpop.f32.mrb[0].mxu0
  %479 = vmatprep.mubr.bf16.mxu0 %v333
  %480 = vmatmul.mubr.bf16.gmra.mrb[0].mxu0 %v149
  %v481 = vpop.f32.mrb[0].mxu0
  %v482 = vadd.f32 %v239, %v481
  %v483 = vpop.f32.mrb[0].mxu0
  %v484 = vpop.f32.mrb[0].mxu0
  %v485 = vadd.f32 %v239, %v484
  %v486 = vpop.f32.mrb[0].mxu0
  %487 = vmatprep.mubr.bf16.mxu0 %v336
  %488 = vmatmul.mubr.bf16.gmra.mrb[0].mxu0 %v151
  %v489 = vpop.f32.mrb[0].mxu0
  %v490 = vadd.f32 %v239, %v489
  %v491 = vpop.f32.mrb[0].mxu0
  %v492 = vpop.f32.mrb[0].mxu0
  %v493 = vadd.f32 %v239, %v492
  %v494 = vpop.f32.mrb[0].mxu0
  %495 = vmatprep.mubr.bf16.mxu0 %v339
  %496 = vmatmul.mubr.bf16.gmra.mrb[0].mxu0 %v153
  %v497 = vpop.f32.mrb[0].mxu0
  %v498 = vadd.f32 %v239, %v497
  %v499 = vpop.f32.mrb[0].mxu0
  %v500 = vpop.f32.mrb[0].mxu0
  %v501 = vadd.f32 %v239, %v500
  %v502 = vpop.f32.mrb[0].mxu0
  %503 = vmatprep.mubr.bf16.mxu0 %v342
  %504 = vmatmul.mubr.bf16.gmra.mrb[0].mxu0 %v155
  %v505 = vpop.f32.mrb[0].mxu0
  %v506 = vadd.f32 %v239, %v505
  %v507 = vpop.f32.mrb[0].mxu0
  %v508 = vpop.f32.mrb[0].mxu0
  %v509 = vadd.f32 %v239, %v508
  %v510 = vpop.f32.mrb[0].mxu0
  %511 = vmatprep.mubr.bf16.mxu0 %v345
  %512 = vmatmul.mubr.bf16.gmra.mrb[0].mxu0 %v157
  %v513 = vpop.f32.mrb[0].mxu0
  %v514 = vadd.f32 %v239, %v513
  %v515 = vpop.f32.mrb[0].mxu0
  %v516 = vpop.f32.mrb[0].mxu0
  %v517 = vadd.f32 %v239, %v516
  %v518 = vpop.f32.mrb[0].mxu0
  %519 = vmatprep.mubr.bf16.mxu0 %v348
  %520 = vmatmul.mubr.bf16.gmra.mrb[0].mxu0 %v159
  %v521 = vpop.f32.mrb[0].mxu0
  %v522 = vadd.f32 %v239, %v521
  %v523 = vpop.f32.mrb[0].mxu0
  %v524 = vpop.f32.mrb[0].mxu0
  %v525 = vadd.f32 %v239, %v524
  %v526 = vpop.f32.mrb[0].mxu0
  %527 = vmatprep.mubr.bf16.mxu0 %v351
  %528 = vmatmul.mubr.bf16.gmra.mrb[0].mxu0 %v161
  %v529 = vpop.f32.mrb[0].mxu0
  %v530 = vadd.f32 %v239, %v529
  %v531 = vpop.f32.mrb[0].mxu0
  %v532 = vpop.f32.mrb[0].mxu0
  %v533 = vadd.f32 %v239, %v532
  %v534 = vpop.f32.mrb[0].mxu0
  %535 = vmatprep.mubr.bf16.mxu0 %v354
  %536 = vmatmul.mubr.bf16.gmra.mrb[0].mxu0 %v163
  %v537 = vpop.f32.mrb[0].mxu0
  %v538 = vadd.f32 %v239, %v537
  %v539 = vpop.f32.mrb[0].mxu0
  %v540 = vpop.f32.mrb[0].mxu0
  %v541 = vadd.f32 %v239, %v540
  %v542 = vpop.f32.mrb[0].mxu0
  %543 = vmatprep.mubr.bf16.mxu0 %v357
  %544 = vmatmul.mubr.bf16.gmra.mrb[0].mxu0 %v165
  %v545 = vpop.f32.mrb[0].mxu0
  %v546 = vadd.f32 %v239, %v545
  %v547 = vpop.f32.mrb[0].mxu0
  %v548 = vpop.f32.mrb[0].mxu0
  %v549 = vadd.f32 %v239, %v548
  %v550 = vpop.f32.mrb[0].mxu0
  %551 = vmatprep.mubr.bf16.mxu0 %v360
  %552 = vmatmul.mubr.bf16.gmra.mrb[0].mxu0 %v167
  %v553 = vpop.f32.mrb[0].mxu0
  %v554 = vadd.f32 %v239, %v553
  %v555 = vpop.f32.mrb[0].mxu0
  %v556 = vpop.f32.mrb[0].mxu0
  %v557 = vadd.f32 %v239, %v556
  %v558 = vpop.f32.mrb[0].mxu0
  %559 = vmatprep.mubr.bf16.mxu0 %v363
  %560 = vmatmul.mubr.bf16.gmra.mrb[0].mxu0 %v169
  %v561 = vpop.f32.mrb[0].mxu0
  %v562 = vadd.f32 %v239, %v561
  %v563 = vpop.f32.mrb[0].mxu0
  %v564 = vpop.f32.mrb[0].mxu0
  %v565 = vadd.f32 %v239, %v564
  %v566 = vpop.f32.mrb[0].mxu0
  %567 = vmatprep.mubr.bf16.mxu0 %v366
  %568 = vmatmul.mubr.bf16.gmra.mrb[0].mxu0 %v171
  %v569 = vpop.f32.mrb[0].mxu0
  %v570 = vadd.f32 %v239, %v569
  %v571 = vpop.f32.mrb[0].mxu0
  %v572 = vpop.f32.mrb[0].mxu0
  %v573 = vadd.f32 %v239, %v572
  %v574 = vpop.f32.mrb[0].mxu0
  %575 = vmatprep.mubr.bf16.mxu0 %v369
  %576 = vmatmul.mubr.bf16.gmra.mrb[0].mxu0 %v173
  %v577 = vpop.f32.mrb[0].mxu0
  %v578 = vadd.f32 %v239, %v577
  %v579 = vpop.f32.mrb[0].mxu0
  %v580 = vpop.f32.mrb[0].mxu0
  %v581 = vadd.f32 %v239, %v580
  %v582 = vpop.f32.mrb[0].mxu0
  %583 = vmatprep.mubr.bf16.mxu0 %v372
  %584 = vmatmul.mubr.bf16.gmra.mrb[0].mxu0 %v175
  %v585 = vpop.f32.mrb[0].mxu0
  %v586 = vadd.f32 %v239, %v585
  %v587 = vpop.f32.mrb[0].mxu0
  %v588 = vpop.f32.mrb[0].mxu0
  %v589 = vadd.f32 %v239, %v588
  %v590 = vpop.f32.mrb[0].mxu0
  %591 = vmatprep.mubr.bf16.mxu0 %v375
  %592 = vmatmul.mubr.bf16.gmra.mrb[0].mxu0 %v177
  %v593 = vpop.f32.mrb[0].mxu0
  %v594 = vadd.f32 %v239, %v593
  %v595 = vpop.f32.mrb[0].mxu0
  %v596 = vpop.f32.mrb[0].mxu0
  %v597 = vadd.f32 %v239, %v596
  %v598 = vpop.f32.mrb[0].mxu0
  %599 = vmatprep.mubr.bf16.mxu0 %v378
  %600 = vmatmul.mubr.bf16.gmra.mrb[0].mxu0 %v179
  %v601 = vpop.f32.mrb[0].mxu0
  %v602 = vadd.f32 %v239, %v601
  %v603 = vpop.f32.mrb[0].mxu0
  %v604 = vpop.f32.mrb[0].mxu0
  %v605 = vadd.f32 %v239, %v604
  %v606 = vpop.f32.mrb[0].mxu0
  %607 = vmatprep.mubr.bf16.mxu0 %v381
  %608 = vmatmul.mubr.bf16.gmra.mrb[0].mxu0 %v181
  %v609 = vpop.f32.mrb[0].mxu0
  %v610 = vadd.f32 %v239, %v609
  %v611 = vpop.f32.mrb[0].mxu0
  %v612 = vpop.f32.mrb[0].mxu0
  %v613 = vadd.f32 %v239, %v612
  %v614 = vpop.f32.mrb[0].mxu0
  %615 = vmatprep.mubr.bf16.mxu0 %v384
  %616 = vmatmul.mubr.bf16.gmra.mrb[0].mxu0 %v183
  %v617 = vpop.f32.mrb[0].mxu0
  %v618 = vadd.f32 %v239, %v617
  %v619 = vpop.f32.mrb[0].mxu0
  %v620 = vpop.f32.mrb[0].mxu0
  %v621 = vadd.f32 %v239, %v620
  %v622 = vpop.f32.mrb[0].mxu0
  %623 = vmatprep.mubr.bf16.mxu0 %v387
  %624 = vmatmul.mubr.bf16.gmra.mrb[0].mxu0 %v185
  %v625 = vpop.f32.mrb[0].mxu0
  %v626 = vadd.f32 %v239, %v625
  %v627 = vpop.f32.mrb[0].mxu0
  %v628 = vpop.f32.mrb[0].mxu0
  %v629 = vadd.f32 %v239, %v628
  %v630 = vpop.f32.mrb[0].mxu0
  %631 = vmatprep.mubr.bf16.mxu0 %v390
  %632 = vmatmul.mubr.bf16.gmra.mrb[0].mxu0 %v187
  %v633 = vpop.f32.mrb[0].mxu0
  %v634 = vadd.f32 %v239, %v633
  %v635 = vpop.f32.mrb[0].mxu0
  %v636 = vpop.f32.mrb[0].mxu0
  %v637 = vadd.f32 %v239, %v636
  %v638 = vpop.f32.mrb[0].mxu0
  %639 = vmatprep.mubr.bf16.mxu0 %v393
  %640 = vmatmul.mubr.bf16.gmra.mrb[0].mxu0 %v189
  %v641 = vpop.f32.mrb[0].mxu0
  %v642 = vadd.f32 %v239, %v641
  %v643 = vpop.f32.mrb[0].mxu0
  %v644 = vpop.f32.mrb[0].mxu0
  %v645 = vadd.f32 %v239, %v644
  %v646 = vpop.f32.mrb[0].mxu0
  %647 = vmatprep.mubr.bf16.mxu0 %v396
  %648 = vmatmul.mubr.bf16.gmra.mrb[0].mxu0 %v191
  %v649 = vpop.f32.mrb[0].mxu0
  %v650 = vadd.f32 %v239, %v649
  %v651 = vpop.f32.mrb[0].mxu0
  %v652 = vpop.f32.mrb[0].mxu0
  %v653 = vadd.f32 %v239, %v652
  %v654 = vpop.f32.mrb[0].mxu0
  %655 = vmatprep.mubr.bf16.mxu0 %v399
  %656 = vmatmul.mubr.bf16.gmra.mrb[0].mxu0 %v193
  %v657 = vpop.f32.mrb[0].mxu0
  %v658 = vadd.f32 %v239, %v657
  %v659 = vpop.f32.mrb[0].mxu0
  %v660 = vpop.f32.mrb[0].mxu0
  %v661 = vadd.f32 %v239, %v660
  %v662 = vpop.f32.mrb[0].mxu0
  %663 = vmatprep.mubr.bf16.mxu0 %v402
  %664 = vmatmul.mubr.bf16.gmra.mrb[0].mxu0 %v195
  %v665 = vpop.f32.mrb[0].mxu0
  %v666 = vadd.f32 %v239, %v665
  %v667 = vpop.f32.mrb[0].mxu0
  %v668 = vpop.f32.mrb[0].mxu0
  %v669 = vadd.f32 %v239, %v668
  %v670 = vpop.f32.mrb[0].mxu0
  %671 = vmatprep.mubr.bf16.mxu0 %v405
  %672 = vmatmul.mubr.bf16.gmra.mrb[0].mxu0 %v197
  %v673 = vpop.f32.mrb[0].mxu0
  %v674 = vadd.f32 %v239, %v673
  %v675 = vpop.f32.mrb[0].mxu0
  %v676 = vpop.f32.mrb[0].mxu0
  %v677 = vadd.f32 %v239, %v676
  %v678 = vpop.f32.mrb[0].mxu0
  %679 = vmatprep.mubr.bf16.mxu0 %v408
  %680 = vmatmul.mubr.bf16.gmra.mrb[0].mxu0 %v199
  %v681 = vpop.f32.mrb[0].mxu0
  %v682 = vadd.f32 %v239, %v681
  %v683 = vpop.f32.mrb[0].mxu0
  %v684 = vpop.f32.mrb[0].mxu0
  %v685 = vadd.f32 %v239, %v684
  %v686 = vpop.f32.mrb[0].mxu0
  %687 = vmatprep.mubr.bf16.mxu0 %v411
  %688 = vmatmul.mubr.bf16.gmra.mrb[0].mxu0 %v201
  %v689 = vpop.f32.mrb[0].mxu0
  %v690 = vadd.f32 %v239, %v689
  %v691 = vpop.f32.mrb[0].mxu0
  %v692 = vpop.f32.mrb[0].mxu0
  %v693 = vadd.f32 %v239, %v692
  %v694 = vpop.f32.mrb[0].mxu0
  %695 = vmatprep.mubr.bf16.mxu0 %v414
  %696 = vmatmul.mubr.bf16.gmra.mrb[0].mxu0 %v203
  %v697 = vpop.f32.mrb[0].mxu0
  %v698 = vadd.f32 %v239, %v697
  %v699 = vpop.f32.mrb[0].mxu0
  %v700 = vpop.f32.mrb[0].mxu0
  %v701 = vadd.f32 %v239, %v700
  %v702 = vpop.f32.mrb[0].mxu0
  %703 = vmatprep.mubr.bf16.mxu0 %v417
  %704 = vmatmul.mubr.bf16.gmra.mrb[0].mxu0 %v205
  %v705 = vpop.f32.mrb[0].mxu0
  %v706 = vadd.f32 %v239, %v705
  %v707 = vpop.f32.mrb[0].mxu0
  %v708 = vpop.f32.mrb[0].mxu0
  %v709 = vadd.f32 %v239, %v708
  %v710 = vpop.f32.mrb[0].mxu0
  %711 = vdwg.mxu0
  %v712 = vmax.f32 %v458, 0.0
  %v713 = vmax.f32 %v461, 0.0
  %v714 = vmax.f32 %v466, 0.0
  %v715 = vmax.f32 %v469, 0.0
  %v716 = vmax.f32 %v474, 0.0
  %v717 = vmax.f32 %v477, 0.0
  %v718 = vmax.f32 %v482, 0.0
  %v719 = vmax.f32 %v485, 0.0
  %v720 = vmax.f32 %v490, 0.0
  %v721 = vmax.f32 %v493, 0.0
  %v722 = vmax.f32 %v498, 0.0
  %v723 = vmax.f32 %v501, 0.0
  %v724 = vmax.f32 %v506, 0.0
  %v725 = vmax.f32 %v509, 0.0
  %v726 = vmax.f32 %v514, 0.0
  %v727 = vmax.f32 %v517, 0.0
  %v728 = vmax.f32 %v522, 0.0
  %v729 = vmax.f32 %v525, 0.0
  %v730 = vmax.f32 %v530, 0.0
  %v731 = vmax.f32 %v533, 0.0
  %v732 = vmax.f32 %v538, 0.0
  %v733 = vmax.f32 %v541, 0.0
  %v734 = vmax.f32 %v546, 0.0
  %v735 = vmax.f32 %v549, 0.0
  %v736 = vmax.f32 %v554, 0.0
  %v737 = vmax.f32 %v557, 0.0
  %v738 = vmax.f32 %v562, 0.0
  %v739 = vmax.f32 %v565, 0.0
  %v740 = vmax.f32 %v570, 0.0
  %v741 = vmax.f32 %v573, 0.0
  %v742 = vmax.f32 %v578, 0.0
  %v743 = vmax.f32 %v581, 0.0
  %v744 = vmax.f32 %v586, 0.0
  %v745 = vmax.f32 %v589, 0.0
  %v746 = vmax.f32 %v594, 0.0
  %v747 = vmax.f32 %v597, 0.0
  %v748 = vmax.f32 %v602, 0.0
  %v749 = vmax.f32 %v605, 0.0
  %v750 = vmax.f32 %v610, 0.0
  %v751 = vmax.f32 %v613, 0.0
  %v752 = vmax.f32 %v618, 0.0
  %v753 = vmax.f32 %v621, 0.0
  %v754 = vmax.f32 %v626, 0.0
  %v755 = vmax.f32 %v629, 0.0
  %v756 = vmax.f32 %v634, 0.0
  %v757 = vmax.f32 %v637, 0.0
  %v758 = vmax.f32 %v642, 0.0
  %v759 = vmax.f32 %v645, 0.0
  %v760 = vmax.f32 %v650, 0.0
  %v761 = vmax.f32 %v653, 0.0
  %v762 = vmax.f32 %v658, 0.0
  %v763 = vmax.f32 %v661, 0.0
  %v764 = vmax.f32 %v666, 0.0
  %v765 = vmax.f32 %v669, 0.0
  %v766 = vmax.f32 %v674, 0.0
  %v767 = vmax.f32 %v677, 0.0
  %v768 = vmax.f32 %v682, 0.0
  %v769 = vmax.f32 %v685, 0.0
  %v770 = vmax.f32 %v690, 0.0
  %v771 = vmax.f32 %v693, 0.0
  %v772 = vmax.f32 %v698, 0.0
  %v773 = vmax.f32 %v701, 0.0
  %v774 = vmax.f32 %v706, 0.0
  %v775 = vmax.f32 %v709, 0.0
  %vm776 = vcmask 64512
  %777 = vst.msk [vmem:[%s3] sm:$0xff] %vm776, %v712
  %778 = vst.msk [vmem:[%s3 + $0x8] sm:$0xff] %vm776, %v713
  %779 = vst.msk [vmem:[%s3 + $0x10] sm:$0xff] %vm776, %v714
  %780 = vst.msk [vmem:[%s3 + $0x18] sm:$0xff] %vm776, %v715
  %781 = vst.msk [vmem:[%s3 + $0x20] sm:$0xff] %vm776, %v716
  %782 = vst.msk [vmem:[%s3 + $0x28] sm:$0xff] %vm776, %v717
  %783 = vst.msk [vmem:[%s3 + $0x30] sm:$0xff] %vm776, %v718
  %784 = vst.msk [vmem:[%s3 + $0x38] sm:$0xff] %vm776, %v719
  %785 = vst.msk [vmem:[%s3 + $0x40] sm:$0xff] %vm776, %v720
  %786 = vst.msk [vmem:[%s3 + $0x48] sm:$0xff] %vm776, %v721
  %787 = vst.msk [vmem:[%s3 + $0x50] sm:$0xff] %vm776, %v722
  %788 = vst.msk [vmem:[%s3 + $0x58] sm:$0xff] %vm776, %v723
  %789 = vst.msk [vmem:[%s3 + $0x60] sm:$0xff] %vm776, %v724
  %790 = vst.msk [vmem:[%s3 + $0x68] sm:$0xff] %vm776, %v725
  %791 = vst.msk [vmem:[%s3 + $0x70] sm:$0xff] %vm776, %v726
  %792 = vst.msk [vmem:[%s3 + $0x78] sm:$0xff] %vm776, %v727
  %793 = vst.msk [vmem:[%s3 + $0x80] sm:$0xff] %vm776, %v728
  %794 = vst.msk [vmem:[%s3 + $0x88] sm:$0xff] %vm776, %v729
  %795 = vst.msk [vmem:[%s3 + $0x90] sm:$0xff] %vm776, %v730
  %796 = vst.msk [vmem:[%s3 + $0x98] sm:$0xff] %vm776, %v731
  %797 = vst.msk [vmem:[%s3 + $0xa0] sm:$0xff] %vm776, %v732
  %798 = vst.msk [vmem:[%s3 + $0xa8] sm:$0xff] %vm776, %v733
  %799 = vst.msk [vmem:[%s3 + $0xb0] sm:$0xff] %vm776, %v734
  %800 = vst.msk [vmem:[%s3 + $0xb8] sm:$0xff] %vm776, %v735
  %801 = vst.msk [vmem:[%s3 + $0xc0] sm:$0xff] %vm776, %v736
  %802 = vst.msk [vmem:[%s3 + $0xc8] sm:$0xff] %vm776, %v737
  %803 = vst.msk [vmem:[%s3 + $0xd0] sm:$0xff] %vm776, %v738
  %804 = vst.msk [vmem:[%s3 + $0xd8] sm:$0xff] %vm776, %v739
  %805 = vst.msk [vmem:[%s3 + $0xe0] sm:$0xff] %vm776, %v740
  %806 = vst.msk [vmem:[%s3 + $0xe8] sm:$0xff] %vm776, %v741
  %807 = vst.msk [vmem:[%s3 + $0xf0] sm:$0xff] %vm776, %v742
  %808 = vst.msk [vmem:[%s3 + $0xf8] sm:$0xff] %vm776, %v743
  %809 = vst.msk [vmem:[%s3 + $0x100] sm:$0xff] %vm776, %v744
  %810 = vst.msk [vmem:[%s3 + $0x108] sm:$0xff] %vm776, %v745
  %811 = vst.msk [vmem:[%s3 + $0x110] sm:$0xff] %vm776, %v746
  %812 = vst.msk [vmem:[%s3 + $0x118] sm:$0xff] %vm776, %v747
  %813 = vst.msk [vmem:[%s3 + $0x120] sm:$0xff] %vm776, %v748
  %814 = vst.msk [vmem:[%s3 + $0x128] sm:$0xff] %vm776, %v749
  %815 = vst.msk [vmem:[%s3 + $0x130] sm:$0xff] %vm776, %v750
  %816 = vst.msk [vmem:[%s3 + $0x138] sm:$0xff] %vm776, %v751
  %817 = vst.msk [vmem:[%s3 + $0x140] sm:$0xff] %vm776, %v752
  %818 = vst.msk [vmem:[%s3 + $0x148] sm:$0xff] %vm776, %v753
  %819 = vst.msk [vmem:[%s3 + $0x150] sm:$0xff] %vm776, %v754
  %820 = vst.msk [vmem:[%s3 + $0x158] sm:$0xff] %vm776, %v755
  %821 = vst.msk [vmem:[%s3 + $0x160] sm:$0xff] %vm776, %v756
  %822 = vst.msk [vmem:[%s3 + $0x168] sm:$0xff] %vm776, %v757
  %823 = vst.msk [vmem:[%s3 + $0x170] sm:$0xff] %vm776, %v758
  %824 = vst.msk [vmem:[%s3 + $0x178] sm:$0xff] %vm776, %v759
  %825 = vst.msk [vmem:[%s3 + $0x180] sm:$0xff] %vm776, %v760
  %826 = vst.msk [vmem:[%s3 + $0x188] sm:$0xff] %vm776, %v761
  %827 = vst.msk [vmem:[%s3 + $0x190] sm:$0xff] %vm776, %v762
  %828 = vst.msk [vmem:[%s3 + $0x198] sm:$0xff] %vm776, %v763
  %829 = vst.msk [vmem:[%s3 + $0x1a0] sm:$0xff] %vm776, %v764
  %830 = vst.msk [vmem:[%s3 + $0x1a8] sm:$0xff] %vm776, %v765
  %831 = vst.msk [vmem:[%s3 + $0x1b0] sm:$0xff] %vm776, %v766
  %832 = vst.msk [vmem:[%s3 + $0x1b8] sm:$0xff] %vm776, %v767
  %833 = vst.msk [vmem:[%s3 + $0x1c0] sm:$0xff] %vm776, %v768
  %834 = vst.msk [vmem:[%s3 + $0x1c8] sm:$0xff] %vm776, %v769
  %835 = vst.msk [vmem:[%s3 + $0x1d0] sm:$0xff] %vm776, %v770
  %836 = vst.msk [vmem:[%s3 + $0x1d8] sm:$0xff] %vm776, %v771
  %837 = vst.msk [vmem:[%s3 + $0x1e0] sm:$0xff] %vm776, %v772
  %838 = vst.msk [vmem:[%s3 + $0x1e8] sm:$0xff] %vm776, %v773
  %839 = vst.msk [vmem:[%s3 + $0x1f0] sm:$0xff] %vm776, %v774
  %840 = vst.msk [vmem:[%s3 + $0x1f8] sm:$0xff] %vm776, %v775
  // Predicated region
  $region14: #{vision_transformer_forward.18} parent=0 // pred_check
    _
  $region15: #{vision_transformer_forward.18} parent=0 // pred_check_branch
    %842 = sbr.rel (0) target = $region17
  $region16: #{vision_transformer_forward.18} parent=0 // pred_region
    _
  $region17: #{vision_transformer_forward.18} parent=0 // pred_fallthru
    _
  // Predicated region
  $region18: #{vision_transformer_forward.18} parent=0 // pred_check
    _
  $region19: #{vision_transformer_forward.18} parent=0 // pred_check_branch
    %844 = sbr.rel (0) target = $region21
  $region20: #{vision_transformer_forward.18} parent=0 // pred_region
    _
  $region21: #{vision_transformer_forward.18} parent=0 // pred_fallthru
    _

// kernel: vision_transformer_forward.19
$region0: #{vision_transformer_forward.19}
  #allocation0 [shape = 'u32[]', space=smem, size = 0x4, offset = 0x4, fixed_abs, tag = 'smem constant byte address 0x4 - core index']
  #allocation1 [shape = 'u32[144,128]{1,0:T(1,128)}', space=vmem, size = 0x12000, scoped, tag = 'internal scratch']
  #allocation2 [shape = 'f32[1,1]{1,0:T(1,128)S(1)}', space=vmem, size = 0x200, scoped, tag = 'scoped memory for vision_transformer_forward.19']
  %s0 = inlined_call_operand.vmem [shape: f32[392,8], index: 0, kind: input, shape index: {}]
  %s1 = inlined_call_operand.vmem [shape: f32[1,8], index: 1, kind: input, shape index: {}]
  %s2 = inlined_call_operand.<no memory space> [shape: f32[1,1], index: 2, kind: input, shape index: {}]
  %s3 = inlined_call_operand.vmem [shape: f32[392,1], index: 3, kind: output, shape index: {}]
  %s4 = sld [smem:[#allocation0]]
  $region22: #{vision_transformer_forward.19} parent=0
    _
  %s6 = ssub.s32 1, %s4
  %s7 = scalar_select 0, %s6, %s4
  %v8 = vstv %s2
  %9 = vst [vmem:[#allocation2] sm:$0x1] %v8
  // Predicated region
  $region2: #{vision_transformer_forward.19} parent=0 // pred_check
    _
  $region3: #{vision_transformer_forward.19} parent=0 // pred_check_branch
    %11 = sbr.rel (0) target = $region5
  $region4: #{vision_transformer_forward.19} parent=0 // pred_region
    _
  $region5: #{vision_transformer_forward.19} parent=0 // pred_fallthru
    _
  // Predicated region
  $region6: #{vision_transformer_forward.19} parent=0 // pred_check
    _
  $region7: #{vision_transformer_forward.19} parent=0 // pred_check_branch
    %13 = sbr.rel (0) target = $region9
  $region8: #{vision_transformer_forward.19} parent=0 // pred_region
    _
  $region9: #{vision_transformer_forward.19} parent=0 // pred_fallthru
    _
  // Predicated region
  $region10: #{vision_transformer_forward.19} parent=0 // pred_check
    _
  $region11: #{vision_transformer_forward.19} parent=0 // pred_check_branch
    %15 = sbr.rel (0) target = $region13
  $region12: #{vision_transformer_forward.19} parent=0 // pred_region
    _
  $region13: #{vision_transformer_forward.19} parent=0 // pred_fallthru
    _
  %v16 = vld [vmem:[%s0] sm:$0xff]
  %v17 = vld [vmem:[%s0 + $0x8] sm:$0xff]
  %v18 = vld [vmem:[%s0 + $0x10] sm:$0xff]
  %v19 = vld [vmem:[%s0 + $0x18] sm:$0xff]
  %v20 = vld [vmem:[%s0 + $0x20] sm:$0xff]
  %v21 = vld [vmem:[%s0 + $0x28] sm:$0xff]
  %v22 = vld [vmem:[%s0 + $0x30] sm:$0xff]
  %v23 = vld [vmem:[%s0 + $0x38] sm:$0xff]
  %v24 = vld [vmem:[%s0 + $0x40] sm:$0xff]
  %v25 = vld [vmem:[%s0 + $0x48] sm:$0xff]
  %v26 = vld [vmem:[%s0 + $0x50] sm:$0xff]
  %v27 = vld [vmem:[%s0 + $0x58] sm:$0xff]
  %v28 = vld [vmem:[%s0 + $0x60] sm:$0xff]
  %v29 = vld [vmem:[%s0 + $0x68] sm:$0xff]
  %v30 = vld [vmem:[%s0 + $0x70] sm:$0xff]
  %v31 = vld [vmem:[%s0 + $0x78] sm:$0xff]
  %v32 = vld [vmem:[%s0 + $0x80] sm:$0xff]
  %v33 = vld [vmem:[%s0 + $0x88] sm:$0xff]
  %v34 = vld [vmem:[%s0 + $0x90] sm:$0xff]
  %v35 = vld [vmem:[%s0 + $0x98] sm:$0xff]
  %v36 = vld [vmem:[%s0 + $0xa0] sm:$0xff]
  %v37 = vld [vmem:[%s0 + $0xa8] sm:$0xff]
  %v38 = vld [vmem:[%s0 + $0xb0] sm:$0xff]
  %v39 = vld [vmem:[%s0 + $0xb8] sm:$0xff]
  %v40 = vld [vmem:[%s0 + $0xc0] sm:$0xff]
  %v41 = vld [vmem:[%s0 + $0xc8] sm:$0xff]
  %v42 = vld [vmem:[%s0 + $0xd0] sm:$0xff]
  %v43 = vld [vmem:[%s0 + $0xd8] sm:$0xff]
  %v44 = vld [vmem:[%s0 + $0xe0] sm:$0xff]
  %v45 = vld [vmem:[%s0 + $0xe8] sm:$0xff]
  %v46 = vld [vmem:[%s0 + $0xf0] sm:$0xff]
  %v47 = vld [vmem:[%s0 + $0xf8] sm:$0xff]
  %v48 = vld [vmem:[%s0 + $0x100] sm:$0xff]
  %v49 = vld [vmem:[%s0 + $0x108] sm:$0xff]
  %v50 = vld [vmem:[%s0 + $0x110] sm:$0xff]
  %v51 = vld [vmem:[%s0 + $0x118] sm:$0xff]
  %v52 = vld [vmem:[%s0 + $0x120] sm:$0xff]
  %v53 = vld [vmem:[%s0 + $0x128] sm:$0xff]
  %v54 = vld [vmem:[%s0 + $0x130] sm:$0xff]
  %v55 = vld [vmem:[%s0 + $0x138] sm:$0xff]
  %v56 = vld [vmem:[%s0 + $0x140] sm:$0xff]
  %v57 = vld [vmem:[%s0 + $0x148] sm:$0xff]
  %v58 = vld [vmem:[%s0 + $0x150] sm:$0xff]
  %v59 = vld [vmem:[%s0 + $0x158] sm:$0xff]
  %v60 = vld [vmem:[%s0 + $0x160] sm:$0xff]
  %v61 = vld [vmem:[%s0 + $0x168] sm:$0xff]
  %v62 = vld [vmem:[%s0 + $0x170] sm:$0xff]
  %v63 = vld [vmem:[%s0 + $0x178] sm:$0xff]
  %v64 = vld [vmem:[%s0 + $0x180] sm:$0xff]
  %v65 = vld [vmem:[%s1] sm:$0x1]
  %v67 = vlaneseq
  %v68 = vshrl.u32 %v67, 7
  %v69 = vsub.s32 0, %v68
  %v70 = vrot.slane %v65, %v69
  %v72 = vmul.f32 %v16, %v70
  %v73 = vmul.f32 %v17, %v70
  %v74 = vmul.f32 %v18, %v70
  %v75 = vmul.f32 %v19, %v70
  %v76 = vmul.f32 %v20, %v70
  %v77 = vmul.f32 %v21, %v70
  %v78 = vmul.f32 %v22, %v70
  %v79 = vmul.f32 %v23, %v70
  %v80 = vmul.f32 %v24, %v70
  %v81 = vmul.f32 %v25, %v70
  %v82 = vmul.f32 %v26, %v70
  %v83 = vmul.f32 %v27, %v70
  %v84 = vmul.f32 %v28, %v70
  %v85 = vmul.f32 %v29, %v70
  %v86 = vmul.f32 %v30, %v70
  %v87 = vmul.f32 %v31, %v70
  %v88 = vmul.f32 %v32, %v70
  %v89 = vmul.f32 %v33, %v70
  %v90 = vmul.f32 %v34, %v70
  %v91 = vmul.f32 %v35, %v70
  %v92 = vmul.f32 %v36, %v70
  %v93 = vmul.f32 %v37, %v70
  %v94 = vmul.f32 %v38, %v70
  %v95 = vmul.f32 %v39, %v70
  %v96 = vmul.f32 %v40, %v70
  %v97 = vmul.f32 %v41, %v70
  %v98 = vmul.f32 %v42, %v70
  %v99 = vmul.f32 %v43, %v70
  %v100 = vmul.f32 %v44, %v70
  %v101 = vmul.f32 %v45, %v70
  %v102 = vmul.f32 %v46, %v70
  %v103 = vmul.f32 %v47, %v70
  %v104 = vmul.f32 %v48, %v70
  %v105 = vmul.f32 %v49, %v70
  %v106 = vmul.f32 %v50, %v70
  %v107 = vmul.f32 %v51, %v70
  %v108 = vmul.f32 %v52, %v70
  %v109 = vmul.f32 %v53, %v70
  %v110 = vmul.f32 %v54, %v70
  %v111 = vmul.f32 %v55, %v70
  %v112 = vmul.f32 %v56, %v70
  %v113 = vmul.f32 %v57, %v70
  %v114 = vmul.f32 %v58, %v70
  %v115 = vmul.f32 %v59, %v70
  %v116 = vmul.f32 %v60, %v70
  %v117 = vmul.f32 %v61, %v70
  %v118 = vmul.f32 %v62, %v70
  %v119 = vmul.f32 %v63, %v70
  %v120 = vmul.f32 %v64, %v70
  %vm121 = vcmask 64512
  %v122 = vsel %vm121, %v72, 0.0
  %123 = vadd.xlane.f32.xlu0 %v122
  %v124 = vpop.xlane.xlu0 %123
  %v125 = vsel %vm121, %v73, 0.0
  %126 = vadd.xlane.f32.xlu0 %v125
  %v127 = vpop.xlane.xlu0 %126
  %v128 = vsel %vm121, %v74, 0.0
  %129 = vadd.xlane.f32.xlu0 %v128
  %v130 = vpop.xlane.xlu0 %129
  %v131 = vsel %vm121, %v75, 0.0
  %132 = vadd.xlane.f32.xlu0 %v131
  %v133 = vpop.xlane.xlu0 %132
  %v134 = vsel %vm121, %v76, 0.0
  %135 = vadd.xlane.f32.xlu0 %v134
  %v136 = vpop.xlane.xlu0 %135
  %v137 = vsel %vm121, %v77, 0.0
  %138 = vadd.xlane.f32.xlu0 %v137
  %v139 = vpop.xlane.xlu0 %138
  %v140 = vsel %vm121, %v78, 0.0
  %141 = vadd.xlane.f32.xlu0 %v140
  %v142 = vpop.xlane.xlu0 %141
  %v143 = vsel %vm121, %v79, 0.0
  %144 = vadd.xlane.f32.xlu0 %v143
  %v145 = vpop.xlane.xlu0 %144
  %v146 = vsel %vm121, %v80, 0.0
  %147 = vadd.xlane.f32.xlu0 %v146
  %v148 = vpop.xlane.xlu0 %147
  %v149 = vsel %vm121, %v81, 0.0
  %150 = vadd.xlane.f32.xlu0 %v149
  %v151 = vpop.xlane.xlu0 %150
  %v152 = vsel %vm121, %v82, 0.0
  %153 = vadd.xlane.f32.xlu0 %v152
  %v154 = vpop.xlane.xlu0 %153
  %v155 = vsel %vm121, %v83, 0.0
  %156 = vadd.xlane.f32.xlu0 %v155
  %v157 = vpop.xlane.xlu0 %156
  %v158 = vsel %vm121, %v84, 0.0
  %159 = vadd.xlane.f32.xlu0 %v158
  %v160 = vpop.xlane.xlu0 %159
  %v161 = vsel %vm121, %v85, 0.0
  %162 = vadd.xlane.f32.xlu0 %v161
  %v163 = vpop.xlane.xlu0 %162
  %v164 = vsel %vm121, %v86, 0.0
  %165 = vadd.xlane.f32.xlu0 %v164
  %v166 = vpop.xlane.xlu0 %165
  %v167 = vsel %vm121, %v87, 0.0
  %168 = vadd.xlane.f32.xlu0 %v167
  %v169 = vpop.xlane.xlu0 %168
  %v170 = vsel %vm121, %v88, 0.0
  %171 = vadd.xlane.f32.xlu0 %v170
  %v172 = vpop.xlane.xlu0 %171
  %v173 = vsel %vm121, %v89, 0.0
  %174 = vadd.xlane.f32.xlu0 %v173
  %v175 = vpop.xlane.xlu0 %174
  %v176 = vsel %vm121, %v90, 0.0
  %177 = vadd.xlane.f32.xlu0 %v176
  %v178 = vpop.xlane.xlu0 %177
  %v179 = vsel %vm121, %v91, 0.0
  %180 = vadd.xlane.f32.xlu0 %v179
  %v181 = vpop.xlane.xlu0 %180
  %v182 = vsel %vm121, %v92, 0.0
  %183 = vadd.xlane.f32.xlu0 %v182
  %v184 = vpop.xlane.xlu0 %183
  %v185 = vsel %vm121, %v93, 0.0
  %186 = vadd.xlane.f32.xlu0 %v185
  %v187 = vpop.xlane.xlu0 %186
  %v188 = vsel %vm121, %v94, 0.0
  %189 = vadd.xlane.f32.xlu0 %v188
  %v190 = vpop.xlane.xlu0 %189
  %v191 = vsel %vm121, %v95, 0.0
  %192 = vadd.xlane.f32.xlu0 %v191
  %v193 = vpop.xlane.xlu0 %192
  %v194 = vsel %vm121, %v96, 0.0
  %195 = vadd.xlane.f32.xlu0 %v194
  %v196 = vpop.xlane.xlu0 %195
  %v197 = vsel %vm121, %v97, 0.0
  %198 = vadd.xlane.f32.xlu0 %v197
  %v199 = vpop.xlane.xlu0 %198
  %v200 = vsel %vm121, %v98, 0.0
  %201 = vadd.xlane.f32.xlu0 %v200
  %v202 = vpop.xlane.xlu0 %201
  %v203 = vsel %vm121, %v99, 0.0
  %204 = vadd.xlane.f32.xlu0 %v203
  %v205 = vpop.xlane.xlu0 %204
  %v206 = vsel %vm121, %v100, 0.0
  %207 = vadd.xlane.f32.xlu0 %v206
  %v208 = vpop.xlane.xlu0 %207
  %v209 = vsel %vm121, %v101, 0.0
  %210 = vadd.xlane.f32.xlu0 %v209
  %v211 = vpop.xlane.xlu0 %210
  %v212 = vsel %vm121, %v102, 0.0
  %213 = vadd.xlane.f32.xlu0 %v212
  %v214 = vpop.xlane.xlu0 %213
  %v215 = vsel %vm121, %v103, 0.0
  %216 = vadd.xlane.f32.xlu0 %v215
  %v217 = vpop.xlane.xlu0 %216
  %v218 = vsel %vm121, %v104, 0.0
  %219 = vadd.xlane.f32.xlu0 %v218
  %v220 = vpop.xlane.xlu0 %219
  %v221 = vsel %vm121, %v105, 0.0
  %222 = vadd.xlane.f32.xlu0 %v221
  %v223 = vpop.xlane.xlu0 %222
  %v224 = vsel %vm121, %v106, 0.0
  %225 = vadd.xlane.f32.xlu0 %v224
  %v226 = vpop.xlane.xlu0 %225
  %v227 = vsel %vm121, %v107, 0.0
  %228 = vadd.xlane.f32.xlu0 %v227
  %v229 = vpop.xlane.xlu0 %228
  %v230 = vsel %vm121, %v108, 0.0
  %231 = vadd.xlane.f32.xlu0 %v230
  %v232 = vpop.xlane.xlu0 %231
  %v233 = vsel %vm121, %v109, 0.0
  %234 = vadd.xlane.f32.xlu0 %v233
  %v235 = vpop.xlane.xlu0 %234
  %v236 = vsel %vm121, %v110, 0.0
  %237 = vadd.xlane.f32.xlu0 %v236
  %v238 = vpop.xlane.xlu0 %237
  %v239 = vsel %vm121, %v111, 0.0
  %240 = vadd.xlane.f32.xlu0 %v239
  %v241 = vpop.xlane.xlu0 %240
  %v242 = vsel %vm121, %v112, 0.0
  %243 = vadd.xlane.f32.xlu0 %v242
  %v244 = vpop.xlane.xlu0 %243
  %v245 = vsel %vm121, %v113, 0.0
  %246 = vadd.xlane.f32.xlu0 %v245
  %v247 = vpop.xlane.xlu0 %246
  %v248 = vsel %vm121, %v114, 0.0
  %249 = vadd.xlane.f32.xlu0 %v248
  %v250 = vpop.xlane.xlu0 %249
  %v251 = vsel %vm121, %v115, 0.0
  %252 = vadd.xlane.f32.xlu0 %v251
  %v253 = vpop.xlane.xlu0 %252
  %v254 = vsel %vm121, %v116, 0.0
  %255 = vadd.xlane.f32.xlu0 %v254
  %v256 = vpop.xlane.xlu0 %255
  %v257 = vsel %vm121, %v117, 0.0
  %258 = vadd.xlane.f32.xlu0 %v257
  %v259 = vpop.xlane.xlu0 %258
  %v260 = vsel %vm121, %v118, 0.0
  %261 = vadd.xlane.f32.xlu0 %v260
  %v262 = vpop.xlane.xlu0 %261
  %v263 = vsel %vm121, %v119, 0.0
  %264 = vadd.xlane.f32.xlu0 %v263
  %v265 = vpop.xlane.xlu0 %264
  %v266 = vsel %vm121, %v120, 0.0
  %267 = vadd.xlane.f32.xlu0 %v266
  %v268 = vpop.xlane.xlu0 %267
  %v269 = vld [vmem:[#allocation2] sm:$0x1]
  %v271 = vlaneseq
  %v272 = vshrl.u32 %v271, 7
  %v273 = vsub.s32 0, %v272
  %v274 = vrot.slane %v269, %v273
  %v276 = vadd.f32 %v124, %v274
  %v277 = vadd.f32 %v127, %v274
  %v278 = vadd.f32 %v130, %v274
  %v279 = vadd.f32 %v133, %v274
  %v280 = vadd.f32 %v136, %v274
  %v281 = vadd.f32 %v139, %v274
  %v282 = vadd.f32 %v142, %v274
  %v283 = vadd.f32 %v145, %v274
  %v284 = vadd.f32 %v148, %v274
  %v285 = vadd.f32 %v151, %v274
  %v286 = vadd.f32 %v154, %v274
  %v287 = vadd.f32 %v157, %v274
  %v288 = vadd.f32 %v160, %v274
  %v289 = vadd.f32 %v163, %v274
  %v290 = vadd.f32 %v166, %v274
  %v291 = vadd.f32 %v169, %v274
  %v292 = vadd.f32 %v172, %v274
  %v293 = vadd.f32 %v175, %v274
  %v294 = vadd.f32 %v178, %v274
  %v295 = vadd.f32 %v181, %v274
  %v296 = vadd.f32 %v184, %v274
  %v297 = vadd.f32 %v187, %v274
  %v298 = vadd.f32 %v190, %v274
  %v299 = vadd.f32 %v193, %v274
  %v300 = vadd.f32 %v196, %v274
  %v301 = vadd.f32 %v199, %v274
  %v302 = vadd.f32 %v202, %v274
  %v303 = vadd.f32 %v205, %v274
  %v304 = vadd.f32 %v208, %v274
  %v305 = vadd.f32 %v211, %v274
  %v306 = vadd.f32 %v214, %v274
  %v307 = vadd.f32 %v217, %v274
  %v308 = vadd.f32 %v220, %v274
  %v309 = vadd.f32 %v223, %v274
  %v310 = vadd.f32 %v226, %v274
  %v311 = vadd.f32 %v229, %v274
  %v312 = vadd.f32 %v232, %v274
  %v313 = vadd.f32 %v235, %v274
  %v314 = vadd.f32 %v238, %v274
  %v315 = vadd.f32 %v241, %v274
  %v316 = vadd.f32 %v244, %v274
  %v317 = vadd.f32 %v247, %v274
  %v318 = vadd.f32 %v250, %v274
  %v319 = vadd.f32 %v253, %v274
  %v320 = vadd.f32 %v256, %v274
  %v321 = vadd.f32 %v259, %v274
  %v322 = vadd.f32 %v262, %v274
  %v323 = vadd.f32 %v265, %v274
  %v324 = vadd.f32 %v268, %v274
  %vm325 = vcmask 7168
  %326 = vst.msk [vmem:[%s3] sm:$0xff] %vm325, %v276
  %327 = vst.msk [vmem:[%s3 + $0x8] sm:$0xff] %vm325, %v277
  %328 = vst.msk [vmem:[%s3 + $0x10] sm:$0xff] %vm325, %v278
  %329 = vst.msk [vmem:[%s3 + $0x18] sm:$0xff] %vm325, %v279
  %330 = vst.msk [vmem:[%s3 + $0x20] sm:$0xff] %vm325, %v280
  %331 = vst.msk [vmem:[%s3 + $0x28] sm:$0xff] %vm325, %v281
  %332 = vst.msk [vmem:[%s3 + $0x30] sm:$0xff] %vm325, %v282
  %333 = vst.msk [vmem:[%s3 + $0x38] sm:$0xff] %vm325, %v283
  %334 = vst.msk [vmem:[%s3 + $0x40] sm:$0xff] %vm325, %v284
  %335 = vst.msk [vmem:[%s3 + $0x48] sm:$0xff] %vm325, %v285
  %336 = vst.msk [vmem:[%s3 + $0x50] sm:$0xff] %vm325, %v286
  %337 = vst.msk [vmem:[%s3 + $0x58] sm:$0xff] %vm325, %v287
  %338 = vst.msk [vmem:[%s3 + $0x60] sm:$0xff] %vm325, %v288
  %339 = vst.msk [vmem:[%s3 + $0x68] sm:$0xff] %vm325, %v289
  %340 = vst.msk [vmem:[%s3 + $0x70] sm:$0xff] %vm325, %v290
  %341 = vst.msk [vmem:[%s3 + $0x78] sm:$0xff] %vm325, %v291
  %342 = vst.msk [vmem:[%s3 + $0x80] sm:$0xff] %vm325, %v292
  %343 = vst.msk [vmem:[%s3 + $0x88] sm:$0xff] %vm325, %v293
  %344 = vst.msk [vmem:[%s3 + $0x90] sm:$0xff] %vm325, %v294
  %345 = vst.msk [vmem:[%s3 + $0x98] sm:$0xff] %vm325, %v295
  %346 = vst.msk [vmem:[%s3 + $0xa0] sm:$0xff] %vm325, %v296
  %347 = vst.msk [vmem:[%s3 + $0xa8] sm:$0xff] %vm325, %v297
  %348 = vst.msk [vmem:[%s3 + $0xb0] sm:$0xff] %vm325, %v298
  %349 = vst.msk [vmem:[%s3 + $0xb8] sm:$0xff] %vm325, %v299
  %350 = vst.msk [vmem:[%s3 + $0xc0] sm:$0xff] %vm325, %v300
  %351 = vst.msk [vmem:[%s3 + $0xc8] sm:$0xff] %vm325, %v301
  %352 = vst.msk [vmem:[%s3 + $0xd0] sm:$0xff] %vm325, %v302
  %353 = vst.msk [vmem:[%s3 + $0xd8] sm:$0xff] %vm325, %v303
  %354 = vst.msk [vmem:[%s3 + $0xe0] sm:$0xff] %vm325, %v304
  %355 = vst.msk [vmem:[%s3 + $0xe8] sm:$0xff] %vm325, %v305
  %356 = vst.msk [vmem:[%s3 + $0xf0] sm:$0xff] %vm325, %v306
  %357 = vst.msk [vmem:[%s3 + $0xf8] sm:$0xff] %vm325, %v307
  %358 = vst.msk [vmem:[%s3 + $0x100] sm:$0xff] %vm325, %v308
  %359 = vst.msk [vmem:[%s3 + $0x108] sm:$0xff] %vm325, %v309
  %360 = vst.msk [vmem:[%s3 + $0x110] sm:$0xff] %vm325, %v310
  %361 = vst.msk [vmem:[%s3 + $0x118] sm:$0xff] %vm325, %v311
  %362 = vst.msk [vmem:[%s3 + $0x120] sm:$0xff] %vm325, %v312
  %363 = vst.msk [vmem:[%s3 + $0x128] sm:$0xff] %vm325, %v313
  %364 = vst.msk [vmem:[%s3 + $0x130] sm:$0xff] %vm325, %v314
  %365 = vst.msk [vmem:[%s3 + $0x138] sm:$0xff] %vm325, %v315
  %366 = vst.msk [vmem:[%s3 + $0x140] sm:$0xff] %vm325, %v316
  %367 = vst.msk [vmem:[%s3 + $0x148] sm:$0xff] %vm325, %v317
  %368 = vst.msk [vmem:[%s3 + $0x150] sm:$0xff] %vm325, %v318
  %369 = vst.msk [vmem:[%s3 + $0x158] sm:$0xff] %vm325, %v319
  %370 = vst.msk [vmem:[%s3 + $0x160] sm:$0xff] %vm325, %v320
  %371 = vst.msk [vmem:[%s3 + $0x168] sm:$0xff] %vm325, %v321
  %372 = vst.msk [vmem:[%s3 + $0x170] sm:$0xff] %vm325, %v322
  %373 = vst.msk [vmem:[%s3 + $0x178] sm:$0xff] %vm325, %v323
  %374 = vst.msk [vmem:[%s3 + $0x180] sm:$0xff] %vm325, %v324
  // Predicated region
  $region14: #{vision_transformer_forward.19} parent=0 // pred_check
    _
  $region15: #{vision_transformer_forward.19} parent=0 // pred_check_branch
    %376 = sbr.rel (0) target = $region17
  $region16: #{vision_transformer_forward.19} parent=0 // pred_region
    _
  $region17: #{vision_transformer_forward.19} parent=0 // pred_fallthru
    _
  // Predicated region
  $region18: #{vision_transformer_forward.19} parent=0 // pred_check
    _
  $region19: #{vision_transformer_forward.19} parent=0 // pred_check_branch
    %378 = sbr.rel (0) target = $region21
  $region20: #{vision_transformer_forward.19} parent=0 // pred_region
    _
  $region21: #{vision_transformer_forward.19} parent=0 // pred_fallthru
    _

</llo_original>
